<compile_context>
chip_gen: v7x
topology: tpu7x:2x2x1
jax: 0.10.0
libtpu: 0.0.40
codegen_flags: <defaults>
</compile_context>

<pallas_src>
import functools

import jax
import jax.numpy as jnp
from jax.experimental import pallas as pl
from jax.experimental.pallas import tpu as pltpu


# ----------------------------- Pallas kernels -----------------------------

def _attn_ln_kernel(x_q_ref, x_kv_ref, mask_ref,
                    wq_ref, bq_ref, wk_ref, bk_ref, wv_ref, bv_ref,
                    wo_ref, bo_ref, g_ref, beta_ref,
                    o_ref, acc_ref, *, heads, embed_size):
    """One (batch, q-block, head) grid step.

    Per-head attention context is projected with Wo_h and accumulated into a
    VMEM f32 scratch; residual + LayerNorm are applied on the last head step.
    """
    h_idx = pl.program_id(2)

    x_q = x_q_ref[0]                                  # (TQ, E)  f32 (residual)
    xq_b = x_q.astype(jnp.bfloat16)
    xkv_b = x_kv_ref[0].astype(jnp.bfloat16)          # (Lk, E)

    @pl.when(h_idx == 0)
    def _():
        # residual + (single) output-projection bias
        acc_ref[...] = x_q + bo_ref[...]

    # Per-head projections (weights sliced per head by the BlockSpec).
    q = jnp.dot(xq_b, wq_ref[0], preferred_element_type=jnp.float32) + bq_ref[0]
    k = jnp.dot(xkv_b, wk_ref[0], preferred_element_type=jnp.float32) + bk_ref[0]
    v = jnp.dot(xkv_b, wv_ref[0], preferred_element_type=jnp.float32) + bv_ref[0]

    # energy[q, k] = sum_d q[q, d] * k[k, d]
    energy = jax.lax.dot_general(
        q.astype(jnp.bfloat16), k.astype(jnp.bfloat16),
        (((1,), (1,)), ((), ())), preferred_element_type=jnp.float32)  # (TQ, Lk)

    m = mask_ref[0]                                   # (1, Lk) key-padding mask
    energy = jnp.where(m == 0.0, -1e20, energy)
    energy = energy * (1.0 / (embed_size ** 0.5))     # module scales by sqrt(E)
    energy = energy - jnp.max(energy, axis=-1, keepdims=True)
    p = jnp.exp(energy)
    inv = pl.reciprocal(jnp.sum(p, axis=-1, keepdims=True), approx=True)
    attn = (p * inv).astype(jnp.bfloat16)

    ctx = jnp.dot(attn, v.astype(jnp.bfloat16),
                  preferred_element_type=jnp.float32)            # (TQ, D)
    acc_ref[...] += jnp.dot(ctx.astype(jnp.bfloat16), wo_ref[0],
                            preferred_element_type=jnp.float32)  # (TQ, E)

    @pl.when(h_idx == heads - 1)
    def _():
        s = acc_ref[...]
        mean = jnp.mean(s, axis=-1, keepdims=True)
        var = jnp.mean((s - mean) ** 2, axis=-1, keepdims=True)
        o_ref[0] = ((s - mean) * jax.lax.rsqrt(var + 1e-5)
                    * g_ref[...] + beta_ref[...])


def _ffn_ln_kernel(x_ref, w1_ref, b1_ref, w2_ref, b2_ref, g_ref, beta_ref, o_ref):
    """Linear -> ReLU -> Linear, fused with residual add + LayerNorm."""
    x = x_ref[...]                                    # (TR, E) f32
    h = jnp.dot(x.astype(jnp.bfloat16), w1_ref[...],
                preferred_element_type=jnp.float32) + b1_ref[...]
    h = jnp.maximum(h, 0.0)
    y = jnp.dot(h.astype(jnp.bfloat16), w2_ref[...],
                preferred_element_type=jnp.float32) + b2_ref[...]
    s = x + y
    mean = jnp.mean(s, axis=-1, keepdims=True)
    var = jnp.mean((s - mean) ** 2, axis=-1, keepdims=True)
    o_ref[...] = (s - mean) * jax.lax.rsqrt(var + 1e-5) * g_ref[...] + beta_ref[...]


# ----------------------------- Pallas wrappers -----------------------------

_VMEM_LIMIT = 32 * 1024 * 1024


def attention_ln_pallas(x, mask, att, ln, heads, tq=128):
    """LayerNorm(x + SelfAttention(x, mask)).  x: (N, L, E), mask: (N, 1, L)."""
    N, L, E = x.shape
    D = E // heads
    TQ = L if L < tq else tq
    assert L % TQ == 0
    kernel = functools.partial(_attn_ln_kernel, heads=heads, embed_size=E)
    return pl.pallas_call(
        kernel,
        out_shape=jax.ShapeDtypeStruct((N, L, E), jnp.float32),
        grid=(N, L // TQ, heads),
        in_specs=[
            pl.BlockSpec((1, TQ, E), lambda n, qb, h: (n, qb, 0)),  # x (queries)
            pl.BlockSpec((1, L, E), lambda n, qb, h: (n, 0, 0)),    # x (keys/values)
            pl.BlockSpec((1, 1, L), lambda n, qb, h: (n, 0, 0)),    # key mask
            pl.BlockSpec((1, E, D), lambda n, qb, h: (h, 0, 0)),    # Wq_h
            pl.BlockSpec((1, 1, D), lambda n, qb, h: (h, 0, 0)),    # bq_h
            pl.BlockSpec((1, E, D), lambda n, qb, h: (h, 0, 0)),    # Wk_h
            pl.BlockSpec((1, 1, D), lambda n, qb, h: (h, 0, 0)),    # bk_h
            pl.BlockSpec((1, E, D), lambda n, qb, h: (h, 0, 0)),    # Wv_h
            pl.BlockSpec((1, 1, D), lambda n, qb, h: (h, 0, 0)),    # bv_h
            pl.BlockSpec((1, D, E), lambda n, qb, h: (h, 0, 0)),    # Wo_h
            pl.BlockSpec((1, E), lambda n, qb, h: (0, 0)),          # bo
            pl.BlockSpec((1, E), lambda n, qb, h: (0, 0)),          # gamma
            pl.BlockSpec((1, E), lambda n, qb, h: (0, 0)),          # beta
        ],
        out_specs=pl.BlockSpec((1, TQ, E), lambda n, qb, h: (n, qb, 0)),
        scratch_shapes=[pltpu.VMEM((TQ, E), jnp.float32)],
        compiler_params=pltpu.CompilerParams(
            dimension_semantics=("parallel", "parallel", "arbitrary"),
            vmem_limit_bytes=_VMEM_LIMIT),
    )(x, x, mask,
      att["wq"], att["bq"], att["wk"], att["bk"], att["wv"], att["bv"],
      att["wo"], att["bo"], ln["gamma"], ln["beta"])


def ffn_ln_pallas(x, ffn, ln, tr=128):
    """LayerNorm(x + FFN(x)), row-tiled.  x: (N, L, E)."""
    N, L, E = x.shape
    Hf = ffn["w1"].shape[1]
    rows = N * L
    TR = rows if rows < tr else tr
    assert rows % TR == 0
    xf = x.reshape(rows, E)
    # NOTE: at realistic Hf the hidden dim should additionally be tiled as a
    # reduction axis (v7x VMEM); at these sizes full-weight blocks fit easily.
    out = pl.pallas_call(
        _ffn_ln_kernel,
        out_shape=jax.ShapeDtypeStruct((rows, E), jnp.float32),
        grid=(rows // TR,),
        in_specs=[
            pl.BlockSpec((TR, E), lambda i: (i, 0)),
            pl.BlockSpec((E, Hf), lambda i: (0, 0)),
            pl.BlockSpec((1, Hf), lambda i: (0, 0)),
            pl.BlockSpec((Hf, E), lambda i: (0, 0)),
            pl.BlockSpec((1, E), lambda i: (0, 0)),
            pl.BlockSpec((1, E), lambda i: (0, 0)),
            pl.BlockSpec((1, E), lambda i: (0, 0)),
        ],
        out_specs=pl.BlockSpec((TR, E), lambda i: (i, 0)),
        compiler_params=pltpu.CompilerParams(
            dimension_semantics=("parallel",),
            vmem_limit_bytes=_VMEM_LIMIT),
    )(xf, ffn["w1"], ffn["b1"], ffn["w2"], ffn["b2"], ln["gamma"], ln["beta"])
    return out.reshape(N, L, E)


# ----------------------------- Parameter init -----------------------------

def _uniform(key, shape, fan_in):
    bound = 1.0 / (fan_in ** 0.5)
    return jax.random.uniform(key, shape, jnp.float32, -bound, bound)


def init_linear(key, fan_in, fan_out):
    k1, k2 = jax.random.split(key)
    w = _uniform(k1, (fan_in, fan_out), fan_in).astype(jnp.bfloat16)
    b = _uniform(k2, (1, fan_out), fan_in)
    return w, b


def init_attention(key, embed_size, heads):
    """Weights stored per head: Wq/Wk/Wv (H, E, D), Wo (H, D, E), biases f32."""
    D = embed_size // heads
    ks = jax.random.split(key, 8)

    def head_w(k):  # (E, E) column-partitioned per head -> (H, E, D)
        w = _uniform(k, (embed_size, embed_size), embed_size)
        return jnp.transpose(w.reshape(embed_size, heads, D), (1, 0, 2)).astype(jnp.bfloat16)

    def head_b(k):  # (E,) -> (H, 1, D)
        b = _uniform(k, (embed_size,), embed_size)
        return b.reshape(heads, 1, D)

    wo = _uniform(ks[6], (embed_size, embed_size), embed_size)
    return {
        "wq": head_w(ks[0]), "bq": head_b(ks[1]),
        "wk": head_w(ks[2]), "bk": head_b(ks[3]),
        "wv": head_w(ks[4]), "bv": head_b(ks[5]),
        "wo": wo.reshape(heads, D, embed_size).astype(jnp.bfloat16),
        "bo": _uniform(ks[7], (1, embed_size), embed_size),
    }


def init_layernorm(embed_size):
    return {"gamma": jnp.ones((1, embed_size), jnp.float32),
            "beta": jnp.zeros((1, embed_size), jnp.float32)}


def init_encoder(key, vocab, max_len, embed_size, num_layers, heads, forward_expansion):
    keys = jax.random.split(key, 2 + num_layers)
    params = {
        "embedding": 0.02 * jax.random.normal(keys[0], (vocab, embed_size), jnp.float32),
        "pos_embedding": 0.02 * jax.random.normal(keys[1], (max_len, embed_size), jnp.float32),
        "layers": [],
    }
    hidden = forward_expansion * embed_size
    for i in range(num_layers):
        lk = jax.random.split(keys[2 + i], 3)
        w1, b1 = init_linear(lk[1], embed_size, hidden)
        w2, b2 = init_linear(lk[2], hidden, embed_size)
        params["layers"].append({
            "att": init_attention(lk[0], embed_size, heads),
            "ln1": init_layernorm(embed_size),
            "ln2": init_layernorm(embed_size),
            "ffn": {"w1": w1, "b1": b1, "w2": w2, "b2": b2},
        })
    return params


# ----------------------------- Encoder forward -----------------------------

def encoder_forward(params, x_ids, mask, heads):
    """x_ids: (N, L) int32, mask: (N, 1, L) f32 key-padding mask (1 = keep)."""
    N, L = x_ids.shape
    # Embedding gathers are data-dependent -> kept as JAX glue; compute is in Pallas.
    pos = jnp.arange(L, dtype=jnp.int32)
    out = params["embedding"][x_ids] + params["pos_embedding"][pos][None]
    # dropout -> identity in eval mode
    for lp in params["layers"]:
        out = attention_ln_pallas(out, mask, lp["att"], lp["ln1"], heads)
        out = ffn_ln_pallas(out, lp["ffn"], lp["ln2"])
    return out


# ----------------------------- Pure-JAX reference -----------------------------

def _ln_ref(s, ln):
    mean = jnp.mean(s, axis=-1, keepdims=True)
    var = jnp.mean((s - mean) ** 2, axis=-1, keepdims=True)
    return (s - mean) * jax.lax.rsqrt(var + 1e-5) * ln["gamma"] + ln["beta"]


def _attention_ln_ref(x, mask, att, ln):
    N, L, E = x.shape
    xb = x.astype(jnp.bfloat16)
    q = jnp.einsum("nle,hed->nhld", xb, att["wq"],
                   preferred_element_type=jnp.float32) + att["bq"][None]
    k = jnp.einsum("nle,hed->nhld", xb, att["wk"],
                   preferred_element_type=jnp.float32) + att["bk"][None]
    v = jnp.einsum("nle,hed->nhld", xb, att["wv"],
                   preferred_element_type=jnp.float32) + att["bv"][None]
    energy = jnp.einsum("nhqd,nhkd->nhqk", q.astype(jnp.bfloat16),
                        k.astype(jnp.bfloat16), preferred_element_type=jnp.float32)
    energy = jnp.where(mask[:, None, :, :] == 0.0, -1e20, energy)
    attn = jax.nn.softmax(energy / (E ** 0.5), axis=-1)
    ctx = jnp.einsum("nhqk,nhkd->nhqd", attn.astype(jnp.bfloat16),
                     v.astype(jnp.bfloat16), preferred_element_type=jnp.float32)
    out = jnp.einsum("nhqd,hde->nqe", ctx.astype(jnp.bfloat16), att["wo"],
                     preferred_element_type=jnp.float32) + att["bo"]
    return _ln_ref(x + out, ln)


def _ffn_ln_ref(x, ffn, ln):
    h = jnp.dot(x.astype(jnp.bfloat16), ffn["w1"],
                preferred_element_type=jnp.float32) + ffn["b1"]
    h = jnp.maximum(h, 0.0)
    y = jnp.dot(h.astype(jnp.bfloat16), ffn["w2"],
                preferred_element_type=jnp.float32) + ffn["b2"]
    return _ln_ref(x + y, ln)


def encoder_ref(params, x_ids, mask, heads):
    N, L = x_ids.shape
    pos = jnp.arange(L, dtype=jnp.int32)
    out = params["embedding"][x_ids] + params["pos_embedding"][pos][None]
    for lp in params["layers"]:
        out = _attention_ln_ref(out, mask, lp["att"], lp["ln1"])
        out = _ffn_ln_ref(out, lp["ffn"], lp["ln2"])
    return out


# ----------------------------- Main -----------------------------

if __name__ == "__main__":
    # Small but lane-friendly config (all lane dims multiples of 128).
    src_vocab_size = 32
    max_length = 128
    embed_size = 256
    num_layers = 2
    heads = 2              # head_dim = 128
    forward_expansion = 4  # hidden = 1024
    p_drop = 0.0           # dropout is identity (eval mode)

    N, L = 2, 128

    key = jax.random.PRNGKey(0)
    k_param, k_ids = jax.random.split(key)

    params = init_encoder(k_param, src_vocab_size, max_length, embed_size,
                          num_layers, heads, forward_expansion)

    x_ids = jax.random.randint(k_ids, (N, L), 0, src_vocab_size, jnp.int32)

    # Key-padding mask (N, 1, L): batch 0 fully valid, batch 1 has last 32 padded.
    valid_len = jnp.array([L, L - 32], jnp.int32)
    mask = (jnp.arange(L)[None, :] < valid_len[:, None]).astype(jnp.float32)
    mask = mask.reshape(N, 1, L)

    fwd = jax.jit(functools.partial(encoder_forward, heads=heads))
    out = jax.block_until_ready(fwd(params, x_ids, mask))

    ref = jax.block_until_ready(encoder_ref(params, x_ids, mask, heads))

    assert out.shape == (N, L, embed_size)
    assert jnp.allclose(out, ref, rtol=2e-2, atol=2e-2), "mismatch vs JAX reference"

    print("KERNEL_OK")
</pallas_src>

<mosaic_0001>
module attributes {stable_mosaic.version = 11 : i64} {
  func.func @_attn_ln_kernel(%arg0: i32, %arg1: i32, %arg2: i32, %arg3: memref<1x128x256xf32, #tpu.memory_space<vmem>>, %arg4: memref<1x128x256xf32, #tpu.memory_space<vmem>>, %arg5: memref<1x1x128xf32, #tpu.memory_space<vmem>>, %arg6: memref<1x256x128xbf16, #tpu.memory_space<vmem>>, %arg7: memref<1x1x128xf32, #tpu.memory_space<vmem>>, %arg8: memref<1x256x128xbf16, #tpu.memory_space<vmem>>, %arg9: memref<1x1x128xf32, #tpu.memory_space<vmem>>, %arg10: memref<1x256x128xbf16, #tpu.memory_space<vmem>>, %arg11: memref<1x1x128xf32, #tpu.memory_space<vmem>>, %arg12: memref<1x128x256xbf16, #tpu.memory_space<vmem>>, %arg13: memref<1x256xf32, #tpu.memory_space<vmem>>, %arg14: memref<1x256xf32, #tpu.memory_space<vmem>>, %arg15: memref<1x256xf32, #tpu.memory_space<vmem>>, %arg16: memref<1x128x256xf32, #tpu.memory_space<vmem>>, %arg17: memref<128x256xf32, #tpu.memory_space<vmem>>) attributes {dimension_semantics = [#tpu.dimension_semantics<parallel>, #tpu.dimension_semantics<parallel>, #tpu.dimension_semantics<arbitrary>], iteration_bounds = array<i64: 2, 1, 2>, scalar_prefetch = 0 : i64, scratch_operands = 1 : i64, tpu.core_type = #tpu.core_type<tc>, window_params = [{transform_indices = @transform_0, window_bounds = array<i64: 1, 128, 256>}, {transform_indices = @transform_1, window_bounds = array<i64: 1, 128, 256>}, {transform_indices = @transform_2, window_bounds = array<i64: 1, 1, 128>}, {transform_indices = @transform_3, window_bounds = array<i64: 1, 256, 128>}, {transform_indices = @transform_4, window_bounds = array<i64: 1, 1, 128>}, {transform_indices = @transform_5, window_bounds = array<i64: 1, 256, 128>}, {transform_indices = @transform_6, window_bounds = array<i64: 1, 1, 128>}, {transform_indices = @transform_7, window_bounds = array<i64: 1, 256, 128>}, {transform_indices = @transform_8, window_bounds = array<i64: 1, 1, 128>}, {transform_indices = @transform_9, window_bounds = array<i64: 1, 128, 256>}, {pipeline_mode = #tpu.pipeline_mode<synchronous>, transform_indices = @transform_10, window_bounds = array<i64: 1, 256>}, {pipeline_mode = #tpu.pipeline_mode<synchronous>, transform_indices = @transform_11, window_bounds = array<i64: 1, 256>}, {pipeline_mode = #tpu.pipeline_mode<synchronous>, transform_indices = @transform_12, window_bounds = array<i64: 1, 256>}, {transform_indices = @transform_13, window_bounds = array<i64: 1, 128, 256>}]} {
    %c0 = arith.constant 0 : index
    %c0_0 = arith.constant 0 : index
    %c0_1 = arith.constant 0 : index
    %0 = vector.load %arg3[%c0, %c0_0, %c0_1] : memref<1x128x256xf32, #tpu.memory_space<vmem>>, vector<1x128x256xf32>
    %1 = vector.shape_cast %0 : vector<1x128x256xf32> to vector<128x256xf32>
    %2 = arith.truncf %1 : vector<128x256xf32> to vector<128x256xbf16>
    %c0_2 = arith.constant 0 : index
    %c0_3 = arith.constant 0 : index
    %c0_4 = arith.constant 0 : index
    %3 = vector.load %arg4[%c0_2, %c0_3, %c0_4] : memref<1x128x256xf32, #tpu.memory_space<vmem>>, vector<1x128x256xf32>
    %4 = vector.shape_cast %3 : vector<1x128x256xf32> to vector<128x256xf32>
    %5 = arith.truncf %4 : vector<128x256xf32> to vector<128x256xbf16>
    %c0_i32 = arith.constant 0 : i32
    %6 = arith.cmpi eq, %arg2, %c0_i32 : i32
    %7 = arith.extui %6 : i1 to i32
    %c0_i32_5 = arith.constant 0 : i32
    %8 = arith.cmpi ne, %7, %c0_i32_5 : i32
    scf.if %8 {
      %c0_45 = arith.constant 0 : index
      %c0_46 = arith.constant 0 : index
      %66 = vector.load %arg13[%c0_45, %c0_46] : memref<1x256xf32, #tpu.memory_space<vmem>>, vector<1x256xf32>
      %67 = vector.broadcast %66 : vector<1x256xf32> to vector<128x256xf32>
      %68 = arith.addf %1, %67 : vector<128x256xf32>
      %c0_47 = arith.constant 0 : index
      %c0_48 = arith.constant 0 : index
      %69 = vector.load %arg17[%c0_47, %c0_48] : memref<128x256xf32, #tpu.memory_space<vmem>>, vector<128x256xf32>
      tpu.vector_store %arg17[%c0_47, %c0_48], %68 {strides = array<i32>} : memref<128x256xf32, #tpu.memory_space<vmem>>, vector<128x256xf32>,
    } else {
    }
    %c0_6 = arith.constant 0 : index
    %c0_7 = arith.constant 0 : index
    %c0_8 = arith.constant 0 : index
    %9 = vector.load %arg6[%c0_6, %c0_7, %c0_8] : memref<1x256x128xbf16, #tpu.memory_space<vmem>>, vector<1x256x128xbf16>
    %10 = vector.shape_cast %9 : vector<1x256x128xbf16> to vector<256x128xbf16>
    %cst = arith.constant dense<0.000000e+00> : vector<128x128xf32>
    %11 = tpu.matmul %2, %10, %cst {dimension_numbers = #tpu.dot_dimension_numbers<[1], [0], [0], [1], [0, 0, 1, 1], [], []>} : vector<128x256xbf16>, vector<256x128xbf16>, vector<128x128xf32> -> vector<128x128xf32>
    %c0_9 = arith.constant 0 : index
    %c0_10 = arith.constant 0 : index
    %c0_11 = arith.constant 0 : index
    %12 = vector.load %arg7[%c0_9, %c0_10, %c0_11] : memref<1x1x128xf32, #tpu.memory_space<vmem>>, vector<1x1x128xf32>
    %13 = vector.shape_cast %12 : vector<1x1x128xf32> to vector<1x128xf32>
    %14 = vector.broadcast %13 : vector<1x128xf32> to vector<128x128xf32>
    %15 = arith.addf %11, %14 : vector<128x128xf32>
    %c0_12 = arith.constant 0 : index
    %c0_13 = arith.constant 0 : index
    %c0_14 = arith.constant 0 : index
    %16 = vector.load %arg8[%c0_12, %c0_13, %c0_14] : memref<1x256x128xbf16, #tpu.memory_space<vmem>>, vector<1x256x128xbf16>
    %17 = vector.shape_cast %16 : vector<1x256x128xbf16> to vector<256x128xbf16>
    %cst_15 = arith.constant dense<0.000000e+00> : vector<128x128xf32>
    %18 = tpu.matmul %5, %17, %cst_15 {dimension_numbers = #tpu.dot_dimension_numbers<[1], [0], [0], [1], [0, 0, 1, 1], [], []>} : vector<128x256xbf16>, vector<256x128xbf16>, vector<128x128xf32> -> vector<128x128xf32>
    %c0_16 = arith.constant 0 : index
    %c0_17 = arith.constant 0 : index
    %c0_18 = arith.constant 0 : index
    %19 = vector.load %arg9[%c0_16, %c0_17, %c0_18] : memref<1x1x128xf32, #tpu.memory_space<vmem>>, vector<1x1x128xf32>
    %20 = vector.shape_cast %19 : vector<1x1x128xf32> to vector<1x128xf32>
    %21 = vector.broadcast %20 : vector<1x128xf32> to vector<128x128xf32>
    %22 = arith.addf %18, %21 : vector<128x128xf32>
    %c0_19 = arith.constant 0 : index
    %c0_20 = arith.constant 0 : index
    %c0_21 = arith.constant 0 : index
    %23 = vector.load %arg10[%c0_19, %c0_20, %c0_21] : memref<1x256x128xbf16, #tpu.memory_space<vmem>>, vector<1x256x128xbf16>
    %24 = vector.shape_cast %23 : vector<1x256x128xbf16> to vector<256x128xbf16>
    %cst_22 = arith.constant dense<0.000000e+00> : vector<128x128xf32>
    %25 = tpu.matmul %5, %24, %cst_22 {dimension_numbers = #tpu.dot_dimension_numbers<[1], [0], [0], [1], [0, 0, 1, 1], [], []>} : vector<128x256xbf16>, vector<256x128xbf16>, vector<128x128xf32> -> vector<128x128xf32>
    %c0_23 = arith.constant 0 : index
    %c0_24 = arith.constant 0 : index
    %c0_25 = arith.constant 0 : index
    %26 = vector.load %arg11[%c0_23, %c0_24, %c0_25] : memref<1x1x128xf32, #tpu.memory_space<vmem>>, vector<1x1x128xf32>
    %27 = vector.shape_cast %26 : vector<1x1x128xf32> to vector<1x128xf32>
    %28 = vector.broadcast %27 : vector<1x128xf32> to vector<128x128xf32>
    %29 = arith.addf %25, %28 : vector<128x128xf32>
    %30 = arith.truncf %15 : vector<128x128xf32> to vector<128x128xbf16>
    %31 = arith.truncf %22 : vector<128x128xf32> to vector<128x128xbf16>
    %cst_26 = arith.constant dense<0.000000e+00> : vector<128x128xf32>
    %32 = tpu.matmul %30, %31, %cst_26 {dimension_numbers = #tpu.dot_dimension_numbers<[1], [1], [0], [0], [0, 0, 1, 0], [], []>} : vector<128x128xbf16>, vector<128x128xbf16>, vector<128x128xf32> -> vector<128x128xf32>
    %c0_27 = arith.constant 0 : index
    %c0_28 = arith.constant 0 : index
    %c0_29 = arith.constant 0 : index
    %33 = vector.load %arg5[%c0_27, %c0_28, %c0_29] : memref<1x1x128xf32, #tpu.memory_space<vmem>>, vector<1x1x128xf32>
    %34 = vector.shape_cast %33 : vector<1x1x128xf32> to vector<1x128xf32>
    %cst_30 = arith.constant 0.000000e+00 : f32
    %35 = vector.broadcast %cst_30 : f32 to vector<1x128xf32>
    %36 = arith.cmpf oeq, %34, %35 : vector<1x128xf32>
    %cst_31 = arith.constant -1.000000e+20 : f32
    %37 = vector.shape_cast %36 : vector<1x128xi1> to vector<1x128xi1>
    %38 = vector.broadcast %37 : vector<1x128xi1> to vector<128x128xi1>
    %39 = vector.broadcast %cst_31 : f32 to vector<128x128xf32>
    %40 = arith.select %38, %39, %32 : vector<128x128xi1>, vector<128x128xf32>
    %cst_32 = arith.constant 6.250000e-02 : f32
    %41 = vector.broadcast %cst_32 : f32 to vector<128x128xf32>
    %42 = arith.mulf %40, %41 : vector<128x128xf32>
    %cst_33 = arith.constant dense<0xFF800000> : vector<128xf32>
    %43 = vector.multi_reduction <maximumf>, %42, %cst_33 [1] : vector<128x128xf32> to vector<128xf32>
    %44 = vector.shape_cast %43 : vector<128xf32> to vector<128x1xf32>
    %45 = vector.broadcast %44 : vector<128x1xf32> to vector<128x128xf32>
    %46 = arith.subf %42, %45 : vector<128x128xf32>
    %47 = math.exp %46 : vector<128x128xf32>
    %cst_34 = arith.constant dense<0.000000e+00> : vector<128xf32>
    %48 = vector.multi_reduction <add>, %47, %cst_34 [1] : vector<128x128xf32> to vector<128xf32>
    %49 = vector.shape_cast %48 : vector<128xf32> to vector<128x1xf32>
    %50 = tpu.reciprocal %49 {approx = true} : vector<128x1xf32> -> vector<128x1xf32>
    %51 = vector.broadcast %50 : vector<128x1xf32> to vector<128x128xf32>
    %52 = arith.mulf %47, %51 : vector<128x128xf32>
    %53 = arith.truncf %52 : vector<128x128xf32> to vector<128x128xbf16>
    %54 = arith.truncf %29 : vector<128x128xf32> to vector<128x128xbf16>
    %cst_35 = arith.constant dense<0.000000e+00> : vector<128x128xf32>
    %55 = tpu.matmul %53, %54, %cst_35 {dimension_numbers = #tpu.dot_dimension_numbers<[1], [0], [0], [1], [0, 0, 1, 1], [], []>} : vector<128x128xbf16>, vector<128x128xbf16>, vector<128x128xf32> -> vector<128x128xf32>
    %c0_36 = arith.constant 0 : index
    %c0_37 = arith.constant 0 : index
    %56 = vector.load %arg17[%c0_36, %c0_37] : memref<128x256xf32, #tpu.memory_space<vmem>>, vector<128x256xf32>
    %57 = arith.truncf %55 : vector<128x128xf32> to vector<128x128xbf16>
    %c0_38 = arith.constant 0 : index
    %c0_39 = arith.constant 0 : index
    %c0_40 = arith.constant 0 : index
    %58 = vector.load %arg12[%c0_38, %c0_39, %c0_40] : memref<1x128x256xbf16, #tpu.memory_space<vmem>>, vector<1x128x256xbf16>
    %59 = vector.shape_cast %58 : vector<1x128x256xbf16> to vector<128x256xbf16>
    %cst_41 = arith.constant dense<0.000000e+00> : vector<128x256xf32>
    %60 = tpu.matmul %57, %59, %cst_41 {dimension_numbers = #tpu.dot_dimension_numbers<[1], [0], [0], [1], [0, 0, 1, 1], [], []>} : vector<128x128xbf16>, vector<128x256xbf16>, vector<128x256xf32> -> vector<128x256xf32>
    %61 = arith.addf %56, %60 : vector<128x256xf32>
    %c0_42 = arith.constant 0 : index
    %c0_43 = arith.constant 0 : index
    %62 = vector.load %arg17[%c0_42, %c0_43] : memref<128x256xf32, #tpu.memory_space<vmem>>, vector<128x256xf32>
    tpu.vector_store %arg17[%c0_42, %c0_43], %61 {strides = array<i32>} : memref<128x256xf32, #tpu.memory_space<vmem>>, vector<128x256xf32>,
    %c1_i32 = arith.constant 1 : i32
    %63 = arith.cmpi eq, %arg2, %c1_i32 : i32
    %64 = arith.extui %63 : i1 to i32
    %c0_i32_44 = arith.constant 0 : i32
    %65 = arith.cmpi ne, %64, %c0_i32_44 : i32
    scf.if %65 {
      %c0_45 = arith.constant 0 : index
      %c0_46 = arith.constant 0 : index
      %66 = vector.load %arg17[%c0_45, %c0_46] : memref<128x256xf32, #tpu.memory_space<vmem>>, vector<128x256xf32>
      %cst_47 = arith.constant dense<0.000000e+00> : vector<128xf32>
      %67 = vector.multi_reduction <add>, %66, %cst_47 [1] : vector<128x256xf32> to vector<128xf32>
      %68 = vector.shape_cast %67 : vector<128xf32> to vector<128x1xf32>
      %cst_48 = arith.constant 2.560000e+02 : f32
      %69 = vector.broadcast %cst_48 : f32 to vector<128x1xf32>
      %70 = arith.divf %68, %69 : vector<128x1xf32>
      %71 = vector.broadcast %70 : vector<128x1xf32> to vector<128x256xf32>
      %72 = arith.subf %66, %71 : vector<128x256xf32>
      %73 = arith.mulf %72, %72 : vector<128x256xf32>
      %cst_49 = arith.constant dense<0.000000e+00> : vector<128xf32>
      %74 = vector.multi_reduction <add>, %73, %cst_49 [1] : vector<128x256xf32> to vector<128xf32>
      %75 = vector.shape_cast %74 : vector<128xf32> to vector<128x1xf32>
      %cst_50 = arith.constant 2.560000e+02 : f32
      %76 = vector.broadcast %cst_50 : f32 to vector<128x1xf32>
      %77 = arith.divf %75, %76 : vector<128x1xf32>
      %78 = vector.broadcast %70 : vector<128x1xf32> to vector<128x256xf32>
      %79 = arith.subf %66, %78 : vector<128x256xf32>
      %cst_51 = arith.constant 9.99999974E-6 : f32
      %80 = vector.broadcast %cst_51 : f32 to vector<128x1xf32>
      %81 = arith.addf %77, %80 : vector<128x1xf32>
      %82 = math.rsqrt %81 : vector<128x1xf32>
      %83 = vector.broadcast %82 : vector<128x1xf32> to vector<128x256xf32>
      %84 = arith.mulf %79, %83 : vector<128x256xf32>
      %c0_52 = arith.constant 0 : index
      %c0_53 = arith.constant 0 : index
      %85 = vector.load %arg14[%c0_52, %c0_53] : memref<1x256xf32, #tpu.memory_space<vmem>>, vector<1x256xf32>
      %86 = vector.broadcast %85 : vector<1x256xf32> to vector<128x256xf32>
      %87 = arith.mulf %84, %86 : vector<128x256xf32>
      %c0_54 = arith.constant 0 : index
      %c0_55 = arith.constant 0 : index
      %88 = vector.load %arg15[%c0_54, %c0_55] : memref<1x256xf32, #tpu.memory_space<vmem>>, vector<1x256xf32>
      %89 = vector.broadcast %88 : vector<1x256xf32> to vector<128x256xf32>
      %90 = arith.addf %87, %89 : vector<128x256xf32>
      %c0_56 = arith.constant 0 : index
      %c0_57 = arith.constant 0 : index
      %c0_58 = arith.constant 0 : index
      %91 = vector.load %arg16[%c0_56, %c0_57, %c0_58] : memref<1x128x256xf32, #tpu.memory_space<vmem>>, vector<1x128x256xf32>
      %92 = vector.shape_cast %91 : vector<1x128x256xf32> to vector<128x256xf32>
      %93 = vector.shape_cast %90 : vector<128x256xf32> to vector<1x128x256xf32>
      tpu.vector_store %arg16[%c0_56, %c0_57, %c0_58], %93 {strides = array<i32>} : memref<1x128x256xf32, #tpu.memory_space<vmem>>, vector<1x128x256xf32>,
    } else {
    }
    return
  }
  func.func @transform_0(%arg0: i32, %arg1: i32, %arg2: i32) -> (i32, i32, i32) {
    %c0_i32 = arith.constant 0 : i32
    %c0_i32_0 = arith.constant 0 : i32
    return %arg0, %arg1, %c0_i32 : i32, i32, i32
  }
  func.func @transform_1(%arg0: i32, %arg1: i32, %arg2: i32) -> (i32, i32, i32) {
    %c0_i32 = arith.constant 0 : i32
    %c0_i32_0 = arith.constant 0 : i32
    %c0_i32_1 = arith.constant 0 : i32
    return %arg0, %c0_i32, %c0_i32_0 : i32, i32, i32
  }
  func.func @transform_2(%arg0: i32, %arg1: i32, %arg2: i32) -> (i32, i32, i32) {
    %c0_i32 = arith.constant 0 : i32
    %c0_i32_0 = arith.constant 0 : i32
    %c0_i32_1 = arith.constant 0 : i32
    return %arg0, %c0_i32, %c0_i32_0 : i32, i32, i32
  }
  func.func @transform_3(%arg0: i32, %arg1: i32, %arg2: i32) -> (i32, i32, i32) {
    %c0_i32 = arith.constant 0 : i32
    %c0_i32_0 = arith.constant 0 : i32
    %c0_i32_1 = arith.constant 0 : i32
    return %arg2, %c0_i32, %c0_i32_0 : i32, i32, i32
  }
  func.func @transform_4(%arg0: i32, %arg1: i32, %arg2: i32) -> (i32, i32, i32) {
    %c0_i32 = arith.constant 0 : i32
    %c0_i32_0 = arith.constant 0 : i32
    %c0_i32_1 = arith.constant 0 : i32
    return %arg2, %c0_i32, %c0_i32_0 : i32, i32, i32
  }
  func.func @transform_5(%arg0: i32, %arg1: i32, %arg2: i32) -> (i32, i32, i32) {
    %c0_i32 = arith.constant 0 : i32
    %c0_i32_0 = arith.constant 0 : i32
    %c0_i32_1 = arith.constant 0 : i32
    return %arg2, %c0_i32, %c0_i32_0 : i32, i32, i32
  }
  func.func @transform_6(%arg0: i32, %arg1: i32, %arg2: i32) -> (i32, i32, i32) {
    %c0_i32 = arith.constant 0 : i32
    %c0_i32_0 = arith.constant 0 : i32
    %c0_i32_1 = arith.constant 0 : i32
    return %arg2, %c0_i32, %c0_i32_0 : i32, i32, i32
  }
  func.func @transform_7(%arg0: i32, %arg1: i32, %arg2: i32) -> (i32, i32, i32) {
    %c0_i32 = arith.constant 0 : i32
    %c0_i32_0 = arith.constant 0 : i32
    %c0_i32_1 = arith.constant 0 : i32
    return %arg2, %c0_i32, %c0_i32_0 : i32, i32, i32
  }
  func.func @transform_8(%arg0: i32, %arg1: i32, %arg2: i32) -> (i32, i32, i32) {
    %c0_i32 = arith.constant 0 : i32
    %c0_i32_0 = arith.constant 0 : i32
    %c0_i32_1 = arith.constant 0 : i32
    return %arg2, %c0_i32, %c0_i32_0 : i32, i32, i32
  }
  func.func @transform_9(%arg0: i32, %arg1: i32, %arg2: i32) -> (i32, i32, i32) {
    %c0_i32 = arith.constant 0 : i32
    %c0_i32_0 = arith.constant 0 : i32
    %c0_i32_1 = arith.constant 0 : i32
    return %arg2, %c0_i32, %c0_i32_0 : i32, i32, i32
  }
  func.func @transform_10(%arg0: i32, %arg1: i32, %arg2: i32) -> (i32, i32) {
    %c0_i32 = arith.constant 0 : i32
    %c0_i32_0 = arith.constant 0 : i32
    %c0_i32_1 = arith.constant 0 : i32
    return %c0_i32, %c0_i32_0 : i32, i32
  }
  func.func @transform_11(%arg0: i32, %arg1: i32, %arg2: i32) -> (i32, i32) {
    %c0_i32 = arith.constant 0 : i32
    %c0_i32_0 = arith.constant 0 : i32
    %c0_i32_1 = arith.constant 0 : i32
    return %c0_i32, %c0_i32_0 : i32, i32
  }
  func.func @transform_12(%arg0: i32, %arg1: i32, %arg2: i32) -> (i32, i32) {
    %c0_i32 = arith.constant 0 : i32
    %c0_i32_0 = arith.constant 0 : i32
    %c0_i32_1 = arith.constant 0 : i32
    return %c0_i32, %c0_i32_0 : i32, i32
  }
  func.func @transform_13(%arg0: i32, %arg1: i32, %arg2: i32) -> (i32, i32, i32) {
    %c0_i32 = arith.constant 0 : i32
    %c0_i32_0 = arith.constant 0 : i32
    return %arg0, %arg1, %c0_i32 : i32, i32, i32
  }
}

module attributes {stable_mosaic.version = 11 : i64} {
  func.func @_ffn_ln_kernel(%arg0: i32, %arg1: memref<128x256xf32, #tpu.memory_space<vmem>>, %arg2: memref<256x1024xbf16, #tpu.memory_space<vmem>>, %arg3: memref<1x1024xf32, #tpu.memory_space<vmem>>, %arg4: memref<1024x256xbf16, #tpu.memory_space<vmem>>, %arg5: memref<1x256xf32, #tpu.memory_space<vmem>>, %arg6: memref<1x256xf32, #tpu.memory_space<vmem>>, %arg7: memref<1x256xf32, #tpu.memory_space<vmem>>, %arg8: memref<128x256xf32, #tpu.memory_space<vmem>>) attributes {dimension_semantics = [#tpu.dimension_semantics<parallel>], iteration_bounds = array<i64: 2>, scalar_prefetch = 0 : i64, scratch_operands = 0 : i64, tpu.core_type = #tpu.core_type<tc>, window_params = [{transform_indices = @transform_0, window_bounds = array<i64: 128, 256>}, {pipeline_mode = #tpu.pipeline_mode<synchronous>, transform_indices = @transform_1, window_bounds = array<i64: 256, 1024>}, {pipeline_mode = #tpu.pipeline_mode<synchronous>, transform_indices = @transform_2, window_bounds = array<i64: 1, 1024>}, {pipeline_mode = #tpu.pipeline_mode<synchronous>, transform_indices = @transform_3, window_bounds = array<i64: 1024, 256>}, {pipeline_mode = #tpu.pipeline_mode<synchronous>, transform_indices = @transform_4, window_bounds = array<i64: 1, 256>}, {pipeline_mode = #tpu.pipeline_mode<synchronous>, transform_indices = @transform_5, window_bounds = array<i64: 1, 256>}, {pipeline_mode = #tpu.pipeline_mode<synchronous>, transform_indices = @transform_6, window_bounds = array<i64: 1, 256>}, {transform_indices = @transform_7, window_bounds = array<i64: 128, 256>}]} {
    %c0 = arith.constant 0 : index
    %c0_0 = arith.constant 0 : index
    %0 = vector.load %arg1[%c0, %c0_0] : memref<128x256xf32, #tpu.memory_space<vmem>>, vector<128x256xf32>
    %1 = arith.truncf %0 : vector<128x256xf32> to vector<128x256xbf16>
    %c0_1 = arith.constant 0 : index
    %c0_2 = arith.constant 0 : index
    %2 = vector.load %arg2[%c0_1, %c0_2] : memref<256x1024xbf16, #tpu.memory_space<vmem>>, vector<256x1024xbf16>
    %cst = arith.constant dense<0.000000e+00> : vector<128x1024xf32>
    %3 = tpu.matmul %1, %2, %cst {dimension_numbers = #tpu.dot_dimension_numbers<[1], [0], [0], [1], [0, 0, 1, 1], [], []>} : vector<128x256xbf16>, vector<256x1024xbf16>, vector<128x1024xf32> -> vector<128x1024xf32>
    %c0_3 = arith.constant 0 : index
    %c0_4 = arith.constant 0 : index
    %4 = vector.load %arg3[%c0_3, %c0_4] : memref<1x1024xf32, #tpu.memory_space<vmem>>, vector<1x1024xf32>
    %5 = vector.broadcast %4 : vector<1x1024xf32> to vector<128x1024xf32>
    %6 = arith.addf %3, %5 : vector<128x1024xf32>
    %cst_5 = arith.constant 0.000000e+00 : f32
    %7 = vector.broadcast %cst_5 : f32 to vector<128x1024xf32>
    %8 = arith.maximumf %6, %7 : vector<128x1024xf32>
    %9 = arith.truncf %8 : vector<128x1024xf32> to vector<128x1024xbf16>
    %c0_6 = arith.constant 0 : index
    %c0_7 = arith.constant 0 : index
    %10 = vector.load %arg4[%c0_6, %c0_7] : memref<1024x256xbf16, #tpu.memory_space<vmem>>, vector<1024x256xbf16>
    %cst_8 = arith.constant dense<0.000000e+00> : vector<128x256xf32>
    %11 = tpu.matmul %9, %10, %cst_8 {dimension_numbers = #tpu.dot_dimension_numbers<[1], [0], [0], [1], [0, 0, 1, 1], [], []>} : vector<128x1024xbf16>, vector<1024x256xbf16>, vector<128x256xf32> -> vector<128x256xf32>
    %c0_9 = arith.constant 0 : index
    %c0_10 = arith.constant 0 : index
    %12 = vector.load %arg5[%c0_9, %c0_10] : memref<1x256xf32, #tpu.memory_space<vmem>>, vector<1x256xf32>
    %13 = vector.broadcast %12 : vector<1x256xf32> to vector<128x256xf32>
    %14 = arith.addf %11, %13 : vector<128x256xf32>
    %15 = arith.addf %0, %14 : vector<128x256xf32>
    %cst_11 = arith.constant dense<0.000000e+00> : vector<128xf32>
    %16 = vector.multi_reduction <add>, %15, %cst_11 [1] : vector<128x256xf32> to vector<128xf32>
    %17 = vector.shape_cast %16 : vector<128xf32> to vector<128x1xf32>
    %cst_12 = arith.constant 2.560000e+02 : f32
    %18 = vector.broadcast %cst_12 : f32 to vector<128x1xf32>
    %19 = arith.divf %17, %18 : vector<128x1xf32>
    %20 = vector.broadcast %19 : vector<128x1xf32> to vector<128x256xf32>
    %21 = arith.subf %15, %20 : vector<128x256xf32>
    %22 = arith.mulf %21, %21 : vector<128x256xf32>
    %cst_13 = arith.constant dense<0.000000e+00> : vector<128xf32>
    %23 = vector.multi_reduction <add>, %22, %cst_13 [1] : vector<128x256xf32> to vector<128xf32>
    %24 = vector.shape_cast %23 : vector<128xf32> to vector<128x1xf32>
    %cst_14 = arith.constant 2.560000e+02 : f32
    %25 = vector.broadcast %cst_14 : f32 to vector<128x1xf32>
    %26 = arith.divf %24, %25 : vector<128x1xf32>
    %27 = vector.broadcast %19 : vector<128x1xf32> to vector<128x256xf32>
    %28 = arith.subf %15, %27 : vector<128x256xf32>
    %cst_15 = arith.constant 9.99999974E-6 : f32
    %29 = vector.broadcast %cst_15 : f32 to vector<128x1xf32>
    %30 = arith.addf %26, %29 : vector<128x1xf32>
    %31 = math.rsqrt %30 : vector<128x1xf32>
    %32 = vector.broadcast %31 : vector<128x1xf32> to vector<128x256xf32>
    %33 = arith.mulf %28, %32 : vector<128x256xf32>
    %c0_16 = arith.constant 0 : index
    %c0_17 = arith.constant 0 : index
    %34 = vector.load %arg6[%c0_16, %c0_17] : memref<1x256xf32, #tpu.memory_space<vmem>>, vector<1x256xf32>
    %35 = vector.broadcast %34 : vector<1x256xf32> to vector<128x256xf32>
    %36 = arith.mulf %33, %35 : vector<128x256xf32>
    %c0_18 = arith.constant 0 : index
    %c0_19 = arith.constant 0 : index
    %37 = vector.load %arg7[%c0_18, %c0_19] : memref<1x256xf32, #tpu.memory_space<vmem>>, vector<1x256xf32>
    %38 = vector.broadcast %37 : vector<1x256xf32> to vector<128x256xf32>
    %39 = arith.addf %36, %38 : vector<128x256xf32>
    %c0_20 = arith.constant 0 : index
    %c0_21 = arith.constant 0 : index
    %40 = vector.load %arg8[%c0_20, %c0_21] : memref<128x256xf32, #tpu.memory_space<vmem>>, vector<128x256xf32>
    tpu.vector_store %arg8[%c0_20, %c0_21], %39 {strides = array<i32>} : memref<128x256xf32, #tpu.memory_space<vmem>>, vector<128x256xf32>,
    return
  }
  func.func @transform_0(%arg0: i32) -> (i32, i32) {
    %c0_i32 = arith.constant 0 : i32
    %c0_i32_0 = arith.constant 0 : i32
    return %arg0, %c0_i32 : i32, i32
  }
  func.func @transform_1(%arg0: i32) -> (i32, i32) {
    %c0_i32 = arith.constant 0 : i32
    %c0_i32_0 = arith.constant 0 : i32
    %c0_i32_1 = arith.constant 0 : i32
    return %c0_i32, %c0_i32_0 : i32, i32
  }
  func.func @transform_2(%arg0: i32) -> (i32, i32) {
    %c0_i32 = arith.constant 0 : i32
    %c0_i32_0 = arith.constant 0 : i32
    %c0_i32_1 = arith.constant 0 : i32
    return %c0_i32, %c0_i32_0 : i32, i32
  }
  func.func @transform_3(%arg0: i32) -> (i32, i32) {
    %c0_i32 = arith.constant 0 : i32
    %c0_i32_0 = arith.constant 0 : i32
    %c0_i32_1 = arith.constant 0 : i32
    return %c0_i32, %c0_i32_0 : i32, i32
  }
  func.func @transform_4(%arg0: i32) -> (i32, i32) {
    %c0_i32 = arith.constant 0 : i32
    %c0_i32_0 = arith.constant 0 : i32
    %c0_i32_1 = arith.constant 0 : i32
    return %c0_i32, %c0_i32_0 : i32, i32
  }
  func.func @transform_5(%arg0: i32) -> (i32, i32) {
    %c0_i32 = arith.constant 0 : i32
    %c0_i32_0 = arith.constant 0 : i32
    %c0_i32_1 = arith.constant 0 : i32
    return %c0_i32, %c0_i32_0 : i32, i32
  }
  func.func @transform_6(%arg0: i32) -> (i32, i32) {
    %c0_i32 = arith.constant 0 : i32
    %c0_i32_0 = arith.constant 0 : i32
    %c0_i32_1 = arith.constant 0 : i32
    return %c0_i32, %c0_i32_0 : i32, i32
  }
  func.func @transform_7(%arg0: i32) -> (i32, i32) {
    %c0_i32 = arith.constant 0 : i32
    %c0_i32_0 = arith.constant 0 : i32
    return %arg0, %c0_i32 : i32, i32
  }
}

module attributes {stable_mosaic.version = 11 : i64} {
  func.func @_ffn_ln_kernel(%arg0: i32, %arg1: memref<128x256xf32, #tpu.memory_space<vmem>>, %arg2: memref<256x1024xbf16, #tpu.memory_space<vmem>>, %arg3: memref<1x1024xf32, #tpu.memory_space<vmem>>, %arg4: memref<1024x256xbf16, #tpu.memory_space<vmem>>, %arg5: memref<1x256xf32, #tpu.memory_space<vmem>>, %arg6: memref<1x256xf32, #tpu.memory_space<vmem>>, %arg7: memref<1x256xf32, #tpu.memory_space<vmem>>, %arg8: memref<128x256xf32, #tpu.memory_space<vmem>>) attributes {dimension_semantics = [#tpu.dimension_semantics<parallel>], iteration_bounds = array<i64: 2>, scalar_prefetch = 0 : i64, scratch_operands = 0 : i64, tpu.core_type = #tpu.core_type<tc>, window_params = [{transform_indices = @transform_0, window_bounds = array<i64: 128, 256>}, {pipeline_mode = #tpu.pipeline_mode<synchronous>, transform_indices = @transform_1, window_bounds = array<i64: 256, 1024>}, {pipeline_mode = #tpu.pipeline_mode<synchronous>, transform_indices = @transform_2, window_bounds = array<i64: 1, 1024>}, {pipeline_mode = #tpu.pipeline_mode<synchronous>, transform_indices = @transform_3, window_bounds = array<i64: 1024, 256>}, {pipeline_mode = #tpu.pipeline_mode<synchronous>, transform_indices = @transform_4, window_bounds = array<i64: 1, 256>}, {pipeline_mode = #tpu.pipeline_mode<synchronous>, transform_indices = @transform_5, window_bounds = array<i64: 1, 256>}, {pipeline_mode = #tpu.pipeline_mode<synchronous>, transform_indices = @transform_6, window_bounds = array<i64: 1, 256>}, {transform_indices = @transform_7, window_bounds = array<i64: 128, 256>}]} {
    %c0 = arith.constant 0 : index
    %c0_0 = arith.constant 0 : index
    %0 = vector.load %arg1[%c0, %c0_0] : memref<128x256xf32, #tpu.memory_space<vmem>>, vector<128x256xf32>
    %1 = arith.truncf %0 : vector<128x256xf32> to vector<128x256xbf16>
    %c0_1 = arith.constant 0 : index
    %c0_2 = arith.constant 0 : index
    %2 = vector.load %arg2[%c0_1, %c0_2] : memref<256x1024xbf16, #tpu.memory_space<vmem>>, vector<256x1024xbf16>
    %cst = arith.constant dense<0.000000e+00> : vector<128x1024xf32>
    %3 = tpu.matmul %1, %2, %cst {dimension_numbers = #tpu.dot_dimension_numbers<[1], [0], [0], [1], [0, 0, 1, 1], [], []>} : vector<128x256xbf16>, vector<256x1024xbf16>, vector<128x1024xf32> -> vector<128x1024xf32>
    %c0_3 = arith.constant 0 : index
    %c0_4 = arith.constant 0 : index
    %4 = vector.load %arg3[%c0_3, %c0_4] : memref<1x1024xf32, #tpu.memory_space<vmem>>, vector<1x1024xf32>
    %5 = vector.broadcast %4 : vector<1x1024xf32> to vector<128x1024xf32>
    %6 = arith.addf %3, %5 : vector<128x1024xf32>
    %cst_5 = arith.constant 0.000000e+00 : f32
    %7 = vector.broadcast %cst_5 : f32 to vector<128x1024xf32>
    %8 = arith.maximumf %6, %7 : vector<128x1024xf32>
    %9 = arith.truncf %8 : vector<128x1024xf32> to vector<128x1024xbf16>
    %c0_6 = arith.constant 0 : index
    %c0_7 = arith.constant 0 : index
    %10 = vector.load %arg4[%c0_6, %c0_7] : memref<1024x256xbf16, #tpu.memory_space<vmem>>, vector<1024x256xbf16>
    %cst_8 = arith.constant dense<0.000000e+00> : vector<128x256xf32>
    %11 = tpu.matmul %9, %10, %cst_8 {dimension_numbers = #tpu.dot_dimension_numbers<[1], [0], [0], [1], [0, 0, 1, 1], [], []>} : vector<128x1024xbf16>, vector<1024x256xbf16>, vector<128x256xf32> -> vector<128x256xf32>
    %c0_9 = arith.constant 0 : index
    %c0_10 = arith.constant 0 : index
    %12 = vector.load %arg5[%c0_9, %c0_10] : memref<1x256xf32, #tpu.memory_space<vmem>>, vector<1x256xf32>
    %13 = vector.broadcast %12 : vector<1x256xf32> to vector<128x256xf32>
    %14 = arith.addf %11, %13 : vector<128x256xf32>
    %15 = arith.addf %0, %14 : vector<128x256xf32>
    %cst_11 = arith.constant dense<0.000000e+00> : vector<128xf32>
    %16 = vector.multi_reduction <add>, %15, %cst_11 [1] : vector<128x256xf32> to vector<128xf32>
    %17 = vector.shape_cast %16 : vector<128xf32> to vector<128x1xf32>
    %cst_12 = arith.constant 2.560000e+02 : f32
    %18 = vector.broadcast %cst_12 : f32 to vector<128x1xf32>
    %19 = arith.divf %17, %18 : vector<128x1xf32>
    %20 = vector.broadcast %19 : vector<128x1xf32> to vector<128x256xf32>
    %21 = arith.subf %15, %20 : vector<128x256xf32>
    %22 = arith.mulf %21, %21 : vector<128x256xf32>
    %cst_13 = arith.constant dense<0.000000e+00> : vector<128xf32>
    %23 = vector.multi_reduction <add>, %22, %cst_13 [1] : vector<128x256xf32> to vector<128xf32>
    %24 = vector.shape_cast %23 : vector<128xf32> to vector<128x1xf32>
    %cst_14 = arith.constant 2.560000e+02 : f32
    %25 = vector.broadcast %cst_14 : f32 to vector<128x1xf32>
    %26 = arith.divf %24, %25 : vector<128x1xf32>
    %27 = vector.broadcast %19 : vector<128x1xf32> to vector<128x256xf32>
    %28 = arith.subf %15, %27 : vector<128x256xf32>
    %cst_15 = arith.constant 9.99999974E-6 : f32
    %29 = vector.broadcast %cst_15 : f32 to vector<128x1xf32>
    %30 = arith.addf %26, %29 : vector<128x1xf32>
    %31 = math.rsqrt %30 : vector<128x1xf32>
    %32 = vector.broadcast %31 : vector<128x1xf32> to vector<128x256xf32>
    %33 = arith.mulf %28, %32 : vector<128x256xf32>
    %c0_16 = arith.constant 0 : index
    %c0_17 = arith.constant 0 : index
    %34 = vector.load %arg6[%c0_16, %c0_17] : memref<1x256xf32, #tpu.memory_space<vmem>>, vector<1x256xf32>
    %35 = vector.broadcast %34 : vector<1x256xf32> to vector<128x256xf32>
    %36 = arith.mulf %33, %35 : vector<128x256xf32>
    %c0_18 = arith.constant 0 : index
    %c0_19 = arith.constant 0 : index
    %37 = vector.load %arg7[%c0_18, %c0_19] : memref<1x256xf32, #tpu.memory_space<vmem>>, vector<1x256xf32>
    %38 = vector.broadcast %37 : vector<1x256xf32> to vector<128x256xf32>
    %39 = arith.addf %36, %38 : vector<128x256xf32>
    %c0_20 = arith.constant 0 : index
    %c0_21 = arith.constant 0 : index
    %40 = vector.load %arg8[%c0_20, %c0_21] : memref<128x256xf32, #tpu.memory_space<vmem>>, vector<128x256xf32>
    tpu.vector_store %arg8[%c0_20, %c0_21], %39 {strides = array<i32>} : memref<128x256xf32, #tpu.memory_space<vmem>>, vector<128x256xf32>,
    return
  }
  func.func @transform_0(%arg0: i32) -> (i32, i32) {
    %c0_i32 = arith.constant 0 : i32
    %c0_i32_0 = arith.constant 0 : i32
    return %arg0, %c0_i32 : i32, i32
  }
  func.func @transform_1(%arg0: i32) -> (i32, i32) {
    %c0_i32 = arith.constant 0 : i32
    %c0_i32_0 = arith.constant 0 : i32
    %c0_i32_1 = arith.constant 0 : i32
    return %c0_i32, %c0_i32_0 : i32, i32
  }
  func.func @transform_2(%arg0: i32) -> (i32, i32) {
    %c0_i32 = arith.constant 0 : i32
    %c0_i32_0 = arith.constant 0 : i32
    %c0_i32_1 = arith.constant 0 : i32
    return %c0_i32, %c0_i32_0 : i32, i32
  }
  func.func @transform_3(%arg0: i32) -> (i32, i32) {
    %c0_i32 = arith.constant 0 : i32
    %c0_i32_0 = arith.constant 0 : i32
    %c0_i32_1 = arith.constant 0 : i32
    return %c0_i32, %c0_i32_0 : i32, i32
  }
  func.func @transform_4(%arg0: i32) -> (i32, i32) {
    %c0_i32 = arith.constant 0 : i32
    %c0_i32_0 = arith.constant 0 : i32
    %c0_i32_1 = arith.constant 0 : i32
    return %c0_i32, %c0_i32_0 : i32, i32
  }
  func.func @transform_5(%arg0: i32) -> (i32, i32) {
    %c0_i32 = arith.constant 0 : i32
    %c0_i32_0 = arith.constant 0 : i32
    %c0_i32_1 = arith.constant 0 : i32
    return %c0_i32, %c0_i32_0 : i32, i32
  }
  func.func @transform_6(%arg0: i32) -> (i32, i32) {
    %c0_i32 = arith.constant 0 : i32
    %c0_i32_0 = arith.constant 0 : i32
    %c0_i32_1 = arith.constant 0 : i32
    return %c0_i32, %c0_i32_0 : i32, i32
  }
  func.func @transform_7(%arg0: i32) -> (i32, i32) {
    %c0_i32 = arith.constant 0 : i32
    %c0_i32_0 = arith.constant 0 : i32
    return %arg0, %c0_i32 : i32, i32
  }
}

</mosaic_0001>

<llo_original>
// kernel: encoder_forward.4
$region0: #{encoder_forward.4}
  #allocation0 [shape = 'u32[]', space=smem, size = 0x4, offset = 0x4, fixed_abs, tag = 'smem constant byte address 0x4 - core index']
  #allocation1 [shape = 'u32[144,128]{1,0:T(1,128)}', space=vmem, size = 0x12000, scoped, tag = 'internal scratch']
  #allocation2 [shape = 'f32[128,256]{1,0:T(8,128)}', space=vmem, size = 0x20000, scoped, tag = 'scratch operand']
  %s0 = inlined_call_operand.vmem [shape: f32[2,128,256], index: 0, kind: input, shape index: {}, may-alias: {0,1}]
  %s1 = inlined_call_operand.vmem [shape: f32[2,128,256], index: 1, kind: input, shape index: {}, may-alias: {0,1}]
  %s2 = inlined_call_operand.vmem [shape: f32[2,1,128], index: 2, kind: input, shape index: {}]
  %s3 = inlined_call_operand.vmem [shape: bf16[2,256,128], index: 3, kind: input, shape index: {}]
  %s4 = inlined_call_operand.vmem [shape: f32[2,1,128], index: 4, kind: input, shape index: {}]
  %s5 = inlined_call_operand.vmem [shape: bf16[2,256,128], index: 5, kind: input, shape index: {}]
  %s6 = inlined_call_operand.vmem [shape: f32[2,1,128], index: 6, kind: input, shape index: {}]
  %s7 = inlined_call_operand.vmem [shape: bf16[2,256,128], index: 7, kind: input, shape index: {}]
  %s8 = inlined_call_operand.vmem [shape: f32[2,1,128], index: 8, kind: input, shape index: {}]
  %s9 = inlined_call_operand.vmem [shape: bf16[2,128,256], index: 9, kind: input, shape index: {}]
  %s10 = inlined_call_operand.vmem [shape: f32[1,256], index: 10, kind: input, shape index: {}]
  %s11 = inlined_call_operand.vmem [shape: f32[1,256], index: 11, kind: input, shape index: {}]
  %s12 = inlined_call_operand.vmem [shape: f32[1,256], index: 12, kind: input, shape index: {}]
  %s13 = inlined_call_operand.vmem [shape: f32[2,128,256], index: 13, kind: output, shape index: {}]
  %s14 = sld [smem:[#allocation0]]
  $region93: #{encoder_forward.4} parent=0
    _
  %s16 = ssub.s32 1, %s14
  %s17 = scalar_select 0, %s16, %s14
  loop: start=0, step=1, limit=6
  $region2: #{encoder_forward.4} parent=0 // loop_pre_header
    _
  $region3: #{encoder_forward.4} parent=0 // loop_header
    %s19 = sphi 0, %s23
    %p20 = scmp.ge.s32.totalorder %s19, 6
    %s26 = sphi 0, %s45
    %s27 = sphi 0, %s41
    %s28 = sphi 0, %s37
    %s29 = sphi 0, %s26
    %s30 = sphi 0, %s27
    %s31 = sphi 0, %s28
    %s32 = sphi 0, %s29
    %s33 = sphi 0, %s30
    %s34 = sphi 0, %s31
    %s50 = sphi 0, %s52
    %s53 = sphi 0, %s50
    %s54 = sphi 0, %s53
    %s70 = sphi 0, %s54
    %s76 = sphi 0, %s78
    %s79 = sphi 0, %s76
    %s80 = sphi 0, %s79
    %s96 = sphi 0, %s80
    %s102 = sphi 0, %s104
    %s105 = sphi 0, %s102
    %s106 = sphi 0, %s105
    %s122 = sphi 0, %s106
    %s128 = sphi 0, %s130
    %s131 = sphi 0, %s128
    %s132 = sphi 0, %s131
    %s148 = sphi 0, %s132
    %s154 = sphi 0, %s156
    %s157 = sphi 0, %s154
    %s158 = sphi 0, %s157
    %s174 = sphi 0, %s158
    %s180 = sphi 0, %s182
    %s183 = sphi 0, %s180
    %s184 = sphi 0, %s183
    %s200 = sphi 0, %s184
    %s206 = sphi 0, %s208
    %s209 = sphi 0, %s206
    %s210 = sphi 0, %s209
    %s226 = sphi 0, %s210
    %s232 = sphi 0, %s234
    %s235 = sphi 0, %s232
    %s236 = sphi 0, %s235
    %s252 = sphi 0, %s236
    %s258 = sphi 0, %s260
    %s261 = sphi 0, %s258
    %s262 = sphi 0, %s261
    %s278 = sphi 0, %s262
    %s284 = sphi 0, %s286
    %s287 = sphi 0, %s284
    %s288 = sphi 0, %s287
    %s304 = sphi 0, %s288
    %s308 = sphi 0, %s308
    %s310 = sphi 0, %s308
    %s311 = sphi 0, %s310
    %s325 = sphi 0, %s311
    %s329 = sphi 0, %s329
    %s331 = sphi 0, %s329
    %s332 = sphi 0, %s331
    %s346 = sphi 0, %s332
    %s350 = sphi 0, %s350
    %s352 = sphi 0, %s350
    %s353 = sphi 0, %s352
    %s367 = sphi 0, %s353
    %s375 = sphi 0, %s377
    %s378 = sphi 0, %s375
    %s379 = sphi 0, %s378
    %s395 = sphi 0, %s379
  $region4: #{encoder_forward.4} parent=0 // loop_header_branch
    %22 = sbr.rel (%p20) target = $region8
  $region5: #{encoder_forward.4} parent=0 // loop_body
    %s24 = ssub.s32 %s19, 1
    %s25 = ssub.s32 %s19, 2
    %s35 = sadd.s32 1, %s28
    %p36 = scmp.ge.s32.totalorder %s35, 2
    %s37 = scalar_select %p36, 0, %s35
    %s38 = sadd.s32 1, %s27
    %s39 = scalar_select %p36, %s38, %s27
    %p40 = scmp.ge.s32.totalorder %s39, 1
    %s41 = scalar_select %p40, 0, %s39
    %s42 = sadd.s32 1, %s26
    %s43 = scalar_select %p40, %s42, %s26
    %p44 = scmp.ge.s32.totalorder %s43, 2
    %s45 = scalar_select %p44, 0, %s43
    %s46 = ssub.s32 %s26, %s45
    %s47 = ssub.s32 %s27, %s41
    %s48 = sor.u32 %s46, %s47
    %p49 = scmp.eq.s32.totalorder %s48, 0
    %s51 = sadd.s32 %s50, 1
    %s52 = scalar_select %p49, %s50, %s51
    %p55 = pneg %p49
    %p56 = scmp.eq.s32.totalorder %s19, 3
    %p57 = por %p55, %p56
    %p58 = scmp.ne.s32.totalorder %s50, %s53
    %p59 = scmp.eq.s32.totalorder %s19, 0
    %p60 = por %p58, %p59
    %p61 = scmp.ne.s32.totalorder %s50, %s53
    %p62 = scmp.eq.s32.totalorder %s24, 3
    %p63 = por %p61, %p62
    %p64 = scmp.ne.s32.totalorder %s53, %s54
    %p65 = scmp.eq.s32.totalorder %s24, 0
    %p66 = por %p64, %p65
    %p67 = scmp.ne.s32.totalorder %s53, %s54
    %p68 = scmp.eq.s32.totalorder %s25, 3
    %p69 = por %p67, %p68
    %p71 = scmp.ne.s32.totalorder %s54, %s70
    %p72 = scmp.eq.s32.totalorder %s25, 0
    %p73 = por %p71, %p72
    %s74 = ssub.s32 %s26, %s45
    %p75 = scmp.eq.s32.totalorder %s74, 0
    %s77 = sadd.s32 %s76, 1
    %s78 = scalar_select %p75, %s76, %s77
    %p81 = pneg %p75
    %p82 = scmp.eq.s32.totalorder %s19, 3
    %p83 = por %p81, %p82
    %p84 = scmp.ne.s32.totalorder %s76, %s79
    %p85 = scmp.eq.s32.totalorder %s19, 0
    %p86 = por %p84, %p85
    %p87 = scmp.ne.s32.totalorder %s76, %s79
    %p88 = scmp.eq.s32.totalorder %s24, 3
    %p89 = por %p87, %p88
    %p90 = scmp.ne.s32.totalorder %s79, %s80
    %p91 = scmp.eq.s32.totalorder %s24, 0
    %p92 = por %p90, %p91
    %p93 = scmp.ne.s32.totalorder %s79, %s80
    %p94 = scmp.eq.s32.totalorder %s25, 3
    %p95 = por %p93, %p94
    %p97 = scmp.ne.s32.totalorder %s80, %s96
    %p98 = scmp.eq.s32.totalorder %s25, 0
    %p99 = por %p97, %p98
    %s100 = ssub.s32 %s26, %s45
    %p101 = scmp.eq.s32.totalorder %s100, 0
    %s103 = sadd.s32 %s102, 1
    %s104 = scalar_select %p101, %s102, %s103
    %p107 = pneg %p101
    %p108 = scmp.eq.s32.totalorder %s19, 3
    %p109 = por %p107, %p108
    %p110 = scmp.ne.s32.totalorder %s102, %s105
    %p111 = scmp.eq.s32.totalorder %s19, 0
    %p112 = por %p110, %p111
    %p113 = scmp.ne.s32.totalorder %s102, %s105
    %p114 = scmp.eq.s32.totalorder %s24, 3
    %p115 = por %p113, %p114
    %p116 = scmp.ne.s32.totalorder %s105, %s106
    %p117 = scmp.eq.s32.totalorder %s24, 0
    %p118 = por %p116, %p117
    %p119 = scmp.ne.s32.totalorder %s105, %s106
    %p120 = scmp.eq.s32.totalorder %s25, 3
    %p121 = por %p119, %p120
    %p123 = scmp.ne.s32.totalorder %s106, %s122
    %p124 = scmp.eq.s32.totalorder %s25, 0
    %p125 = por %p123, %p124
    %s126 = ssub.s32 %s28, %s37
    %p127 = scmp.eq.s32.totalorder %s126, 0
    %s129 = sadd.s32 %s128, 1
    %s130 = scalar_select %p127, %s128, %s129
    %p133 = pneg %p127
    %p134 = scmp.eq.s32.totalorder %s19, 3
    %p135 = por %p133, %p134
    %p136 = scmp.ne.s32.totalorder %s128, %s131
    %p137 = scmp.eq.s32.totalorder %s19, 0
    %p138 = por %p136, %p137
    %p139 = scmp.ne.s32.totalorder %s128, %s131
    %p140 = scmp.eq.s32.totalorder %s24, 3
    %p141 = por %p139, %p140
    %p142 = scmp.ne.s32.totalorder %s131, %s132
    %p143 = scmp.eq.s32.totalorder %s24, 0
    %p144 = por %p142, %p143
    %p145 = scmp.ne.s32.totalorder %s131, %s132
    %p146 = scmp.eq.s32.totalorder %s25, 3
    %p147 = por %p145, %p146
    %p149 = scmp.ne.s32.totalorder %s132, %s148
    %p150 = scmp.eq.s32.totalorder %s25, 0
    %p151 = por %p149, %p150
    %s152 = ssub.s32 %s28, %s37
    %p153 = scmp.eq.s32.totalorder %s152, 0
    %s155 = sadd.s32 %s154, 1
    %s156 = scalar_select %p153, %s154, %s155
    %p159 = pneg %p153
    %p160 = scmp.eq.s32.totalorder %s19, 3
    %p161 = por %p159, %p160
    %p162 = scmp.ne.s32.totalorder %s154, %s157
    %p163 = scmp.eq.s32.totalorder %s19, 0
    %p164 = por %p162, %p163
    %p165 = scmp.ne.s32.totalorder %s154, %s157
    %p166 = scmp.eq.s32.totalorder %s24, 3
    %p167 = por %p165, %p166
    %p168 = scmp.ne.s32.totalorder %s157, %s158
    %p169 = scmp.eq.s32.totalorder %s24, 0
    %p170 = por %p168, %p169
    %p171 = scmp.ne.s32.totalorder %s157, %s158
    %p172 = scmp.eq.s32.totalorder %s25, 3
    %p173 = por %p171, %p172
    %p175 = scmp.ne.s32.totalorder %s158, %s174
    %p176 = scmp.eq.s32.totalorder %s25, 0
    %p177 = por %p175, %p176
    %s178 = ssub.s32 %s28, %s37
    %p179 = scmp.eq.s32.totalorder %s178, 0
    %s181 = sadd.s32 %s180, 1
    %s182 = scalar_select %p179, %s180, %s181
    %p185 = pneg %p179
    %p186 = scmp.eq.s32.totalorder %s19, 3
    %p187 = por %p185, %p186
    %p188 = scmp.ne.s32.totalorder %s180, %s183
    %p189 = scmp.eq.s32.totalorder %s19, 0
    %p190 = por %p188, %p189
    %p191 = scmp.ne.s32.totalorder %s180, %s183
    %p192 = scmp.eq.s32.totalorder %s24, 3
    %p193 = por %p191, %p192
    %p194 = scmp.ne.s32.totalorder %s183, %s184
    %p195 = scmp.eq.s32.totalorder %s24, 0
    %p196 = por %p194, %p195
    %p197 = scmp.ne.s32.totalorder %s183, %s184
    %p198 = scmp.eq.s32.totalorder %s25, 3
    %p199 = por %p197, %p198
    %p201 = scmp.ne.s32.totalorder %s184, %s200
    %p202 = scmp.eq.s32.totalorder %s25, 0
    %p203 = por %p201, %p202
    %s204 = ssub.s32 %s28, %s37
    %p205 = scmp.eq.s32.totalorder %s204, 0
    %s207 = sadd.s32 %s206, 1
    %s208 = scalar_select %p205, %s206, %s207
    %p211 = pneg %p205
    %p212 = scmp.eq.s32.totalorder %s19, 3
    %p213 = por %p211, %p212
    %p214 = scmp.ne.s32.totalorder %s206, %s209
    %p215 = scmp.eq.s32.totalorder %s19, 0
    %p216 = por %p214, %p215
    %p217 = scmp.ne.s32.totalorder %s206, %s209
    %p218 = scmp.eq.s32.totalorder %s24, 3
    %p219 = por %p217, %p218
    %p220 = scmp.ne.s32.totalorder %s209, %s210
    %p221 = scmp.eq.s32.totalorder %s24, 0
    %p222 = por %p220, %p221
    %p223 = scmp.ne.s32.totalorder %s209, %s210
    %p224 = scmp.eq.s32.totalorder %s25, 3
    %p225 = por %p223, %p224
    %p227 = scmp.ne.s32.totalorder %s210, %s226
    %p228 = scmp.eq.s32.totalorder %s25, 0
    %p229 = por %p227, %p228
    %s230 = ssub.s32 %s28, %s37
    %p231 = scmp.eq.s32.totalorder %s230, 0
    %s233 = sadd.s32 %s232, 1
    %s234 = scalar_select %p231, %s232, %s233
    %p237 = pneg %p231
    %p238 = scmp.eq.s32.totalorder %s19, 3
    %p239 = por %p237, %p238
    %p240 = scmp.ne.s32.totalorder %s232, %s235
    %p241 = scmp.eq.s32.totalorder %s19, 0
    %p242 = por %p240, %p241
    %p243 = scmp.ne.s32.totalorder %s232, %s235
    %p244 = scmp.eq.s32.totalorder %s24, 3
    %p245 = por %p243, %p244
    %p246 = scmp.ne.s32.totalorder %s235, %s236
    %p247 = scmp.eq.s32.totalorder %s24, 0
    %p248 = por %p246, %p247
    %p249 = scmp.ne.s32.totalorder %s235, %s236
    %p250 = scmp.eq.s32.totalorder %s25, 3
    %p251 = por %p249, %p250
    %p253 = scmp.ne.s32.totalorder %s236, %s252
    %p254 = scmp.eq.s32.totalorder %s25, 0
    %p255 = por %p253, %p254
    %s256 = ssub.s32 %s28, %s37
    %p257 = scmp.eq.s32.totalorder %s256, 0
    %s259 = sadd.s32 %s258, 1
    %s260 = scalar_select %p257, %s258, %s259
    %p263 = pneg %p257
    %p264 = scmp.eq.s32.totalorder %s19, 3
    %p265 = por %p263, %p264
    %p266 = scmp.ne.s32.totalorder %s258, %s261
    %p267 = scmp.eq.s32.totalorder %s19, 0
    %p268 = por %p266, %p267
    %p269 = scmp.ne.s32.totalorder %s258, %s261
    %p270 = scmp.eq.s32.totalorder %s24, 3
    %p271 = por %p269, %p270
    %p272 = scmp.ne.s32.totalorder %s261, %s262
    %p273 = scmp.eq.s32.totalorder %s24, 0
    %p274 = por %p272, %p273
    %p275 = scmp.ne.s32.totalorder %s261, %s262
    %p276 = scmp.eq.s32.totalorder %s25, 3
    %p277 = por %p275, %p276
    %p279 = scmp.ne.s32.totalorder %s262, %s278
    %p280 = scmp.eq.s32.totalorder %s25, 0
    %p281 = por %p279, %p280
    %s282 = ssub.s32 %s28, %s37
    %p283 = scmp.eq.s32.totalorder %s282, 0
    %s285 = sadd.s32 %s284, 1
    %s286 = scalar_select %p283, %s284, %s285
    %p289 = pneg %p283
    %p290 = scmp.eq.s32.totalorder %s19, 3
    %p291 = por %p289, %p290
    %p292 = scmp.ne.s32.totalorder %s284, %s287
    %p293 = scmp.eq.s32.totalorder %s19, 0
    %p294 = por %p292, %p293
    %p295 = scmp.ne.s32.totalorder %s284, %s287
    %p296 = scmp.eq.s32.totalorder %s24, 3
    %p297 = por %p295, %p296
    %p298 = scmp.ne.s32.totalorder %s287, %s288
    %p299 = scmp.eq.s32.totalorder %s24, 0
    %p300 = por %p298, %p299
    %p301 = scmp.ne.s32.totalorder %s287, %s288
    %p302 = scmp.eq.s32.totalorder %s25, 3
    %p303 = por %p301, %p302
    %p305 = scmp.ne.s32.totalorder %s288, %s304
    %p306 = scmp.eq.s32.totalorder %s25, 0
    %p307 = por %p305, %p306
    %s309 = sadd.s32 %s308, 1
    %p312 = scmp.eq.s32.totalorder %s19, 3
    %p313 = scmp.ne.s32.totalorder %s308, %s310
    %p314 = scmp.eq.s32.totalorder %s19, 0
    %p315 = por %p313, %p314
    %p316 = scmp.ne.s32.totalorder %s308, %s310
    %p317 = scmp.eq.s32.totalorder %s24, 3
    %p318 = por %p316, %p317
    %p319 = scmp.ne.s32.totalorder %s310, %s311
    %p320 = scmp.eq.s32.totalorder %s24, 0
    %p321 = por %p319, %p320
    %p322 = scmp.ne.s32.totalorder %s310, %s311
    %p323 = scmp.eq.s32.totalorder %s25, 3
    %p324 = por %p322, %p323
    %p326 = scmp.ne.s32.totalorder %s311, %s325
    %p327 = scmp.eq.s32.totalorder %s25, 0
    %p328 = por %p326, %p327
    %s330 = sadd.s32 %s329, 1
    %p333 = scmp.eq.s32.totalorder %s19, 3
    %p334 = scmp.ne.s32.totalorder %s329, %s331
    %p335 = scmp.eq.s32.totalorder %s19, 0
    %p336 = por %p334, %p335
    %p337 = scmp.ne.s32.totalorder %s329, %s331
    %p338 = scmp.eq.s32.totalorder %s24, 3
    %p339 = por %p337, %p338
    %p340 = scmp.ne.s32.totalorder %s331, %s332
    %p341 = scmp.eq.s32.totalorder %s24, 0
    %p342 = por %p340, %p341
    %p343 = scmp.ne.s32.totalorder %s331, %s332
    %p344 = scmp.eq.s32.totalorder %s25, 3
    %p345 = por %p343, %p344
    %p347 = scmp.ne.s32.totalorder %s332, %s346
    %p348 = scmp.eq.s32.totalorder %s25, 0
    %p349 = por %p347, %p348
    %s351 = sadd.s32 %s350, 1
    %p354 = scmp.eq.s32.totalorder %s19, 3
    %p355 = scmp.ne.s32.totalorder %s350, %s352
    %p356 = scmp.eq.s32.totalorder %s19, 0
    %p357 = por %p355, %p356
    %p358 = scmp.ne.s32.totalorder %s350, %s352
    %p359 = scmp.eq.s32.totalorder %s24, 3
    %p360 = por %p358, %p359
    %p361 = scmp.ne.s32.totalorder %s352, %s353
    %p362 = scmp.eq.s32.totalorder %s24, 0
    %p363 = por %p361, %p362
    %p364 = scmp.ne.s32.totalorder %s352, %s353
    %p365 = scmp.eq.s32.totalorder %s25, 3
    %p366 = por %p364, %p365
    %p368 = scmp.ne.s32.totalorder %s353, %s367
    %p369 = scmp.eq.s32.totalorder %s25, 0
    %p370 = por %p368, %p369
    %s371 = ssub.s32 %s26, %s45
    %s372 = ssub.s32 %s27, %s41
    %s373 = sor.u32 %s371, %s372
    %p374 = scmp.eq.s32.totalorder %s373, 0
    %s376 = sadd.s32 %s375, 1
    %s377 = scalar_select %p374, %s375, %s376
    %p380 = pneg %p374
    %p381 = scmp.eq.s32.totalorder %s19, 3
    %p382 = por %p380, %p381
    %p383 = scmp.ne.s32.totalorder %s375, %s378
    %p384 = scmp.eq.s32.totalorder %s19, 0
    %p385 = por %p383, %p384
    %p386 = scmp.ne.s32.totalorder %s375, %s378
    %p387 = scmp.eq.s32.totalorder %s24, 3
    %p388 = por %p386, %p387
    %p389 = scmp.ne.s32.totalorder %s378, %s379
    %p390 = scmp.eq.s32.totalorder %s24, 0
    %p391 = por %p389, %p390
    %p392 = scmp.ne.s32.totalorder %s378, %s379
    %p393 = scmp.eq.s32.totalorder %s25, 3
    %p394 = por %p392, %p393
    %p396 = scmp.ne.s32.totalorder %s379, %s395
    %p397 = scmp.eq.s32.totalorder %s25, 0
    %p398 = por %p396, %p397
    %p399 = scmp.le.s32.totalorder 1, %s19
    %p400 = scmp.lt.s32.totalorder %s19, 5
    %p401 = pnand %p399, %p400
    %p402 = pneg %p401
    // Predicated region
    $region9: #{encoder_forward.4} parent=5 // pred_check
      _
    $region10: #{encoder_forward.4} parent=5 // pred_check_branch
      %404 = sbr.rel (%p401) target = $region12
    $region11: #{encoder_forward.4} parent=5 // pred_region
      %s405 = ssub.s32 %s19, 1
      // Predicated region
      $region13: #{encoder_forward.4} parent=11 // pred_check
        %p406 = pneg %p321
      $region14: #{encoder_forward.4} parent=11 // pred_check_branch
        %408 = sbr.rel (%p406) target = $region16
      $region15: #{encoder_forward.4} parent=11 // pred_region
        _
      $region16: #{encoder_forward.4} parent=11 // pred_fallthru
        _
      // Predicated region
      $region17: #{encoder_forward.4} parent=11 // pred_check
        %p409 = pneg %p342
      $region18: #{encoder_forward.4} parent=11 // pred_check_branch
        %411 = sbr.rel (%p409) target = $region20
      $region19: #{encoder_forward.4} parent=11 // pred_region
        _
      $region20: #{encoder_forward.4} parent=11 // pred_fallthru
        _
      // Predicated region
      $region21: #{encoder_forward.4} parent=11 // pred_check
        %p412 = pneg %p363
      $region22: #{encoder_forward.4} parent=11 // pred_check_branch
        %414 = sbr.rel (%p412) target = $region24
      $region23: #{encoder_forward.4} parent=11 // pred_region
        _
      $region24: #{encoder_forward.4} parent=11 // pred_fallthru
        _
    $region12: #{encoder_forward.4} parent=5 // pred_fallthru
      _
    %p415 = scmp.lt.s32.totalorder %s19, 4
    // Predicated region
    $region25: #{encoder_forward.4} parent=5 // pred_check
      %p416 = pneg %p415
    $region26: #{encoder_forward.4} parent=5 // pred_check_branch
      %418 = sbr.rel (%p416) target = $region28
    $region27: #{encoder_forward.4} parent=5 // pred_region
      // Predicated region
      $region29: #{encoder_forward.4} parent=27 // pred_check
        %p419 = pneg %p60
      $region30: #{encoder_forward.4} parent=27 // pred_check_branch
        %421 = sbr.rel (%p419) target = $region32
      $region31: #{encoder_forward.4} parent=27 // pred_region
        %s422 = smul.u32 16, %s27
        %p423 = scmp.lt.s32.totalorder %s26, 1
        %s424 = scalar_select %p423, %s26, 1
        %p425 = scmp.lt.s32.totalorder %s422, 15
        %s426 = scalar_select %p425, %s422, 15
        %s427 = smul.addr %s426, 2
        %s428 = smul.addr %s424, 32
        %s429 = sadd.s32 %s427, %s428
        %s430 = smul.addr %s429, 8
        %s431 = scalar_lea.vmem %s0, %s430
        %s432 = smul.u32 16, %s27
      $region32: #{encoder_forward.4} parent=27 // pred_fallthru
        _
      // Predicated region
      $region33: #{encoder_forward.4} parent=27 // pred_check
        %p433 = pneg %p86
      $region34: #{encoder_forward.4} parent=27 // pred_check_branch
        %435 = sbr.rel (%p433) target = $region36
      $region35: #{encoder_forward.4} parent=27 // pred_region
        %p436 = scmp.lt.s32.totalorder %s26, 1
        %s437 = scalar_select %p436, %s26, 1
        %s438 = smul.addr %s437, 32
        %s439 = smul.addr %s438, 8
        %s440 = scalar_lea.vmem %s1, %s439
      $region36: #{encoder_forward.4} parent=27 // pred_fallthru
        _
      // Predicated region
      $region37: #{encoder_forward.4} parent=27 // pred_check
        %p441 = pneg %p112
      $region38: #{encoder_forward.4} parent=27 // pred_check_branch
        %443 = sbr.rel (%p441) target = $region40
      $region39: #{encoder_forward.4} parent=27 // pred_region
        %p444 = scmp.lt.s32.totalorder %s26, 1
        %s445 = scalar_select %p444, %s26, 1
        %s446 = scalar_lea.vmem %s2, %s445
      $region40: #{encoder_forward.4} parent=27 // pred_fallthru
        _
      // Predicated region
      $region41: #{encoder_forward.4} parent=27 // pred_check
        %p447 = pneg %p138
      $region42: #{encoder_forward.4} parent=27 // pred_check_branch
        %449 = sbr.rel (%p447) target = $region44
      $region43: #{encoder_forward.4} parent=27 // pred_region
        %p450 = scmp.lt.s32.totalorder %s28, 1
        %s451 = scalar_select %p450, %s28, 1
        %s452 = smul.addr %s451, 32
        %s453 = smul.addr %s452, 4
        %s454 = scalar_lea.vmem %s3, %s453
      $region44: #{encoder_forward.4} parent=27 // pred_fallthru
        _
      // Predicated region
      $region45: #{encoder_forward.4} parent=27 // pred_check
        %p455 = pneg %p164
      $region46: #{encoder_forward.4} parent=27 // pred_check_branch
        %457 = sbr.rel (%p455) target = $region48
      $region47: #{encoder_forward.4} parent=27 // pred_region
        %p458 = scmp.lt.s32.totalorder %s28, 1
        %s459 = scalar_select %p458, %s28, 1
        %s460 = scalar_lea.vmem %s4, %s459
      $region48: #{encoder_forward.4} parent=27 // pred_fallthru
        _
      // Predicated region
      $region49: #{encoder_forward.4} parent=27 // pred_check
        %p461 = pneg %p190
      $region50: #{encoder_forward.4} parent=27 // pred_check_branch
        %463 = sbr.rel (%p461) target = $region52
      $region51: #{encoder_forward.4} parent=27 // pred_region
        %p464 = scmp.lt.s32.totalorder %s28, 1
        %s465 = scalar_select %p464, %s28, 1
        %s466 = smul.addr %s465, 32
        %s467 = smul.addr %s466, 4
        %s468 = scalar_lea.vmem %s5, %s467
      $region52: #{encoder_forward.4} parent=27 // pred_fallthru
        _
      // Predicated region
      $region53: #{encoder_forward.4} parent=27 // pred_check
        %p469 = pneg %p216
      $region54: #{encoder_forward.4} parent=27 // pred_check_branch
        %471 = sbr.rel (%p469) target = $region56
      $region55: #{encoder_forward.4} parent=27 // pred_region
        %p472 = scmp.lt.s32.totalorder %s28, 1
        %s473 = scalar_select %p472, %s28, 1
        %s474 = scalar_lea.vmem %s6, %s473
      $region56: #{encoder_forward.4} parent=27 // pred_fallthru
        _
      // Predicated region
      $region57: #{encoder_forward.4} parent=27 // pred_check
        %p475 = pneg %p242
      $region58: #{encoder_forward.4} parent=27 // pred_check_branch
        %477 = sbr.rel (%p475) target = $region60
      $region59: #{encoder_forward.4} parent=27 // pred_region
        %p478 = scmp.lt.s32.totalorder %s28, 1
        %s479 = scalar_select %p478, %s28, 1
        %s480 = smul.addr %s479, 32
        %s481 = smul.addr %s480, 4
        %s482 = scalar_lea.vmem %s7, %s481
      $region60: #{encoder_forward.4} parent=27 // pred_fallthru
        _
      // Predicated region
      $region61: #{encoder_forward.4} parent=27 // pred_check
        %p483 = pneg %p268
      $region62: #{encoder_forward.4} parent=27 // pred_check_branch
        %485 = sbr.rel (%p483) target = $region64
      $region63: #{encoder_forward.4} parent=27 // pred_region
        %p486 = scmp.lt.s32.totalorder %s28, 1
        %s487 = scalar_select %p486, %s28, 1
        %s488 = scalar_lea.vmem %s8, %s487
      $region64: #{encoder_forward.4} parent=27 // pred_fallthru
        _
      // Predicated region
      $region65: #{encoder_forward.4} parent=27 // pred_check
        %p489 = pneg %p294
      $region66: #{encoder_forward.4} parent=27 // pred_check_branch
        %491 = sbr.rel (%p489) target = $region68
      $region67: #{encoder_forward.4} parent=27 // pred_region
        %p492 = scmp.lt.s32.totalorder %s28, 1
        %s493 = scalar_select %p492, %s28, 1
        %s494 = smul.addr %s493, 32
        %s495 = smul.addr %s494, 4
        %s496 = scalar_lea.vmem %s9, %s495
      $region68: #{encoder_forward.4} parent=27 // pred_fallthru
        _
    $region28: #{encoder_forward.4} parent=5 // pred_fallthru
      _
    %p497 = scmp.le.s32.totalorder 1, %s19
    %p498 = scmp.lt.s32.totalorder %s19, 5
    %p499 = pnand %p497, %p498
    %p500 = pneg %p499
    // Predicated region
    $region69: #{encoder_forward.4} parent=5 // pred_check
      _
    $region70: #{encoder_forward.4} parent=5 // pred_check_branch
      %502 = sbr.rel (%p499) target = $region72
    $region71: #{encoder_forward.4} parent=5 // pred_region
      %s503 = ssub.s32 %s19, 1
      %s504 = smul.u32 16, %s30
      %p505 = scmp.lt.s32.totalorder %s29, 1
      %s506 = scalar_select %p505, %s29, 1
      %p507 = scmp.lt.s32.totalorder %s504, 15
      %s508 = scalar_select %p507, %s504, 15
      %s509 = smul.addr %s508, 2
      %s510 = smul.addr %s506, 32
      %s511 = sadd.s32 %s509, %s510
      %s512 = smul.addr %s511, 8
      %s513 = scalar_lea.vmem %s0, %s512
      %p514 = pneg %p66
      %p515 = pneg %p63
      %p516 = scmp.lt.s32.totalorder %s29, 1
      %s517 = scalar_select %p516, %s29, 1
      %s518 = smul.addr %s517, 32
      %s519 = smul.addr %s518, 8
      %s520 = scalar_lea.vmem %s1, %s519
      %p521 = pneg %p92
      %p522 = pneg %p89
      %p523 = scmp.lt.s32.totalorder %s29, 1
      %s524 = scalar_select %p523, %s29, 1
      %s525 = scalar_lea.vmem %s2, %s524
      %p526 = pneg %p118
      %p527 = pneg %p115
      %p528 = scmp.lt.s32.totalorder %s31, 1
      %s529 = scalar_select %p528, %s31, 1
      %s530 = smul.addr %s529, 32
      %s531 = smul.addr %s530, 4
      %s532 = scalar_lea.vmem %s3, %s531
      %p533 = pneg %p144
      %p534 = pneg %p141
      %p535 = scmp.lt.s32.totalorder %s31, 1
      %s536 = scalar_select %p535, %s31, 1
      %s537 = scalar_lea.vmem %s4, %s536
      %p538 = pneg %p170
      %p539 = pneg %p167
      %p540 = scmp.lt.s32.totalorder %s31, 1
      %s541 = scalar_select %p540, %s31, 1
      %s542 = smul.addr %s541, 32
      %s543 = smul.addr %s542, 4
      %s544 = scalar_lea.vmem %s5, %s543
      %p545 = pneg %p196
      %p546 = pneg %p193
      %p547 = scmp.lt.s32.totalorder %s31, 1
      %s548 = scalar_select %p547, %s31, 1
      %s549 = scalar_lea.vmem %s6, %s548
      %p550 = pneg %p222
      %p551 = pneg %p219
      %p552 = scmp.lt.s32.totalorder %s31, 1
      %s553 = scalar_select %p552, %s31, 1
      %s554 = smul.addr %s553, 32
      %s555 = smul.addr %s554, 4
      %s556 = scalar_lea.vmem %s7, %s555
      %p557 = pneg %p248
      %p558 = pneg %p245
      %p559 = scmp.lt.s32.totalorder %s31, 1
      %s560 = scalar_select %p559, %s31, 1
      %s561 = scalar_lea.vmem %s8, %s560
      %p562 = pneg %p274
      %p563 = pneg %p271
      %p564 = scmp.lt.s32.totalorder %s31, 1
      %s565 = scalar_select %p564, %s31, 1
      %s566 = smul.addr %s565, 32
      %s567 = smul.addr %s566, 4
      %s568 = scalar_lea.vmem %s9, %s567
      %p569 = pneg %p300
      %p570 = pneg %p297
      %p571 = pneg %p321
      %p572 = pneg %p318
      %p573 = pneg %p342
      %p574 = pneg %p339
      %p575 = pneg %p363
      %p576 = pneg %p360
      %p577 = pneg %p391
      %p578 = pneg %p388
      %s579 = smul.u32 16, %s30
      %p580 = scmp.lt.s32.totalorder %s29, 1
      %s581 = scalar_select %p580, %s29, 1
      %p582 = scmp.lt.s32.totalorder %s579, 15
      %s583 = scalar_select %p582, %s579, 15
      %s584 = smul.addr %s583, 2
      %s585 = smul.addr %s581, 32
      %s586 = sadd.s32 %s584, %s585
      %s587 = smul.addr %s586, 8
      %s588 = scalar_lea.vmem %s13, %s587
      %s589 = smul.u32 16, %s30
      %p590 = scmp.lt.s32.totalorder %s29, 1
      %s591 = scalar_select %p590, %s29, 1
      %p592 = scmp.lt.s32.totalorder %s589, 15
      %s593 = scalar_select %p592, %s589, 15
      %s594 = smul.addr %s593, 2
      %s595 = smul.addr %s591, 32
      %s596 = sadd.s32 %s594, %s595
      %s597 = smul.addr %s596, 8
      %s598 = scalar_lea.vmem %s0, %s597
      %s599 = smul.u32 16, %s30
      %p600 = scmp.lt.s32.totalorder %s29, 1
      %s601 = scalar_select %p600, %s29, 1
      %s602 = smul.addr %s601, 32
      %s603 = smul.addr %s602, 8
      %s604 = scalar_lea.vmem %s1, %s603
      %p605 = scmp.lt.s32.totalorder %s29, 1
      %s606 = scalar_select %p605, %s29, 1
      %s607 = scalar_lea.vmem %s2, %s606
      %p608 = scmp.lt.s32.totalorder %s31, 1
      %s609 = scalar_select %p608, %s31, 1
      %s610 = smul.addr %s609, 32
      %s611 = smul.addr %s610, 4
      %s612 = scalar_lea.vmem %s3, %s611
      %p613 = scmp.lt.s32.totalorder %s31, 1
      %s614 = scalar_select %p613, %s31, 1
      %s615 = scalar_lea.vmem %s4, %s614
      %p616 = scmp.lt.s32.totalorder %s31, 1
      %s617 = scalar_select %p616, %s31, 1
      %s618 = smul.addr %s617, 32
      %s619 = smul.addr %s618, 4
      %s620 = scalar_lea.vmem %s5, %s619
      %p621 = scmp.lt.s32.totalorder %s31, 1
      %s622 = scalar_select %p621, %s31, 1
      %s623 = scalar_lea.vmem %s6, %s622
      %p624 = scmp.lt.s32.totalorder %s31, 1
      %s625 = scalar_select %p624, %s31, 1
      %s626 = smul.addr %s625, 32
      %s627 = smul.addr %s626, 4
      %s628 = scalar_lea.vmem %s7, %s627
      %p629 = scmp.lt.s32.totalorder %s31, 1
      %s630 = scalar_select %p629, %s31, 1
      %s631 = scalar_lea.vmem %s8, %s630
      %p632 = scmp.lt.s32.totalorder %s31, 1
      %s633 = scalar_select %p632, %s31, 1
      %s634 = smul.addr %s633, 32
      %s635 = smul.addr %s634, 4
      %s636 = scalar_lea.vmem %s9, %s635
      %s637 = smul.u32 16, %s30
      %p638 = scmp.lt.s32.totalorder %s29, 1
      %s639 = scalar_select %p638, %s29, 1
      %p640 = scmp.lt.s32.totalorder %s637, 15
      %s641 = scalar_select %p640, %s637, 15
      %s642 = smul.addr %s641, 2
      %s643 = smul.addr %s639, 32
      %s644 = sadd.s32 %s642, %s643
      %s645 = smul.addr %s644, 8
      %s646 = scalar_lea.vmem %s13, %s645
      %s647 = smul.u32 16, %s30
      %v649 = vld [vmem:[%s598] sm:$0xff]
      %v650 = vld [vmem:[%s598 + $0x8] sm:$0xff]
      %v651 = vld [vmem:[%s598 + $0x10] sm:$0xff]
      %v652 = vld [vmem:[%s598 + $0x18] sm:$0xff]
      %v653 = vld [vmem:[%s598 + $0x20] sm:$0xff]
      %v654 = vld [vmem:[%s598 + $0x28] sm:$0xff]
      %v655 = vld [vmem:[%s598 + $0x30] sm:$0xff]
      %v656 = vld [vmem:[%s598 + $0x38] sm:$0xff]
      %v657 = vld [vmem:[%s598 + $0x40] sm:$0xff]
      %v658 = vld [vmem:[%s598 + $0x48] sm:$0xff]
      %v659 = vld [vmem:[%s598 + $0x50] sm:$0xff]
      %v660 = vld [vmem:[%s598 + $0x58] sm:$0xff]
      %v661 = vld [vmem:[%s598 + $0x60] sm:$0xff]
      %v662 = vld [vmem:[%s598 + $0x68] sm:$0xff]
      %v663 = vld [vmem:[%s598 + $0x70] sm:$0xff]
      %v664 = vld [vmem:[%s598 + $0x78] sm:$0xff]
      %v665 = vld [vmem:[%s598 + $0x80] sm:$0xff]
      %v666 = vld [vmem:[%s598 + $0x88] sm:$0xff]
      %v667 = vld [vmem:[%s598 + $0x90] sm:$0xff]
      %v668 = vld [vmem:[%s598 + $0x98] sm:$0xff]
      %v669 = vld [vmem:[%s598 + $0xa0] sm:$0xff]
      %v670 = vld [vmem:[%s598 + $0xa8] sm:$0xff]
      %v671 = vld [vmem:[%s598 + $0xb0] sm:$0xff]
      %v672 = vld [vmem:[%s598 + $0xb8] sm:$0xff]
      %v673 = vld [vmem:[%s598 + $0xc0] sm:$0xff]
      %v674 = vld [vmem:[%s598 + $0xc8] sm:$0xff]
      %v675 = vld [vmem:[%s598 + $0xd0] sm:$0xff]
      %v676 = vld [vmem:[%s598 + $0xd8] sm:$0xff]
      %v677 = vld [vmem:[%s598 + $0xe0] sm:$0xff]
      %v678 = vld [vmem:[%s598 + $0xe8] sm:$0xff]
      %v679 = vld [vmem:[%s598 + $0xf0] sm:$0xff]
      %v680 = vld [vmem:[%s598 + $0xf8] sm:$0xff]
      %v681 = vpack.c.bf16 %v651, %v649
      %v682 = vpack.c.bf16 %v652, %v650
      %v683 = vpack.c.bf16 %v655, %v653
      %v684 = vpack.c.bf16 %v656, %v654
      %v685 = vpack.c.bf16 %v659, %v657
      %v686 = vpack.c.bf16 %v660, %v658
      %v687 = vpack.c.bf16 %v663, %v661
      %v688 = vpack.c.bf16 %v664, %v662
      %v689 = vpack.c.bf16 %v667, %v665
      %v690 = vpack.c.bf16 %v668, %v666
      %v691 = vpack.c.bf16 %v671, %v669
      %v692 = vpack.c.bf16 %v672, %v670
      %v693 = vpack.c.bf16 %v675, %v673
      %v694 = vpack.c.bf16 %v676, %v674
      %v695 = vpack.c.bf16 %v679, %v677
      %v696 = vpack.c.bf16 %v680, %v678
      %v697 = vld [vmem:[%s604] sm:$0xff]
      %v698 = vld [vmem:[%s604 + $0x8] sm:$0xff]
      %v699 = vld [vmem:[%s604 + $0x10] sm:$0xff]
      %v700 = vld [vmem:[%s604 + $0x18] sm:$0xff]
      %v701 = vld [vmem:[%s604 + $0x20] sm:$0xff]
      %v702 = vld [vmem:[%s604 + $0x28] sm:$0xff]
      %v703 = vld [vmem:[%s604 + $0x30] sm:$0xff]
      %v704 = vld [vmem:[%s604 + $0x38] sm:$0xff]
      %v705 = vld [vmem:[%s604 + $0x40] sm:$0xff]
      %v706 = vld [vmem:[%s604 + $0x48] sm:$0xff]
      %v707 = vld [vmem:[%s604 + $0x50] sm:$0xff]
      %v708 = vld [vmem:[%s604 + $0x58] sm:$0xff]
      %v709 = vld [vmem:[%s604 + $0x60] sm:$0xff]
      %v710 = vld [vmem:[%s604 + $0x68] sm:$0xff]
      %v711 = vld [vmem:[%s604 + $0x70] sm:$0xff]
      %v712 = vld [vmem:[%s604 + $0x78] sm:$0xff]
      %v713 = vld [vmem:[%s604 + $0x80] sm:$0xff]
      %v714 = vld [vmem:[%s604 + $0x88] sm:$0xff]
      %v715 = vld [vmem:[%s604 + $0x90] sm:$0xff]
      %v716 = vld [vmem:[%s604 + $0x98] sm:$0xff]
      %v717 = vld [vmem:[%s604 + $0xa0] sm:$0xff]
      %v718 = vld [vmem:[%s604 + $0xa8] sm:$0xff]
      %v719 = vld [vmem:[%s604 + $0xb0] sm:$0xff]
      %v720 = vld [vmem:[%s604 + $0xb8] sm:$0xff]
      %v721 = vld [vmem:[%s604 + $0xc0] sm:$0xff]
      %v722 = vld [vmem:[%s604 + $0xc8] sm:$0xff]
      %v723 = vld [vmem:[%s604 + $0xd0] sm:$0xff]
      %v724 = vld [vmem:[%s604 + $0xd8] sm:$0xff]
      %v725 = vld [vmem:[%s604 + $0xe0] sm:$0xff]
      %v726 = vld [vmem:[%s604 + $0xe8] sm:$0xff]
      %v727 = vld [vmem:[%s604 + $0xf0] sm:$0xff]
      %v728 = vld [vmem:[%s604 + $0xf8] sm:$0xff]
      %v729 = vpack.c.bf16 %v699, %v697
      %v730 = vpack.c.bf16 %v700, %v698
      %v731 = vpack.c.bf16 %v703, %v701
      %v732 = vpack.c.bf16 %v704, %v702
      %v733 = vpack.c.bf16 %v707, %v705
      %v734 = vpack.c.bf16 %v708, %v706
      %v735 = vpack.c.bf16 %v711, %v709
      %v736 = vpack.c.bf16 %v712, %v710
      %v737 = vpack.c.bf16 %v715, %v713
      %v738 = vpack.c.bf16 %v716, %v714
      %v739 = vpack.c.bf16 %v719, %v717
      %v740 = vpack.c.bf16 %v720, %v718
      %v741 = vpack.c.bf16 %v723, %v721
      %v742 = vpack.c.bf16 %v724, %v722
      %v743 = vpack.c.bf16 %v727, %v725
      %v744 = vpack.c.bf16 %v728, %v726
      %p745 = scmp.eq.s32.totalorder %s31, 0
      // Predicated region
      $region73: #{encoder_forward.4} parent=71 // pred_check
        %p746 = pneg %p745
      $region74: #{encoder_forward.4} parent=71 // pred_check_branch
        %748 = sbr.rel (%p746) target = $region76
      $region75: #{encoder_forward.4} parent=71 // pred_region
        %v749 = vld [vmem:[%s10] sm:$0x3]
        %v751 = vlaneseq
        %v752 = vshrl.u32 %v751, 7
        %v753 = vsub.s32 0, %v752
        %v754 = vrot.slane %v749, %v753
        %v755 = vlaneseq
        %v756 = vshrl.u32 %v755, 7
        %v757 = vsub.s32 1, %v756
        %v758 = vrot.slane %v749, %v757
        %v761 = vadd.f32 %v649, %v754
        %v762 = vadd.f32 %v650, %v758
        %v763 = vadd.f32 %v651, %v754
        %v764 = vadd.f32 %v652, %v758
        %v765 = vadd.f32 %v653, %v754
        %v766 = vadd.f32 %v654, %v758
        %v767 = vadd.f32 %v655, %v754
        %v768 = vadd.f32 %v656, %v758
        %v769 = vadd.f32 %v657, %v754
        %v770 = vadd.f32 %v658, %v758
        %v771 = vadd.f32 %v659, %v754
        %v772 = vadd.f32 %v660, %v758
        %v773 = vadd.f32 %v661, %v754
        %v774 = vadd.f32 %v662, %v758
        %v775 = vadd.f32 %v663, %v754
        %v776 = vadd.f32 %v664, %v758
        %v777 = vadd.f32 %v665, %v754
        %v778 = vadd.f32 %v666, %v758
        %v779 = vadd.f32 %v667, %v754
        %v780 = vadd.f32 %v668, %v758
        %v781 = vadd.f32 %v669, %v754
        %v782 = vadd.f32 %v670, %v758
        %v783 = vadd.f32 %v671, %v754
        %v784 = vadd.f32 %v672, %v758
        %v785 = vadd.f32 %v673, %v754
        %v786 = vadd.f32 %v674, %v758
        %v787 = vadd.f32 %v675, %v754
        %v788 = vadd.f32 %v676, %v758
        %v789 = vadd.f32 %v677, %v754
        %v790 = vadd.f32 %v678, %v758
        %v791 = vadd.f32 %v679, %v754
        %v792 = vadd.f32 %v680, %v758
        %793 = vst [vmem:[#allocation2] sm:$0xff] %v761
        %794 = vst [vmem:[#allocation2 + $0x8] sm:$0xff] %v762
        %795 = vst [vmem:[#allocation2 + $0x10] sm:$0xff] %v763
        %796 = vst [vmem:[#allocation2 + $0x18] sm:$0xff] %v764
        %797 = vst [vmem:[#allocation2 + $0x20] sm:$0xff] %v765
        %798 = vst [vmem:[#allocation2 + $0x28] sm:$0xff] %v766
        %799 = vst [vmem:[#allocation2 + $0x30] sm:$0xff] %v767
        %800 = vst [vmem:[#allocation2 + $0x38] sm:$0xff] %v768
        %801 = vst [vmem:[#allocation2 + $0x40] sm:$0xff] %v769
        %802 = vst [vmem:[#allocation2 + $0x48] sm:$0xff] %v770
        %803 = vst [vmem:[#allocation2 + $0x50] sm:$0xff] %v771
        %804 = vst [vmem:[#allocation2 + $0x58] sm:$0xff] %v772
        %805 = vst [vmem:[#allocation2 + $0x60] sm:$0xff] %v773
        %806 = vst [vmem:[#allocation2 + $0x68] sm:$0xff] %v774
        %807 = vst [vmem:[#allocation2 + $0x70] sm:$0xff] %v775
        %808 = vst [vmem:[#allocation2 + $0x78] sm:$0xff] %v776
        %809 = vst [vmem:[#allocation2 + $0x80] sm:$0xff] %v777
        %810 = vst [vmem:[#allocation2 + $0x88] sm:$0xff] %v778
        %811 = vst [vmem:[#allocation2 + $0x90] sm:$0xff] %v779
        %812 = vst [vmem:[#allocation2 + $0x98] sm:$0xff] %v780
        %813 = vst [vmem:[#allocation2 + $0xa0] sm:$0xff] %v781
        %814 = vst [vmem:[#allocation2 + $0xa8] sm:$0xff] %v782
        %815 = vst [vmem:[#allocation2 + $0xb0] sm:$0xff] %v783
        %816 = vst [vmem:[#allocation2 + $0xb8] sm:$0xff] %v784
        %817 = vst [vmem:[#allocation2 + $0xc0] sm:$0xff] %v785
        %818 = vst [vmem:[#allocation2 + $0xc8] sm:$0xff] %v786
        %819 = vst [vmem:[#allocation2 + $0xd0] sm:$0xff] %v787
        %820 = vst [vmem:[#allocation2 + $0xd8] sm:$0xff] %v788
        %821 = vst [vmem:[#allocation2 + $0xe0] sm:$0xff] %v789
        %822 = vst [vmem:[#allocation2 + $0xe8] sm:$0xff] %v790
        %823 = vst [vmem:[#allocation2 + $0xf0] sm:$0xff] %v791
        %824 = vst [vmem:[#allocation2 + $0xf8] sm:$0xff] %v792
      $region76: #{encoder_forward.4} parent=71 // pred_fallthru
        _
      %v825 = vld [vmem:[%s612] sm:$0xf]
      %v826 = vld [vmem:[%s612 + $0x4] sm:$0xf]
      %v827 = vld [vmem:[%s612 + $0x8] sm:$0xf]
      %v828 = vld [vmem:[%s612 + $0xc] sm:$0xf]
      %v829 = vld [vmem:[%s612 + $0x10] sm:$0xf]
      %v830 = vld [vmem:[%s612 + $0x14] sm:$0xf]
      %v831 = vld [vmem:[%s612 + $0x18] sm:$0xf]
      %v832 = vld [vmem:[%s612 + $0x1c] sm:$0xf]
      %v833 = vld [vmem:[%s612 + $0x20] sm:$0xf]
      %v834 = vld [vmem:[%s612 + $0x24] sm:$0xf]
      %v835 = vld [vmem:[%s612 + $0x28] sm:$0xf]
      %v836 = vld [vmem:[%s612 + $0x2c] sm:$0xf]
      %v837 = vld [vmem:[%s612 + $0x30] sm:$0xf]
      %v838 = vld [vmem:[%s612 + $0x34] sm:$0xf]
      %v839 = vld [vmem:[%s612 + $0x38] sm:$0xf]
      %v840 = vld [vmem:[%s612 + $0x3c] sm:$0xf]
      %v841 = vld [vmem:[%s612 + $0x40] sm:$0xf]
      %v842 = vld [vmem:[%s612 + $0x44] sm:$0xf]
      %v843 = vld [vmem:[%s612 + $0x48] sm:$0xf]
      %v844 = vld [vmem:[%s612 + $0x4c] sm:$0xf]
      %v845 = vld [vmem:[%s612 + $0x50] sm:$0xf]
      %v846 = vld [vmem:[%s612 + $0x54] sm:$0xf]
      %v847 = vld [vmem:[%s612 + $0x58] sm:$0xf]
      %v848 = vld [vmem:[%s612 + $0x5c] sm:$0xf]
      %v849 = vld [vmem:[%s612 + $0x60] sm:$0xf]
      %v850 = vld [vmem:[%s612 + $0x64] sm:$0xf]
      %v851 = vld [vmem:[%s612 + $0x68] sm:$0xf]
      %v852 = vld [vmem:[%s612 + $0x6c] sm:$0xf]
      %v853 = vld [vmem:[%s612 + $0x70] sm:$0xf]
      %v854 = vld [vmem:[%s612 + $0x74] sm:$0xf]
      %v855 = vld [vmem:[%s612 + $0x78] sm:$0xf]
      %v856 = vld [vmem:[%s612 + $0x7c] sm:$0xf]
      %v857 = vld [vmem:[%s615] sm:$0x1]
      %v859 = vlaneseq
      %v860 = vshrl.u32 %v859, 7
      %v861 = vsub.s32 0, %v860
      %v862 = vrot.slane %v857, %v861
      %v896 = vunpack.c.l.b16 %v825
      %v897 = vunpack.c.l.b16 %v826
      %v898 = vunpack.c.l.b16 %v827
      %v899 = vunpack.c.l.b16 %v828
      %v900 = vunpack.c.l.b16 %v829
      %v901 = vunpack.c.l.b16 %v830
      %v902 = vunpack.c.l.b16 %v831
      %v903 = vunpack.c.l.b16 %v832
      %v904 = vunpack.c.l.b16 %v833
      %v905 = vunpack.c.l.b16 %v834
      %v906 = vunpack.c.l.b16 %v835
      %v907 = vunpack.c.l.b16 %v836
      %v908 = vunpack.c.l.b16 %v837
      %v909 = vunpack.c.l.b16 %v838
      %v910 = vunpack.c.l.b16 %v839
      %v911 = vunpack.c.l.b16 %v840
      %v912 = vunpack.c.l.b16 %v841
      %v913 = vunpack.c.l.b16 %v842
      %v914 = vunpack.c.l.b16 %v843
      %v915 = vunpack.c.l.b16 %v844
      %v916 = vunpack.c.l.b16 %v845
      %v917 = vunpack.c.l.b16 %v846
      %v918 = vunpack.c.l.b16 %v847
      %v919 = vunpack.c.l.b16 %v848
      %v920 = vunpack.c.l.b16 %v849
      %v921 = vunpack.c.l.b16 %v850
      %v922 = vunpack.c.l.b16 %v851
      %v923 = vunpack.c.l.b16 %v852
      %v924 = vunpack.c.l.b16 %v853
      %v925 = vunpack.c.l.b16 %v854
      %v926 = vunpack.c.l.b16 %v855
      %v927 = vunpack.c.l.b16 %v856
      %v928 = vpack.c.b16 %v897, %v896
      %v929 = vpack.c.b16 %v899, %v898
      %v930 = vpack.c.b16 %v901, %v900
      %v931 = vpack.c.b16 %v903, %v902
      %v932 = vpack.c.b16 %v905, %v904
      %v933 = vpack.c.b16 %v907, %v906
      %v934 = vpack.c.b16 %v909, %v908
      %v935 = vpack.c.b16 %v911, %v910
      %v936 = vpack.c.b16 %v913, %v912
      %v937 = vpack.c.b16 %v915, %v914
      %v938 = vpack.c.b16 %v917, %v916
      %v939 = vpack.c.b16 %v919, %v918
      %v940 = vpack.c.b16 %v921, %v920
      %v941 = vpack.c.b16 %v923, %v922
      %v942 = vpack.c.b16 %v925, %v924
      %v943 = vpack.c.b16 %v927, %v926
      %960 = vmatprep.subr.bf16.mxu0 0
      %961 = vmatpush1.bf16.msra.mxu0 %v928
      %962 = vmatprep.subr.bf16.mxu0 0
      %963 = vmatpush1.bf16.msra.mxu0 %v929
      %964 = vmatprep.subr.bf16.mxu0 0
      %965 = vmatpush1.bf16.msra.mxu0 %v930
      %966 = vmatprep.subr.bf16.mxu0 0
      %967 = vmatpush1.bf16.msra.mxu0 %v931
      %968 = vmatprep.subr.bf16.mxu0 0
      %969 = vmatpush1.bf16.msra.mxu0 %v932
      %970 = vmatprep.subr.bf16.mxu0 0
      %971 = vmatpush1.bf16.msra.mxu0 %v933
      %972 = vmatprep.subr.bf16.mxu0 0
      %973 = vmatpush1.bf16.msra.mxu0 %v934
      %974 = vmatprep.subr.bf16.mxu0 0
      %975 = vmatpush1.bf16.msra.mxu0 %v935
      %976 = vmatprep.subr.bf16.mxu0 0
      %977 = vmatpush1.bf16.msra.mxu0 %v936
      %978 = vmatprep.subr.bf16.mxu0 0
      %979 = vmatpush1.bf16.msra.mxu0 %v937
      %980 = vmatprep.subr.bf16.mxu0 0
      %981 = vmatpush1.bf16.msra.mxu0 %v938
      %982 = vmatprep.subr.bf16.mxu0 0
      %983 = vmatpush1.bf16.msra.mxu0 %v939
      %984 = vmatprep.subr.bf16.mxu0 0
      %985 = vmatpush1.bf16.msra.mxu0 %v940
      %986 = vmatprep.subr.bf16.mxu0 0
      %987 = vmatpush1.bf16.msra.mxu0 %v941
      %988 = vmatprep.subr.bf16.mxu0 0
      %989 = vmatpush1.bf16.msra.mxu0 %v942
      %990 = vmatprep.subr.bf16.mxu0 0
      %991 = vmatpush1.bf16.msra.mxu0 %v943
      %992 = vmatprep.mubr.bf16.mxu0 %v682
      %993 = vmatmul.mubr.bf16.gmra.mrb[0].mxu0 %v681
      %v994 = vpop.f32.mrb[0].mxu0
      %v995 = vadd.f32 %v862, %v994
      %v996 = vpop.f32.mrb[0].mxu0
      %v997 = vpop.f32.mrb[0].mxu0
      %v998 = vadd.f32 %v862, %v997
      %v999 = vpop.f32.mrb[0].mxu0
      %1000 = vmatprep.mubr.bf16.mxu0 %v684
      %1001 = vmatmul.mubr.bf16.gmra.mrb[0].mxu0 %v683
      %v1002 = vpop.f32.mrb[0].mxu0
      %v1003 = vadd.f32 %v862, %v1002
      %v1004 = vpop.f32.mrb[0].mxu0
      %v1005 = vpop.f32.mrb[0].mxu0
      %v1006 = vadd.f32 %v862, %v1005
      %v1007 = vpop.f32.mrb[0].mxu0
      %1008 = vmatprep.mubr.bf16.mxu0 %v686
      %1009 = vmatmul.mubr.bf16.gmra.mrb[0].mxu0 %v685
      %v1010 = vpop.f32.mrb[0].mxu0
      %v1011 = vadd.f32 %v862, %v1010
      %v1012 = vpop.f32.mrb[0].mxu0
      %v1013 = vpop.f32.mrb[0].mxu0
      %v1014 = vadd.f32 %v862, %v1013
      %v1015 = vpop.f32.mrb[0].mxu0
      %1016 = vmatprep.mubr.bf16.mxu0 %v688
      %1017 = vmatmul.mubr.bf16.gmra.mrb[0].mxu0 %v687
      %v1018 = vpop.f32.mrb[0].mxu0
      %v1019 = vadd.f32 %v862, %v1018
      %v1020 = vpop.f32.mrb[0].mxu0
      %v1021 = vpop.f32.mrb[0].mxu0
      %v1022 = vadd.f32 %v862, %v1021
      %v1023 = vpop.f32.mrb[0].mxu0
      %1024 = vmatprep.mubr.bf16.mxu0 %v690
      %1025 = vmatmul.mubr.bf16.gmra.mrb[0].mxu0 %v689
      %v1026 = vpop.f32.mrb[0].mxu0
      %v1027 = vadd.f32 %v862, %v1026
      %v1028 = vpop.f32.mrb[0].mxu0
      %v1029 = vpop.f32.mrb[0].mxu0
      %v1030 = vadd.f32 %v862, %v1029
      %v1031 = vpop.f32.mrb[0].mxu0
      %1032 = vmatprep.mubr.bf16.mxu0 %v692
      %1033 = vmatmul.mubr.bf16.gmra.mrb[0].mxu0 %v691
      %v1034 = vpop.f32.mrb[0].mxu0
      %v1035 = vadd.f32 %v862, %v1034
      %v1036 = vpop.f32.mrb[0].mxu0
      %v1037 = vpop.f32.mrb[0].mxu0
      %v1038 = vadd.f32 %v862, %v1037
      %v1039 = vpop.f32.mrb[0].mxu0
      %1040 = vmatprep.mubr.bf16.mxu0 %v694
      %1041 = vmatmul.mubr.bf16.gmra.mrb[0].mxu0 %v693
      %v1042 = vpop.f32.mrb[0].mxu0
      %v1043 = vadd.f32 %v862, %v1042
      %v1044 = vpop.f32.mrb[0].mxu0
      %v1045 = vpop.f32.mrb[0].mxu0
      %v1046 = vadd.f32 %v862, %v1045
      %v1047 = vpop.f32.mrb[0].mxu0
      %1048 = vmatprep.mubr.bf16.mxu0 %v696
      %1049 = vmatmul.mubr.bf16.gmra.mrb[0].mxu0 %v695
      %v1050 = vpop.f32.mrb[0].mxu0
      %v1051 = vadd.f32 %v862, %v1050
      %v1052 = vpop.f32.mrb[0].mxu0
      %v1053 = vpop.f32.mrb[0].mxu0
      %v1054 = vadd.f32 %v862, %v1053
      %v1055 = vpop.f32.mrb[0].mxu0
      %1056 = vdwg.mxu0
      %v1057 = vld [vmem:[%s620] sm:$0xf]
      %v1058 = vld [vmem:[%s620 + $0x4] sm:$0xf]
      %v1059 = vld [vmem:[%s620 + $0x8] sm:$0xf]
      %v1060 = vld [vmem:[%s620 + $0xc] sm:$0xf]
      %v1061 = vld [vmem:[%s620 + $0x10] sm:$0xf]
      %v1062 = vld [vmem:[%s620 + $0x14] sm:$0xf]
      %v1063 = vld [vmem:[%s620 + $0x18] sm:$0xf]
      %v1064 = vld [vmem:[%s620 + $0x1c] sm:$0xf]
      %v1065 = vld [vmem:[%s620 + $0x20] sm:$0xf]
      %v1066 = vld [vmem:[%s620 + $0x24] sm:$0xf]
      %v1067 = vld [vmem:[%s620 + $0x28] sm:$0xf]
      %v1068 = vld [vmem:[%s620 + $0x2c] sm:$0xf]
      %v1069 = vld [vmem:[%s620 + $0x30] sm:$0xf]
      %v1070 = vld [vmem:[%s620 + $0x34] sm:$0xf]
      %v1071 = vld [vmem:[%s620 + $0x38] sm:$0xf]
      %v1072 = vld [vmem:[%s620 + $0x3c] sm:$0xf]
      %v1073 = vld [vmem:[%s620 + $0x40] sm:$0xf]
      %v1074 = vld [vmem:[%s620 + $0x44] sm:$0xf]
      %v1075 = vld [vmem:[%s620 + $0x48] sm:$0xf]
      %v1076 = vld [vmem:[%s620 + $0x4c] sm:$0xf]
      %v1077 = vld [vmem:[%s620 + $0x50] sm:$0xf]
      %v1078 = vld [vmem:[%s620 + $0x54] sm:$0xf]
      %v1079 = vld [vmem:[%s620 + $0x58] sm:$0xf]
      %v1080 = vld [vmem:[%s620 + $0x5c] sm:$0xf]
      %v1081 = vld [vmem:[%s620 + $0x60] sm:$0xf]
      %v1082 = vld [vmem:[%s620 + $0x64] sm:$0xf]
      %v1083 = vld [vmem:[%s620 + $0x68] sm:$0xf]
      %v1084 = vld [vmem:[%s620 + $0x6c] sm:$0xf]
      %v1085 = vld [vmem:[%s620 + $0x70] sm:$0xf]
      %v1086 = vld [vmem:[%s620 + $0x74] sm:$0xf]
      %v1087 = vld [vmem:[%s620 + $0x78] sm:$0xf]
      %v1088 = vld [vmem:[%s620 + $0x7c] sm:$0xf]
      %v1089 = vld [vmem:[%s623] sm:$0x1]
      %v1091 = vlaneseq
      %v1092 = vshrl.u32 %v1091, 7
      %v1093 = vsub.s32 0, %v1092
      %v1094 = vrot.slane %v1089, %v1093
      %v1128 = vunpack.c.l.b16 %v1057
      %v1129 = vunpack.c.l.b16 %v1058
      %v1130 = vunpack.c.l.b16 %v1059
      %v1131 = vunpack.c.l.b16 %v1060
      %v1132 = vunpack.c.l.b16 %v1061
      %v1133 = vunpack.c.l.b16 %v1062
      %v1134 = vunpack.c.l.b16 %v1063
      %v1135 = vunpack.c.l.b16 %v1064
      %v1136 = vunpack.c.l.b16 %v1065
      %v1137 = vunpack.c.l.b16 %v1066
      %v1138 = vunpack.c.l.b16 %v1067
      %v1139 = vunpack.c.l.b16 %v1068
      %v1140 = vunpack.c.l.b16 %v1069
      %v1141 = vunpack.c.l.b16 %v1070
      %v1142 = vunpack.c.l.b16 %v1071
      %v1143 = vunpack.c.l.b16 %v1072
      %v1144 = vunpack.c.l.b16 %v1073
      %v1145 = vunpack.c.l.b16 %v1074
      %v1146 = vunpack.c.l.b16 %v1075
      %v1147 = vunpack.c.l.b16 %v1076
      %v1148 = vunpack.c.l.b16 %v1077
      %v1149 = vunpack.c.l.b16 %v1078
      %v1150 = vunpack.c.l.b16 %v1079
      %v1151 = vunpack.c.l.b16 %v1080
      %v1152 = vunpack.c.l.b16 %v1081
      %v1153 = vunpack.c.l.b16 %v1082
      %v1154 = vunpack.c.l.b16 %v1083
      %v1155 = vunpack.c.l.b16 %v1084
      %v1156 = vunpack.c.l.b16 %v1085
      %v1157 = vunpack.c.l.b16 %v1086
      %v1158 = vunpack.c.l.b16 %v1087
      %v1159 = vunpack.c.l.b16 %v1088
      %v1160 = vpack.c.b16 %v1129, %v1128
      %v1161 = vpack.c.b16 %v1131, %v1130
      %v1162 = vpack.c.b16 %v1133, %v1132
      %v1163 = vpack.c.b16 %v1135, %v1134
      %v1164 = vpack.c.b16 %v1137, %v1136
      %v1165 = vpack.c.b16 %v1139, %v1138
      %v1166 = vpack.c.b16 %v1141, %v1140
      %v1167 = vpack.c.b16 %v1143, %v1142
      %v1168 = vpack.c.b16 %v1145, %v1144
      %v1169 = vpack.c.b16 %v1147, %v1146
      %v1170 = vpack.c.b16 %v1149, %v1148
      %v1171 = vpack.c.b16 %v1151, %v1150
      %v1172 = vpack.c.b16 %v1153, %v1152
      %v1173 = vpack.c.b16 %v1155, %v1154
      %v1174 = vpack.c.b16 %v1157, %v1156
      %v1175 = vpack.c.b16 %v1159, %v1158
      %1192 = vmatprep.subr.bf16.mxu0 0
      %1193 = vmatpush1.bf16.msra.mxu0 %v1160
      %1194 = vmatprep.subr.bf16.mxu0 0
      %1195 = vmatpush1.bf16.msra.mxu0 %v1161
      %1196 = vmatprep.subr.bf16.mxu0 0
      %1197 = vmatpush1.bf16.msra.mxu0 %v1162
      %1198 = vmatprep.subr.bf16.mxu0 0
      %1199 = vmatpush1.bf16.msra.mxu0 %v1163
      %1200 = vmatprep.subr.bf16.mxu0 0
      %1201 = vmatpush1.bf16.msra.mxu0 %v1164
      %1202 = vmatprep.subr.bf16.mxu0 0
      %1203 = vmatpush1.bf16.msra.mxu0 %v1165
      %1204 = vmatprep.subr.bf16.mxu0 0
      %1205 = vmatpush1.bf16.msra.mxu0 %v1166
      %1206 = vmatprep.subr.bf16.mxu0 0
      %1207 = vmatpush1.bf16.msra.mxu0 %v1167
      %1208 = vmatprep.subr.bf16.mxu0 0
      %1209 = vmatpush1.bf16.msra.mxu0 %v1168
      %1210 = vmatprep.subr.bf16.mxu0 0
      %1211 = vmatpush1.bf16.msra.mxu0 %v1169
      %1212 = vmatprep.subr.bf16.mxu0 0
      %1213 = vmatpush1.bf16.msra.mxu0 %v1170
      %1214 = vmatprep.subr.bf16.mxu0 0
      %1215 = vmatpush1.bf16.msra.mxu0 %v1171
      %1216 = vmatprep.subr.bf16.mxu0 0
      %1217 = vmatpush1.bf16.msra.mxu0 %v1172
      %1218 = vmatprep.subr.bf16.mxu0 0
      %1219 = vmatpush1.bf16.msra.mxu0 %v1173
      %1220 = vmatprep.subr.bf16.mxu0 0
      %1221 = vmatpush1.bf16.msra.mxu0 %v1174
      %1222 = vmatprep.subr.bf16.mxu0 0
      %1223 = vmatpush1.bf16.msra.mxu0 %v1175
      %1224 = vmatprep.mubr.bf16.mxu0 %v730
      %1225 = vmatmul.mubr.bf16.gmra.mrb[0].mxu0 %v729
      %v1226 = vpop.f32.mrb[0].mxu0
      %v1227 = vadd.f32 %v1094, %v1226
      %v1228 = vpop.f32.mrb[0].mxu0
      %v1229 = vpop.f32.mrb[0].mxu0
      %v1230 = vadd.f32 %v1094, %v1229
      %v1231 = vpop.f32.mrb[0].mxu0
      %1232 = vmatprep.mubr.bf16.mxu0 %v732
      %1233 = vmatmul.mubr.bf16.gmra.mrb[0].mxu0 %v731
      %v1234 = vpop.f32.mrb[0].mxu0
      %v1235 = vadd.f32 %v1094, %v1234
      %v1236 = vpop.f32.mrb[0].mxu0
      %v1237 = vpop.f32.mrb[0].mxu0
      %v1238 = vadd.f32 %v1094, %v1237
      %v1239 = vpop.f32.mrb[0].mxu0
      %1240 = vmatprep.mubr.bf16.mxu0 %v734
      %1241 = vmatmul.mubr.bf16.gmra.mrb[0].mxu0 %v733
      %v1242 = vpop.f32.mrb[0].mxu0
      %v1243 = vadd.f32 %v1094, %v1242
      %v1244 = vpop.f32.mrb[0].mxu0
      %v1245 = vpop.f32.mrb[0].mxu0
      %v1246 = vadd.f32 %v1094, %v1245
      %v1247 = vpop.f32.mrb[0].mxu0
      %1248 = vmatprep.mubr.bf16.mxu0 %v736
      %1249 = vmatmul.mubr.bf16.gmra.mrb[0].mxu0 %v735
      %v1250 = vpop.f32.mrb[0].mxu0
      %v1251 = vadd.f32 %v1094, %v1250
      %v1252 = vpop.f32.mrb[0].mxu0
      %v1253 = vpop.f32.mrb[0].mxu0
      %v1254 = vadd.f32 %v1094, %v1253
      %v1255 = vpop.f32.mrb[0].mxu0
      %1256 = vmatprep.mubr.bf16.mxu0 %v738
      %1257 = vmatmul.mubr.bf16.gmra.mrb[0].mxu0 %v737
      %v1258 = vpop.f32.mrb[0].mxu0
      %v1259 = vadd.f32 %v1094, %v1258
      %v1260 = vpop.f32.mrb[0].mxu0
      %v1261 = vpop.f32.mrb[0].mxu0
      %v1262 = vadd.f32 %v1094, %v1261
      %v1263 = vpop.f32.mrb[0].mxu0
      %1264 = vmatprep.mubr.bf16.mxu0 %v740
      %1265 = vmatmul.mubr.bf16.gmra.mrb[0].mxu0 %v739
      %v1266 = vpop.f32.mrb[0].mxu0
      %v1267 = vadd.f32 %v1094, %v1266
      %v1268 = vpop.f32.mrb[0].mxu0
      %v1269 = vpop.f32.mrb[0].mxu0
      %v1270 = vadd.f32 %v1094, %v1269
      %v1271 = vpop.f32.mrb[0].mxu0
      %1272 = vmatprep.mubr.bf16.mxu0 %v742
      %1273 = vmatmul.mubr.bf16.gmra.mrb[0].mxu0 %v741
      %v1274 = vpop.f32.mrb[0].mxu0
      %v1275 = vadd.f32 %v1094, %v1274
      %v1276 = vpop.f32.mrb[0].mxu0
      %v1277 = vpop.f32.mrb[0].mxu0
      %v1278 = vadd.f32 %v1094, %v1277
      %v1279 = vpop.f32.mrb[0].mxu0
      %1280 = vmatprep.mubr.bf16.mxu0 %v744
      %1281 = vmatmul.mubr.bf16.gmra.mrb[0].mxu0 %v743
      %v1282 = vpop.f32.mrb[0].mxu0
      %v1283 = vadd.f32 %v1094, %v1282
      %v1284 = vpop.f32.mrb[0].mxu0
      %v1285 = vpop.f32.mrb[0].mxu0
      %v1286 = vadd.f32 %v1094, %v1285
      %v1287 = vpop.f32.mrb[0].mxu0
      %1288 = vdwg.mxu0
      %v1289 = vld [vmem:[%s628] sm:$0xf]
      %v1290 = vld [vmem:[%s628 + $0x4] sm:$0xf]
      %v1291 = vld [vmem:[%s628 + $0x8] sm:$0xf]
      %v1292 = vld [vmem:[%s628 + $0xc] sm:$0xf]
      %v1293 = vld [vmem:[%s628 + $0x10] sm:$0xf]
      %v1294 = vld [vmem:[%s628 + $0x14] sm:$0xf]
      %v1295 = vld [vmem:[%s628 + $0x18] sm:$0xf]
      %v1296 = vld [vmem:[%s628 + $0x1c] sm:$0xf]
      %v1297 = vld [vmem:[%s628 + $0x20] sm:$0xf]
      %v1298 = vld [vmem:[%s628 + $0x24] sm:$0xf]
      %v1299 = vld [vmem:[%s628 + $0x28] sm:$0xf]
      %v1300 = vld [vmem:[%s628 + $0x2c] sm:$0xf]
      %v1301 = vld [vmem:[%s628 + $0x30] sm:$0xf]
      %v1302 = vld [vmem:[%s628 + $0x34] sm:$0xf]
      %v1303 = vld [vmem:[%s628 + $0x38] sm:$0xf]
      %v1304 = vld [vmem:[%s628 + $0x3c] sm:$0xf]
      %v1305 = vld [vmem:[%s628 + $0x40] sm:$0xf]
      %v1306 = vld [vmem:[%s628 + $0x44] sm:$0xf]
      %v1307 = vld [vmem:[%s628 + $0x48] sm:$0xf]
      %v1308 = vld [vmem:[%s628 + $0x4c] sm:$0xf]
      %v1309 = vld [vmem:[%s628 + $0x50] sm:$0xf]
      %v1310 = vld [vmem:[%s628 + $0x54] sm:$0xf]
      %v1311 = vld [vmem:[%s628 + $0x58] sm:$0xf]
      %v1312 = vld [vmem:[%s628 + $0x5c] sm:$0xf]
      %v1313 = vld [vmem:[%s628 + $0x60] sm:$0xf]
      %v1314 = vld [vmem:[%s628 + $0x64] sm:$0xf]
      %v1315 = vld [vmem:[%s628 + $0x68] sm:$0xf]
      %v1316 = vld [vmem:[%s628 + $0x6c] sm:$0xf]
      %v1317 = vld [vmem:[%s628 + $0x70] sm:$0xf]
      %v1318 = vld [vmem:[%s628 + $0x74] sm:$0xf]
      %v1319 = vld [vmem:[%s628 + $0x78] sm:$0xf]
      %v1320 = vld [vmem:[%s628 + $0x7c] sm:$0xf]
      %v1321 = vld [vmem:[%s631] sm:$0x1]
      %v1323 = vlaneseq
      %v1324 = vshrl.u32 %v1323, 7
      %v1325 = vsub.s32 0, %v1324
      %v1326 = vrot.slane %v1321, %v1325
      %v1360 = vunpack.c.l.b16 %v1289
      %v1361 = vunpack.c.l.b16 %v1290
      %v1362 = vunpack.c.l.b16 %v1291
      %v1363 = vunpack.c.l.b16 %v1292
      %v1364 = vunpack.c.l.b16 %v1293
      %v1365 = vunpack.c.l.b16 %v1294
      %v1366 = vunpack.c.l.b16 %v1295
      %v1367 = vunpack.c.l.b16 %v1296
      %v1368 = vunpack.c.l.b16 %v1297
      %v1369 = vunpack.c.l.b16 %v1298
      %v1370 = vunpack.c.l.b16 %v1299
      %v1371 = vunpack.c.l.b16 %v1300
      %v1372 = vunpack.c.l.b16 %v1301
      %v1373 = vunpack.c.l.b16 %v1302
      %v1374 = vunpack.c.l.b16 %v1303
      %v1375 = vunpack.c.l.b16 %v1304
      %v1376 = vunpack.c.l.b16 %v1305
      %v1377 = vunpack.c.l.b16 %v1306
      %v1378 = vunpack.c.l.b16 %v1307
      %v1379 = vunpack.c.l.b16 %v1308
      %v1380 = vunpack.c.l.b16 %v1309
      %v1381 = vunpack.c.l.b16 %v1310
      %v1382 = vunpack.c.l.b16 %v1311
      %v1383 = vunpack.c.l.b16 %v1312
      %v1384 = vunpack.c.l.b16 %v1313
      %v1385 = vunpack.c.l.b16 %v1314
      %v1386 = vunpack.c.l.b16 %v1315
      %v1387 = vunpack.c.l.b16 %v1316
      %v1388 = vunpack.c.l.b16 %v1317
      %v1389 = vunpack.c.l.b16 %v1318
      %v1390 = vunpack.c.l.b16 %v1319
      %v1391 = vunpack.c.l.b16 %v1320
      %v1392 = vpack.c.b16 %v1361, %v1360
      %v1393 = vpack.c.b16 %v1363, %v1362
      %v1394 = vpack.c.b16 %v1365, %v1364
      %v1395 = vpack.c.b16 %v1367, %v1366
      %v1396 = vpack.c.b16 %v1369, %v1368
      %v1397 = vpack.c.b16 %v1371, %v1370
      %v1398 = vpack.c.b16 %v1373, %v1372
      %v1399 = vpack.c.b16 %v1375, %v1374
      %v1400 = vpack.c.b16 %v1377, %v1376
      %v1401 = vpack.c.b16 %v1379, %v1378
      %v1402 = vpack.c.b16 %v1381, %v1380
      %v1403 = vpack.c.b16 %v1383, %v1382
      %v1404 = vpack.c.b16 %v1385, %v1384
      %v1405 = vpack.c.b16 %v1387, %v1386
      %v1406 = vpack.c.b16 %v1389, %v1388
      %v1407 = vpack.c.b16 %v1391, %v1390
      %1424 = vmatprep.subr.bf16.mxu0 0
      %1425 = vmatpush1.bf16.msra.mxu0 %v1392
      %1426 = vmatprep.subr.bf16.mxu0 0
      %1427 = vmatpush1.bf16.msra.mxu0 %v1393
      %1428 = vmatprep.subr.bf16.mxu0 0
      %1429 = vmatpush1.bf16.msra.mxu0 %v1394
      %1430 = vmatprep.subr.bf16.mxu0 0
      %1431 = vmatpush1.bf16.msra.mxu0 %v1395
      %1432 = vmatprep.subr.bf16.mxu0 0
      %1433 = vmatpush1.bf16.msra.mxu0 %v1396
      %1434 = vmatprep.subr.bf16.mxu0 0
      %1435 = vmatpush1.bf16.msra.mxu0 %v1397
      %1436 = vmatprep.subr.bf16.mxu0 0
      %1437 = vmatpush1.bf16.msra.mxu0 %v1398
      %1438 = vmatprep.subr.bf16.mxu0 0
      %1439 = vmatpush1.bf16.msra.mxu0 %v1399
      %1440 = vmatprep.subr.bf16.mxu0 0
      %1441 = vmatpush1.bf16.msra.mxu0 %v1400
      %1442 = vmatprep.subr.bf16.mxu0 0
      %1443 = vmatpush1.bf16.msra.mxu0 %v1401
      %1444 = vmatprep.subr.bf16.mxu0 0
      %1445 = vmatpush1.bf16.msra.mxu0 %v1402
      %1446 = vmatprep.subr.bf16.mxu0 0
      %1447 = vmatpush1.bf16.msra.mxu0 %v1403
      %1448 = vmatprep.subr.bf16.mxu0 0
      %1449 = vmatpush1.bf16.msra.mxu0 %v1404
      %1450 = vmatprep.subr.bf16.mxu0 0
      %1451 = vmatpush1.bf16.msra.mxu0 %v1405
      %1452 = vmatprep.subr.bf16.mxu0 0
      %1453 = vmatpush1.bf16.msra.mxu0 %v1406
      %1454 = vmatprep.subr.bf16.mxu0 0
      %1455 = vmatpush1.bf16.msra.mxu0 %v1407
      %1456 = vmatprep.mubr.bf16.mxu0 %v730
      %1457 = vmatmul.mubr.bf16.gmra.mrb[0].mxu0 %v729
      %v1458 = vpop.f32.mrb[0].mxu0
      %v1459 = vadd.f32 %v1326, %v1458
      %v1460 = vpop.f32.mrb[0].mxu0
      %v1461 = vpop.f32.mrb[0].mxu0
      %v1462 = vadd.f32 %v1326, %v1461
      %v1463 = vpop.f32.mrb[0].mxu0
      %1464 = vmatprep.mubr.bf16.mxu0 %v732
      %1465 = vmatmul.mubr.bf16.gmra.mrb[0].mxu0 %v731
      %v1466 = vpop.f32.mrb[0].mxu0
      %v1467 = vadd.f32 %v1326, %v1466
      %v1468 = vpop.f32.mrb[0].mxu0
      %v1469 = vpop.f32.mrb[0].mxu0
      %v1470 = vadd.f32 %v1326, %v1469
      %v1471 = vpop.f32.mrb[0].mxu0
      %1472 = vmatprep.mubr.bf16.mxu0 %v734
      %1473 = vmatmul.mubr.bf16.gmra.mrb[0].mxu0 %v733
      %v1474 = vpop.f32.mrb[0].mxu0
      %v1475 = vadd.f32 %v1326, %v1474
      %v1476 = vpop.f32.mrb[0].mxu0
      %v1477 = vpop.f32.mrb[0].mxu0
      %v1478 = vadd.f32 %v1326, %v1477
      %v1479 = vpop.f32.mrb[0].mxu0
      %1480 = vmatprep.mubr.bf16.mxu0 %v736
      %1481 = vmatmul.mubr.bf16.gmra.mrb[0].mxu0 %v735
      %v1482 = vpop.f32.mrb[0].mxu0
      %v1483 = vadd.f32 %v1326, %v1482
      %v1484 = vpop.f32.mrb[0].mxu0
      %v1485 = vpop.f32.mrb[0].mxu0
      %v1486 = vadd.f32 %v1326, %v1485
      %v1487 = vpop.f32.mrb[0].mxu0
      %1488 = vmatprep.mubr.bf16.mxu0 %v738
      %1489 = vmatmul.mubr.bf16.gmra.mrb[0].mxu0 %v737
      %v1490 = vpop.f32.mrb[0].mxu0
      %v1491 = vadd.f32 %v1326, %v1490
      %v1492 = vpop.f32.mrb[0].mxu0
      %v1493 = vpop.f32.mrb[0].mxu0
      %v1494 = vadd.f32 %v1326, %v1493
      %v1495 = vpop.f32.mrb[0].mxu0
      %1496 = vmatprep.mubr.bf16.mxu0 %v740
      %1497 = vmatmul.mubr.bf16.gmra.mrb[0].mxu0 %v739
      %v1498 = vpop.f32.mrb[0].mxu0
      %v1499 = vadd.f32 %v1326, %v1498
      %v1500 = vpop.f32.mrb[0].mxu0
      %v1501 = vpop.f32.mrb[0].mxu0
      %v1502 = vadd.f32 %v1326, %v1501
      %v1503 = vpop.f32.mrb[0].mxu0
      %1504 = vmatprep.mubr.bf16.mxu0 %v742
      %1505 = vmatmul.mubr.bf16.gmra.mrb[0].mxu0 %v741
      %v1506 = vpop.f32.mrb[0].mxu0
      %v1507 = vadd.f32 %v1326, %v1506
      %v1508 = vpop.f32.mrb[0].mxu0
      %v1509 = vpop.f32.mrb[0].mxu0
      %v1510 = vadd.f32 %v1326, %v1509
      %v1511 = vpop.f32.mrb[0].mxu0
      %1512 = vmatprep.mubr.bf16.mxu0 %v744
      %1513 = vmatmul.mubr.bf16.gmra.mrb[0].mxu0 %v743
      %v1514 = vpop.f32.mrb[0].mxu0
      %v1515 = vadd.f32 %v1326, %v1514
      %v1516 = vpop.f32.mrb[0].mxu0
      %v1517 = vpop.f32.mrb[0].mxu0
      %v1518 = vadd.f32 %v1326, %v1517
      %v1519 = vpop.f32.mrb[0].mxu0
      %1520 = vdwg.mxu0
      %v1521 = vpack.c.bf16 %v998, %v995
      %v1522 = vpack.c.bf16 %v1006, %v1003
      %v1523 = vpack.c.bf16 %v1014, %v1011
      %v1524 = vpack.c.bf16 %v1022, %v1019
      %v1525 = vpack.c.bf16 %v1030, %v1027
      %v1526 = vpack.c.bf16 %v1038, %v1035
      %v1527 = vpack.c.bf16 %v1046, %v1043
      %v1528 = vpack.c.bf16 %v1054, %v1051
      %v1529 = vpack.c.bf16 %v1230, %v1227
      %v1530 = vpack.c.bf16 %v1238, %v1235
      %v1531 = vpack.c.bf16 %v1246, %v1243
      %v1532 = vpack.c.bf16 %v1254, %v1251
      %v1533 = vpack.c.bf16 %v1262, %v1259
      %v1534 = vpack.c.bf16 %v1270, %v1267
      %v1535 = vpack.c.bf16 %v1278, %v1275
      %v1536 = vpack.c.bf16 %v1286, %v1283
      %1537 = vmatprep.subr.bf16.mxu0 0
      %1538 = vmatpush1.bf16.xpose.msra.mxu0 %v1529
      %1539 = vmatprep.subr.bf16.mxu0 0
      %1540 = vmatpush1.bf16.xpose.msra.mxu0 %v1530
      %1541 = vmatprep.subr.bf16.mxu0 0
      %1542 = vmatpush1.bf16.xpose.msra.mxu0 %v1531
      %1543 = vmatprep.subr.bf16.mxu0 0
      %1544 = vmatpush1.bf16.xpose.msra.mxu0 %v1532
      %1545 = vmatprep.subr.bf16.mxu0 0
      %1546 = vmatpush1.bf16.xpose.msra.mxu0 %v1533
      %1547 = vmatprep.subr.bf16.mxu0 0
      %1548 = vmatpush1.bf16.xpose.msra.mxu0 %v1534
      %1549 = vmatprep.subr.bf16.mxu0 0
      %1550 = vmatpush1.bf16.xpose.msra.mxu0 %v1535
      %1551 = vmatprep.subr.bf16.mxu0 0
      %1552 = vmatpush1.bf16.xpose.msra.mxu0 %v1536
      %1553 = vmatprep.subr.bf16.mxu0 0
      %1554 = vmatpush1.bf16.xpose.msra.mxu0 0
      %1555 = vmatprep.subr.bf16.mxu0 0
      %1556 = vmatpush1.bf16.xpose.msra.mxu0 0
      %1557 = vmatprep.subr.bf16.mxu0 0
      %1558 = vmatpush1.bf16.xpose.msra.mxu0 0
      %1559 = vmatprep.subr.bf16.mxu0 0
      %1560 = vmatpush1.bf16.xpose.msra.mxu0 0
      %1561 = vmatprep.subr.bf16.mxu0 0
      %1562 = vmatpush1.bf16.xpose.msra.mxu0 0
      %1563 = vmatprep.subr.bf16.mxu0 0
      %1564 = vmatpush1.bf16.xpose.msra.mxu0 0
      %1565 = vmatprep.subr.bf16.mxu0 0
      %1566 = vmatpush1.bf16.xpose.msra.mxu0 0
      %1567 = vmatprep.subr.bf16.mxu0 0
      %1568 = vmatpush1.bf16.xpose.msra.mxu0 0
      %1569 = vmatprep.mubr.bf16.mxu0 0
      %1570 = vmatmul.mubr.bf16.gmra.mrb[0].mxu0 %v1521
      %v1571 = vpop.f32.mrb[0].mxu0
      %v1572 = vadd.f32 0.0, %v1571
      %v1573 = vpop.f32.mrb[0].mxu0
      %v1574 = vpop.f32.mrb[0].mxu0
      %v1575 = vadd.f32 0.0, %v1574
      %v1576 = vpop.f32.mrb[0].mxu0
      %1577 = vmatprep.mubr.bf16.mxu0 0
      %1578 = vmatmul.mubr.bf16.gmra.mrb[0].mxu0 %v1522
      %v1579 = vpop.f32.mrb[0].mxu0
      %v1580 = vadd.f32 0.0, %v1579
      %v1581 = vpop.f32.mrb[0].mxu0
      %v1582 = vpop.f32.mrb[0].mxu0
      %v1583 = vadd.f32 0.0, %v1582
      %v1584 = vpop.f32.mrb[0].mxu0
      %1585 = vmatprep.mubr.bf16.mxu0 0
      %1586 = vmatmul.mubr.bf16.gmra.mrb[0].mxu0 %v1523
      %v1587 = vpop.f32.mrb[0].mxu0
      %v1588 = vadd.f32 0.0, %v1587
      %v1589 = vpop.f32.mrb[0].mxu0
      %v1590 = vpop.f32.mrb[0].mxu0
      %v1591 = vadd.f32 0.0, %v1590
      %v1592 = vpop.f32.mrb[0].mxu0
      %1593 = vmatprep.mubr.bf16.mxu0 0
      %1594 = vmatmul.mubr.bf16.gmra.mrb[0].mxu0 %v1524
      %v1595 = vpop.f32.mrb[0].mxu0
      %v1596 = vadd.f32 0.0, %v1595
      %v1597 = vpop.f32.mrb[0].mxu0
      %v1598 = vpop.f32.mrb[0].mxu0
      %v1599 = vadd.f32 0.0, %v1598
      %v1600 = vpop.f32.mrb[0].mxu0
      %1601 = vmatprep.mubr.bf16.mxu0 0
      %1602 = vmatmul.mubr.bf16.gmra.mrb[0].mxu0 %v1525
      %v1603 = vpop.f32.mrb[0].mxu0
      %v1604 = vadd.f32 0.0, %v1603
      %v1605 = vpop.f32.mrb[0].mxu0
      %v1606 = vpop.f32.mrb[0].mxu0
      %v1607 = vadd.f32 0.0, %v1606
      %v1608 = vpop.f32.mrb[0].mxu0
      %1609 = vmatprep.mubr.bf16.mxu0 0
      %1610 = vmatmul.mubr.bf16.gmra.mrb[0].mxu0 %v1526
      %v1611 = vpop.f32.mrb[0].mxu0
      %v1612 = vadd.f32 0.0, %v1611
      %v1613 = vpop.f32.mrb[0].mxu0
      %v1614 = vpop.f32.mrb[0].mxu0
      %v1615 = vadd.f32 0.0, %v1614
      %v1616 = vpop.f32.mrb[0].mxu0
      %1617 = vmatprep.mubr.bf16.mxu0 0
      %1618 = vmatmul.mubr.bf16.gmra.mrb[0].mxu0 %v1527
      %v1619 = vpop.f32.mrb[0].mxu0
      %v1620 = vadd.f32 0.0, %v1619
      %v1621 = vpop.f32.mrb[0].mxu0
      %v1622 = vpop.f32.mrb[0].mxu0
      %v1623 = vadd.f32 0.0, %v1622
      %v1624 = vpop.f32.mrb[0].mxu0
      %1625 = vmatprep.mubr.bf16.mxu0 0
      %1626 = vmatmul.mubr.bf16.gmra.mrb[0].mxu0 %v1528
      %v1627 = vpop.f32.mrb[0].mxu0
      %v1628 = vadd.f32 0.0, %v1627
      %v1629 = vpop.f32.mrb[0].mxu0
      %v1630 = vpop.f32.mrb[0].mxu0
      %v1631 = vadd.f32 0.0, %v1630
      %v1632 = vpop.f32.mrb[0].mxu0
      %1633 = vdwg.mxu0
      %v1634 = vld [vmem:[%s607] sm:$0x1]
      %vm1635 = vcmp.eq.f32.partialorder %v1634, 0.0
      %v1636 = vsel %vm1635, 1, 0
      %v1637 = vlaneseq
      %v1638 = vshrl.u32 %v1637, 7
      %v1639 = vsub.s32 0, %v1638
      %v1640 = vrot.slane %v1636, %v1639
      %vm1641 = vcmp.eq.s32.totalorder %v1640, 1
      %v1642 = vsel %vm1641, -1e+20, %v1572
      %v1643 = vsel %vm1641, -1e+20, %v1575
      %v1644 = vsel %vm1641, -1e+20, %v1580
      %v1645 = vsel %vm1641, -1e+20, %v1583
      %v1646 = vsel %vm1641, -1e+20, %v1588
      %v1647 = vsel %vm1641, -1e+20, %v1591
      %v1648 = vsel %vm1641, -1e+20, %v1596
      %v1649 = vsel %vm1641, -1e+20, %v1599
      %v1650 = vsel %vm1641, -1e+20, %v1604
      %v1651 = vsel %vm1641, -1e+20, %v1607
      %v1652 = vsel %vm1641, -1e+20, %v1612
      %v1653 = vsel %vm1641, -1e+20, %v1615
      %v1654 = vsel %vm1641, -1e+20, %v1620
      %v1655 = vsel %vm1641, -1e+20, %v1623
      %v1656 = vsel %vm1641, -1e+20, %v1628
      %v1657 = vsel %vm1641, -1e+20, %v1631
      %v1658 = vmul.f32 %v1642, 0.0625
      %v1659 = vmul.f32 %v1643, 0.0625
      %v1660 = vmul.f32 %v1644, 0.0625
      %v1661 = vmul.f32 %v1645, 0.0625
      %v1662 = vmul.f32 %v1646, 0.0625
      %v1663 = vmul.f32 %v1647, 0.0625
      %v1664 = vmul.f32 %v1648, 0.0625
      %v1665 = vmul.f32 %v1649, 0.0625
      %v1666 = vmul.f32 %v1650, 0.0625
      %v1667 = vmul.f32 %v1651, 0.0625
      %v1668 = vmul.f32 %v1652, 0.0625
      %v1669 = vmul.f32 %v1653, 0.0625
      %v1670 = vmul.f32 %v1654, 0.0625
      %v1671 = vmul.f32 %v1655, 0.0625
      %v1672 = vmul.f32 %v1656, 0.0625
      %v1673 = vmul.f32 %v1657, 0.0625
      %1674 = vmax.xlane.f32.xlu0 %v1658
      %v1675 = vpop.xlane.xlu0 %1674
      %1676 = vmax.xlane.f32.xlu0 %v1659
      %v1677 = vpop.xlane.xlu0 %1676
      %1678 = vmax.xlane.f32.xlu0 %v1660
      %v1679 = vpop.xlane.xlu0 %1678
      %1680 = vmax.xlane.f32.xlu0 %v1661
      %v1681 = vpop.xlane.xlu0 %1680
      %1682 = vmax.xlane.f32.xlu0 %v1662
      %v1683 = vpop.xlane.xlu0 %1682
      %1684 = vmax.xlane.f32.xlu0 %v1663
      %v1685 = vpop.xlane.xlu0 %1684
      %1686 = vmax.xlane.f32.xlu0 %v1664
      %v1687 = vpop.xlane.xlu0 %1686
      %1688 = vmax.xlane.f32.xlu0 %v1665
      %v1689 = vpop.xlane.xlu0 %1688
      %1690 = vmax.xlane.f32.xlu0 %v1666
      %v1691 = vpop.xlane.xlu0 %1690
      %1692 = vmax.xlane.f32.xlu0 %v1667
      %v1693 = vpop.xlane.xlu0 %1692
      %1694 = vmax.xlane.f32.xlu0 %v1668
      %v1695 = vpop.xlane.xlu0 %1694
      %1696 = vmax.xlane.f32.xlu0 %v1669
      %v1697 = vpop.xlane.xlu0 %1696
      %1698 = vmax.xlane.f32.xlu0 %v1670
      %v1699 = vpop.xlane.xlu0 %1698
      %1700 = vmax.xlane.f32.xlu0 %v1671
      %v1701 = vpop.xlane.xlu0 %1700
      %1702 = vmax.xlane.f32.xlu0 %v1672
      %v1703 = vpop.xlane.xlu0 %1702
      %1704 = vmax.xlane.f32.xlu0 %v1673
      %v1705 = vpop.xlane.xlu0 %1704
      %v1706 = vsub.f32 %v1658, %v1675
      %v1707 = vsub.f32 %v1659, %v1677
      %v1708 = vsub.f32 %v1660, %v1679
      %v1709 = vsub.f32 %v1661, %v1681
      %v1710 = vsub.f32 %v1662, %v1683
      %v1711 = vsub.f32 %v1663, %v1685
      %v1712 = vsub.f32 %v1664, %v1687
      %v1713 = vsub.f32 %v1665, %v1689
      %v1714 = vsub.f32 %v1666, %v1691
      %v1715 = vsub.f32 %v1667, %v1693
      %v1716 = vsub.f32 %v1668, %v1695
      %v1717 = vsub.f32 %v1669, %v1697
      %v1718 = vsub.f32 %v1670, %v1699
      %v1719 = vsub.f32 %v1671, %v1701
      %v1720 = vsub.f32 %v1672, %v1703
      %v1721 = vsub.f32 %v1673, %v1705
      %v1722 = vmul.f32 %v1706, 1.442695
      %v1723 = vpow.pop %v1722
      %v1724 = vmul.f32 %v1707, 1.442695
      %v1725 = vpow.pop %v1724
      %v1726 = vmul.f32 %v1708, 1.442695
      %v1727 = vpow.pop %v1726
      %v1728 = vmul.f32 %v1709, 1.442695
      %v1729 = vpow.pop %v1728
      %v1730 = vmul.f32 %v1710, 1.442695
      %v1731 = vpow.pop %v1730
      %v1732 = vmul.f32 %v1711, 1.442695
      %v1733 = vpow.pop %v1732
      %v1734 = vmul.f32 %v1712, 1.442695
      %v1735 = vpow.pop %v1734
      %v1736 = vmul.f32 %v1713, 1.442695
      %v1737 = vpow.pop %v1736
      %v1738 = vmul.f32 %v1714, 1.442695
      %v1739 = vpow.pop %v1738
      %v1740 = vmul.f32 %v1715, 1.442695
      %v1741 = vpow.pop %v1740
      %v1742 = vmul.f32 %v1716, 1.442695
      %v1743 = vpow.pop %v1742
      %v1744 = vmul.f32 %v1717, 1.442695
      %v1745 = vpow.pop %v1744
      %v1746 = vmul.f32 %v1718, 1.442695
      %v1747 = vpow.pop %v1746
      %v1748 = vmul.f32 %v1719, 1.442695
      %v1749 = vpow.pop %v1748
      %v1750 = vmul.f32 %v1720, 1.442695
      %v1751 = vpow.pop %v1750
      %v1752 = vmul.f32 %v1721, 1.442695
      %v1753 = vpow.pop %v1752
      %1754 = vadd.xlane.f32.xlu0 %v1723
      %v1755 = vpop.xlane.xlu0 %1754
      %1756 = vadd.xlane.f32.xlu0 %v1725
      %v1757 = vpop.xlane.xlu0 %1756
      %1758 = vadd.xlane.f32.xlu0 %v1727
      %v1759 = vpop.xlane.xlu0 %1758
      %1760 = vadd.xlane.f32.xlu0 %v1729
      %v1761 = vpop.xlane.xlu0 %1760
      %1762 = vadd.xlane.f32.xlu0 %v1731
      %v1763 = vpop.xlane.xlu0 %1762
      %1764 = vadd.xlane.f32.xlu0 %v1733
      %v1765 = vpop.xlane.xlu0 %1764
      %1766 = vadd.xlane.f32.xlu0 %v1735
      %v1767 = vpop.xlane.xlu0 %1766
      %1768 = vadd.xlane.f32.xlu0 %v1737
      %v1769 = vpop.xlane.xlu0 %1768
      %1770 = vadd.xlane.f32.xlu0 %v1739
      %v1771 = vpop.xlane.xlu0 %1770
      %1772 = vadd.xlane.f32.xlu0 %v1741
      %v1773 = vpop.xlane.xlu0 %1772
      %1774 = vadd.xlane.f32.xlu0 %v1743
      %v1775 = vpop.xlane.xlu0 %1774
      %1776 = vadd.xlane.f32.xlu0 %v1745
      %v1777 = vpop.xlane.xlu0 %1776
      %1778 = vadd.xlane.f32.xlu0 %v1747
      %v1779 = vpop.xlane.xlu0 %1778
      %1780 = vadd.xlane.f32.xlu0 %v1749
      %v1781 = vpop.xlane.xlu0 %1780
      %1782 = vadd.xlane.f32.xlu0 %v1751
      %v1783 = vpop.xlane.xlu0 %1782
      %1784 = vadd.xlane.f32.xlu0 %v1753
      %v1785 = vpop.xlane.xlu0 %1784
      %v1786 = vrcp.pop %v1755
      %v1787 = vrcp.pop %v1757
      %v1788 = vrcp.pop %v1759
      %v1789 = vrcp.pop %v1761
      %v1790 = vrcp.pop %v1763
      %v1791 = vrcp.pop %v1765
      %v1792 = vrcp.pop %v1767
      %v1793 = vrcp.pop %v1769
      %v1794 = vrcp.pop %v1771
      %v1795 = vrcp.pop %v1773
      %v1796 = vrcp.pop %v1775
      %v1797 = vrcp.pop %v1777
      %v1798 = vrcp.pop %v1779
      %v1799 = vrcp.pop %v1781
      %v1800 = vrcp.pop %v1783
      %v1801 = vrcp.pop %v1785
      %v1802 = vmul.f32 %v1723, %v1786
      %v1803 = vmul.f32 %v1725, %v1787
      %v1804 = vmul.f32 %v1727, %v1788
      %v1805 = vmul.f32 %v1729, %v1789
      %v1806 = vmul.f32 %v1731, %v1790
      %v1807 = vmul.f32 %v1733, %v1791
      %v1808 = vmul.f32 %v1735, %v1792
      %v1809 = vmul.f32 %v1737, %v1793
      %v1810 = vmul.f32 %v1739, %v1794
      %v1811 = vmul.f32 %v1741, %v1795
      %v1812 = vmul.f32 %v1743, %v1796
      %v1813 = vmul.f32 %v1745, %v1797
      %v1814 = vmul.f32 %v1747, %v1798
      %v1815 = vmul.f32 %v1749, %v1799
      %v1816 = vmul.f32 %v1751, %v1800
      %v1817 = vmul.f32 %v1753, %v1801
      %v1818 = vpack.c.bf16 %v1803, %v1802
      %v1819 = vpack.c.bf16 %v1805, %v1804
      %v1820 = vpack.c.bf16 %v1807, %v1806
      %v1821 = vpack.c.bf16 %v1809, %v1808
      %v1822 = vpack.c.bf16 %v1811, %v1810
      %v1823 = vpack.c.bf16 %v1813, %v1812
      %v1824 = vpack.c.bf16 %v1815, %v1814
      %v1825 = vpack.c.bf16 %v1817, %v1816
      %v1826 = vpack.c.bf16 %v1462, %v1459
      %v1827 = vpack.c.bf16 %v1470, %v1467
      %v1828 = vpack.c.bf16 %v1478, %v1475
      %v1829 = vpack.c.bf16 %v1486, %v1483
      %v1830 = vpack.c.bf16 %v1494, %v1491
      %v1831 = vpack.c.bf16 %v1502, %v1499
      %v1832 = vpack.c.bf16 %v1510, %v1507
      %v1833 = vpack.c.bf16 %v1518, %v1515
      %1834 = vmatprep.subr.bf16.mxu0 0
      %1835 = vmatpush1.bf16.msra.mxu0 %v1826
      %1836 = vmatprep.subr.bf16.mxu0 0
      %1837 = vmatpush1.bf16.msra.mxu0 %v1827
      %1838 = vmatprep.subr.bf16.mxu0 0
      %1839 = vmatpush1.bf16.msra.mxu0 %v1828
      %1840 = vmatprep.subr.bf16.mxu0 0
      %1841 = vmatpush1.bf16.msra.mxu0 %v1829
      %1842 = vmatprep.subr.bf16.mxu0 0
      %1843 = vmatpush1.bf16.msra.mxu0 %v1830
      %1844 = vmatprep.subr.bf16.mxu0 0
      %1845 = vmatpush1.bf16.msra.mxu0 %v1831
      %1846 = vmatprep.subr.bf16.mxu0 0
      %1847 = vmatpush1.bf16.msra.mxu0 %v1832
      %1848 = vmatprep.subr.bf16.mxu0 0
      %1849 = vmatpush1.bf16.msra.mxu0 %v1833
      %1850 = vmatprep.subr.bf16.mxu0 0
      %1851 = vmatpush1.bf16.msra.mxu0 0
      %1852 = vmatprep.subr.bf16.mxu0 0
      %1853 = vmatpush1.bf16.msra.mxu0 0
      %1854 = vmatprep.subr.bf16.mxu0 0
      %1855 = vmatpush1.bf16.msra.mxu0 0
      %1856 = vmatprep.subr.bf16.mxu0 0
      %1857 = vmatpush1.bf16.msra.mxu0 0
      %1858 = vmatprep.subr.bf16.mxu0 0
      %1859 = vmatpush1.bf16.msra.mxu0 0
      %1860 = vmatprep.subr.bf16.mxu0 0
      %1861 = vmatpush1.bf16.msra.mxu0 0
      %1862 = vmatprep.subr.bf16.mxu0 0
      %1863 = vmatpush1.bf16.msra.mxu0 0
      %1864 = vmatprep.subr.bf16.mxu0 0
      %1865 = vmatpush1.bf16.msra.mxu0 0
      %1866 = vmatprep.mubr.bf16.mxu0 0
      %1867 = vmatmul.mubr.bf16.gmra.mrb[0].mxu0 %v1818
      %v1868 = vpop.f32.mrb[0].mxu0
      %v1869 = vadd.f32 0.0, %v1868
      %v1870 = vpop.f32.mrb[0].mxu0
      %v1871 = vpop.f32.mrb[0].mxu0
      %v1872 = vadd.f32 0.0, %v1871
      %v1873 = vpop.f32.mrb[0].mxu0
      %1874 = vmatprep.mubr.bf16.mxu0 0
      %1875 = vmatmul.mubr.bf16.gmra.mrb[0].mxu0 %v1819
      %v1876 = vpop.f32.mrb[0].mxu0
      %v1877 = vadd.f32 0.0, %v1876
      %v1878 = vpop.f32.mrb[0].mxu0
      %v1879 = vpop.f32.mrb[0].mxu0
      %v1880 = vadd.f32 0.0, %v1879
      %v1881 = vpop.f32.mrb[0].mxu0
      %1882 = vmatprep.mubr.bf16.mxu0 0
      %1883 = vmatmul.mubr.bf16.gmra.mrb[0].mxu0 %v1820
      %v1884 = vpop.f32.mrb[0].mxu0
      %v1885 = vadd.f32 0.0, %v1884
      %v1886 = vpop.f32.mrb[0].mxu0
      %v1887 = vpop.f32.mrb[0].mxu0
      %v1888 = vadd.f32 0.0, %v1887
      %v1889 = vpop.f32.mrb[0].mxu0
      %1890 = vmatprep.mubr.bf16.mxu0 0
      %1891 = vmatmul.mubr.bf16.gmra.mrb[0].mxu0 %v1821
      %v1892 = vpop.f32.mrb[0].mxu0
      %v1893 = vadd.f32 0.0, %v1892
      %v1894 = vpop.f32.mrb[0].mxu0
      %v1895 = vpop.f32.mrb[0].mxu0
      %v1896 = vadd.f32 0.0, %v1895
      %v1897 = vpop.f32.mrb[0].mxu0
      %1898 = vmatprep.mubr.bf16.mxu0 0
      %1899 = vmatmul.mubr.bf16.gmra.mrb[0].mxu0 %v1822
      %v1900 = vpop.f32.mrb[0].mxu0
      %v1901 = vadd.f32 0.0, %v1900
      %v1902 = vpop.f32.mrb[0].mxu0
      %v1903 = vpop.f32.mrb[0].mxu0
      %v1904 = vadd.f32 0.0, %v1903
      %v1905 = vpop.f32.mrb[0].mxu0
      %1906 = vmatprep.mubr.bf16.mxu0 0
      %1907 = vmatmul.mubr.bf16.gmra.mrb[0].mxu0 %v1823
      %v1908 = vpop.f32.mrb[0].mxu0
      %v1909 = vadd.f32 0.0, %v1908
      %v1910 = vpop.f32.mrb[0].mxu0
      %v1911 = vpop.f32.mrb[0].mxu0
      %v1912 = vadd.f32 0.0, %v1911
      %v1913 = vpop.f32.mrb[0].mxu0
      %1914 = vmatprep.mubr.bf16.mxu0 0
      %1915 = vmatmul.mubr.bf16.gmra.mrb[0].mxu0 %v1824
      %v1916 = vpop.f32.mrb[0].mxu0
      %v1917 = vadd.f32 0.0, %v1916
      %v1918 = vpop.f32.mrb[0].mxu0
      %v1919 = vpop.f32.mrb[0].mxu0
      %v1920 = vadd.f32 0.0, %v1919
      %v1921 = vpop.f32.mrb[0].mxu0
      %1922 = vmatprep.mubr.bf16.mxu0 0
      %1923 = vmatmul.mubr.bf16.gmra.mrb[0].mxu0 %v1825
      %v1924 = vpop.f32.mrb[0].mxu0
      %v1925 = vadd.f32 0.0, %v1924
      %v1926 = vpop.f32.mrb[0].mxu0
      %v1927 = vpop.f32.mrb[0].mxu0
      %v1928 = vadd.f32 0.0, %v1927
      %v1929 = vpop.f32.mrb[0].mxu0
      %1930 = vdwg.mxu0
      %v1931 = vld [vmem:[#allocation2] sm:$0xff]
      %v1932 = vld [vmem:[#allocation2 + $0x8] sm:$0xff]
      %v1933 = vld [vmem:[#allocation2 + $0x10] sm:$0xff]
      %v1934 = vld [vmem:[#allocation2 + $0x18] sm:$0xff]
      %v1935 = vld [vmem:[#allocation2 + $0x20] sm:$0xff]
      %v1936 = vld [vmem:[#allocation2 + $0x28] sm:$0xff]
      %v1937 = vld [vmem:[#allocation2 + $0x30] sm:$0xff]
      %v1938 = vld [vmem:[#allocation2 + $0x38] sm:$0xff]
      %v1939 = vld [vmem:[#allocation2 + $0x40] sm:$0xff]
      %v1940 = vld [vmem:[#allocation2 + $0x48] sm:$0xff]
      %v1941 = vld [vmem:[#allocation2 + $0x50] sm:$0xff]
      %v1942 = vld [vmem:[#allocation2 + $0x58] sm:$0xff]
      %v1943 = vld [vmem:[#allocation2 + $0x60] sm:$0xff]
      %v1944 = vld [vmem:[#allocation2 + $0x68] sm:$0xff]
      %v1945 = vld [vmem:[#allocation2 + $0x70] sm:$0xff]
      %v1946 = vld [vmem:[#allocation2 + $0x78] sm:$0xff]
      %v1947 = vld [vmem:[#allocation2 + $0x80] sm:$0xff]
      %v1948 = vld [vmem:[#allocation2 + $0x88] sm:$0xff]
      %v1949 = vld [vmem:[#allocation2 + $0x90] sm:$0xff]
      %v1950 = vld [vmem:[#allocation2 + $0x98] sm:$0xff]
      %v1951 = vld [vmem:[#allocation2 + $0xa0] sm:$0xff]
      %v1952 = vld [vmem:[#allocation2 + $0xa8] sm:$0xff]
      %v1953 = vld [vmem:[#allocation2 + $0xb0] sm:$0xff]
      %v1954 = vld [vmem:[#allocation2 + $0xb8] sm:$0xff]
      %v1955 = vld [vmem:[#allocation2 + $0xc0] sm:$0xff]
      %v1956 = vld [vmem:[#allocation2 + $0xc8] sm:$0xff]
      %v1957 = vld [vmem:[#allocation2 + $0xd0] sm:$0xff]
      %v1958 = vld [vmem:[#allocation2 + $0xd8] sm:$0xff]
      %v1959 = vld [vmem:[#allocation2 + $0xe0] sm:$0xff]
      %v1960 = vld [vmem:[#allocation2 + $0xe8] sm:$0xff]
      %v1961 = vld [vmem:[#allocation2 + $0xf0] sm:$0xff]
      %v1962 = vld [vmem:[#allocation2 + $0xf8] sm:$0xff]
      %v1963 = vpack.c.bf16 %v1872, %v1869
      %v1964 = vpack.c.bf16 %v1880, %v1877
      %v1965 = vpack.c.bf16 %v1888, %v1885
      %v1966 = vpack.c.bf16 %v1896, %v1893
      %v1967 = vpack.c.bf16 %v1904, %v1901
      %v1968 = vpack.c.bf16 %v1912, %v1909
      %v1969 = vpack.c.bf16 %v1920, %v1917
      %v1970 = vpack.c.bf16 %v1928, %v1925
      %v1971 = vld [vmem:[%s636] sm:$0xff]
      %v1972 = vld [vmem:[%s636 + $0x8] sm:$0xff]
      %v1973 = vld [vmem:[%s636 + $0x10] sm:$0xff]
      %v1974 = vld [vmem:[%s636 + $0x18] sm:$0xff]
      %v1975 = vld [vmem:[%s636 + $0x20] sm:$0xff]
      %v1976 = vld [vmem:[%s636 + $0x28] sm:$0xff]
      %v1977 = vld [vmem:[%s636 + $0x30] sm:$0xff]
      %v1978 = vld [vmem:[%s636 + $0x38] sm:$0xff]
      %v1979 = vld [vmem:[%s636 + $0x40] sm:$0xff]
      %v1980 = vld [vmem:[%s636 + $0x48] sm:$0xff]
      %v1981 = vld [vmem:[%s636 + $0x50] sm:$0xff]
      %v1982 = vld [vmem:[%s636 + $0x58] sm:$0xff]
      %v1983 = vld [vmem:[%s636 + $0x60] sm:$0xff]
      %v1984 = vld [vmem:[%s636 + $0x68] sm:$0xff]
      %v1985 = vld [vmem:[%s636 + $0x70] sm:$0xff]
      %v1986 = vld [vmem:[%s636 + $0x78] sm:$0xff]
      %v2003 = vunpack.c.l.b16 %v1971
      %v2004 = vunpack.c.h.b16 %v1971
      %v2005 = vunpack.c.l.b16 %v1972
      %v2006 = vunpack.c.h.b16 %v1972
      %v2007 = vunpack.c.l.b16 %v1973
      %v2008 = vunpack.c.h.b16 %v1973
      %v2009 = vunpack.c.l.b16 %v1974
      %v2010 = vunpack.c.h.b16 %v1974
      %v2011 = vunpack.c.l.b16 %v1975
      %v2012 = vunpack.c.h.b16 %v1975
      %v2013 = vunpack.c.l.b16 %v1976
      %v2014 = vunpack.c.h.b16 %v1976
      %v2015 = vunpack.c.l.b16 %v1977
      %v2016 = vunpack.c.h.b16 %v1977
      %v2017 = vunpack.c.l.b16 %v1978
      %v2018 = vunpack.c.h.b16 %v1978
      %v2019 = vunpack.c.l.b16 %v1979
      %v2020 = vunpack.c.h.b16 %v1979
      %v2021 = vunpack.c.l.b16 %v1980
      %v2022 = vunpack.c.h.b16 %v1980
      %v2023 = vunpack.c.l.b16 %v1981
      %v2024 = vunpack.c.h.b16 %v1981
      %v2025 = vunpack.c.l.b16 %v1982
      %v2026 = vunpack.c.h.b16 %v1982
      %v2027 = vunpack.c.l.b16 %v1983
      %v2028 = vunpack.c.h.b16 %v1983
      %v2029 = vunpack.c.l.b16 %v1984
      %v2030 = vunpack.c.h.b16 %v1984
      %v2031 = vunpack.c.l.b16 %v1985
      %v2032 = vunpack.c.h.b16 %v1985
      %v2033 = vunpack.c.l.b16 %v1986
      %v2034 = vunpack.c.h.b16 %v1986
      %v2035 = vpack.c.b16 %v2005, %v2003
      %v2036 = vpack.c.b16 %v2006, %v2004
      %v2037 = vpack.c.b16 %v2009, %v2007
      %v2038 = vpack.c.b16 %v2010, %v2008
      %v2039 = vpack.c.b16 %v2013, %v2011
      %v2040 = vpack.c.b16 %v2014, %v2012
      %v2041 = vpack.c.b16 %v2017, %v2015
      %v2042 = vpack.c.b16 %v2018, %v2016
      %v2043 = vpack.c.b16 %v2021, %v2019
      %v2044 = vpack.c.b16 %v2022, %v2020
      %v2045 = vpack.c.b16 %v2025, %v2023
      %v2046 = vpack.c.b16 %v2026, %v2024
      %v2047 = vpack.c.b16 %v2029, %v2027
      %v2048 = vpack.c.b16 %v2030, %v2028
      %v2049 = vpack.c.b16 %v2033, %v2031
      %v2050 = vpack.c.b16 %v2034, %v2032
      %2067 = vmatprep.subr.bf16.mxu0 %v2036
      %2068 = vmatpush1.bf16.msra.mxu0 %v2035
      %2069 = vmatprep.subr.bf16.mxu0 %v2038
      %2070 = vmatpush1.bf16.msra.mxu0 %v2037
      %2071 = vmatprep.subr.bf16.mxu0 %v2040
      %2072 = vmatpush1.bf16.msra.mxu0 %v2039
      %2073 = vmatprep.subr.bf16.mxu0 %v2042
      %2074 = vmatpush1.bf16.msra.mxu0 %v2041
      %2075 = vmatprep.subr.bf16.mxu0 %v2044
      %2076 = vmatpush1.bf16.msra.mxu0 %v2043
      %2077 = vmatprep.subr.bf16.mxu0 %v2046
      %2078 = vmatpush1.bf16.msra.mxu0 %v2045
      %2079 = vmatprep.subr.bf16.mxu0 %v2048
      %2080 = vmatpush1.bf16.msra.mxu0 %v2047
      %2081 = vmatprep.subr.bf16.mxu0 %v2050
      %2082 = vmatpush1.bf16.msra.mxu0 %v2049
      %2083 = vmatprep.subr.bf16.mxu0 0
      %2084 = vmatpush1.bf16.msra.mxu0 0
      %2085 = vmatprep.subr.bf16.mxu0 0
      %2086 = vmatpush1.bf16.msra.mxu0 0
      %2087 = vmatprep.subr.bf16.mxu0 0
      %2088 = vmatpush1.bf16.msra.mxu0 0
      %2089 = vmatprep.subr.bf16.mxu0 0
      %2090 = vmatpush1.bf16.msra.mxu0 0
      %2091 = vmatprep.subr.bf16.mxu0 0
      %2092 = vmatpush1.bf16.msra.mxu0 0
      %2093 = vmatprep.subr.bf16.mxu0 0
      %2094 = vmatpush1.bf16.msra.mxu0 0
      %2095 = vmatprep.subr.bf16.mxu0 0
      %2096 = vmatpush1.bf16.msra.mxu0 0
      %2097 = vmatprep.subr.bf16.mxu0 0
      %2098 = vmatpush1.bf16.msra.mxu0 0
      %2099 = vmatprep.mubr.bf16.mxu0 0
      %2100 = vmatmul.mubr.bf16.gmra.mrb[0].mxu0 %v1963
      %v2101 = vpop.f32.mrb[0].mxu0
      %v2102 = vadd.f32 0.0, %v2101
      %v2103 = vpop.f32.mrb[0].mxu0
      %v2104 = vadd.f32 0.0, %v2103
      %v2105 = vpop.f32.mrb[0].mxu0
      %v2106 = vadd.f32 0.0, %v2105
      %v2107 = vpop.f32.mrb[0].mxu0
      %v2108 = vadd.f32 0.0, %v2107
      %2109 = vmatprep.mubr.bf16.mxu0 0
      %2110 = vmatmul.mubr.bf16.gmra.mrb[0].mxu0 %v1964
      %v2111 = vpop.f32.mrb[0].mxu0
      %v2112 = vadd.f32 0.0, %v2111
      %v2113 = vpop.f32.mrb[0].mxu0
      %v2114 = vadd.f32 0.0, %v2113
      %v2115 = vpop.f32.mrb[0].mxu0
      %v2116 = vadd.f32 0.0, %v2115
      %v2117 = vpop.f32.mrb[0].mxu0
      %v2118 = vadd.f32 0.0, %v2117
      %2119 = vmatprep.mubr.bf16.mxu0 0
      %2120 = vmatmul.mubr.bf16.gmra.mrb[0].mxu0 %v1965
      %v2121 = vpop.f32.mrb[0].mxu0
      %v2122 = vadd.f32 0.0, %v2121
      %v2123 = vpop.f32.mrb[0].mxu0
      %v2124 = vadd.f32 0.0, %v2123
      %v2125 = vpop.f32.mrb[0].mxu0
      %v2126 = vadd.f32 0.0, %v2125
      %v2127 = vpop.f32.mrb[0].mxu0
      %v2128 = vadd.f32 0.0, %v2127
      %2129 = vmatprep.mubr.bf16.mxu0 0
      %2130 = vmatmul.mubr.bf16.gmra.mrb[0].mxu0 %v1966
      %v2131 = vpop.f32.mrb[0].mxu0
      %v2132 = vadd.f32 0.0, %v2131
      %v2133 = vpop.f32.mrb[0].mxu0
      %v2134 = vadd.f32 0.0, %v2133
      %v2135 = vpop.f32.mrb[0].mxu0
      %v2136 = vadd.f32 0.0, %v2135
      %v2137 = vpop.f32.mrb[0].mxu0
      %v2138 = vadd.f32 0.0, %v2137
      %2139 = vmatprep.mubr.bf16.mxu0 0
      %2140 = vmatmul.mubr.bf16.gmra.mrb[0].mxu0 %v1967
      %v2141 = vpop.f32.mrb[0].mxu0
      %v2142 = vadd.f32 0.0, %v2141
      %v2143 = vpop.f32.mrb[0].mxu0
      %v2144 = vadd.f32 0.0, %v2143
      %v2145 = vpop.f32.mrb[0].mxu0
      %v2146 = vadd.f32 0.0, %v2145
      %v2147 = vpop.f32.mrb[0].mxu0
      %v2148 = vadd.f32 0.0, %v2147
      %2149 = vmatprep.mubr.bf16.mxu0 0
      %2150 = vmatmul.mubr.bf16.gmra.mrb[0].mxu0 %v1968
      %v2151 = vpop.f32.mrb[0].mxu0
      %v2152 = vadd.f32 0.0, %v2151
      %v2153 = vpop.f32.mrb[0].mxu0
      %v2154 = vadd.f32 0.0, %v2153
      %v2155 = vpop.f32.mrb[0].mxu0
      %v2156 = vadd.f32 0.0, %v2155
      %v2157 = vpop.f32.mrb[0].mxu0
      %v2158 = vadd.f32 0.0, %v2157
      %2159 = vmatprep.mubr.bf16.mxu0 0
      %2160 = vmatmul.mubr.bf16.gmra.mrb[0].mxu0 %v1969
      %v2161 = vpop.f32.mrb[0].mxu0
      %v2162 = vadd.f32 0.0, %v2161
      %v2163 = vpop.f32.mrb[0].mxu0
      %v2164 = vadd.f32 0.0, %v2163
      %v2165 = vpop.f32.mrb[0].mxu0
      %v2166 = vadd.f32 0.0, %v2165
      %v2167 = vpop.f32.mrb[0].mxu0
      %v2168 = vadd.f32 0.0, %v2167
      %2169 = vmatprep.mubr.bf16.mxu0 0
      %2170 = vmatmul.mubr.bf16.gmra.mrb[0].mxu0 %v1970
      %v2171 = vpop.f32.mrb[0].mxu0
      %v2172 = vadd.f32 0.0, %v2171
      %v2173 = vpop.f32.mrb[0].mxu0
      %v2174 = vadd.f32 0.0, %v2173
      %v2175 = vpop.f32.mrb[0].mxu0
      %v2176 = vadd.f32 0.0, %v2175
      %v2177 = vpop.f32.mrb[0].mxu0
      %v2178 = vadd.f32 0.0, %v2177
      %2179 = vdwg.mxu0
      %v2180 = vadd.f32 %v1931, %v2102
      %v2181 = vadd.f32 %v1932, %v2104
      %v2182 = vadd.f32 %v1933, %v2106
      %v2183 = vadd.f32 %v1934, %v2108
      %v2184 = vadd.f32 %v1935, %v2112
      %v2185 = vadd.f32 %v1936, %v2114
      %v2186 = vadd.f32 %v1937, %v2116
      %v2187 = vadd.f32 %v1938, %v2118
      %v2188 = vadd.f32 %v1939, %v2122
      %v2189 = vadd.f32 %v1940, %v2124
      %v2190 = vadd.f32 %v1941, %v2126
      %v2191 = vadd.f32 %v1942, %v2128
      %v2192 = vadd.f32 %v1943, %v2132
      %v2193 = vadd.f32 %v1944, %v2134
      %v2194 = vadd.f32 %v1945, %v2136
      %v2195 = vadd.f32 %v1946, %v2138
      %v2196 = vadd.f32 %v1947, %v2142
      %v2197 = vadd.f32 %v1948, %v2144
      %v2198 = vadd.f32 %v1949, %v2146
      %v2199 = vadd.f32 %v1950, %v2148
      %v2200 = vadd.f32 %v1951, %v2152
      %v2201 = vadd.f32 %v1952, %v2154
      %v2202 = vadd.f32 %v1953, %v2156
      %v2203 = vadd.f32 %v1954, %v2158
      %v2204 = vadd.f32 %v1955, %v2162
      %v2205 = vadd.f32 %v1956, %v2164
      %v2206 = vadd.f32 %v1957, %v2166
      %v2207 = vadd.f32 %v1958, %v2168
      %v2208 = vadd.f32 %v1959, %v2172
      %v2209 = vadd.f32 %v1960, %v2174
      %v2210 = vadd.f32 %v1961, %v2176
      %v2211 = vadd.f32 %v1962, %v2178
      %2212 = vst [vmem:[#allocation2] sm:$0xff] %v2180
      %2213 = vst [vmem:[#allocation2 + $0x8] sm:$0xff] %v2181
      %2214 = vst [vmem:[#allocation2 + $0x10] sm:$0xff] %v2182
      %2215 = vst [vmem:[#allocation2 + $0x18] sm:$0xff] %v2183
      %2216 = vst [vmem:[#allocation2 + $0x20] sm:$0xff] %v2184
      %2217 = vst [vmem:[#allocation2 + $0x28] sm:$0xff] %v2185
      %2218 = vst [vmem:[#allocation2 + $0x30] sm:$0xff] %v2186
      %2219 = vst [vmem:[#allocation2 + $0x38] sm:$0xff] %v2187
      %2220 = vst [vmem:[#allocation2 + $0x40] sm:$0xff] %v2188
      %2221 = vst [vmem:[#allocation2 + $0x48] sm:$0xff] %v2189
      %2222 = vst [vmem:[#allocation2 + $0x50] sm:$0xff] %v2190
      %2223 = vst [vmem:[#allocation2 + $0x58] sm:$0xff] %v2191
      %2224 = vst [vmem:[#allocation2 + $0x60] sm:$0xff] %v2192
      %2225 = vst [vmem:[#allocation2 + $0x68] sm:$0xff] %v2193
      %2226 = vst [vmem:[#allocation2 + $0x70] sm:$0xff] %v2194
      %2227 = vst [vmem:[#allocation2 + $0x78] sm:$0xff] %v2195
      %2228 = vst [vmem:[#allocation2 + $0x80] sm:$0xff] %v2196
      %2229 = vst [vmem:[#allocation2 + $0x88] sm:$0xff] %v2197
      %2230 = vst [vmem:[#allocation2 + $0x90] sm:$0xff] %v2198
      %2231 = vst [vmem:[#allocation2 + $0x98] sm:$0xff] %v2199
      %2232 = vst [vmem:[#allocation2 + $0xa0] sm:$0xff] %v2200
      %2233 = vst [vmem:[#allocation2 + $0xa8] sm:$0xff] %v2201
      %2234 = vst [vmem:[#allocation2 + $0xb0] sm:$0xff] %v2202
      %2235 = vst [vmem:[#allocation2 + $0xb8] sm:$0xff] %v2203
      %2236 = vst [vmem:[#allocation2 + $0xc0] sm:$0xff] %v2204
      %2237 = vst [vmem:[#allocation2 + $0xc8] sm:$0xff] %v2205
      %2238 = vst [vmem:[#allocation2 + $0xd0] sm:$0xff] %v2206
      %2239 = vst [vmem:[#allocation2 + $0xd8] sm:$0xff] %v2207
      %2240 = vst [vmem:[#allocation2 + $0xe0] sm:$0xff] %v2208
      %2241 = vst [vmem:[#allocation2 + $0xe8] sm:$0xff] %v2209
      %2242 = vst [vmem:[#allocation2 + $0xf0] sm:$0xff] %v2210
      %2243 = vst [vmem:[#allocation2 + $0xf8] sm:$0xff] %v2211
      %p2244 = scmp.eq.s32.totalorder %s31, 1
      // Predicated region
      $region77: #{encoder_forward.4} parent=71 // pred_check
        %p2245 = pneg %p2244
      $region78: #{encoder_forward.4} parent=71 // pred_check_branch
        %2247 = sbr.rel (%p2245) target = $region80
      $region79: #{encoder_forward.4} parent=71 // pred_region
        %v2248 = vld [vmem:[#allocation2] sm:$0xff]
        %v2249 = vld [vmem:[#allocation2 + $0x8] sm:$0xff]
        %v2250 = vld [vmem:[#allocation2 + $0x10] sm:$0xff]
        %v2251 = vld [vmem:[#allocation2 + $0x18] sm:$0xff]
        %v2252 = vld [vmem:[#allocation2 + $0x20] sm:$0xff]
        %v2253 = vld [vmem:[#allocation2 + $0x28] sm:$0xff]
        %v2254 = vld [vmem:[#allocation2 + $0x30] sm:$0xff]
        %v2255 = vld [vmem:[#allocation2 + $0x38] sm:$0xff]
        %v2256 = vld [vmem:[#allocation2 + $0x40] sm:$0xff]
        %v2257 = vld [vmem:[#allocation2 + $0x48] sm:$0xff]
        %v2258 = vld [vmem:[#allocation2 + $0x50] sm:$0xff]
        %v2259 = vld [vmem:[#allocation2 + $0x58] sm:$0xff]
        %v2260 = vld [vmem:[#allocation2 + $0x60] sm:$0xff]
        %v2261 = vld [vmem:[#allocation2 + $0x68] sm:$0xff]
        %v2262 = vld [vmem:[#allocation2 + $0x70] sm:$0xff]
        %v2263 = vld [vmem:[#allocation2 + $0x78] sm:$0xff]
        %v2264 = vld [vmem:[#allocation2 + $0x80] sm:$0xff]
        %v2265 = vld [vmem:[#allocation2 + $0x88] sm:$0xff]
        %v2266 = vld [vmem:[#allocation2 + $0x90] sm:$0xff]
        %v2267 = vld [vmem:[#allocation2 + $0x98] sm:$0xff]
        %v2268 = vld [vmem:[#allocation2 + $0xa0] sm:$0xff]
        %v2269 = vld [vmem:[#allocation2 + $0xa8] sm:$0xff]
        %v2270 = vld [vmem:[#allocation2 + $0xb0] sm:$0xff]
        %v2271 = vld [vmem:[#allocation2 + $0xb8] sm:$0xff]
        %v2272 = vld [vmem:[#allocation2 + $0xc0] sm:$0xff]
        %v2273 = vld [vmem:[#allocation2 + $0xc8] sm:$0xff]
        %v2274 = vld [vmem:[#allocation2 + $0xd0] sm:$0xff]
        %v2275 = vld [vmem:[#allocation2 + $0xd8] sm:$0xff]
        %v2276 = vld [vmem:[#allocation2 + $0xe0] sm:$0xff]
        %v2277 = vld [vmem:[#allocation2 + $0xe8] sm:$0xff]
        %v2278 = vld [vmem:[#allocation2 + $0xf0] sm:$0xff]
        %v2279 = vld [vmem:[#allocation2 + $0xf8] sm:$0xff]
        %v2280 = vadd.f32 %v2248, %v2249
        %2281 = vadd.xlane.f32.xlu0 %v2280
        %v2282 = vpop.xlane.xlu0 %2281
        %v2283 = vadd.f32 %v2250, %v2251
        %2284 = vadd.xlane.f32.xlu0 %v2283
        %v2285 = vpop.xlane.xlu0 %2284
        %v2286 = vadd.f32 %v2252, %v2253
        %2287 = vadd.xlane.f32.xlu0 %v2286
        %v2288 = vpop.xlane.xlu0 %2287
        %v2289 = vadd.f32 %v2254, %v2255
        %2290 = vadd.xlane.f32.xlu0 %v2289
        %v2291 = vpop.xlane.xlu0 %2290
        %v2292 = vadd.f32 %v2256, %v2257
        %2293 = vadd.xlane.f32.xlu0 %v2292
        %v2294 = vpop.xlane.xlu0 %2293
        %v2295 = vadd.f32 %v2258, %v2259
        %2296 = vadd.xlane.f32.xlu0 %v2295
        %v2297 = vpop.xlane.xlu0 %2296
        %v2298 = vadd.f32 %v2260, %v2261
        %2299 = vadd.xlane.f32.xlu0 %v2298
        %v2300 = vpop.xlane.xlu0 %2299
        %v2301 = vadd.f32 %v2262, %v2263
        %2302 = vadd.xlane.f32.xlu0 %v2301
        %v2303 = vpop.xlane.xlu0 %2302
        %v2304 = vadd.f32 %v2264, %v2265
        %2305 = vadd.xlane.f32.xlu0 %v2304
        %v2306 = vpop.xlane.xlu0 %2305
        %v2307 = vadd.f32 %v2266, %v2267
        %2308 = vadd.xlane.f32.xlu0 %v2307
        %v2309 = vpop.xlane.xlu0 %2308
        %v2310 = vadd.f32 %v2268, %v2269
        %2311 = vadd.xlane.f32.xlu0 %v2310
        %v2312 = vpop.xlane.xlu0 %2311
        %v2313 = vadd.f32 %v2270, %v2271
        %2314 = vadd.xlane.f32.xlu0 %v2313
        %v2315 = vpop.xlane.xlu0 %2314
        %v2316 = vadd.f32 %v2272, %v2273
        %2317 = vadd.xlane.f32.xlu0 %v2316
        %v2318 = vpop.xlane.xlu0 %2317
        %v2319 = vadd.f32 %v2274, %v2275
        %2320 = vadd.xlane.f32.xlu0 %v2319
        %v2321 = vpop.xlane.xlu0 %2320
        %v2322 = vadd.f32 %v2276, %v2277
        %2323 = vadd.xlane.f32.xlu0 %v2322
        %v2324 = vpop.xlane.xlu0 %2323
        %v2325 = vadd.f32 %v2278, %v2279
        %2326 = vadd.xlane.f32.xlu0 %v2325
        %v2327 = vpop.xlane.xlu0 %2326
        %v2328 = vrcp.pop 256.0
        %v2329 = vmul.f32 %v2282, %v2328
        %v2330 = vmul.f32 %v2285, %v2328
        %v2331 = vmul.f32 %v2288, %v2328
        %v2332 = vmul.f32 %v2291, %v2328
        %v2333 = vmul.f32 %v2294, %v2328
        %v2334 = vmul.f32 %v2297, %v2328
        %v2335 = vmul.f32 %v2300, %v2328
        %v2336 = vmul.f32 %v2303, %v2328
        %v2337 = vmul.f32 %v2306, %v2328
        %v2338 = vmul.f32 %v2309, %v2328
        %v2339 = vmul.f32 %v2312, %v2328
        %v2340 = vmul.f32 %v2315, %v2328
        %v2341 = vmul.f32 %v2318, %v2328
        %v2342 = vmul.f32 %v2321, %v2328
        %v2343 = vmul.f32 %v2324, %v2328
        %v2344 = vmul.f32 %v2327, %v2328
        %v2345 = vsub.f32 %v2248, %v2329
        %v2346 = vsub.f32 %v2249, %v2329
        %v2347 = vsub.f32 %v2250, %v2330
        %v2348 = vsub.f32 %v2251, %v2330
        %v2349 = vsub.f32 %v2252, %v2331
        %v2350 = vsub.f32 %v2253, %v2331
        %v2351 = vsub.f32 %v2254, %v2332
        %v2352 = vsub.f32 %v2255, %v2332
        %v2353 = vsub.f32 %v2256, %v2333
        %v2354 = vsub.f32 %v2257, %v2333
        %v2355 = vsub.f32 %v2258, %v2334
        %v2356 = vsub.f32 %v2259, %v2334
        %v2357 = vsub.f32 %v2260, %v2335
        %v2358 = vsub.f32 %v2261, %v2335
        %v2359 = vsub.f32 %v2262, %v2336
        %v2360 = vsub.f32 %v2263, %v2336
        %v2361 = vsub.f32 %v2264, %v2337
        %v2362 = vsub.f32 %v2265, %v2337
        %v2363 = vsub.f32 %v2266, %v2338
        %v2364 = vsub.f32 %v2267, %v2338
        %v2365 = vsub.f32 %v2268, %v2339
        %v2366 = vsub.f32 %v2269, %v2339
        %v2367 = vsub.f32 %v2270, %v2340
        %v2368 = vsub.f32 %v2271, %v2340
        %v2369 = vsub.f32 %v2272, %v2341
        %v2370 = vsub.f32 %v2273, %v2341
        %v2371 = vsub.f32 %v2274, %v2342
        %v2372 = vsub.f32 %v2275, %v2342
        %v2373 = vsub.f32 %v2276, %v2343
        %v2374 = vsub.f32 %v2277, %v2343
        %v2375 = vsub.f32 %v2278, %v2344
        %v2376 = vsub.f32 %v2279, %v2344
        %v2377 = vmul.f32 %v2345, %v2345
        %v2378 = vmul.f32 %v2346, %v2346
        %v2379 = vmul.f32 %v2347, %v2347
        %v2380 = vmul.f32 %v2348, %v2348
        %v2381 = vmul.f32 %v2349, %v2349
        %v2382 = vmul.f32 %v2350, %v2350
        %v2383 = vmul.f32 %v2351, %v2351
        %v2384 = vmul.f32 %v2352, %v2352
        %v2385 = vmul.f32 %v2353, %v2353
        %v2386 = vmul.f32 %v2354, %v2354
        %v2387 = vmul.f32 %v2355, %v2355
        %v2388 = vmul.f32 %v2356, %v2356
        %v2389 = vmul.f32 %v2357, %v2357
        %v2390 = vmul.f32 %v2358, %v2358
        %v2391 = vmul.f32 %v2359, %v2359
        %v2392 = vmul.f32 %v2360, %v2360
        %v2393 = vmul.f32 %v2361, %v2361
        %v2394 = vmul.f32 %v2362, %v2362
        %v2395 = vmul.f32 %v2363, %v2363
        %v2396 = vmul.f32 %v2364, %v2364
        %v2397 = vmul.f32 %v2365, %v2365
        %v2398 = vmul.f32 %v2366, %v2366
        %v2399 = vmul.f32 %v2367, %v2367
        %v2400 = vmul.f32 %v2368, %v2368
        %v2401 = vmul.f32 %v2369, %v2369
        %v2402 = vmul.f32 %v2370, %v2370
        %v2403 = vmul.f32 %v2371, %v2371
        %v2404 = vmul.f32 %v2372, %v2372
        %v2405 = vmul.f32 %v2373, %v2373
        %v2406 = vmul.f32 %v2374, %v2374
        %v2407 = vmul.f32 %v2375, %v2375
        %v2408 = vmul.f32 %v2376, %v2376
        %v2409 = vadd.f32 %v2377, %v2378
        %2410 = vadd.xlane.f32.xlu0 %v2409
        %v2411 = vpop.xlane.xlu0 %2410
        %v2412 = vadd.f32 %v2379, %v2380
        %2413 = vadd.xlane.f32.xlu0 %v2412
        %v2414 = vpop.xlane.xlu0 %2413
        %v2415 = vadd.f32 %v2381, %v2382
        %2416 = vadd.xlane.f32.xlu0 %v2415
        %v2417 = vpop.xlane.xlu0 %2416
        %v2418 = vadd.f32 %v2383, %v2384
        %2419 = vadd.xlane.f32.xlu0 %v2418
        %v2420 = vpop.xlane.xlu0 %2419
        %v2421 = vadd.f32 %v2385, %v2386
        %2422 = vadd.xlane.f32.xlu0 %v2421
        %v2423 = vpop.xlane.xlu0 %2422
        %v2424 = vadd.f32 %v2387, %v2388
        %2425 = vadd.xlane.f32.xlu0 %v2424
        %v2426 = vpop.xlane.xlu0 %2425
        %v2427 = vadd.f32 %v2389, %v2390
        %2428 = vadd.xlane.f32.xlu0 %v2427
        %v2429 = vpop.xlane.xlu0 %2428
        %v2430 = vadd.f32 %v2391, %v2392
        %2431 = vadd.xlane.f32.xlu0 %v2430
        %v2432 = vpop.xlane.xlu0 %2431
        %v2433 = vadd.f32 %v2393, %v2394
        %2434 = vadd.xlane.f32.xlu0 %v2433
        %v2435 = vpop.xlane.xlu0 %2434
        %v2436 = vadd.f32 %v2395, %v2396
        %2437 = vadd.xlane.f32.xlu0 %v2436
        %v2438 = vpop.xlane.xlu0 %2437
        %v2439 = vadd.f32 %v2397, %v2398
        %2440 = vadd.xlane.f32.xlu0 %v2439
        %v2441 = vpop.xlane.xlu0 %2440
        %v2442 = vadd.f32 %v2399, %v2400
        %2443 = vadd.xlane.f32.xlu0 %v2442
        %v2444 = vpop.xlane.xlu0 %2443
        %v2445 = vadd.f32 %v2401, %v2402
        %2446 = vadd.xlane.f32.xlu0 %v2445
        %v2447 = vpop.xlane.xlu0 %2446
        %v2448 = vadd.f32 %v2403, %v2404
        %2449 = vadd.xlane.f32.xlu0 %v2448
        %v2450 = vpop.xlane.xlu0 %2449
        %v2451 = vadd.f32 %v2405, %v2406
        %2452 = vadd.xlane.f32.xlu0 %v2451
        %v2453 = vpop.xlane.xlu0 %2452
        %v2454 = vadd.f32 %v2407, %v2408
        %2455 = vadd.xlane.f32.xlu0 %v2454
        %v2456 = vpop.xlane.xlu0 %2455
        %v2457 = vmul.f32 %v2411, %v2328
        %v2458 = vmul.f32 %v2414, %v2328
        %v2459 = vmul.f32 %v2417, %v2328
        %v2460 = vmul.f32 %v2420, %v2328
        %v2461 = vmul.f32 %v2423, %v2328
        %v2462 = vmul.f32 %v2426, %v2328
        %v2463 = vmul.f32 %v2429, %v2328
        %v2464 = vmul.f32 %v2432, %v2328
        %v2465 = vmul.f32 %v2435, %v2328
        %v2466 = vmul.f32 %v2438, %v2328
        %v2467 = vmul.f32 %v2441, %v2328
        %v2468 = vmul.f32 %v2444, %v2328
        %v2469 = vmul.f32 %v2447, %v2328
        %v2470 = vmul.f32 %v2450, %v2328
        %v2471 = vmul.f32 %v2453, %v2328
        %v2472 = vmul.f32 %v2456, %v2328
        %v2473 = vadd.f32 %v2457, 1e-05
        %v2474 = vadd.f32 %v2458, 1e-05
        %v2475 = vadd.f32 %v2459, 1e-05
        %v2476 = vadd.f32 %v2460, 1e-05
        %v2477 = vadd.f32 %v2461, 1e-05
        %v2478 = vadd.f32 %v2462, 1e-05
        %v2479 = vadd.f32 %v2463, 1e-05
        %v2480 = vadd.f32 %v2464, 1e-05
        %v2481 = vadd.f32 %v2465, 1e-05
        %v2482 = vadd.f32 %v2466, 1e-05
        %v2483 = vadd.f32 %v2467, 1e-05
        %v2484 = vadd.f32 %v2468, 1e-05
        %v2485 = vadd.f32 %v2469, 1e-05
        %v2486 = vadd.f32 %v2470, 1e-05
        %v2487 = vadd.f32 %v2471, 1e-05
        %v2488 = vadd.f32 %v2472, 1e-05
        %v2489 = vrsqrt.pop %v2473
        %v2490 = vrsqrt.pop %v2474
        %v2491 = vrsqrt.pop %v2475
        %v2492 = vrsqrt.pop %v2476
        %v2493 = vrsqrt.pop %v2477
        %v2494 = vrsqrt.pop %v2478
        %v2495 = vrsqrt.pop %v2479
        %v2496 = vrsqrt.pop %v2480
        %v2497 = vrsqrt.pop %v2481
        %v2498 = vrsqrt.pop %v2482
        %v2499 = vrsqrt.pop %v2483
        %v2500 = vrsqrt.pop %v2484
        %v2501 = vrsqrt.pop %v2485
        %v2502 = vrsqrt.pop %v2486
        %v2503 = vrsqrt.pop %v2487
        %v2504 = vrsqrt.pop %v2488
        %v2505 = vmul.f32 %v2345, %v2489
        %v2506 = vmul.f32 %v2346, %v2489
        %v2507 = vmul.f32 %v2347, %v2490
        %v2508 = vmul.f32 %v2348, %v2490
        %v2509 = vmul.f32 %v2349, %v2491
        %v2510 = vmul.f32 %v2350, %v2491
        %v2511 = vmul.f32 %v2351, %v2492
        %v2512 = vmul.f32 %v2352, %v2492
        %v2513 = vmul.f32 %v2353, %v2493
        %v2514 = vmul.f32 %v2354, %v2493
        %v2515 = vmul.f32 %v2355, %v2494
        %v2516 = vmul.f32 %v2356, %v2494
        %v2517 = vmul.f32 %v2357, %v2495
        %v2518 = vmul.f32 %v2358, %v2495
        %v2519 = vmul.f32 %v2359, %v2496
        %v2520 = vmul.f32 %v2360, %v2496
        %v2521 = vmul.f32 %v2361, %v2497
        %v2522 = vmul.f32 %v2362, %v2497
        %v2523 = vmul.f32 %v2363, %v2498
        %v2524 = vmul.f32 %v2364, %v2498
        %v2525 = vmul.f32 %v2365, %v2499
        %v2526 = vmul.f32 %v2366, %v2499
        %v2527 = vmul.f32 %v2367, %v2500
        %v2528 = vmul.f32 %v2368, %v2500
        %v2529 = vmul.f32 %v2369, %v2501
        %v2530 = vmul.f32 %v2370, %v2501
        %v2531 = vmul.f32 %v2371, %v2502
        %v2532 = vmul.f32 %v2372, %v2502
        %v2533 = vmul.f32 %v2373, %v2503
        %v2534 = vmul.f32 %v2374, %v2503
        %v2535 = vmul.f32 %v2375, %v2504
        %v2536 = vmul.f32 %v2376, %v2504
        %v2537 = vld [vmem:[%s11] sm:$0x3]
        %v2539 = vlaneseq
        %v2540 = vshrl.u32 %v2539, 7
        %v2541 = vsub.s32 0, %v2540
        %v2542 = vrot.slane %v2537, %v2541
        %v2543 = vlaneseq
        %v2544 = vshrl.u32 %v2543, 7
        %v2545 = vsub.s32 1, %v2544
        %v2546 = vrot.slane %v2537, %v2545
        %v2549 = vmul.f32 %v2505, %v2542
        %v2550 = vmul.f32 %v2506, %v2546
        %v2551 = vmul.f32 %v2507, %v2542
        %v2552 = vmul.f32 %v2508, %v2546
        %v2553 = vmul.f32 %v2509, %v2542
        %v2554 = vmul.f32 %v2510, %v2546
        %v2555 = vmul.f32 %v2511, %v2542
        %v2556 = vmul.f32 %v2512, %v2546
        %v2557 = vmul.f32 %v2513, %v2542
        %v2558 = vmul.f32 %v2514, %v2546
        %v2559 = vmul.f32 %v2515, %v2542
        %v2560 = vmul.f32 %v2516, %v2546
        %v2561 = vmul.f32 %v2517, %v2542
        %v2562 = vmul.f32 %v2518, %v2546
        %v2563 = vmul.f32 %v2519, %v2542
        %v2564 = vmul.f32 %v2520, %v2546
        %v2565 = vmul.f32 %v2521, %v2542
        %v2566 = vmul.f32 %v2522, %v2546
        %v2567 = vmul.f32 %v2523, %v2542
        %v2568 = vmul.f32 %v2524, %v2546
        %v2569 = vmul.f32 %v2525, %v2542
        %v2570 = vmul.f32 %v2526, %v2546
        %v2571 = vmul.f32 %v2527, %v2542
        %v2572 = vmul.f32 %v2528, %v2546
        %v2573 = vmul.f32 %v2529, %v2542
        %v2574 = vmul.f32 %v2530, %v2546
        %v2575 = vmul.f32 %v2531, %v2542
        %v2576 = vmul.f32 %v2532, %v2546
        %v2577 = vmul.f32 %v2533, %v2542
        %v2578 = vmul.f32 %v2534, %v2546
        %v2579 = vmul.f32 %v2535, %v2542
        %v2580 = vmul.f32 %v2536, %v2546
        %v2581 = vld [vmem:[%s12] sm:$0x3]
        %v2583 = vlaneseq
        %v2584 = vshrl.u32 %v2583, 7
        %v2585 = vsub.s32 0, %v2584
        %v2586 = vrot.slane %v2581, %v2585
        %v2587 = vlaneseq
        %v2588 = vshrl.u32 %v2587, 7
        %v2589 = vsub.s32 1, %v2588
        %v2590 = vrot.slane %v2581, %v2589
        %v2593 = vadd.f32 %v2549, %v2586
        %v2594 = vadd.f32 %v2550, %v2590
        %v2595 = vadd.f32 %v2551, %v2586
        %v2596 = vadd.f32 %v2552, %v2590
        %v2597 = vadd.f32 %v2553, %v2586
        %v2598 = vadd.f32 %v2554, %v2590
        %v2599 = vadd.f32 %v2555, %v2586
        %v2600 = vadd.f32 %v2556, %v2590
        %v2601 = vadd.f32 %v2557, %v2586
        %v2602 = vadd.f32 %v2558, %v2590
        %v2603 = vadd.f32 %v2559, %v2586
        %v2604 = vadd.f32 %v2560, %v2590
        %v2605 = vadd.f32 %v2561, %v2586
        %v2606 = vadd.f32 %v2562, %v2590
        %v2607 = vadd.f32 %v2563, %v2586
        %v2608 = vadd.f32 %v2564, %v2590
        %v2609 = vadd.f32 %v2565, %v2586
        %v2610 = vadd.f32 %v2566, %v2590
        %v2611 = vadd.f32 %v2567, %v2586
        %v2612 = vadd.f32 %v2568, %v2590
        %v2613 = vadd.f32 %v2569, %v2586
        %v2614 = vadd.f32 %v2570, %v2590
        %v2615 = vadd.f32 %v2571, %v2586
        %v2616 = vadd.f32 %v2572, %v2590
        %v2617 = vadd.f32 %v2573, %v2586
        %v2618 = vadd.f32 %v2574, %v2590
        %v2619 = vadd.f32 %v2575, %v2586
        %v2620 = vadd.f32 %v2576, %v2590
        %v2621 = vadd.f32 %v2577, %v2586
        %v2622 = vadd.f32 %v2578, %v2590
        %v2623 = vadd.f32 %v2579, %v2586
        %v2624 = vadd.f32 %v2580, %v2590
        %2625 = vst [vmem:[%s646] sm:$0xff] %v2593
        %2626 = vst [vmem:[%s646 + $0x8] sm:$0xff] %v2594
        %2627 = vst [vmem:[%s646 + $0x10] sm:$0xff] %v2595
        %2628 = vst [vmem:[%s646 + $0x18] sm:$0xff] %v2596
        %2629 = vst [vmem:[%s646 + $0x20] sm:$0xff] %v2597
        %2630 = vst [vmem:[%s646 + $0x28] sm:$0xff] %v2598
        %2631 = vst [vmem:[%s646 + $0x30] sm:$0xff] %v2599
        %2632 = vst [vmem:[%s646 + $0x38] sm:$0xff] %v2600
        %2633 = vst [vmem:[%s646 + $0x40] sm:$0xff] %v2601
        %2634 = vst [vmem:[%s646 + $0x48] sm:$0xff] %v2602
        %2635 = vst [vmem:[%s646 + $0x50] sm:$0xff] %v2603
        %2636 = vst [vmem:[%s646 + $0x58] sm:$0xff] %v2604
        %2637 = vst [vmem:[%s646 + $0x60] sm:$0xff] %v2605
        %2638 = vst [vmem:[%s646 + $0x68] sm:$0xff] %v2606
        %2639 = vst [vmem:[%s646 + $0x70] sm:$0xff] %v2607
        %2640 = vst [vmem:[%s646 + $0x78] sm:$0xff] %v2608
        %2641 = vst [vmem:[%s646 + $0x80] sm:$0xff] %v2609
        %2642 = vst [vmem:[%s646 + $0x88] sm:$0xff] %v2610
        %2643 = vst [vmem:[%s646 + $0x90] sm:$0xff] %v2611
        %2644 = vst [vmem:[%s646 + $0x98] sm:$0xff] %v2612
        %2645 = vst [vmem:[%s646 + $0xa0] sm:$0xff] %v2613
        %2646 = vst [vmem:[%s646 + $0xa8] sm:$0xff] %v2614
        %2647 = vst [vmem:[%s646 + $0xb0] sm:$0xff] %v2615
        %2648 = vst [vmem:[%s646 + $0xb8] sm:$0xff] %v2616
        %2649 = vst [vmem:[%s646 + $0xc0] sm:$0xff] %v2617
        %2650 = vst [vmem:[%s646 + $0xc8] sm:$0xff] %v2618
        %2651 = vst [vmem:[%s646 + $0xd0] sm:$0xff] %v2619
        %2652 = vst [vmem:[%s646 + $0xd8] sm:$0xff] %v2620
        %2653 = vst [vmem:[%s646 + $0xe0] sm:$0xff] %v2621
        %2654 = vst [vmem:[%s646 + $0xe8] sm:$0xff] %v2622
        %2655 = vst [vmem:[%s646 + $0xf0] sm:$0xff] %v2623
        %2656 = vst [vmem:[%s646 + $0xf8] sm:$0xff] %v2624
      $region80: #{encoder_forward.4} parent=71 // pred_fallthru
        _
      %s2657 = smul.u32 16, %s30
      %p2658 = scmp.lt.s32.totalorder %s29, 1
      %s2659 = scalar_select %p2658, %s29, 1
      %p2660 = scmp.lt.s32.totalorder %s2657, 15
      %s2661 = scalar_select %p2660, %s2657, 15
      %s2662 = smul.addr %s2661, 2
      %s2663 = smul.addr %s2659, 32
      %s2664 = sadd.s32 %s2662, %s2663
      %s2665 = smul.addr %s2664, 8
      %s2666 = scalar_lea.vmem %s13, %s2665
      // Predicated region
      $region81: #{encoder_forward.4} parent=71 // pred_check
        %p2667 = pneg %p388
      $region82: #{encoder_forward.4} parent=71 // pred_check_branch
        %2669 = sbr.rel (%p2667) target = $region84
      $region83: #{encoder_forward.4} parent=71 // pred_region
        %s2670 = smul.u32 16, %s30
      $region84: #{encoder_forward.4} parent=71 // pred_fallthru
        _
    $region72: #{encoder_forward.4} parent=5 // pred_fallthru
      _
    %p2671 = scmp.le.s32.totalorder 2, %s19
    // Predicated region
    $region85: #{encoder_forward.4} parent=5 // pred_check
      %p2672 = pneg %p2671
    $region86: #{encoder_forward.4} parent=5 // pred_check_branch
      %2674 = sbr.rel (%p2672) target = $region88
    $region87: #{encoder_forward.4} parent=5 // pred_region
      %s2675 = ssub.s32 %s19, 2
      // Predicated region
      $region89: #{encoder_forward.4} parent=87 // pred_check
        %p2676 = pneg %p394
      $region90: #{encoder_forward.4} parent=87 // pred_check_branch
        %2678 = sbr.rel (%p2676) target = $region92
      $region91: #{encoder_forward.4} parent=87 // pred_region
        %s2679 = smul.u32 16, %s33
        %p2680 = scmp.lt.s32.totalorder %s32, 1
        %s2681 = scalar_select %p2680, %s32, 1
        %p2682 = scmp.lt.s32.totalorder %s2679, 15
        %s2683 = scalar_select %p2682, %s2679, 15
        %s2684 = smul.addr %s2683, 2
        %s2685 = smul.addr %s2681, 32
        %s2686 = sadd.s32 %s2684, %s2685
        %s2687 = smul.addr %s2686, 8
        %s2688 = scalar_lea.vmem %s13, %s2687
      $region92: #{encoder_forward.4} parent=87 // pred_fallthru
        _
    $region88: #{encoder_forward.4} parent=5 // pred_fallthru
      _
  $region6: #{encoder_forward.4} parent=0 // loop_footer
    %s23 = sadd.s32 1, %s19
  $region7: #{encoder_forward.4} parent=0 // loop_footer_branch
    %18 = sbr.rel target = $region3
  $region8: #{encoder_forward.4} parent=0 // loop_exit
    _

// kernel: encoder_forward.5
$region0: #{encoder_forward.5}
  #allocation0 [shape = 'u32[]', space=smem, size = 0x4, offset = 0x4, fixed_abs, tag = 'smem constant byte address 0x4 - core index']
  #allocation1 [shape = 'u32[144,128]{1,0:T(1,128)}', space=vmem, size = 0x12000, scoped, tag = 'internal scratch']
  %s0 = inlined_call_operand.vmem [shape: f32[256,256], index: 0, kind: input, shape index: {}]
  %s1 = inlined_call_operand.vmem [shape: bf16[256,1024], index: 1, kind: input, shape index: {}]
  %s2 = inlined_call_operand.vmem [shape: f32[1,1024], index: 2, kind: input, shape index: {}]
  %s3 = inlined_call_operand.vmem [shape: bf16[1024,256], index: 3, kind: input, shape index: {}]
  %s4 = inlined_call_operand.vmem [shape: f32[1,256], index: 4, kind: input, shape index: {}]
  %s5 = inlined_call_operand.vmem [shape: f32[1,256], index: 5, kind: input, shape index: {}]
  %s6 = inlined_call_operand.vmem [shape: f32[1,256], index: 6, kind: input, shape index: {}]
  %s7 = inlined_call_operand.vmem [shape: f32[256,256], index: 7, kind: output, shape index: {}]
  %s8 = sld [smem:[#allocation0]]
  $region61: #{encoder_forward.5} parent=0
    _
  %s10 = ssub.s32 1, %s8
  %s11 = scalar_select 0, %s10, %s8
  loop: start=0, step=1, limit=4
  $region2: #{encoder_forward.5} parent=0 // loop_pre_header
    _
  $region3: #{encoder_forward.5} parent=0 // loop_header
    %s13 = sphi 0, %s17
    %p14 = scmp.ge.s32.totalorder %s13, 4
    %s23 = sphi 0, %s25
    %s26 = sphi 0, %s23
    %s27 = sphi 0, %s26
    %s43 = sphi 0, %s27
    %s47 = sphi 0, %s47
    %s49 = sphi 0, %s47
    %s50 = sphi 0, %s49
    %s64 = sphi 0, %s50
    %s68 = sphi 0, %s68
    %s70 = sphi 0, %s68
    %s71 = sphi 0, %s70
    %s85 = sphi 0, %s71
    %s89 = sphi 0, %s89
    %s91 = sphi 0, %s89
    %s92 = sphi 0, %s91
    %s106 = sphi 0, %s92
    %s110 = sphi 0, %s110
    %s112 = sphi 0, %s110
    %s113 = sphi 0, %s112
    %s127 = sphi 0, %s113
    %s131 = sphi 0, %s131
    %s133 = sphi 0, %s131
    %s134 = sphi 0, %s133
    %s148 = sphi 0, %s134
    %s152 = sphi 0, %s152
    %s154 = sphi 0, %s152
    %s155 = sphi 0, %s154
    %s169 = sphi 0, %s155
    %s175 = sphi 0, %s177
    %s178 = sphi 0, %s175
    %s179 = sphi 0, %s178
    %s195 = sphi 0, %s179
  $region4: #{encoder_forward.5} parent=0 // loop_header_branch
    %16 = sbr.rel (%p14) target = $region8
  $region5: #{encoder_forward.5} parent=0 // loop_body
    %s18 = ssub.s32 %s13, 1
    %s19 = ssub.s32 %s13, 2
    %s20 = sadd.s32 %s13, 1
    %s21 = ssub.s32 %s13, %s20
    %p22 = scmp.eq.s32.totalorder %s21, 0
    %s24 = sadd.s32 %s23, 1
    %s25 = scalar_select %p22, %s23, %s24
    %p28 = pneg %p22
    %p29 = scmp.eq.s32.totalorder %s13, 1
    %p30 = por %p28, %p29
    %p31 = scmp.ne.s32.totalorder %s23, %s26
    %p32 = scmp.eq.s32.totalorder %s13, 0
    %p33 = por %p31, %p32
    %p34 = scmp.ne.s32.totalorder %s23, %s26
    %p35 = scmp.eq.s32.totalorder %s18, 1
    %p36 = por %p34, %p35
    %p37 = scmp.ne.s32.totalorder %s26, %s27
    %p38 = scmp.eq.s32.totalorder %s18, 0
    %p39 = por %p37, %p38
    %p40 = scmp.ne.s32.totalorder %s26, %s27
    %p41 = scmp.eq.s32.totalorder %s19, 1
    %p42 = por %p40, %p41
    %p44 = scmp.ne.s32.totalorder %s27, %s43
    %p45 = scmp.eq.s32.totalorder %s19, 0
    %p46 = por %p44, %p45
    %s48 = sadd.s32 %s47, 1
    %p51 = scmp.eq.s32.totalorder %s13, 1
    %p52 = scmp.ne.s32.totalorder %s47, %s49
    %p53 = scmp.eq.s32.totalorder %s13, 0
    %p54 = por %p52, %p53
    %p55 = scmp.ne.s32.totalorder %s47, %s49
    %p56 = scmp.eq.s32.totalorder %s18, 1
    %p57 = por %p55, %p56
    %p58 = scmp.ne.s32.totalorder %s49, %s50
    %p59 = scmp.eq.s32.totalorder %s18, 0
    %p60 = por %p58, %p59
    %p61 = scmp.ne.s32.totalorder %s49, %s50
    %p62 = scmp.eq.s32.totalorder %s19, 1
    %p63 = por %p61, %p62
    %p65 = scmp.ne.s32.totalorder %s50, %s64
    %p66 = scmp.eq.s32.totalorder %s19, 0
    %p67 = por %p65, %p66
    %s69 = sadd.s32 %s68, 1
    %p72 = scmp.eq.s32.totalorder %s13, 1
    %p73 = scmp.ne.s32.totalorder %s68, %s70
    %p74 = scmp.eq.s32.totalorder %s13, 0
    %p75 = por %p73, %p74
    %p76 = scmp.ne.s32.totalorder %s68, %s70
    %p77 = scmp.eq.s32.totalorder %s18, 1
    %p78 = por %p76, %p77
    %p79 = scmp.ne.s32.totalorder %s70, %s71
    %p80 = scmp.eq.s32.totalorder %s18, 0
    %p81 = por %p79, %p80
    %p82 = scmp.ne.s32.totalorder %s70, %s71
    %p83 = scmp.eq.s32.totalorder %s19, 1
    %p84 = por %p82, %p83
    %p86 = scmp.ne.s32.totalorder %s71, %s85
    %p87 = scmp.eq.s32.totalorder %s19, 0
    %p88 = por %p86, %p87
    %s90 = sadd.s32 %s89, 1
    %p93 = scmp.eq.s32.totalorder %s13, 1
    %p94 = scmp.ne.s32.totalorder %s89, %s91
    %p95 = scmp.eq.s32.totalorder %s13, 0
    %p96 = por %p94, %p95
    %p97 = scmp.ne.s32.totalorder %s89, %s91
    %p98 = scmp.eq.s32.totalorder %s18, 1
    %p99 = por %p97, %p98
    %p100 = scmp.ne.s32.totalorder %s91, %s92
    %p101 = scmp.eq.s32.totalorder %s18, 0
    %p102 = por %p100, %p101
    %p103 = scmp.ne.s32.totalorder %s91, %s92
    %p104 = scmp.eq.s32.totalorder %s19, 1
    %p105 = por %p103, %p104
    %p107 = scmp.ne.s32.totalorder %s92, %s106
    %p108 = scmp.eq.s32.totalorder %s19, 0
    %p109 = por %p107, %p108
    %s111 = sadd.s32 %s110, 1
    %p114 = scmp.eq.s32.totalorder %s13, 1
    %p115 = scmp.ne.s32.totalorder %s110, %s112
    %p116 = scmp.eq.s32.totalorder %s13, 0
    %p117 = por %p115, %p116
    %p118 = scmp.ne.s32.totalorder %s110, %s112
    %p119 = scmp.eq.s32.totalorder %s18, 1
    %p120 = por %p118, %p119
    %p121 = scmp.ne.s32.totalorder %s112, %s113
    %p122 = scmp.eq.s32.totalorder %s18, 0
    %p123 = por %p121, %p122
    %p124 = scmp.ne.s32.totalorder %s112, %s113
    %p125 = scmp.eq.s32.totalorder %s19, 1
    %p126 = por %p124, %p125
    %p128 = scmp.ne.s32.totalorder %s113, %s127
    %p129 = scmp.eq.s32.totalorder %s19, 0
    %p130 = por %p128, %p129
    %s132 = sadd.s32 %s131, 1
    %p135 = scmp.eq.s32.totalorder %s13, 1
    %p136 = scmp.ne.s32.totalorder %s131, %s133
    %p137 = scmp.eq.s32.totalorder %s13, 0
    %p138 = por %p136, %p137
    %p139 = scmp.ne.s32.totalorder %s131, %s133
    %p140 = scmp.eq.s32.totalorder %s18, 1
    %p141 = por %p139, %p140
    %p142 = scmp.ne.s32.totalorder %s133, %s134
    %p143 = scmp.eq.s32.totalorder %s18, 0
    %p144 = por %p142, %p143
    %p145 = scmp.ne.s32.totalorder %s133, %s134
    %p146 = scmp.eq.s32.totalorder %s19, 1
    %p147 = por %p145, %p146
    %p149 = scmp.ne.s32.totalorder %s134, %s148
    %p150 = scmp.eq.s32.totalorder %s19, 0
    %p151 = por %p149, %p150
    %s153 = sadd.s32 %s152, 1
    %p156 = scmp.eq.s32.totalorder %s13, 1
    %p157 = scmp.ne.s32.totalorder %s152, %s154
    %p158 = scmp.eq.s32.totalorder %s13, 0
    %p159 = por %p157, %p158
    %p160 = scmp.ne.s32.totalorder %s152, %s154
    %p161 = scmp.eq.s32.totalorder %s18, 1
    %p162 = por %p160, %p161
    %p163 = scmp.ne.s32.totalorder %s154, %s155
    %p164 = scmp.eq.s32.totalorder %s18, 0
    %p165 = por %p163, %p164
    %p166 = scmp.ne.s32.totalorder %s154, %s155
    %p167 = scmp.eq.s32.totalorder %s19, 1
    %p168 = por %p166, %p167
    %p170 = scmp.ne.s32.totalorder %s155, %s169
    %p171 = scmp.eq.s32.totalorder %s19, 0
    %p172 = por %p170, %p171
    %s173 = ssub.s32 %s13, %s20
    %p174 = scmp.eq.s32.totalorder %s173, 0
    %s176 = sadd.s32 %s175, 1
    %s177 = scalar_select %p174, %s175, %s176
    %p180 = pneg %p174
    %p181 = scmp.eq.s32.totalorder %s13, 1
    %p182 = por %p180, %p181
    %p183 = scmp.ne.s32.totalorder %s175, %s178
    %p184 = scmp.eq.s32.totalorder %s13, 0
    %p185 = por %p183, %p184
    %p186 = scmp.ne.s32.totalorder %s175, %s178
    %p187 = scmp.eq.s32.totalorder %s18, 1
    %p188 = por %p186, %p187
    %p189 = scmp.ne.s32.totalorder %s178, %s179
    %p190 = scmp.eq.s32.totalorder %s18, 0
    %p191 = por %p189, %p190
    %p192 = scmp.ne.s32.totalorder %s178, %s179
    %p193 = scmp.eq.s32.totalorder %s19, 1
    %p194 = por %p192, %p193
    %p196 = scmp.ne.s32.totalorder %s179, %s195
    %p197 = scmp.eq.s32.totalorder %s19, 0
    %p198 = por %p196, %p197
    %p199 = scmp.le.s32.totalorder 1, %s13
    %p200 = scmp.lt.s32.totalorder %s13, 3
    %p201 = pnand %p199, %p200
    %p202 = pneg %p201
    // Predicated region
    $region9: #{encoder_forward.5} parent=5 // pred_check
      _
    $region10: #{encoder_forward.5} parent=5 // pred_check_branch
      %204 = sbr.rel (%p201) target = $region12
    $region11: #{encoder_forward.5} parent=5 // pred_region
      %s205 = ssub.s32 %s13, 1
      // Predicated region
      $region13: #{encoder_forward.5} parent=11 // pred_check
        %p206 = pneg %p60
      $region14: #{encoder_forward.5} parent=11 // pred_check_branch
        %208 = sbr.rel (%p206) target = $region16
      $region15: #{encoder_forward.5} parent=11 // pred_region
        _
      $region16: #{encoder_forward.5} parent=11 // pred_fallthru
        _
      // Predicated region
      $region17: #{encoder_forward.5} parent=11 // pred_check
        %p209 = pneg %p81
      $region18: #{encoder_forward.5} parent=11 // pred_check_branch
        %211 = sbr.rel (%p209) target = $region20
      $region19: #{encoder_forward.5} parent=11 // pred_region
        _
      $region20: #{encoder_forward.5} parent=11 // pred_fallthru
        _
      // Predicated region
      $region21: #{encoder_forward.5} parent=11 // pred_check
        %p212 = pneg %p102
      $region22: #{encoder_forward.5} parent=11 // pred_check_branch
        %214 = sbr.rel (%p212) target = $region24
      $region23: #{encoder_forward.5} parent=11 // pred_region
        _
      $region24: #{encoder_forward.5} parent=11 // pred_fallthru
        _
      // Predicated region
      $region25: #{encoder_forward.5} parent=11 // pred_check
        %p215 = pneg %p123
      $region26: #{encoder_forward.5} parent=11 // pred_check_branch
        %217 = sbr.rel (%p215) target = $region28
      $region27: #{encoder_forward.5} parent=11 // pred_region
        _
      $region28: #{encoder_forward.5} parent=11 // pred_fallthru
        _
      // Predicated region
      $region29: #{encoder_forward.5} parent=11 // pred_check
        %p218 = pneg %p144
      $region30: #{encoder_forward.5} parent=11 // pred_check_branch
        %220 = sbr.rel (%p218) target = $region32
      $region31: #{encoder_forward.5} parent=11 // pred_region
        _
      $region32: #{encoder_forward.5} parent=11 // pred_fallthru
        _
      // Predicated region
      $region33: #{encoder_forward.5} parent=11 // pred_check
        %p221 = pneg %p165
      $region34: #{encoder_forward.5} parent=11 // pred_check_branch
        %223 = sbr.rel (%p221) target = $region36
      $region35: #{encoder_forward.5} parent=11 // pred_region
        _
      $region36: #{encoder_forward.5} parent=11 // pred_fallthru
        _
    $region12: #{encoder_forward.5} parent=5 // pred_fallthru
      _
    %p224 = scmp.lt.s32.totalorder %s13, 2
    // Predicated region
    $region37: #{encoder_forward.5} parent=5 // pred_check
      %p225 = pneg %p224
    $region38: #{encoder_forward.5} parent=5 // pred_check_branch
      %227 = sbr.rel (%p225) target = $region40
    $region39: #{encoder_forward.5} parent=5 // pred_region
      // Predicated region
      $region41: #{encoder_forward.5} parent=39 // pred_check
        %p228 = pneg %p33
      $region42: #{encoder_forward.5} parent=39 // pred_check_branch
        %230 = sbr.rel (%p228) target = $region44
      $region43: #{encoder_forward.5} parent=39 // pred_region
        %s231 = smul.u32 16, %s13
        %p232 = scmp.lt.s32.totalorder %s231, 31
        %s233 = scalar_select %p232, %s231, 31
        %s234 = smul.addr %s233, 2
        %s235 = smul.addr %s234, 8
        %s236 = scalar_lea.vmem %s0, %s235
        %s237 = smul.u32 16, %s13
      $region44: #{encoder_forward.5} parent=39 // pred_fallthru
        _
    $region40: #{encoder_forward.5} parent=5 // pred_fallthru
      _
    %p238 = scmp.le.s32.totalorder 1, %s13
    %p239 = scmp.lt.s32.totalorder %s13, 3
    %p240 = pnand %p238, %p239
    %p241 = pneg %p240
    // Predicated region
    $region45: #{encoder_forward.5} parent=5 // pred_check
      _
    $region46: #{encoder_forward.5} parent=5 // pred_check_branch
      %243 = sbr.rel (%p240) target = $region48
    $region47: #{encoder_forward.5} parent=5 // pred_region
      %s244 = ssub.s32 %s13, 1
      %s245 = smul.u32 16, %s18
      %p246 = scmp.lt.s32.totalorder %s245, 31
      %s247 = scalar_select %p246, %s245, 31
      %s248 = smul.addr %s247, 2
      %s249 = smul.addr %s248, 8
      %s250 = scalar_lea.vmem %s0, %s249
      %p251 = pneg %p39
      %p252 = pneg %p36
      %p253 = pneg %p60
      %p254 = pneg %p57
      %p255 = pneg %p81
      %p256 = pneg %p78
      %p257 = pneg %p102
      %p258 = pneg %p99
      %p259 = pneg %p123
      %p260 = pneg %p120
      %p261 = pneg %p144
      %p262 = pneg %p141
      %p263 = pneg %p165
      %p264 = pneg %p162
      %p265 = pneg %p191
      %p266 = pneg %p188
      %s267 = smul.u32 16, %s18
      %p268 = scmp.lt.s32.totalorder %s267, 31
      %s269 = scalar_select %p268, %s267, 31
      %s270 = smul.addr %s269, 2
      %s271 = smul.addr %s270, 8
      %s272 = scalar_lea.vmem %s7, %s271
      %s273 = smul.u32 16, %s18
      %p274 = scmp.lt.s32.totalorder %s273, 31
      %s275 = scalar_select %p274, %s273, 31
      %s276 = smul.addr %s275, 2
      %s277 = smul.addr %s276, 8
      %s278 = scalar_lea.vmem %s0, %s277
      %s279 = smul.u32 16, %s18
      %s280 = smul.u32 16, %s18
      %p281 = scmp.lt.s32.totalorder %s280, 31
      %s282 = scalar_select %p281, %s280, 31
      %s283 = smul.addr %s282, 2
      %s284 = smul.addr %s283, 8
      %s285 = scalar_lea.vmem %s7, %s284
      %s286 = smul.u32 16, %s18
      %v287 = vld [vmem:[%s278] sm:$0xff]
      %v288 = vld [vmem:[%s278 + $0x8] sm:$0xff]
      %v289 = vld [vmem:[%s278 + $0x10] sm:$0xff]
      %v290 = vld [vmem:[%s278 + $0x18] sm:$0xff]
      %v291 = vld [vmem:[%s278 + $0x20] sm:$0xff]
      %v292 = vld [vmem:[%s278 + $0x28] sm:$0xff]
      %v293 = vld [vmem:[%s278 + $0x30] sm:$0xff]
      %v294 = vld [vmem:[%s278 + $0x38] sm:$0xff]
      %v295 = vld [vmem:[%s278 + $0x40] sm:$0xff]
      %v296 = vld [vmem:[%s278 + $0x48] sm:$0xff]
      %v297 = vld [vmem:[%s278 + $0x50] sm:$0xff]
      %v298 = vld [vmem:[%s278 + $0x58] sm:$0xff]
      %v299 = vld [vmem:[%s278 + $0x60] sm:$0xff]
      %v300 = vld [vmem:[%s278 + $0x68] sm:$0xff]
      %v301 = vld [vmem:[%s278 + $0x70] sm:$0xff]
      %v302 = vld [vmem:[%s278 + $0x78] sm:$0xff]
      %v303 = vld [vmem:[%s278 + $0x80] sm:$0xff]
      %v304 = vld [vmem:[%s278 + $0x88] sm:$0xff]
      %v305 = vld [vmem:[%s278 + $0x90] sm:$0xff]
      %v306 = vld [vmem:[%s278 + $0x98] sm:$0xff]
      %v307 = vld [vmem:[%s278 + $0xa0] sm:$0xff]
      %v308 = vld [vmem:[%s278 + $0xa8] sm:$0xff]
      %v309 = vld [vmem:[%s278 + $0xb0] sm:$0xff]
      %v310 = vld [vmem:[%s278 + $0xb8] sm:$0xff]
      %v311 = vld [vmem:[%s278 + $0xc0] sm:$0xff]
      %v312 = vld [vmem:[%s278 + $0xc8] sm:$0xff]
      %v313 = vld [vmem:[%s278 + $0xd0] sm:$0xff]
      %v314 = vld [vmem:[%s278 + $0xd8] sm:$0xff]
      %v315 = vld [vmem:[%s278 + $0xe0] sm:$0xff]
      %v316 = vld [vmem:[%s278 + $0xe8] sm:$0xff]
      %v317 = vld [vmem:[%s278 + $0xf0] sm:$0xff]
      %v318 = vld [vmem:[%s278 + $0xf8] sm:$0xff]
      %v319 = vpack.c.bf16 %v289, %v287
      %v320 = vpack.c.bf16 %v290, %v288
      %v321 = vpack.c.bf16 %v293, %v291
      %v322 = vpack.c.bf16 %v294, %v292
      %v323 = vpack.c.bf16 %v297, %v295
      %v324 = vpack.c.bf16 %v298, %v296
      %v325 = vpack.c.bf16 %v301, %v299
      %v326 = vpack.c.bf16 %v302, %v300
      %v327 = vpack.c.bf16 %v305, %v303
      %v328 = vpack.c.bf16 %v306, %v304
      %v329 = vpack.c.bf16 %v309, %v307
      %v330 = vpack.c.bf16 %v310, %v308
      %v331 = vpack.c.bf16 %v313, %v311
      %v332 = vpack.c.bf16 %v314, %v312
      %v333 = vpack.c.bf16 %v317, %v315
      %v334 = vpack.c.bf16 %v318, %v316
      %v335 = vld [vmem:[%s1] sm:$0xff]
      %v336 = vld [vmem:[%s1 + $0x8] sm:$0xff]
      %v337 = vld [vmem:[%s1 + $0x10] sm:$0xff]
      %v338 = vld [vmem:[%s1 + $0x18] sm:$0xff]
      %v339 = vld [vmem:[%s1 + $0x20] sm:$0xff]
      %v340 = vld [vmem:[%s1 + $0x28] sm:$0xff]
      %v341 = vld [vmem:[%s1 + $0x30] sm:$0xff]
      %v342 = vld [vmem:[%s1 + $0x38] sm:$0xff]
      %v343 = vld [vmem:[%s1 + $0x40] sm:$0xff]
      %v344 = vld [vmem:[%s1 + $0x48] sm:$0xff]
      %v345 = vld [vmem:[%s1 + $0x50] sm:$0xff]
      %v346 = vld [vmem:[%s1 + $0x58] sm:$0xff]
      %v347 = vld [vmem:[%s1 + $0x60] sm:$0xff]
      %v348 = vld [vmem:[%s1 + $0x68] sm:$0xff]
      %v349 = vld [vmem:[%s1 + $0x70] sm:$0xff]
      %v350 = vld [vmem:[%s1 + $0x78] sm:$0xff]
      %v351 = vld [vmem:[%s1 + $0x80] sm:$0xff]
      %v352 = vld [vmem:[%s1 + $0x88] sm:$0xff]
      %v353 = vld [vmem:[%s1 + $0x90] sm:$0xff]
      %v354 = vld [vmem:[%s1 + $0x98] sm:$0xff]
      %v355 = vld [vmem:[%s1 + $0xa0] sm:$0xff]
      %v356 = vld [vmem:[%s1 + $0xa8] sm:$0xff]
      %v357 = vld [vmem:[%s1 + $0xb0] sm:$0xff]
      %v358 = vld [vmem:[%s1 + $0xb8] sm:$0xff]
      %v359 = vld [vmem:[%s1 + $0xc0] sm:$0xff]
      %v360 = vld [vmem:[%s1 + $0xc8] sm:$0xff]
      %v361 = vld [vmem:[%s1 + $0xd0] sm:$0xff]
      %v362 = vld [vmem:[%s1 + $0xd8] sm:$0xff]
      %v363 = vld [vmem:[%s1 + $0xe0] sm:$0xff]
      %v364 = vld [vmem:[%s1 + $0xe8] sm:$0xff]
      %v365 = vld [vmem:[%s1 + $0xf0] sm:$0xff]
      %v366 = vld [vmem:[%s1 + $0xf8] sm:$0xff]
      %v367 = vld [vmem:[%s1 + $0x100] sm:$0xff]
      %v368 = vld [vmem:[%s1 + $0x108] sm:$0xff]
      %v369 = vld [vmem:[%s1 + $0x110] sm:$0xff]
      %v370 = vld [vmem:[%s1 + $0x118] sm:$0xff]
      %v371 = vld [vmem:[%s1 + $0x120] sm:$0xff]
      %v372 = vld [vmem:[%s1 + $0x128] sm:$0xff]
      %v373 = vld [vmem:[%s1 + $0x130] sm:$0xff]
      %v374 = vld [vmem:[%s1 + $0x138] sm:$0xff]
      %v375 = vld [vmem:[%s1 + $0x140] sm:$0xff]
      %v376 = vld [vmem:[%s1 + $0x148] sm:$0xff]
      %v377 = vld [vmem:[%s1 + $0x150] sm:$0xff]
      %v378 = vld [vmem:[%s1 + $0x158] sm:$0xff]
      %v379 = vld [vmem:[%s1 + $0x160] sm:$0xff]
      %v380 = vld [vmem:[%s1 + $0x168] sm:$0xff]
      %v381 = vld [vmem:[%s1 + $0x170] sm:$0xff]
      %v382 = vld [vmem:[%s1 + $0x178] sm:$0xff]
      %v383 = vld [vmem:[%s1 + $0x180] sm:$0xff]
      %v384 = vld [vmem:[%s1 + $0x188] sm:$0xff]
      %v385 = vld [vmem:[%s1 + $0x190] sm:$0xff]
      %v386 = vld [vmem:[%s1 + $0x198] sm:$0xff]
      %v387 = vld [vmem:[%s1 + $0x1a0] sm:$0xff]
      %v388 = vld [vmem:[%s1 + $0x1a8] sm:$0xff]
      %v389 = vld [vmem:[%s1 + $0x1b0] sm:$0xff]
      %v390 = vld [vmem:[%s1 + $0x1b8] sm:$0xff]
      %v391 = vld [vmem:[%s1 + $0x1c0] sm:$0xff]
      %v392 = vld [vmem:[%s1 + $0x1c8] sm:$0xff]
      %v393 = vld [vmem:[%s1 + $0x1d0] sm:$0xff]
      %v394 = vld [vmem:[%s1 + $0x1d8] sm:$0xff]
      %v395 = vld [vmem:[%s1 + $0x1e0] sm:$0xff]
      %v396 = vld [vmem:[%s1 + $0x1e8] sm:$0xff]
      %v397 = vld [vmem:[%s1 + $0x1f0] sm:$0xff]
      %v398 = vld [vmem:[%s1 + $0x1f8] sm:$0xff]
      %v399 = vld [vmem:[%s1 + $0x200] sm:$0xff]
      %v400 = vld [vmem:[%s1 + $0x208] sm:$0xff]
      %v401 = vld [vmem:[%s1 + $0x210] sm:$0xff]
      %v402 = vld [vmem:[%s1 + $0x218] sm:$0xff]
      %v403 = vld [vmem:[%s1 + $0x220] sm:$0xff]
      %v404 = vld [vmem:[%s1 + $0x228] sm:$0xff]
      %v405 = vld [vmem:[%s1 + $0x230] sm:$0xff]
      %v406 = vld [vmem:[%s1 + $0x238] sm:$0xff]
      %v407 = vld [vmem:[%s1 + $0x240] sm:$0xff]
      %v408 = vld [vmem:[%s1 + $0x248] sm:$0xff]
      %v409 = vld [vmem:[%s1 + $0x250] sm:$0xff]
      %v410 = vld [vmem:[%s1 + $0x258] sm:$0xff]
      %v411 = vld [vmem:[%s1 + $0x260] sm:$0xff]
      %v412 = vld [vmem:[%s1 + $0x268] sm:$0xff]
      %v413 = vld [vmem:[%s1 + $0x270] sm:$0xff]
      %v414 = vld [vmem:[%s1 + $0x278] sm:$0xff]
      %v415 = vld [vmem:[%s1 + $0x280] sm:$0xff]
      %v416 = vld [vmem:[%s1 + $0x288] sm:$0xff]
      %v417 = vld [vmem:[%s1 + $0x290] sm:$0xff]
      %v418 = vld [vmem:[%s1 + $0x298] sm:$0xff]
      %v419 = vld [vmem:[%s1 + $0x2a0] sm:$0xff]
      %v420 = vld [vmem:[%s1 + $0x2a8] sm:$0xff]
      %v421 = vld [vmem:[%s1 + $0x2b0] sm:$0xff]
      %v422 = vld [vmem:[%s1 + $0x2b8] sm:$0xff]
      %v423 = vld [vmem:[%s1 + $0x2c0] sm:$0xff]
      %v424 = vld [vmem:[%s1 + $0x2c8] sm:$0xff]
      %v425 = vld [vmem:[%s1 + $0x2d0] sm:$0xff]
      %v426 = vld [vmem:[%s1 + $0x2d8] sm:$0xff]
      %v427 = vld [vmem:[%s1 + $0x2e0] sm:$0xff]
      %v428 = vld [vmem:[%s1 + $0x2e8] sm:$0xff]
      %v429 = vld [vmem:[%s1 + $0x2f0] sm:$0xff]
      %v430 = vld [vmem:[%s1 + $0x2f8] sm:$0xff]
      %v431 = vld [vmem:[%s1 + $0x300] sm:$0xff]
      %v432 = vld [vmem:[%s1 + $0x308] sm:$0xff]
      %v433 = vld [vmem:[%s1 + $0x310] sm:$0xff]
      %v434 = vld [vmem:[%s1 + $0x318] sm:$0xff]
      %v435 = vld [vmem:[%s1 + $0x320] sm:$0xff]
      %v436 = vld [vmem:[%s1 + $0x328] sm:$0xff]
      %v437 = vld [vmem:[%s1 + $0x330] sm:$0xff]
      %v438 = vld [vmem:[%s1 + $0x338] sm:$0xff]
      %v439 = vld [vmem:[%s1 + $0x340] sm:$0xff]
      %v440 = vld [vmem:[%s1 + $0x348] sm:$0xff]
      %v441 = vld [vmem:[%s1 + $0x350] sm:$0xff]
      %v442 = vld [vmem:[%s1 + $0x358] sm:$0xff]
      %v443 = vld [vmem:[%s1 + $0x360] sm:$0xff]
      %v444 = vld [vmem:[%s1 + $0x368] sm:$0xff]
      %v445 = vld [vmem:[%s1 + $0x370] sm:$0xff]
      %v446 = vld [vmem:[%s1 + $0x378] sm:$0xff]
      %v447 = vld [vmem:[%s1 + $0x380] sm:$0xff]
      %v448 = vld [vmem:[%s1 + $0x388] sm:$0xff]
      %v449 = vld [vmem:[%s1 + $0x390] sm:$0xff]
      %v450 = vld [vmem:[%s1 + $0x398] sm:$0xff]
      %v451 = vld [vmem:[%s1 + $0x3a0] sm:$0xff]
      %v452 = vld [vmem:[%s1 + $0x3a8] sm:$0xff]
      %v453 = vld [vmem:[%s1 + $0x3b0] sm:$0xff]
      %v454 = vld [vmem:[%s1 + $0x3b8] sm:$0xff]
      %v455 = vld [vmem:[%s1 + $0x3c0] sm:$0xff]
      %v456 = vld [vmem:[%s1 + $0x3c8] sm:$0xff]
      %v457 = vld [vmem:[%s1 + $0x3d0] sm:$0xff]
      %v458 = vld [vmem:[%s1 + $0x3d8] sm:$0xff]
      %v459 = vld [vmem:[%s1 + $0x3e0] sm:$0xff]
      %v460 = vld [vmem:[%s1 + $0x3e8] sm:$0xff]
      %v461 = vld [vmem:[%s1 + $0x3f0] sm:$0xff]
      %v462 = vld [vmem:[%s1 + $0x3f8] sm:$0xff]
      %v463 = vld [vmem:[%s2] sm:$0xff]
      %v465 = vlaneseq
      %v466 = vshrl.u32 %v465, 7
      %v467 = vsub.s32 0, %v466
      %v468 = vrot.slane %v463, %v467
      %v469 = vlaneseq
      %v470 = vshrl.u32 %v469, 7
      %v471 = vsub.s32 1, %v470
      %v472 = vrot.slane %v463, %v471
      %v473 = vlaneseq
      %v474 = vshrl.u32 %v473, 7
      %v475 = vsub.s32 2, %v474
      %v476 = vrot.slane %v463, %v475
      %v477 = vlaneseq
      %v478 = vshrl.u32 %v477, 7
      %v479 = vsub.s32 3, %v478
      %v480 = vrot.slane %v463, %v479
      %v481 = vlaneseq
      %v482 = vshrl.u32 %v481, 7
      %v483 = vsub.s32 4, %v482
      %v484 = vrot.slane %v463, %v483
      %v485 = vlaneseq
      %v486 = vshrl.u32 %v485, 7
      %v487 = vsub.s32 5, %v486
      %v488 = vrot.slane %v463, %v487
      %v489 = vlaneseq
      %v490 = vshrl.u32 %v489, 7
      %v491 = vsub.s32 6, %v490
      %v492 = vrot.slane %v463, %v491
      %v493 = vlaneseq
      %v494 = vshrl.u32 %v493, 7
      %v495 = vsub.s32 7, %v494
      %v496 = vrot.slane %v463, %v495
      %v633 = vunpack.c.l.b16 %v335
      %v634 = vunpack.c.h.b16 %v335
      %v635 = vunpack.c.l.b16 %v336
      %v636 = vunpack.c.h.b16 %v336
      %v637 = vunpack.c.l.b16 %v337
      %v638 = vunpack.c.h.b16 %v337
      %v639 = vunpack.c.l.b16 %v338
      %v640 = vunpack.c.h.b16 %v338
      %v641 = vunpack.c.l.b16 %v339
      %v642 = vunpack.c.h.b16 %v339
      %v643 = vunpack.c.l.b16 %v340
      %v644 = vunpack.c.h.b16 %v340
      %v645 = vunpack.c.l.b16 %v341
      %v646 = vunpack.c.h.b16 %v341
      %v647 = vunpack.c.l.b16 %v342
      %v648 = vunpack.c.h.b16 %v342
      %v649 = vunpack.c.l.b16 %v343
      %v650 = vunpack.c.h.b16 %v343
      %v651 = vunpack.c.l.b16 %v344
      %v652 = vunpack.c.h.b16 %v344
      %v653 = vunpack.c.l.b16 %v345
      %v654 = vunpack.c.h.b16 %v345
      %v655 = vunpack.c.l.b16 %v346
      %v656 = vunpack.c.h.b16 %v346
      %v657 = vunpack.c.l.b16 %v347
      %v658 = vunpack.c.h.b16 %v347
      %v659 = vunpack.c.l.b16 %v348
      %v660 = vunpack.c.h.b16 %v348
      %v661 = vunpack.c.l.b16 %v349
      %v662 = vunpack.c.h.b16 %v349
      %v663 = vunpack.c.l.b16 %v350
      %v664 = vunpack.c.h.b16 %v350
      %v665 = vunpack.c.l.b16 %v351
      %v666 = vunpack.c.h.b16 %v351
      %v667 = vunpack.c.l.b16 %v352
      %v668 = vunpack.c.h.b16 %v352
      %v669 = vunpack.c.l.b16 %v353
      %v670 = vunpack.c.h.b16 %v353
      %v671 = vunpack.c.l.b16 %v354
      %v672 = vunpack.c.h.b16 %v354
      %v673 = vunpack.c.l.b16 %v355
      %v674 = vunpack.c.h.b16 %v355
      %v675 = vunpack.c.l.b16 %v356
      %v676 = vunpack.c.h.b16 %v356
      %v677 = vunpack.c.l.b16 %v357
      %v678 = vunpack.c.h.b16 %v357
      %v679 = vunpack.c.l.b16 %v358
      %v680 = vunpack.c.h.b16 %v358
      %v681 = vunpack.c.l.b16 %v359
      %v682 = vunpack.c.h.b16 %v359
      %v683 = vunpack.c.l.b16 %v360
      %v684 = vunpack.c.h.b16 %v360
      %v685 = vunpack.c.l.b16 %v361
      %v686 = vunpack.c.h.b16 %v361
      %v687 = vunpack.c.l.b16 %v362
      %v688 = vunpack.c.h.b16 %v362
      %v689 = vunpack.c.l.b16 %v363
      %v690 = vunpack.c.h.b16 %v363
      %v691 = vunpack.c.l.b16 %v364
      %v692 = vunpack.c.h.b16 %v364
      %v693 = vunpack.c.l.b16 %v365
      %v694 = vunpack.c.h.b16 %v365
      %v695 = vunpack.c.l.b16 %v366
      %v696 = vunpack.c.h.b16 %v366
      %v697 = vunpack.c.l.b16 %v367
      %v698 = vunpack.c.h.b16 %v367
      %v699 = vunpack.c.l.b16 %v368
      %v700 = vunpack.c.h.b16 %v368
      %v701 = vunpack.c.l.b16 %v369
      %v702 = vunpack.c.h.b16 %v369
      %v703 = vunpack.c.l.b16 %v370
      %v704 = vunpack.c.h.b16 %v370
      %v705 = vunpack.c.l.b16 %v371
      %v706 = vunpack.c.h.b16 %v371
      %v707 = vunpack.c.l.b16 %v372
      %v708 = vunpack.c.h.b16 %v372
      %v709 = vunpack.c.l.b16 %v373
      %v710 = vunpack.c.h.b16 %v373
      %v711 = vunpack.c.l.b16 %v374
      %v712 = vunpack.c.h.b16 %v374
      %v713 = vunpack.c.l.b16 %v375
      %v714 = vunpack.c.h.b16 %v375
      %v715 = vunpack.c.l.b16 %v376
      %v716 = vunpack.c.h.b16 %v376
      %v717 = vunpack.c.l.b16 %v377
      %v718 = vunpack.c.h.b16 %v377
      %v719 = vunpack.c.l.b16 %v378
      %v720 = vunpack.c.h.b16 %v378
      %v721 = vunpack.c.l.b16 %v379
      %v722 = vunpack.c.h.b16 %v379
      %v723 = vunpack.c.l.b16 %v380
      %v724 = vunpack.c.h.b16 %v380
      %v725 = vunpack.c.l.b16 %v381
      %v726 = vunpack.c.h.b16 %v381
      %v727 = vunpack.c.l.b16 %v382
      %v728 = vunpack.c.h.b16 %v382
      %v729 = vunpack.c.l.b16 %v383
      %v730 = vunpack.c.h.b16 %v383
      %v731 = vunpack.c.l.b16 %v384
      %v732 = vunpack.c.h.b16 %v384
      %v733 = vunpack.c.l.b16 %v385
      %v734 = vunpack.c.h.b16 %v385
      %v735 = vunpack.c.l.b16 %v386
      %v736 = vunpack.c.h.b16 %v386
      %v737 = vunpack.c.l.b16 %v387
      %v738 = vunpack.c.h.b16 %v387
      %v739 = vunpack.c.l.b16 %v388
      %v740 = vunpack.c.h.b16 %v388
      %v741 = vunpack.c.l.b16 %v389
      %v742 = vunpack.c.h.b16 %v389
      %v743 = vunpack.c.l.b16 %v390
      %v744 = vunpack.c.h.b16 %v390
      %v745 = vunpack.c.l.b16 %v391
      %v746 = vunpack.c.h.b16 %v391
      %v747 = vunpack.c.l.b16 %v392
      %v748 = vunpack.c.h.b16 %v392
      %v749 = vunpack.c.l.b16 %v393
      %v750 = vunpack.c.h.b16 %v393
      %v751 = vunpack.c.l.b16 %v394
      %v752 = vunpack.c.h.b16 %v394
      %v753 = vunpack.c.l.b16 %v395
      %v754 = vunpack.c.h.b16 %v395
      %v755 = vunpack.c.l.b16 %v396
      %v756 = vunpack.c.h.b16 %v396
      %v757 = vunpack.c.l.b16 %v397
      %v758 = vunpack.c.h.b16 %v397
      %v759 = vunpack.c.l.b16 %v398
      %v760 = vunpack.c.h.b16 %v398
      %v761 = vunpack.c.l.b16 %v399
      %v762 = vunpack.c.h.b16 %v399
      %v763 = vunpack.c.l.b16 %v400
      %v764 = vunpack.c.h.b16 %v400
      %v765 = vunpack.c.l.b16 %v401
      %v766 = vunpack.c.h.b16 %v401
      %v767 = vunpack.c.l.b16 %v402
      %v768 = vunpack.c.h.b16 %v402
      %v769 = vunpack.c.l.b16 %v403
      %v770 = vunpack.c.h.b16 %v403
      %v771 = vunpack.c.l.b16 %v404
      %v772 = vunpack.c.h.b16 %v404
      %v773 = vunpack.c.l.b16 %v405
      %v774 = vunpack.c.h.b16 %v405
      %v775 = vunpack.c.l.b16 %v406
      %v776 = vunpack.c.h.b16 %v406
      %v777 = vunpack.c.l.b16 %v407
      %v778 = vunpack.c.h.b16 %v407
      %v779 = vunpack.c.l.b16 %v408
      %v780 = vunpack.c.h.b16 %v408
      %v781 = vunpack.c.l.b16 %v409
      %v782 = vunpack.c.h.b16 %v409
      %v783 = vunpack.c.l.b16 %v410
      %v784 = vunpack.c.h.b16 %v410
      %v785 = vunpack.c.l.b16 %v411
      %v786 = vunpack.c.h.b16 %v411
      %v787 = vunpack.c.l.b16 %v412
      %v788 = vunpack.c.h.b16 %v412
      %v789 = vunpack.c.l.b16 %v413
      %v790 = vunpack.c.h.b16 %v413
      %v791 = vunpack.c.l.b16 %v414
      %v792 = vunpack.c.h.b16 %v414
      %v793 = vunpack.c.l.b16 %v415
      %v794 = vunpack.c.h.b16 %v415
      %v795 = vunpack.c.l.b16 %v416
      %v796 = vunpack.c.h.b16 %v416
      %v797 = vunpack.c.l.b16 %v417
      %v798 = vunpack.c.h.b16 %v417
      %v799 = vunpack.c.l.b16 %v418
      %v800 = vunpack.c.h.b16 %v418
      %v801 = vunpack.c.l.b16 %v419
      %v802 = vunpack.c.h.b16 %v419
      %v803 = vunpack.c.l.b16 %v420
      %v804 = vunpack.c.h.b16 %v420
      %v805 = vunpack.c.l.b16 %v421
      %v806 = vunpack.c.h.b16 %v421
      %v807 = vunpack.c.l.b16 %v422
      %v808 = vunpack.c.h.b16 %v422
      %v809 = vunpack.c.l.b16 %v423
      %v810 = vunpack.c.h.b16 %v423
      %v811 = vunpack.c.l.b16 %v424
      %v812 = vunpack.c.h.b16 %v424
      %v813 = vunpack.c.l.b16 %v425
      %v814 = vunpack.c.h.b16 %v425
      %v815 = vunpack.c.l.b16 %v426
      %v816 = vunpack.c.h.b16 %v426
      %v817 = vunpack.c.l.b16 %v427
      %v818 = vunpack.c.h.b16 %v427
      %v819 = vunpack.c.l.b16 %v428
      %v820 = vunpack.c.h.b16 %v428
      %v821 = vunpack.c.l.b16 %v429
      %v822 = vunpack.c.h.b16 %v429
      %v823 = vunpack.c.l.b16 %v430
      %v824 = vunpack.c.h.b16 %v430
      %v825 = vunpack.c.l.b16 %v431
      %v826 = vunpack.c.h.b16 %v431
      %v827 = vunpack.c.l.b16 %v432
      %v828 = vunpack.c.h.b16 %v432
      %v829 = vunpack.c.l.b16 %v433
      %v830 = vunpack.c.h.b16 %v433
      %v831 = vunpack.c.l.b16 %v434
      %v832 = vunpack.c.h.b16 %v434
      %v833 = vunpack.c.l.b16 %v435
      %v834 = vunpack.c.h.b16 %v435
      %v835 = vunpack.c.l.b16 %v436
      %v836 = vunpack.c.h.b16 %v436
      %v837 = vunpack.c.l.b16 %v437
      %v838 = vunpack.c.h.b16 %v437
      %v839 = vunpack.c.l.b16 %v438
      %v840 = vunpack.c.h.b16 %v438
      %v841 = vunpack.c.l.b16 %v439
      %v842 = vunpack.c.h.b16 %v439
      %v843 = vunpack.c.l.b16 %v440
      %v844 = vunpack.c.h.b16 %v440
      %v845 = vunpack.c.l.b16 %v441
      %v846 = vunpack.c.h.b16 %v441
      %v847 = vunpack.c.l.b16 %v442
      %v848 = vunpack.c.h.b16 %v442
      %v849 = vunpack.c.l.b16 %v443
      %v850 = vunpack.c.h.b16 %v443
      %v851 = vunpack.c.l.b16 %v444
      %v852 = vunpack.c.h.b16 %v444
      %v853 = vunpack.c.l.b16 %v445
      %v854 = vunpack.c.h.b16 %v445
      %v855 = vunpack.c.l.b16 %v446
      %v856 = vunpack.c.h.b16 %v446
      %v857 = vunpack.c.l.b16 %v447
      %v858 = vunpack.c.h.b16 %v447
      %v859 = vunpack.c.l.b16 %v448
      %v860 = vunpack.c.h.b16 %v448
      %v861 = vunpack.c.l.b16 %v449
      %v862 = vunpack.c.h.b16 %v449
      %v863 = vunpack.c.l.b16 %v450
      %v864 = vunpack.c.h.b16 %v450
      %v865 = vunpack.c.l.b16 %v451
      %v866 = vunpack.c.h.b16 %v451
      %v867 = vunpack.c.l.b16 %v452
      %v868 = vunpack.c.h.b16 %v452
      %v869 = vunpack.c.l.b16 %v453
      %v870 = vunpack.c.h.b16 %v453
      %v871 = vunpack.c.l.b16 %v454
      %v872 = vunpack.c.h.b16 %v454
      %v873 = vunpack.c.l.b16 %v455
      %v874 = vunpack.c.h.b16 %v455
      %v875 = vunpack.c.l.b16 %v456
      %v876 = vunpack.c.h.b16 %v456
      %v877 = vunpack.c.l.b16 %v457
      %v878 = vunpack.c.h.b16 %v457
      %v879 = vunpack.c.l.b16 %v458
      %v880 = vunpack.c.h.b16 %v458
      %v881 = vunpack.c.l.b16 %v459
      %v882 = vunpack.c.h.b16 %v459
      %v883 = vunpack.c.l.b16 %v460
      %v884 = vunpack.c.h.b16 %v460
      %v885 = vunpack.c.l.b16 %v461
      %v886 = vunpack.c.h.b16 %v461
      %v887 = vunpack.c.l.b16 %v462
      %v888 = vunpack.c.h.b16 %v462
      %v889 = vpack.c.b16 %v641, %v633
      %v890 = vpack.c.b16 %v642, %v634
      %v891 = vpack.c.b16 %v643, %v635
      %v892 = vpack.c.b16 %v644, %v636
      %v893 = vpack.c.b16 %v645, %v637
      %v894 = vpack.c.b16 %v646, %v638
      %v895 = vpack.c.b16 %v647, %v639
      %v896 = vpack.c.b16 %v648, %v640
      %v897 = vpack.c.b16 %v657, %v649
      %v898 = vpack.c.b16 %v658, %v650
      %v899 = vpack.c.b16 %v659, %v651
      %v900 = vpack.c.b16 %v660, %v652
      %v901 = vpack.c.b16 %v661, %v653
      %v902 = vpack.c.b16 %v662, %v654
      %v903 = vpack.c.b16 %v663, %v655
      %v904 = vpack.c.b16 %v664, %v656
      %v905 = vpack.c.b16 %v673, %v665
      %v906 = vpack.c.b16 %v674, %v666
      %v907 = vpack.c.b16 %v675, %v667
      %v908 = vpack.c.b16 %v676, %v668
      %v909 = vpack.c.b16 %v677, %v669
      %v910 = vpack.c.b16 %v678, %v670
      %v911 = vpack.c.b16 %v679, %v671
      %v912 = vpack.c.b16 %v680, %v672
      %v913 = vpack.c.b16 %v689, %v681
      %v914 = vpack.c.b16 %v690, %v682
      %v915 = vpack.c.b16 %v691, %v683
      %v916 = vpack.c.b16 %v692, %v684
      %v917 = vpack.c.b16 %v693, %v685
      %v918 = vpack.c.b16 %v694, %v686
      %v919 = vpack.c.b16 %v695, %v687
      %v920 = vpack.c.b16 %v696, %v688
      %v921 = vpack.c.b16 %v705, %v697
      %v922 = vpack.c.b16 %v706, %v698
      %v923 = vpack.c.b16 %v707, %v699
      %v924 = vpack.c.b16 %v708, %v700
      %v925 = vpack.c.b16 %v709, %v701
      %v926 = vpack.c.b16 %v710, %v702
      %v927 = vpack.c.b16 %v711, %v703
      %v928 = vpack.c.b16 %v712, %v704
      %v929 = vpack.c.b16 %v721, %v713
      %v930 = vpack.c.b16 %v722, %v714
      %v931 = vpack.c.b16 %v723, %v715
      %v932 = vpack.c.b16 %v724, %v716
      %v933 = vpack.c.b16 %v725, %v717
      %v934 = vpack.c.b16 %v726, %v718
      %v935 = vpack.c.b16 %v727, %v719
      %v936 = vpack.c.b16 %v728, %v720
      %v937 = vpack.c.b16 %v737, %v729
      %v938 = vpack.c.b16 %v738, %v730
      %v939 = vpack.c.b16 %v739, %v731
      %v940 = vpack.c.b16 %v740, %v732
      %v941 = vpack.c.b16 %v741, %v733
      %v942 = vpack.c.b16 %v742, %v734
      %v943 = vpack.c.b16 %v743, %v735
      %v944 = vpack.c.b16 %v744, %v736
      %v945 = vpack.c.b16 %v753, %v745
      %v946 = vpack.c.b16 %v754, %v746
      %v947 = vpack.c.b16 %v755, %v747
      %v948 = vpack.c.b16 %v756, %v748
      %v949 = vpack.c.b16 %v757, %v749
      %v950 = vpack.c.b16 %v758, %v750
      %v951 = vpack.c.b16 %v759, %v751
      %v952 = vpack.c.b16 %v760, %v752
      %v953 = vpack.c.b16 %v769, %v761
      %v954 = vpack.c.b16 %v770, %v762
      %v955 = vpack.c.b16 %v771, %v763
      %v956 = vpack.c.b16 %v772, %v764
      %v957 = vpack.c.b16 %v773, %v765
      %v958 = vpack.c.b16 %v774, %v766
      %v959 = vpack.c.b16 %v775, %v767
      %v960 = vpack.c.b16 %v776, %v768
      %v961 = vpack.c.b16 %v785, %v777
      %v962 = vpack.c.b16 %v786, %v778
      %v963 = vpack.c.b16 %v787, %v779
      %v964 = vpack.c.b16 %v788, %v780
      %v965 = vpack.c.b16 %v789, %v781
      %v966 = vpack.c.b16 %v790, %v782
      %v967 = vpack.c.b16 %v791, %v783
      %v968 = vpack.c.b16 %v792, %v784
      %v969 = vpack.c.b16 %v801, %v793
      %v970 = vpack.c.b16 %v802, %v794
      %v971 = vpack.c.b16 %v803, %v795
      %v972 = vpack.c.b16 %v804, %v796
      %v973 = vpack.c.b16 %v805, %v797
      %v974 = vpack.c.b16 %v806, %v798
      %v975 = vpack.c.b16 %v807, %v799
      %v976 = vpack.c.b16 %v808, %v800
      %v977 = vpack.c.b16 %v817, %v809
      %v978 = vpack.c.b16 %v818, %v810
      %v979 = vpack.c.b16 %v819, %v811
      %v980 = vpack.c.b16 %v820, %v812
      %v981 = vpack.c.b16 %v821, %v813
      %v982 = vpack.c.b16 %v822, %v814
      %v983 = vpack.c.b16 %v823, %v815
      %v984 = vpack.c.b16 %v824, %v816
      %v985 = vpack.c.b16 %v833, %v825
      %v986 = vpack.c.b16 %v834, %v826
      %v987 = vpack.c.b16 %v835, %v827
      %v988 = vpack.c.b16 %v836, %v828
      %v989 = vpack.c.b16 %v837, %v829
      %v990 = vpack.c.b16 %v838, %v830
      %v991 = vpack.c.b16 %v839, %v831
      %v992 = vpack.c.b16 %v840, %v832
      %v993 = vpack.c.b16 %v849, %v841
      %v994 = vpack.c.b16 %v850, %v842
      %v995 = vpack.c.b16 %v851, %v843
      %v996 = vpack.c.b16 %v852, %v844
      %v997 = vpack.c.b16 %v853, %v845
      %v998 = vpack.c.b16 %v854, %v846
      %v999 = vpack.c.b16 %v855, %v847
      %v1000 = vpack.c.b16 %v856, %v848
      %v1001 = vpack.c.b16 %v865, %v857
      %v1002 = vpack.c.b16 %v866, %v858
      %v1003 = vpack.c.b16 %v867, %v859
      %v1004 = vpack.c.b16 %v868, %v860
      %v1005 = vpack.c.b16 %v869, %v861
      %v1006 = vpack.c.b16 %v870, %v862
      %v1007 = vpack.c.b16 %v871, %v863
      %v1008 = vpack.c.b16 %v872, %v864
      %v1009 = vpack.c.b16 %v881, %v873
      %v1010 = vpack.c.b16 %v882, %v874
      %v1011 = vpack.c.b16 %v883, %v875
      %v1012 = vpack.c.b16 %v884, %v876
      %v1013 = vpack.c.b16 %v885, %v877
      %v1014 = vpack.c.b16 %v886, %v878
      %v1015 = vpack.c.b16 %v887, %v879
      %v1016 = vpack.c.b16 %v888, %v880
      %1145 = vmatprep.subr.bf16.mxu0 %v890
      %1146 = vmatpush1.bf16.msra.mxu0 %v889
      %1147 = vmatprep.subr.bf16.mxu0 %v898
      %1148 = vmatpush1.bf16.msra.mxu0 %v897
      %1149 = vmatprep.subr.bf16.mxu0 %v906
      %1150 = vmatpush1.bf16.msra.mxu0 %v905
      %1151 = vmatprep.subr.bf16.mxu0 %v914
      %1152 = vmatpush1.bf16.msra.mxu0 %v913
      %1153 = vmatprep.subr.bf16.mxu0 %v922
      %1154 = vmatpush1.bf16.msra.mxu0 %v921
      %1155 = vmatprep.subr.bf16.mxu0 %v930
      %1156 = vmatpush1.bf16.msra.mxu0 %v929
      %1157 = vmatprep.subr.bf16.mxu0 %v938
      %1158 = vmatpush1.bf16.msra.mxu0 %v937
      %1159 = vmatprep.subr.bf16.mxu0 %v946
      %1160 = vmatpush1.bf16.msra.mxu0 %v945
      %1161 = vmatprep.subr.bf16.mxu0 %v954
      %1162 = vmatpush1.bf16.msra.mxu0 %v953
      %1163 = vmatprep.subr.bf16.mxu0 %v962
      %1164 = vmatpush1.bf16.msra.mxu0 %v961
      %1165 = vmatprep.subr.bf16.mxu0 %v970
      %1166 = vmatpush1.bf16.msra.mxu0 %v969
      %1167 = vmatprep.subr.bf16.mxu0 %v978
      %1168 = vmatpush1.bf16.msra.mxu0 %v977
      %1169 = vmatprep.subr.bf16.mxu0 %v986
      %1170 = vmatpush1.bf16.msra.mxu0 %v985
      %1171 = vmatprep.subr.bf16.mxu0 %v994
      %1172 = vmatpush1.bf16.msra.mxu0 %v993
      %1173 = vmatprep.subr.bf16.mxu0 %v1002
      %1174 = vmatpush1.bf16.msra.mxu0 %v1001
      %1175 = vmatprep.subr.bf16.mxu0 %v1010
      %1176 = vmatpush1.bf16.msra.mxu0 %v1009
      %1177 = vmatprep.mubr.bf16.mxu0 %v320
      %1178 = vmatmul.mubr.bf16.gmra.mrb[0].mxu0 %v319
      %v1179 = vpop.f32.mrb[0].mxu0
      %v1180 = vadd.f32 %v468, %v1179
      %v1181 = vpop.f32.mrb[0].mxu0
      %v1182 = vadd.f32 %v472, %v1181
      %v1183 = vpop.f32.mrb[0].mxu0
      %v1184 = vadd.f32 %v468, %v1183
      %v1185 = vpop.f32.mrb[0].mxu0
      %v1186 = vadd.f32 %v472, %v1185
      %1187 = vmatprep.mubr.bf16.mxu0 %v322
      %1188 = vmatmul.mubr.bf16.gmra.mrb[0].mxu0 %v321
      %v1189 = vpop.f32.mrb[0].mxu0
      %v1190 = vadd.f32 %v468, %v1189
      %v1191 = vpop.f32.mrb[0].mxu0
      %v1192 = vadd.f32 %v472, %v1191
      %v1193 = vpop.f32.mrb[0].mxu0
      %v1194 = vadd.f32 %v468, %v1193
      %v1195 = vpop.f32.mrb[0].mxu0
      %v1196 = vadd.f32 %v472, %v1195
      %1197 = vmatprep.mubr.bf16.mxu0 %v324
      %1198 = vmatmul.mubr.bf16.gmra.mrb[0].mxu0 %v323
      %v1199 = vpop.f32.mrb[0].mxu0
      %v1200 = vadd.f32 %v468, %v1199
      %v1201 = vpop.f32.mrb[0].mxu0
      %v1202 = vadd.f32 %v472, %v1201
      %v1203 = vpop.f32.mrb[0].mxu0
      %v1204 = vadd.f32 %v468, %v1203
      %v1205 = vpop.f32.mrb[0].mxu0
      %v1206 = vadd.f32 %v472, %v1205
      %1207 = vmatprep.mubr.bf16.mxu0 %v326
      %1208 = vmatmul.mubr.bf16.gmra.mrb[0].mxu0 %v325
      %v1209 = vpop.f32.mrb[0].mxu0
      %v1210 = vadd.f32 %v468, %v1209
      %v1211 = vpop.f32.mrb[0].mxu0
      %v1212 = vadd.f32 %v472, %v1211
      %v1213 = vpop.f32.mrb[0].mxu0
      %v1214 = vadd.f32 %v468, %v1213
      %v1215 = vpop.f32.mrb[0].mxu0
      %v1216 = vadd.f32 %v472, %v1215
      %1217 = vmatprep.mubr.bf16.mxu0 %v328
      %1218 = vmatmul.mubr.bf16.gmra.mrb[0].mxu0 %v327
      %v1219 = vpop.f32.mrb[0].mxu0
      %v1220 = vadd.f32 %v468, %v1219
      %v1221 = vpop.f32.mrb[0].mxu0
      %v1222 = vadd.f32 %v472, %v1221
      %v1223 = vpop.f32.mrb[0].mxu0
      %v1224 = vadd.f32 %v468, %v1223
      %v1225 = vpop.f32.mrb[0].mxu0
      %v1226 = vadd.f32 %v472, %v1225
      %1227 = vmatprep.mubr.bf16.mxu0 %v330
      %1228 = vmatmul.mubr.bf16.gmra.mrb[0].mxu0 %v329
      %v1229 = vpop.f32.mrb[0].mxu0
      %v1230 = vadd.f32 %v468, %v1229
      %v1231 = vpop.f32.mrb[0].mxu0
      %v1232 = vadd.f32 %v472, %v1231
      %v1233 = vpop.f32.mrb[0].mxu0
      %v1234 = vadd.f32 %v468, %v1233
      %v1235 = vpop.f32.mrb[0].mxu0
      %v1236 = vadd.f32 %v472, %v1235
      %1237 = vmatprep.mubr.bf16.mxu0 %v332
      %1238 = vmatmul.mubr.bf16.gmra.mrb[0].mxu0 %v331
      %v1239 = vpop.f32.mrb[0].mxu0
      %v1240 = vadd.f32 %v468, %v1239
      %v1241 = vpop.f32.mrb[0].mxu0
      %v1242 = vadd.f32 %v472, %v1241
      %v1243 = vpop.f32.mrb[0].mxu0
      %v1244 = vadd.f32 %v468, %v1243
      %v1245 = vpop.f32.mrb[0].mxu0
      %v1246 = vadd.f32 %v472, %v1245
      %1247 = vmatprep.mubr.bf16.mxu0 %v334
      %1248 = vmatmul.mubr.bf16.gmra.mrb[0].mxu0 %v333
      %v1249 = vpop.f32.mrb[0].mxu0
      %v1250 = vadd.f32 %v468, %v1249
      %v1251 = vpop.f32.mrb[0].mxu0
      %v1252 = vadd.f32 %v472, %v1251
      %v1253 = vpop.f32.mrb[0].mxu0
      %v1254 = vadd.f32 %v468, %v1253
      %v1255 = vpop.f32.mrb[0].mxu0
      %v1256 = vadd.f32 %v472, %v1255
      %1257 = vdwg.mxu0
      %1258 = vmatprep.subr.bf16.mxu0 %v892
      %1259 = vmatpush1.bf16.msra.mxu0 %v891
      %1260 = vmatprep.subr.bf16.mxu0 %v900
      %1261 = vmatpush1.bf16.msra.mxu0 %v899
      %1262 = vmatprep.subr.bf16.mxu0 %v908
      %1263 = vmatpush1.bf16.msra.mxu0 %v907
      %1264 = vmatprep.subr.bf16.mxu0 %v916
      %1265 = vmatpush1.bf16.msra.mxu0 %v915
      %1266 = vmatprep.subr.bf16.mxu0 %v924
      %1267 = vmatpush1.bf16.msra.mxu0 %v923
      %1268 = vmatprep.subr.bf16.mxu0 %v932
      %1269 = vmatpush1.bf16.msra.mxu0 %v931
      %1270 = vmatprep.subr.bf16.mxu0 %v940
      %1271 = vmatpush1.bf16.msra.mxu0 %v939
      %1272 = vmatprep.subr.bf16.mxu0 %v948
      %1273 = vmatpush1.bf16.msra.mxu0 %v947
      %1274 = vmatprep.subr.bf16.mxu0 %v956
      %1275 = vmatpush1.bf16.msra.mxu0 %v955
      %1276 = vmatprep.subr.bf16.mxu0 %v964
      %1277 = vmatpush1.bf16.msra.mxu0 %v963
      %1278 = vmatprep.subr.bf16.mxu0 %v972
      %1279 = vmatpush1.bf16.msra.mxu0 %v971
      %1280 = vmatprep.subr.bf16.mxu0 %v980
      %1281 = vmatpush1.bf16.msra.mxu0 %v979
      %1282 = vmatprep.subr.bf16.mxu0 %v988
      %1283 = vmatpush1.bf16.msra.mxu0 %v987
      %1284 = vmatprep.subr.bf16.mxu0 %v996
      %1285 = vmatpush1.bf16.msra.mxu0 %v995
      %1286 = vmatprep.subr.bf16.mxu0 %v1004
      %1287 = vmatpush1.bf16.msra.mxu0 %v1003
      %1288 = vmatprep.subr.bf16.mxu0 %v1012
      %1289 = vmatpush1.bf16.msra.mxu0 %v1011
      %1290 = vmatprep.mubr.bf16.mxu0 %v320
      %1291 = vmatmul.mubr.bf16.gmra.mrb[0].mxu0 %v319
      %v1292 = vpop.f32.mrb[0].mxu0
      %v1293 = vadd.f32 %v476, %v1292
      %v1294 = vpop.f32.mrb[0].mxu0
      %v1295 = vadd.f32 %v480, %v1294
      %v1296 = vpop.f32.mrb[0].mxu0
      %v1297 = vadd.f32 %v476, %v1296
      %v1298 = vpop.f32.mrb[0].mxu0
      %v1299 = vadd.f32 %v480, %v1298
      %1300 = vmatprep.mubr.bf16.mxu0 %v322
      %1301 = vmatmul.mubr.bf16.gmra.mrb[0].mxu0 %v321
      %v1302 = vpop.f32.mrb[0].mxu0
      %v1303 = vadd.f32 %v476, %v1302
      %v1304 = vpop.f32.mrb[0].mxu0
      %v1305 = vadd.f32 %v480, %v1304
      %v1306 = vpop.f32.mrb[0].mxu0
      %v1307 = vadd.f32 %v476, %v1306
      %v1308 = vpop.f32.mrb[0].mxu0
      %v1309 = vadd.f32 %v480, %v1308
      %1310 = vmatprep.mubr.bf16.mxu0 %v324
      %1311 = vmatmul.mubr.bf16.gmra.mrb[0].mxu0 %v323
      %v1312 = vpop.f32.mrb[0].mxu0
      %v1313 = vadd.f32 %v476, %v1312
      %v1314 = vpop.f32.mrb[0].mxu0
      %v1315 = vadd.f32 %v480, %v1314
      %v1316 = vpop.f32.mrb[0].mxu0
      %v1317 = vadd.f32 %v476, %v1316
      %v1318 = vpop.f32.mrb[0].mxu0
      %v1319 = vadd.f32 %v480, %v1318
      %1320 = vmatprep.mubr.bf16.mxu0 %v326
      %1321 = vmatmul.mubr.bf16.gmra.mrb[0].mxu0 %v325
      %v1322 = vpop.f32.mrb[0].mxu0
      %v1323 = vadd.f32 %v476, %v1322
      %v1324 = vpop.f32.mrb[0].mxu0
      %v1325 = vadd.f32 %v480, %v1324
      %v1326 = vpop.f32.mrb[0].mxu0
      %v1327 = vadd.f32 %v476, %v1326
      %v1328 = vpop.f32.mrb[0].mxu0
      %v1329 = vadd.f32 %v480, %v1328
      %1330 = vmatprep.mubr.bf16.mxu0 %v328
      %1331 = vmatmul.mubr.bf16.gmra.mrb[0].mxu0 %v327
      %v1332 = vpop.f32.mrb[0].mxu0
      %v1333 = vadd.f32 %v476, %v1332
      %v1334 = vpop.f32.mrb[0].mxu0
      %v1335 = vadd.f32 %v480, %v1334
      %v1336 = vpop.f32.mrb[0].mxu0
      %v1337 = vadd.f32 %v476, %v1336
      %v1338 = vpop.f32.mrb[0].mxu0
      %v1339 = vadd.f32 %v480, %v1338
      %1340 = vmatprep.mubr.bf16.mxu0 %v330
      %1341 = vmatmul.mubr.bf16.gmra.mrb[0].mxu0 %v329
      %v1342 = vpop.f32.mrb[0].mxu0
      %v1343 = vadd.f32 %v476, %v1342
      %v1344 = vpop.f32.mrb[0].mxu0
      %v1345 = vadd.f32 %v480, %v1344
      %v1346 = vpop.f32.mrb[0].mxu0
      %v1347 = vadd.f32 %v476, %v1346
      %v1348 = vpop.f32.mrb[0].mxu0
      %v1349 = vadd.f32 %v480, %v1348
      %1350 = vmatprep.mubr.bf16.mxu0 %v332
      %1351 = vmatmul.mubr.bf16.gmra.mrb[0].mxu0 %v331
      %v1352 = vpop.f32.mrb[0].mxu0
      %v1353 = vadd.f32 %v476, %v1352
      %v1354 = vpop.f32.mrb[0].mxu0
      %v1355 = vadd.f32 %v480, %v1354
      %v1356 = vpop.f32.mrb[0].mxu0
      %v1357 = vadd.f32 %v476, %v1356
      %v1358 = vpop.f32.mrb[0].mxu0
      %v1359 = vadd.f32 %v480, %v1358
      %1360 = vmatprep.mubr.bf16.mxu0 %v334
      %1361 = vmatmul.mubr.bf16.gmra.mrb[0].mxu0 %v333
      %v1362 = vpop.f32.mrb[0].mxu0
      %v1363 = vadd.f32 %v476, %v1362
      %v1364 = vpop.f32.mrb[0].mxu0
      %v1365 = vadd.f32 %v480, %v1364
      %v1366 = vpop.f32.mrb[0].mxu0
      %v1367 = vadd.f32 %v476, %v1366
      %v1368 = vpop.f32.mrb[0].mxu0
      %v1369 = vadd.f32 %v480, %v1368
      %1370 = vdwg.mxu0
      %1371 = vmatprep.subr.bf16.mxu0 %v894
      %1372 = vmatpush1.bf16.msra.mxu0 %v893
      %1373 = vmatprep.subr.bf16.mxu0 %v902
      %1374 = vmatpush1.bf16.msra.mxu0 %v901
      %1375 = vmatprep.subr.bf16.mxu0 %v910
      %1376 = vmatpush1.bf16.msra.mxu0 %v909
      %1377 = vmatprep.subr.bf16.mxu0 %v918
      %1378 = vmatpush1.bf16.msra.mxu0 %v917
      %1379 = vmatprep.subr.bf16.mxu0 %v926
      %1380 = vmatpush1.bf16.msra.mxu0 %v925
      %1381 = vmatprep.subr.bf16.mxu0 %v934
      %1382 = vmatpush1.bf16.msra.mxu0 %v933
      %1383 = vmatprep.subr.bf16.mxu0 %v942
      %1384 = vmatpush1.bf16.msra.mxu0 %v941
      %1385 = vmatprep.subr.bf16.mxu0 %v950
      %1386 = vmatpush1.bf16.msra.mxu0 %v949
      %1387 = vmatprep.subr.bf16.mxu0 %v958
      %1388 = vmatpush1.bf16.msra.mxu0 %v957
      %1389 = vmatprep.subr.bf16.mxu0 %v966
      %1390 = vmatpush1.bf16.msra.mxu0 %v965
      %1391 = vmatprep.subr.bf16.mxu0 %v974
      %1392 = vmatpush1.bf16.msra.mxu0 %v973
      %1393 = vmatprep.subr.bf16.mxu0 %v982
      %1394 = vmatpush1.bf16.msra.mxu0 %v981
      %1395 = vmatprep.subr.bf16.mxu0 %v990
      %1396 = vmatpush1.bf16.msra.mxu0 %v989
      %1397 = vmatprep.subr.bf16.mxu0 %v998
      %1398 = vmatpush1.bf16.msra.mxu0 %v997
      %1399 = vmatprep.subr.bf16.mxu0 %v1006
      %1400 = vmatpush1.bf16.msra.mxu0 %v1005
      %1401 = vmatprep.subr.bf16.mxu0 %v1014
      %1402 = vmatpush1.bf16.msra.mxu0 %v1013
      %1403 = vmatprep.mubr.bf16.mxu0 %v320
      %1404 = vmatmul.mubr.bf16.gmra.mrb[0].mxu0 %v319
      %v1405 = vpop.f32.mrb[0].mxu0
      %v1406 = vadd.f32 %v484, %v1405
      %v1407 = vpop.f32.mrb[0].mxu0
      %v1408 = vadd.f32 %v488, %v1407
      %v1409 = vpop.f32.mrb[0].mxu0
      %v1410 = vadd.f32 %v484, %v1409
      %v1411 = vpop.f32.mrb[0].mxu0
      %v1412 = vadd.f32 %v488, %v1411
      %1413 = vmatprep.mubr.bf16.mxu0 %v322
      %1414 = vmatmul.mubr.bf16.gmra.mrb[0].mxu0 %v321
      %v1415 = vpop.f32.mrb[0].mxu0
      %v1416 = vadd.f32 %v484, %v1415
      %v1417 = vpop.f32.mrb[0].mxu0
      %v1418 = vadd.f32 %v488, %v1417
      %v1419 = vpop.f32.mrb[0].mxu0
      %v1420 = vadd.f32 %v484, %v1419
      %v1421 = vpop.f32.mrb[0].mxu0
      %v1422 = vadd.f32 %v488, %v1421
      %1423 = vmatprep.mubr.bf16.mxu0 %v324
      %1424 = vmatmul.mubr.bf16.gmra.mrb[0].mxu0 %v323
      %v1425 = vpop.f32.mrb[0].mxu0
      %v1426 = vadd.f32 %v484, %v1425
      %v1427 = vpop.f32.mrb[0].mxu0
      %v1428 = vadd.f32 %v488, %v1427
      %v1429 = vpop.f32.mrb[0].mxu0
      %v1430 = vadd.f32 %v484, %v1429
      %v1431 = vpop.f32.mrb[0].mxu0
      %v1432 = vadd.f32 %v488, %v1431
      %1433 = vmatprep.mubr.bf16.mxu0 %v326
      %1434 = vmatmul.mubr.bf16.gmra.mrb[0].mxu0 %v325
      %v1435 = vpop.f32.mrb[0].mxu0
      %v1436 = vadd.f32 %v484, %v1435
      %v1437 = vpop.f32.mrb[0].mxu0
      %v1438 = vadd.f32 %v488, %v1437
      %v1439 = vpop.f32.mrb[0].mxu0
      %v1440 = vadd.f32 %v484, %v1439
      %v1441 = vpop.f32.mrb[0].mxu0
      %v1442 = vadd.f32 %v488, %v1441
      %1443 = vmatprep.mubr.bf16.mxu0 %v328
      %1444 = vmatmul.mubr.bf16.gmra.mrb[0].mxu0 %v327
      %v1445 = vpop.f32.mrb[0].mxu0
      %v1446 = vadd.f32 %v484, %v1445
      %v1447 = vpop.f32.mrb[0].mxu0
      %v1448 = vadd.f32 %v488, %v1447
      %v1449 = vpop.f32.mrb[0].mxu0
      %v1450 = vadd.f32 %v484, %v1449
      %v1451 = vpop.f32.mrb[0].mxu0
      %v1452 = vadd.f32 %v488, %v1451
      %1453 = vmatprep.mubr.bf16.mxu0 %v330
      %1454 = vmatmul.mubr.bf16.gmra.mrb[0].mxu0 %v329
      %v1455 = vpop.f32.mrb[0].mxu0
      %v1456 = vadd.f32 %v484, %v1455
      %v1457 = vpop.f32.mrb[0].mxu0
      %v1458 = vadd.f32 %v488, %v1457
      %v1459 = vpop.f32.mrb[0].mxu0
      %v1460 = vadd.f32 %v484, %v1459
      %v1461 = vpop.f32.mrb[0].mxu0
      %v1462 = vadd.f32 %v488, %v1461
      %1463 = vmatprep.mubr.bf16.mxu0 %v332
      %1464 = vmatmul.mubr.bf16.gmra.mrb[0].mxu0 %v331
      %v1465 = vpop.f32.mrb[0].mxu0
      %v1466 = vadd.f32 %v484, %v1465
      %v1467 = vpop.f32.mrb[0].mxu0
      %v1468 = vadd.f32 %v488, %v1467
      %v1469 = vpop.f32.mrb[0].mxu0
      %v1470 = vadd.f32 %v484, %v1469
      %v1471 = vpop.f32.mrb[0].mxu0
      %v1472 = vadd.f32 %v488, %v1471
      %1473 = vmatprep.mubr.bf16.mxu0 %v334
      %1474 = vmatmul.mubr.bf16.gmra.mrb[0].mxu0 %v333
      %v1475 = vpop.f32.mrb[0].mxu0
      %v1476 = vadd.f32 %v484, %v1475
      %v1477 = vpop.f32.mrb[0].mxu0
      %v1478 = vadd.f32 %v488, %v1477
      %v1479 = vpop.f32.mrb[0].mxu0
      %v1480 = vadd.f32 %v484, %v1479
      %v1481 = vpop.f32.mrb[0].mxu0
      %v1482 = vadd.f32 %v488, %v1481
      %1483 = vdwg.mxu0
      %1484 = vmatprep.subr.bf16.mxu0 %v896
      %1485 = vmatpush1.bf16.msra.mxu0 %v895
      %1486 = vmatprep.subr.bf16.mxu0 %v904
      %1487 = vmatpush1.bf16.msra.mxu0 %v903
      %1488 = vmatprep.subr.bf16.mxu0 %v912
      %1489 = vmatpush1.bf16.msra.mxu0 %v911
      %1490 = vmatprep.subr.bf16.mxu0 %v920
      %1491 = vmatpush1.bf16.msra.mxu0 %v919
      %1492 = vmatprep.subr.bf16.mxu0 %v928
      %1493 = vmatpush1.bf16.msra.mxu0 %v927
      %1494 = vmatprep.subr.bf16.mxu0 %v936
      %1495 = vmatpush1.bf16.msra.mxu0 %v935
      %1496 = vmatprep.subr.bf16.mxu0 %v944
      %1497 = vmatpush1.bf16.msra.mxu0 %v943
      %1498 = vmatprep.subr.bf16.mxu0 %v952
      %1499 = vmatpush1.bf16.msra.mxu0 %v951
      %1500 = vmatprep.subr.bf16.mxu0 %v960
      %1501 = vmatpush1.bf16.msra.mxu0 %v959
      %1502 = vmatprep.subr.bf16.mxu0 %v968
      %1503 = vmatpush1.bf16.msra.mxu0 %v967
      %1504 = vmatprep.subr.bf16.mxu0 %v976
      %1505 = vmatpush1.bf16.msra.mxu0 %v975
      %1506 = vmatprep.subr.bf16.mxu0 %v984
      %1507 = vmatpush1.bf16.msra.mxu0 %v983
      %1508 = vmatprep.subr.bf16.mxu0 %v992
      %1509 = vmatpush1.bf16.msra.mxu0 %v991
      %1510 = vmatprep.subr.bf16.mxu0 %v1000
      %1511 = vmatpush1.bf16.msra.mxu0 %v999
      %1512 = vmatprep.subr.bf16.mxu0 %v1008
      %1513 = vmatpush1.bf16.msra.mxu0 %v1007
      %1514 = vmatprep.subr.bf16.mxu0 %v1016
      %1515 = vmatpush1.bf16.msra.mxu0 %v1015
      %1516 = vmatprep.mubr.bf16.mxu0 %v320
      %1517 = vmatmul.mubr.bf16.gmra.mrb[0].mxu0 %v319
      %v1518 = vpop.f32.mrb[0].mxu0
      %v1519 = vadd.f32 %v492, %v1518
      %v1520 = vpop.f32.mrb[0].mxu0
      %v1521 = vadd.f32 %v496, %v1520
      %v1522 = vpop.f32.mrb[0].mxu0
      %v1523 = vadd.f32 %v492, %v1522
      %v1524 = vpop.f32.mrb[0].mxu0
      %v1525 = vadd.f32 %v496, %v1524
      %1526 = vmatprep.mubr.bf16.mxu0 %v322
      %1527 = vmatmul.mubr.bf16.gmra.mrb[0].mxu0 %v321
      %v1528 = vpop.f32.mrb[0].mxu0
      %v1529 = vadd.f32 %v492, %v1528
      %v1530 = vpop.f32.mrb[0].mxu0
      %v1531 = vadd.f32 %v496, %v1530
      %v1532 = vpop.f32.mrb[0].mxu0
      %v1533 = vadd.f32 %v492, %v1532
      %v1534 = vpop.f32.mrb[0].mxu0
      %v1535 = vadd.f32 %v496, %v1534
      %1536 = vmatprep.mubr.bf16.mxu0 %v324
      %1537 = vmatmul.mubr.bf16.gmra.mrb[0].mxu0 %v323
      %v1538 = vpop.f32.mrb[0].mxu0
      %v1539 = vadd.f32 %v492, %v1538
      %v1540 = vpop.f32.mrb[0].mxu0
      %v1541 = vadd.f32 %v496, %v1540
      %v1542 = vpop.f32.mrb[0].mxu0
      %v1543 = vadd.f32 %v492, %v1542
      %v1544 = vpop.f32.mrb[0].mxu0
      %v1545 = vadd.f32 %v496, %v1544
      %1546 = vmatprep.mubr.bf16.mxu0 %v326
      %1547 = vmatmul.mubr.bf16.gmra.mrb[0].mxu0 %v325
      %v1548 = vpop.f32.mrb[0].mxu0
      %v1549 = vadd.f32 %v492, %v1548
      %v1550 = vpop.f32.mrb[0].mxu0
      %v1551 = vadd.f32 %v496, %v1550
      %v1552 = vpop.f32.mrb[0].mxu0
      %v1553 = vadd.f32 %v492, %v1552
      %v1554 = vpop.f32.mrb[0].mxu0
      %v1555 = vadd.f32 %v496, %v1554
      %1556 = vmatprep.mubr.bf16.mxu0 %v328
      %1557 = vmatmul.mubr.bf16.gmra.mrb[0].mxu0 %v327
      %v1558 = vpop.f32.mrb[0].mxu0
      %v1559 = vadd.f32 %v492, %v1558
      %v1560 = vpop.f32.mrb[0].mxu0
      %v1561 = vadd.f32 %v496, %v1560
      %v1562 = vpop.f32.mrb[0].mxu0
      %v1563 = vadd.f32 %v492, %v1562
      %v1564 = vpop.f32.mrb[0].mxu0
      %v1565 = vadd.f32 %v496, %v1564
      %1566 = vmatprep.mubr.bf16.mxu0 %v330
      %1567 = vmatmul.mubr.bf16.gmra.mrb[0].mxu0 %v329
      %v1568 = vpop.f32.mrb[0].mxu0
      %v1569 = vadd.f32 %v492, %v1568
      %v1570 = vpop.f32.mrb[0].mxu0
      %v1571 = vadd.f32 %v496, %v1570
      %v1572 = vpop.f32.mrb[0].mxu0
      %v1573 = vadd.f32 %v492, %v1572
      %v1574 = vpop.f32.mrb[0].mxu0
      %v1575 = vadd.f32 %v496, %v1574
      %1576 = vmatprep.mubr.bf16.mxu0 %v332
      %1577 = vmatmul.mubr.bf16.gmra.mrb[0].mxu0 %v331
      %v1578 = vpop.f32.mrb[0].mxu0
      %v1579 = vadd.f32 %v492, %v1578
      %v1580 = vpop.f32.mrb[0].mxu0
      %v1581 = vadd.f32 %v496, %v1580
      %v1582 = vpop.f32.mrb[0].mxu0
      %v1583 = vadd.f32 %v492, %v1582
      %v1584 = vpop.f32.mrb[0].mxu0
      %v1585 = vadd.f32 %v496, %v1584
      %1586 = vmatprep.mubr.bf16.mxu0 %v334
      %1587 = vmatmul.mubr.bf16.gmra.mrb[0].mxu0 %v333
      %v1588 = vpop.f32.mrb[0].mxu0
      %v1589 = vadd.f32 %v492, %v1588
      %v1590 = vpop.f32.mrb[0].mxu0
      %v1591 = vadd.f32 %v496, %v1590
      %v1592 = vpop.f32.mrb[0].mxu0
      %v1593 = vadd.f32 %v492, %v1592
      %v1594 = vpop.f32.mrb[0].mxu0
      %v1595 = vadd.f32 %v496, %v1594
      %1596 = vdwg.mxu0
      %v1597 = vmax.f32 %v1180, 0.0
      %v1598 = vmax.f32 %v1182, 0.0
      %v1599 = vmax.f32 %v1293, 0.0
      %v1600 = vmax.f32 %v1295, 0.0
      %v1601 = vmax.f32 %v1406, 0.0
      %v1602 = vmax.f32 %v1408, 0.0
      %v1603 = vmax.f32 %v1519, 0.0
      %v1604 = vmax.f32 %v1521, 0.0
      %v1605 = vmax.f32 %v1184, 0.0
      %v1606 = vmax.f32 %v1186, 0.0
      %v1607 = vmax.f32 %v1297, 0.0
      %v1608 = vmax.f32 %v1299, 0.0
      %v1609 = vmax.f32 %v1410, 0.0
      %v1610 = vmax.f32 %v1412, 0.0
      %v1611 = vmax.f32 %v1523, 0.0
      %v1612 = vmax.f32 %v1525, 0.0
      %v1613 = vmax.f32 %v1190, 0.0
      %v1614 = vmax.f32 %v1192, 0.0
      %v1615 = vmax.f32 %v1303, 0.0
      %v1616 = vmax.f32 %v1305, 0.0
      %v1617 = vmax.f32 %v1416, 0.0
      %v1618 = vmax.f32 %v1418, 0.0
      %v1619 = vmax.f32 %v1529, 0.0
      %v1620 = vmax.f32 %v1531, 0.0
      %v1621 = vmax.f32 %v1194, 0.0
      %v1622 = vmax.f32 %v1196, 0.0
      %v1623 = vmax.f32 %v1307, 0.0
      %v1624 = vmax.f32 %v1309, 0.0
      %v1625 = vmax.f32 %v1420, 0.0
      %v1626 = vmax.f32 %v1422, 0.0
      %v1627 = vmax.f32 %v1533, 0.0
      %v1628 = vmax.f32 %v1535, 0.0
      %v1629 = vmax.f32 %v1200, 0.0
      %v1630 = vmax.f32 %v1202, 0.0
      %v1631 = vmax.f32 %v1313, 0.0
      %v1632 = vmax.f32 %v1315, 0.0
      %v1633 = vmax.f32 %v1426, 0.0
      %v1634 = vmax.f32 %v1428, 0.0
      %v1635 = vmax.f32 %v1539, 0.0
      %v1636 = vmax.f32 %v1541, 0.0
      %v1637 = vmax.f32 %v1204, 0.0
      %v1638 = vmax.f32 %v1206, 0.0
      %v1639 = vmax.f32 %v1317, 0.0
      %v1640 = vmax.f32 %v1319, 0.0
      %v1641 = vmax.f32 %v1430, 0.0
      %v1642 = vmax.f32 %v1432, 0.0
      %v1643 = vmax.f32 %v1543, 0.0
      %v1644 = vmax.f32 %v1545, 0.0
      %v1645 = vmax.f32 %v1210, 0.0
      %v1646 = vmax.f32 %v1212, 0.0
      %v1647 = vmax.f32 %v1323, 0.0
      %v1648 = vmax.f32 %v1325, 0.0
      %v1649 = vmax.f32 %v1436, 0.0
      %v1650 = vmax.f32 %v1438, 0.0
      %v1651 = vmax.f32 %v1549, 0.0
      %v1652 = vmax.f32 %v1551, 0.0
      %v1653 = vmax.f32 %v1214, 0.0
      %v1654 = vmax.f32 %v1216, 0.0
      %v1655 = vmax.f32 %v1327, 0.0
      %v1656 = vmax.f32 %v1329, 0.0
      %v1657 = vmax.f32 %v1440, 0.0
      %v1658 = vmax.f32 %v1442, 0.0
      %v1659 = vmax.f32 %v1553, 0.0
      %v1660 = vmax.f32 %v1555, 0.0
      %v1661 = vmax.f32 %v1220, 0.0
      %v1662 = vmax.f32 %v1222, 0.0
      %v1663 = vmax.f32 %v1333, 0.0
      %v1664 = vmax.f32 %v1335, 0.0
      %v1665 = vmax.f32 %v1446, 0.0
      %v1666 = vmax.f32 %v1448, 0.0
      %v1667 = vmax.f32 %v1559, 0.0
      %v1668 = vmax.f32 %v1561, 0.0
      %v1669 = vmax.f32 %v1224, 0.0
      %v1670 = vmax.f32 %v1226, 0.0
      %v1671 = vmax.f32 %v1337, 0.0
      %v1672 = vmax.f32 %v1339, 0.0
      %v1673 = vmax.f32 %v1450, 0.0
      %v1674 = vmax.f32 %v1452, 0.0
      %v1675 = vmax.f32 %v1563, 0.0
      %v1676 = vmax.f32 %v1565, 0.0
      %v1677 = vmax.f32 %v1230, 0.0
      %v1678 = vmax.f32 %v1232, 0.0
      %v1679 = vmax.f32 %v1343, 0.0
      %v1680 = vmax.f32 %v1345, 0.0
      %v1681 = vmax.f32 %v1456, 0.0
      %v1682 = vmax.f32 %v1458, 0.0
      %v1683 = vmax.f32 %v1569, 0.0
      %v1684 = vmax.f32 %v1571, 0.0
      %v1685 = vmax.f32 %v1234, 0.0
      %v1686 = vmax.f32 %v1236, 0.0
      %v1687 = vmax.f32 %v1347, 0.0
      %v1688 = vmax.f32 %v1349, 0.0
      %v1689 = vmax.f32 %v1460, 0.0
      %v1690 = vmax.f32 %v1462, 0.0
      %v1691 = vmax.f32 %v1573, 0.0
      %v1692 = vmax.f32 %v1575, 0.0
      %v1693 = vmax.f32 %v1240, 0.0
      %v1694 = vmax.f32 %v1242, 0.0
      %v1695 = vmax.f32 %v1353, 0.0
      %v1696 = vmax.f32 %v1355, 0.0
      %v1697 = vmax.f32 %v1466, 0.0
      %v1698 = vmax.f32 %v1468, 0.0
      %v1699 = vmax.f32 %v1579, 0.0
      %v1700 = vmax.f32 %v1581, 0.0
      %v1701 = vmax.f32 %v1244, 0.0
      %v1702 = vmax.f32 %v1246, 0.0
      %v1703 = vmax.f32 %v1357, 0.0
      %v1704 = vmax.f32 %v1359, 0.0
      %v1705 = vmax.f32 %v1470, 0.0
      %v1706 = vmax.f32 %v1472, 0.0
      %v1707 = vmax.f32 %v1583, 0.0
      %v1708 = vmax.f32 %v1585, 0.0
      %v1709 = vmax.f32 %v1250, 0.0
      %v1710 = vmax.f32 %v1252, 0.0
      %v1711 = vmax.f32 %v1363, 0.0
      %v1712 = vmax.f32 %v1365, 0.0
      %v1713 = vmax.f32 %v1476, 0.0
      %v1714 = vmax.f32 %v1478, 0.0
      %v1715 = vmax.f32 %v1589, 0.0
      %v1716 = vmax.f32 %v1591, 0.0
      %v1717 = vmax.f32 %v1254, 0.0
      %v1718 = vmax.f32 %v1256, 0.0
      %v1719 = vmax.f32 %v1367, 0.0
      %v1720 = vmax.f32 %v1369, 0.0
      %v1721 = vmax.f32 %v1480, 0.0
      %v1722 = vmax.f32 %v1482, 0.0
      %v1723 = vmax.f32 %v1593, 0.0
      %v1724 = vmax.f32 %v1595, 0.0
      %v1725 = vpack.c.bf16 %v1605, %v1597
      %v1726 = vpack.c.bf16 %v1606, %v1598
      %v1727 = vpack.c.bf16 %v1607, %v1599
      %v1728 = vpack.c.bf16 %v1608, %v1600
      %v1729 = vpack.c.bf16 %v1609, %v1601
      %v1730 = vpack.c.bf16 %v1610, %v1602
      %v1731 = vpack.c.bf16 %v1611, %v1603
      %v1732 = vpack.c.bf16 %v1612, %v1604
      %v1733 = vpack.c.bf16 %v1621, %v1613
      %v1734 = vpack.c.bf16 %v1622, %v1614
      %v1735 = vpack.c.bf16 %v1623, %v1615
      %v1736 = vpack.c.bf16 %v1624, %v1616
      %v1737 = vpack.c.bf16 %v1625, %v1617
      %v1738 = vpack.c.bf16 %v1626, %v1618
      %v1739 = vpack.c.bf16 %v1627, %v1619
      %v1740 = vpack.c.bf16 %v1628, %v1620
      %v1741 = vpack.c.bf16 %v1637, %v1629
      %v1742 = vpack.c.bf16 %v1638, %v1630
      %v1743 = vpack.c.bf16 %v1639, %v1631
      %v1744 = vpack.c.bf16 %v1640, %v1632
      %v1745 = vpack.c.bf16 %v1641, %v1633
      %v1746 = vpack.c.bf16 %v1642, %v1634
      %v1747 = vpack.c.bf16 %v1643, %v1635
      %v1748 = vpack.c.bf16 %v1644, %v1636
      %v1749 = vpack.c.bf16 %v1653, %v1645
      %v1750 = vpack.c.bf16 %v1654, %v1646
      %v1751 = vpack.c.bf16 %v1655, %v1647
      %v1752 = vpack.c.bf16 %v1656, %v1648
      %v1753 = vpack.c.bf16 %v1657, %v1649
      %v1754 = vpack.c.bf16 %v1658, %v1650
      %v1755 = vpack.c.bf16 %v1659, %v1651
      %v1756 = vpack.c.bf16 %v1660, %v1652
      %v1757 = vpack.c.bf16 %v1669, %v1661
      %v1758 = vpack.c.bf16 %v1670, %v1662
      %v1759 = vpack.c.bf16 %v1671, %v1663
      %v1760 = vpack.c.bf16 %v1672, %v1664
      %v1761 = vpack.c.bf16 %v1673, %v1665
      %v1762 = vpack.c.bf16 %v1674, %v1666
      %v1763 = vpack.c.bf16 %v1675, %v1667
      %v1764 = vpack.c.bf16 %v1676, %v1668
      %v1765 = vpack.c.bf16 %v1685, %v1677
      %v1766 = vpack.c.bf16 %v1686, %v1678
      %v1767 = vpack.c.bf16 %v1687, %v1679
      %v1768 = vpack.c.bf16 %v1688, %v1680
      %v1769 = vpack.c.bf16 %v1689, %v1681
      %v1770 = vpack.c.bf16 %v1690, %v1682
      %v1771 = vpack.c.bf16 %v1691, %v1683
      %v1772 = vpack.c.bf16 %v1692, %v1684
      %v1773 = vpack.c.bf16 %v1701, %v1693
      %v1774 = vpack.c.bf16 %v1702, %v1694
      %v1775 = vpack.c.bf16 %v1703, %v1695
      %v1776 = vpack.c.bf16 %v1704, %v1696
      %v1777 = vpack.c.bf16 %v1705, %v1697
      %v1778 = vpack.c.bf16 %v1706, %v1698
      %v1779 = vpack.c.bf16 %v1707, %v1699
      %v1780 = vpack.c.bf16 %v1708, %v1700
      %v1781 = vpack.c.bf16 %v1717, %v1709
      %v1782 = vpack.c.bf16 %v1718, %v1710
      %v1783 = vpack.c.bf16 %v1719, %v1711
      %v1784 = vpack.c.bf16 %v1720, %v1712
      %v1785 = vpack.c.bf16 %v1721, %v1713
      %v1786 = vpack.c.bf16 %v1722, %v1714
      %v1787 = vpack.c.bf16 %v1723, %v1715
      %v1788 = vpack.c.bf16 %v1724, %v1716
      %v1789 = vld [vmem:[%s3] sm:$0xff]
      %v1790 = vld [vmem:[%s3 + $0x8] sm:$0xff]
      %v1791 = vld [vmem:[%s3 + $0x10] sm:$0xff]
      %v1792 = vld [vmem:[%s3 + $0x18] sm:$0xff]
      %v1793 = vld [vmem:[%s3 + $0x20] sm:$0xff]
      %v1794 = vld [vmem:[%s3 + $0x28] sm:$0xff]
      %v1795 = vld [vmem:[%s3 + $0x30] sm:$0xff]
      %v1796 = vld [vmem:[%s3 + $0x38] sm:$0xff]
      %v1797 = vld [vmem:[%s3 + $0x40] sm:$0xff]
      %v1798 = vld [vmem:[%s3 + $0x48] sm:$0xff]
      %v1799 = vld [vmem:[%s3 + $0x50] sm:$0xff]
      %v1800 = vld [vmem:[%s3 + $0x58] sm:$0xff]
      %v1801 = vld [vmem:[%s3 + $0x60] sm:$0xff]
      %v1802 = vld [vmem:[%s3 + $0x68] sm:$0xff]
      %v1803 = vld [vmem:[%s3 + $0x70] sm:$0xff]
      %v1804 = vld [vmem:[%s3 + $0x78] sm:$0xff]
      %v1805 = vld [vmem:[%s3 + $0x80] sm:$0xff]
      %v1806 = vld [vmem:[%s3 + $0x88] sm:$0xff]
      %v1807 = vld [vmem:[%s3 + $0x90] sm:$0xff]
      %v1808 = vld [vmem:[%s3 + $0x98] sm:$0xff]
      %v1809 = vld [vmem:[%s3 + $0xa0] sm:$0xff]
      %v1810 = vld [vmem:[%s3 + $0xa8] sm:$0xff]
      %v1811 = vld [vmem:[%s3 + $0xb0] sm:$0xff]
      %v1812 = vld [vmem:[%s3 + $0xb8] sm:$0xff]
      %v1813 = vld [vmem:[%s3 + $0xc0] sm:$0xff]
      %v1814 = vld [vmem:[%s3 + $0xc8] sm:$0xff]
      %v1815 = vld [vmem:[%s3 + $0xd0] sm:$0xff]
      %v1816 = vld [vmem:[%s3 + $0xd8] sm:$0xff]
      %v1817 = vld [vmem:[%s3 + $0xe0] sm:$0xff]
      %v1818 = vld [vmem:[%s3 + $0xe8] sm:$0xff]
      %v1819 = vld [vmem:[%s3 + $0xf0] sm:$0xff]
      %v1820 = vld [vmem:[%s3 + $0xf8] sm:$0xff]
      %v1821 = vld [vmem:[%s3 + $0x100] sm:$0xff]
      %v1822 = vld [vmem:[%s3 + $0x108] sm:$0xff]
      %v1823 = vld [vmem:[%s3 + $0x110] sm:$0xff]
      %v1824 = vld [vmem:[%s3 + $0x118] sm:$0xff]
      %v1825 = vld [vmem:[%s3 + $0x120] sm:$0xff]
      %v1826 = vld [vmem:[%s3 + $0x128] sm:$0xff]
      %v1827 = vld [vmem:[%s3 + $0x130] sm:$0xff]
      %v1828 = vld [vmem:[%s3 + $0x138] sm:$0xff]
      %v1829 = vld [vmem:[%s3 + $0x140] sm:$0xff]
      %v1830 = vld [vmem:[%s3 + $0x148] sm:$0xff]
      %v1831 = vld [vmem:[%s3 + $0x150] sm:$0xff]
      %v1832 = vld [vmem:[%s3 + $0x158] sm:$0xff]
      %v1833 = vld [vmem:[%s3 + $0x160] sm:$0xff]
      %v1834 = vld [vmem:[%s3 + $0x168] sm:$0xff]
      %v1835 = vld [vmem:[%s3 + $0x170] sm:$0xff]
      %v1836 = vld [vmem:[%s3 + $0x178] sm:$0xff]
      %v1837 = vld [vmem:[%s3 + $0x180] sm:$0xff]
      %v1838 = vld [vmem:[%s3 + $0x188] sm:$0xff]
      %v1839 = vld [vmem:[%s3 + $0x190] sm:$0xff]
      %v1840 = vld [vmem:[%s3 + $0x198] sm:$0xff]
      %v1841 = vld [vmem:[%s3 + $0x1a0] sm:$0xff]
      %v1842 = vld [vmem:[%s3 + $0x1a8] sm:$0xff]
      %v1843 = vld [vmem:[%s3 + $0x1b0] sm:$0xff]
      %v1844 = vld [vmem:[%s3 + $0x1b8] sm:$0xff]
      %v1845 = vld [vmem:[%s3 + $0x1c0] sm:$0xff]
      %v1846 = vld [vmem:[%s3 + $0x1c8] sm:$0xff]
      %v1847 = vld [vmem:[%s3 + $0x1d0] sm:$0xff]
      %v1848 = vld [vmem:[%s3 + $0x1d8] sm:$0xff]
      %v1849 = vld [vmem:[%s3 + $0x1e0] sm:$0xff]
      %v1850 = vld [vmem:[%s3 + $0x1e8] sm:$0xff]
      %v1851 = vld [vmem:[%s3 + $0x1f0] sm:$0xff]
      %v1852 = vld [vmem:[%s3 + $0x1f8] sm:$0xff]
      %v1853 = vld [vmem:[%s3 + $0x200] sm:$0xff]
      %v1854 = vld [vmem:[%s3 + $0x208] sm:$0xff]
      %v1855 = vld [vmem:[%s3 + $0x210] sm:$0xff]
      %v1856 = vld [vmem:[%s3 + $0x218] sm:$0xff]
      %v1857 = vld [vmem:[%s3 + $0x220] sm:$0xff]
      %v1858 = vld [vmem:[%s3 + $0x228] sm:$0xff]
      %v1859 = vld [vmem:[%s3 + $0x230] sm:$0xff]
      %v1860 = vld [vmem:[%s3 + $0x238] sm:$0xff]
      %v1861 = vld [vmem:[%s3 + $0x240] sm:$0xff]
      %v1862 = vld [vmem:[%s3 + $0x248] sm:$0xff]
      %v1863 = vld [vmem:[%s3 + $0x250] sm:$0xff]
      %v1864 = vld [vmem:[%s3 + $0x258] sm:$0xff]
      %v1865 = vld [vmem:[%s3 + $0x260] sm:$0xff]
      %v1866 = vld [vmem:[%s3 + $0x268] sm:$0xff]
      %v1867 = vld [vmem:[%s3 + $0x270] sm:$0xff]
      %v1868 = vld [vmem:[%s3 + $0x278] sm:$0xff]
      %v1869 = vld [vmem:[%s3 + $0x280] sm:$0xff]
      %v1870 = vld [vmem:[%s3 + $0x288] sm:$0xff]
      %v1871 = vld [vmem:[%s3 + $0x290] sm:$0xff]
      %v1872 = vld [vmem:[%s3 + $0x298] sm:$0xff]
      %v1873 = vld [vmem:[%s3 + $0x2a0] sm:$0xff]
      %v1874 = vld [vmem:[%s3 + $0x2a8] sm:$0xff]
      %v1875 = vld [vmem:[%s3 + $0x2b0] sm:$0xff]
      %v1876 = vld [vmem:[%s3 + $0x2b8] sm:$0xff]
      %v1877 = vld [vmem:[%s3 + $0x2c0] sm:$0xff]
      %v1878 = vld [vmem:[%s3 + $0x2c8] sm:$0xff]
      %v1879 = vld [vmem:[%s3 + $0x2d0] sm:$0xff]
      %v1880 = vld [vmem:[%s3 + $0x2d8] sm:$0xff]
      %v1881 = vld [vmem:[%s3 + $0x2e0] sm:$0xff]
      %v1882 = vld [vmem:[%s3 + $0x2e8] sm:$0xff]
      %v1883 = vld [vmem:[%s3 + $0x2f0] sm:$0xff]
      %v1884 = vld [vmem:[%s3 + $0x2f8] sm:$0xff]
      %v1885 = vld [vmem:[%s3 + $0x300] sm:$0xff]
      %v1886 = vld [vmem:[%s3 + $0x308] sm:$0xff]
      %v1887 = vld [vmem:[%s3 + $0x310] sm:$0xff]
      %v1888 = vld [vmem:[%s3 + $0x318] sm:$0xff]
      %v1889 = vld [vmem:[%s3 + $0x320] sm:$0xff]
      %v1890 = vld [vmem:[%s3 + $0x328] sm:$0xff]
      %v1891 = vld [vmem:[%s3 + $0x330] sm:$0xff]
      %v1892 = vld [vmem:[%s3 + $0x338] sm:$0xff]
      %v1893 = vld [vmem:[%s3 + $0x340] sm:$0xff]
      %v1894 = vld [vmem:[%s3 + $0x348] sm:$0xff]
      %v1895 = vld [vmem:[%s3 + $0x350] sm:$0xff]
      %v1896 = vld [vmem:[%s3 + $0x358] sm:$0xff]
      %v1897 = vld [vmem:[%s3 + $0x360] sm:$0xff]
      %v1898 = vld [vmem:[%s3 + $0x368] sm:$0xff]
      %v1899 = vld [vmem:[%s3 + $0x370] sm:$0xff]
      %v1900 = vld [vmem:[%s3 + $0x378] sm:$0xff]
      %v1901 = vld [vmem:[%s3 + $0x380] sm:$0xff]
      %v1902 = vld [vmem:[%s3 + $0x388] sm:$0xff]
      %v1903 = vld [vmem:[%s3 + $0x390] sm:$0xff]
      %v1904 = vld [vmem:[%s3 + $0x398] sm:$0xff]
      %v1905 = vld [vmem:[%s3 + $0x3a0] sm:$0xff]
      %v1906 = vld [vmem:[%s3 + $0x3a8] sm:$0xff]
      %v1907 = vld [vmem:[%s3 + $0x3b0] sm:$0xff]
      %v1908 = vld [vmem:[%s3 + $0x3b8] sm:$0xff]
      %v1909 = vld [vmem:[%s3 + $0x3c0] sm:$0xff]
      %v1910 = vld [vmem:[%s3 + $0x3c8] sm:$0xff]
      %v1911 = vld [vmem:[%s3 + $0x3d0] sm:$0xff]
      %v1912 = vld [vmem:[%s3 + $0x3d8] sm:$0xff]
      %v1913 = vld [vmem:[%s3 + $0x3e0] sm:$0xff]
      %v1914 = vld [vmem:[%s3 + $0x3e8] sm:$0xff]
      %v1915 = vld [vmem:[%s3 + $0x3f0] sm:$0xff]
      %v1916 = vld [vmem:[%s3 + $0x3f8] sm:$0xff]
      %v1917 = vld [vmem:[%s4] sm:$0x3]
      %v1919 = vlaneseq
      %v1920 = vshrl.u32 %v1919, 7
      %v1921 = vsub.s32 0, %v1920
      %v1922 = vrot.slane %v1917, %v1921
      %v1923 = vlaneseq
      %v1924 = vshrl.u32 %v1923, 7
      %v1925 = vsub.s32 1, %v1924
      %v1926 = vrot.slane %v1917, %v1925
      %v2057 = vunpack.c.l.b16 %v1789
      %v2058 = vunpack.c.h.b16 %v1789
      %v2059 = vunpack.c.l.b16 %v1790
      %v2060 = vunpack.c.h.b16 %v1790
      %v2061 = vunpack.c.l.b16 %v1791
      %v2062 = vunpack.c.h.b16 %v1791
      %v2063 = vunpack.c.l.b16 %v1792
      %v2064 = vunpack.c.h.b16 %v1792
      %v2065 = vunpack.c.l.b16 %v1793
      %v2066 = vunpack.c.h.b16 %v1793
      %v2067 = vunpack.c.l.b16 %v1794
      %v2068 = vunpack.c.h.b16 %v1794
      %v2069 = vunpack.c.l.b16 %v1795
      %v2070 = vunpack.c.h.b16 %v1795
      %v2071 = vunpack.c.l.b16 %v1796
      %v2072 = vunpack.c.h.b16 %v1796
      %v2073 = vunpack.c.l.b16 %v1797
      %v2074 = vunpack.c.h.b16 %v1797
      %v2075 = vunpack.c.l.b16 %v1798
      %v2076 = vunpack.c.h.b16 %v1798
      %v2077 = vunpack.c.l.b16 %v1799
      %v2078 = vunpack.c.h.b16 %v1799
      %v2079 = vunpack.c.l.b16 %v1800
      %v2080 = vunpack.c.h.b16 %v1800
      %v2081 = vunpack.c.l.b16 %v1801
      %v2082 = vunpack.c.h.b16 %v1801
      %v2083 = vunpack.c.l.b16 %v1802
      %v2084 = vunpack.c.h.b16 %v1802
      %v2085 = vunpack.c.l.b16 %v1803
      %v2086 = vunpack.c.h.b16 %v1803
      %v2087 = vunpack.c.l.b16 %v1804
      %v2088 = vunpack.c.h.b16 %v1804
      %v2089 = vunpack.c.l.b16 %v1805
      %v2090 = vunpack.c.h.b16 %v1805
      %v2091 = vunpack.c.l.b16 %v1806
      %v2092 = vunpack.c.h.b16 %v1806
      %v2093 = vunpack.c.l.b16 %v1807
      %v2094 = vunpack.c.h.b16 %v1807
      %v2095 = vunpack.c.l.b16 %v1808
      %v2096 = vunpack.c.h.b16 %v1808
      %v2097 = vunpack.c.l.b16 %v1809
      %v2098 = vunpack.c.h.b16 %v1809
      %v2099 = vunpack.c.l.b16 %v1810
      %v2100 = vunpack.c.h.b16 %v1810
      %v2101 = vunpack.c.l.b16 %v1811
      %v2102 = vunpack.c.h.b16 %v1811
      %v2103 = vunpack.c.l.b16 %v1812
      %v2104 = vunpack.c.h.b16 %v1812
      %v2105 = vunpack.c.l.b16 %v1813
      %v2106 = vunpack.c.h.b16 %v1813
      %v2107 = vunpack.c.l.b16 %v1814
      %v2108 = vunpack.c.h.b16 %v1814
      %v2109 = vunpack.c.l.b16 %v1815
      %v2110 = vunpack.c.h.b16 %v1815
      %v2111 = vunpack.c.l.b16 %v1816
      %v2112 = vunpack.c.h.b16 %v1816
      %v2113 = vunpack.c.l.b16 %v1817
      %v2114 = vunpack.c.h.b16 %v1817
      %v2115 = vunpack.c.l.b16 %v1818
      %v2116 = vunpack.c.h.b16 %v1818
      %v2117 = vunpack.c.l.b16 %v1819
      %v2118 = vunpack.c.h.b16 %v1819
      %v2119 = vunpack.c.l.b16 %v1820
      %v2120 = vunpack.c.h.b16 %v1820
      %v2121 = vunpack.c.l.b16 %v1821
      %v2122 = vunpack.c.h.b16 %v1821
      %v2123 = vunpack.c.l.b16 %v1822
      %v2124 = vunpack.c.h.b16 %v1822
      %v2125 = vunpack.c.l.b16 %v1823
      %v2126 = vunpack.c.h.b16 %v1823
      %v2127 = vunpack.c.l.b16 %v1824
      %v2128 = vunpack.c.h.b16 %v1824
      %v2129 = vunpack.c.l.b16 %v1825
      %v2130 = vunpack.c.h.b16 %v1825
      %v2131 = vunpack.c.l.b16 %v1826
      %v2132 = vunpack.c.h.b16 %v1826
      %v2133 = vunpack.c.l.b16 %v1827
      %v2134 = vunpack.c.h.b16 %v1827
      %v2135 = vunpack.c.l.b16 %v1828
      %v2136 = vunpack.c.h.b16 %v1828
      %v2137 = vunpack.c.l.b16 %v1829
      %v2138 = vunpack.c.h.b16 %v1829
      %v2139 = vunpack.c.l.b16 %v1830
      %v2140 = vunpack.c.h.b16 %v1830
      %v2141 = vunpack.c.l.b16 %v1831
      %v2142 = vunpack.c.h.b16 %v1831
      %v2143 = vunpack.c.l.b16 %v1832
      %v2144 = vunpack.c.h.b16 %v1832
      %v2145 = vunpack.c.l.b16 %v1833
      %v2146 = vunpack.c.h.b16 %v1833
      %v2147 = vunpack.c.l.b16 %v1834
      %v2148 = vunpack.c.h.b16 %v1834
      %v2149 = vunpack.c.l.b16 %v1835
      %v2150 = vunpack.c.h.b16 %v1835
      %v2151 = vunpack.c.l.b16 %v1836
      %v2152 = vunpack.c.h.b16 %v1836
      %v2153 = vunpack.c.l.b16 %v1837
      %v2154 = vunpack.c.h.b16 %v1837
      %v2155 = vunpack.c.l.b16 %v1838
      %v2156 = vunpack.c.h.b16 %v1838
      %v2157 = vunpack.c.l.b16 %v1839
      %v2158 = vunpack.c.h.b16 %v1839
      %v2159 = vunpack.c.l.b16 %v1840
      %v2160 = vunpack.c.h.b16 %v1840
      %v2161 = vunpack.c.l.b16 %v1841
      %v2162 = vunpack.c.h.b16 %v1841
      %v2163 = vunpack.c.l.b16 %v1842
      %v2164 = vunpack.c.h.b16 %v1842
      %v2165 = vunpack.c.l.b16 %v1843
      %v2166 = vunpack.c.h.b16 %v1843
      %v2167 = vunpack.c.l.b16 %v1844
      %v2168 = vunpack.c.h.b16 %v1844
      %v2169 = vunpack.c.l.b16 %v1845
      %v2170 = vunpack.c.h.b16 %v1845
      %v2171 = vunpack.c.l.b16 %v1846
      %v2172 = vunpack.c.h.b16 %v1846
      %v2173 = vunpack.c.l.b16 %v1847
      %v2174 = vunpack.c.h.b16 %v1847
      %v2175 = vunpack.c.l.b16 %v1848
      %v2176 = vunpack.c.h.b16 %v1848
      %v2177 = vunpack.c.l.b16 %v1849
      %v2178 = vunpack.c.h.b16 %v1849
      %v2179 = vunpack.c.l.b16 %v1850
      %v2180 = vunpack.c.h.b16 %v1850
      %v2181 = vunpack.c.l.b16 %v1851
      %v2182 = vunpack.c.h.b16 %v1851
      %v2183 = vunpack.c.l.b16 %v1852
      %v2184 = vunpack.c.h.b16 %v1852
      %v2185 = vunpack.c.l.b16 %v1853
      %v2186 = vunpack.c.h.b16 %v1853
      %v2187 = vunpack.c.l.b16 %v1854
      %v2188 = vunpack.c.h.b16 %v1854
      %v2189 = vunpack.c.l.b16 %v1855
      %v2190 = vunpack.c.h.b16 %v1855
      %v2191 = vunpack.c.l.b16 %v1856
      %v2192 = vunpack.c.h.b16 %v1856
      %v2193 = vunpack.c.l.b16 %v1857
      %v2194 = vunpack.c.h.b16 %v1857
      %v2195 = vunpack.c.l.b16 %v1858
      %v2196 = vunpack.c.h.b16 %v1858
      %v2197 = vunpack.c.l.b16 %v1859
      %v2198 = vunpack.c.h.b16 %v1859
      %v2199 = vunpack.c.l.b16 %v1860
      %v2200 = vunpack.c.h.b16 %v1860
      %v2201 = vunpack.c.l.b16 %v1861
      %v2202 = vunpack.c.h.b16 %v1861
      %v2203 = vunpack.c.l.b16 %v1862
      %v2204 = vunpack.c.h.b16 %v1862
      %v2205 = vunpack.c.l.b16 %v1863
      %v2206 = vunpack.c.h.b16 %v1863
      %v2207 = vunpack.c.l.b16 %v1864
      %v2208 = vunpack.c.h.b16 %v1864
      %v2209 = vunpack.c.l.b16 %v1865
      %v2210 = vunpack.c.h.b16 %v1865
      %v2211 = vunpack.c.l.b16 %v1866
      %v2212 = vunpack.c.h.b16 %v1866
      %v2213 = vunpack.c.l.b16 %v1867
      %v2214 = vunpack.c.h.b16 %v1867
      %v2215 = vunpack.c.l.b16 %v1868
      %v2216 = vunpack.c.h.b16 %v1868
      %v2217 = vunpack.c.l.b16 %v1869
      %v2218 = vunpack.c.h.b16 %v1869
      %v2219 = vunpack.c.l.b16 %v1870
      %v2220 = vunpack.c.h.b16 %v1870
      %v2221 = vunpack.c.l.b16 %v1871
      %v2222 = vunpack.c.h.b16 %v1871
      %v2223 = vunpack.c.l.b16 %v1872
      %v2224 = vunpack.c.h.b16 %v1872
      %v2225 = vunpack.c.l.b16 %v1873
      %v2226 = vunpack.c.h.b16 %v1873
      %v2227 = vunpack.c.l.b16 %v1874
      %v2228 = vunpack.c.h.b16 %v1874
      %v2229 = vunpack.c.l.b16 %v1875
      %v2230 = vunpack.c.h.b16 %v1875
      %v2231 = vunpack.c.l.b16 %v1876
      %v2232 = vunpack.c.h.b16 %v1876
      %v2233 = vunpack.c.l.b16 %v1877
      %v2234 = vunpack.c.h.b16 %v1877
      %v2235 = vunpack.c.l.b16 %v1878
      %v2236 = vunpack.c.h.b16 %v1878
      %v2237 = vunpack.c.l.b16 %v1879
      %v2238 = vunpack.c.h.b16 %v1879
      %v2239 = vunpack.c.l.b16 %v1880
      %v2240 = vunpack.c.h.b16 %v1880
      %v2241 = vunpack.c.l.b16 %v1881
      %v2242 = vunpack.c.h.b16 %v1881
      %v2243 = vunpack.c.l.b16 %v1882
      %v2244 = vunpack.c.h.b16 %v1882
      %v2245 = vunpack.c.l.b16 %v1883
      %v2246 = vunpack.c.h.b16 %v1883
      %v2247 = vunpack.c.l.b16 %v1884
      %v2248 = vunpack.c.h.b16 %v1884
      %v2249 = vunpack.c.l.b16 %v1885
      %v2250 = vunpack.c.h.b16 %v1885
      %v2251 = vunpack.c.l.b16 %v1886
      %v2252 = vunpack.c.h.b16 %v1886
      %v2253 = vunpack.c.l.b16 %v1887
      %v2254 = vunpack.c.h.b16 %v1887
      %v2255 = vunpack.c.l.b16 %v1888
      %v2256 = vunpack.c.h.b16 %v1888
      %v2257 = vunpack.c.l.b16 %v1889
      %v2258 = vunpack.c.h.b16 %v1889
      %v2259 = vunpack.c.l.b16 %v1890
      %v2260 = vunpack.c.h.b16 %v1890
      %v2261 = vunpack.c.l.b16 %v1891
      %v2262 = vunpack.c.h.b16 %v1891
      %v2263 = vunpack.c.l.b16 %v1892
      %v2264 = vunpack.c.h.b16 %v1892
      %v2265 = vunpack.c.l.b16 %v1893
      %v2266 = vunpack.c.h.b16 %v1893
      %v2267 = vunpack.c.l.b16 %v1894
      %v2268 = vunpack.c.h.b16 %v1894
      %v2269 = vunpack.c.l.b16 %v1895
      %v2270 = vunpack.c.h.b16 %v1895
      %v2271 = vunpack.c.l.b16 %v1896
      %v2272 = vunpack.c.h.b16 %v1896
      %v2273 = vunpack.c.l.b16 %v1897
      %v2274 = vunpack.c.h.b16 %v1897
      %v2275 = vunpack.c.l.b16 %v1898
      %v2276 = vunpack.c.h.b16 %v1898
      %v2277 = vunpack.c.l.b16 %v1899
      %v2278 = vunpack.c.h.b16 %v1899
      %v2279 = vunpack.c.l.b16 %v1900
      %v2280 = vunpack.c.h.b16 %v1900
      %v2281 = vunpack.c.l.b16 %v1901
      %v2282 = vunpack.c.h.b16 %v1901
      %v2283 = vunpack.c.l.b16 %v1902
      %v2284 = vunpack.c.h.b16 %v1902
      %v2285 = vunpack.c.l.b16 %v1903
      %v2286 = vunpack.c.h.b16 %v1903
      %v2287 = vunpack.c.l.b16 %v1904
      %v2288 = vunpack.c.h.b16 %v1904
      %v2289 = vunpack.c.l.b16 %v1905
      %v2290 = vunpack.c.h.b16 %v1905
      %v2291 = vunpack.c.l.b16 %v1906
      %v2292 = vunpack.c.h.b16 %v1906
      %v2293 = vunpack.c.l.b16 %v1907
      %v2294 = vunpack.c.h.b16 %v1907
      %v2295 = vunpack.c.l.b16 %v1908
      %v2296 = vunpack.c.h.b16 %v1908
      %v2297 = vunpack.c.l.b16 %v1909
      %v2298 = vunpack.c.h.b16 %v1909
      %v2299 = vunpack.c.l.b16 %v1910
      %v2300 = vunpack.c.h.b16 %v1910
      %v2301 = vunpack.c.l.b16 %v1911
      %v2302 = vunpack.c.h.b16 %v1911
      %v2303 = vunpack.c.l.b16 %v1912
      %v2304 = vunpack.c.h.b16 %v1912
      %v2305 = vunpack.c.l.b16 %v1913
      %v2306 = vunpack.c.h.b16 %v1913
      %v2307 = vunpack.c.l.b16 %v1914
      %v2308 = vunpack.c.h.b16 %v1914
      %v2309 = vunpack.c.l.b16 %v1915
      %v2310 = vunpack.c.h.b16 %v1915
      %v2311 = vunpack.c.l.b16 %v1916
      %v2312 = vunpack.c.h.b16 %v1916
      %v2313 = vpack.c.b16 %v2059, %v2057
      %v2314 = vpack.c.b16 %v2060, %v2058
      %v2315 = vpack.c.b16 %v2063, %v2061
      %v2316 = vpack.c.b16 %v2064, %v2062
      %v2317 = vpack.c.b16 %v2067, %v2065
      %v2318 = vpack.c.b16 %v2068, %v2066
      %v2319 = vpack.c.b16 %v2071, %v2069
      %v2320 = vpack.c.b16 %v2072, %v2070
      %v2321 = vpack.c.b16 %v2075, %v2073
      %v2322 = vpack.c.b16 %v2076, %v2074
      %v2323 = vpack.c.b16 %v2079, %v2077
      %v2324 = vpack.c.b16 %v2080, %v2078
      %v2325 = vpack.c.b16 %v2083, %v2081
      %v2326 = vpack.c.b16 %v2084, %v2082
      %v2327 = vpack.c.b16 %v2087, %v2085
      %v2328 = vpack.c.b16 %v2088, %v2086
      %v2329 = vpack.c.b16 %v2091, %v2089
      %v2330 = vpack.c.b16 %v2092, %v2090
      %v2331 = vpack.c.b16 %v2095, %v2093
      %v2332 = vpack.c.b16 %v2096, %v2094
      %v2333 = vpack.c.b16 %v2099, %v2097
      %v2334 = vpack.c.b16 %v2100, %v2098
      %v2335 = vpack.c.b16 %v2103, %v2101
      %v2336 = vpack.c.b16 %v2104, %v2102
      %v2337 = vpack.c.b16 %v2107, %v2105
      %v2338 = vpack.c.b16 %v2108, %v2106
      %v2339 = vpack.c.b16 %v2111, %v2109
      %v2340 = vpack.c.b16 %v2112, %v2110
      %v2341 = vpack.c.b16 %v2115, %v2113
      %v2342 = vpack.c.b16 %v2116, %v2114
      %v2343 = vpack.c.b16 %v2119, %v2117
      %v2344 = vpack.c.b16 %v2120, %v2118
      %v2345 = vpack.c.b16 %v2123, %v2121
      %v2346 = vpack.c.b16 %v2124, %v2122
      %v2347 = vpack.c.b16 %v2127, %v2125
      %v2348 = vpack.c.b16 %v2128, %v2126
      %v2349 = vpack.c.b16 %v2131, %v2129
      %v2350 = vpack.c.b16 %v2132, %v2130
      %v2351 = vpack.c.b16 %v2135, %v2133
      %v2352 = vpack.c.b16 %v2136, %v2134
      %v2353 = vpack.c.b16 %v2139, %v2137
      %v2354 = vpack.c.b16 %v2140, %v2138
      %v2355 = vpack.c.b16 %v2143, %v2141
      %v2356 = vpack.c.b16 %v2144, %v2142
      %v2357 = vpack.c.b16 %v2147, %v2145
      %v2358 = vpack.c.b16 %v2148, %v2146
      %v2359 = vpack.c.b16 %v2151, %v2149
      %v2360 = vpack.c.b16 %v2152, %v2150
      %v2361 = vpack.c.b16 %v2155, %v2153
      %v2362 = vpack.c.b16 %v2156, %v2154
      %v2363 = vpack.c.b16 %v2159, %v2157
      %v2364 = vpack.c.b16 %v2160, %v2158
      %v2365 = vpack.c.b16 %v2163, %v2161
      %v2366 = vpack.c.b16 %v2164, %v2162
      %v2367 = vpack.c.b16 %v2167, %v2165
      %v2368 = vpack.c.b16 %v2168, %v2166
      %v2369 = vpack.c.b16 %v2171, %v2169
      %v2370 = vpack.c.b16 %v2172, %v2170
      %v2371 = vpack.c.b16 %v2175, %v2173
      %v2372 = vpack.c.b16 %v2176, %v2174
      %v2373 = vpack.c.b16 %v2179, %v2177
      %v2374 = vpack.c.b16 %v2180, %v2178
      %v2375 = vpack.c.b16 %v2183, %v2181
      %v2376 = vpack.c.b16 %v2184, %v2182
      %v2377 = vpack.c.b16 %v2187, %v2185
      %v2378 = vpack.c.b16 %v2188, %v2186
      %v2379 = vpack.c.b16 %v2191, %v2189
      %v2380 = vpack.c.b16 %v2192, %v2190
      %v2381 = vpack.c.b16 %v2195, %v2193
      %v2382 = vpack.c.b16 %v2196, %v2194
      %v2383 = vpack.c.b16 %v2199, %v2197
      %v2384 = vpack.c.b16 %v2200, %v2198
      %v2385 = vpack.c.b16 %v2203, %v2201
      %v2386 = vpack.c.b16 %v2204, %v2202
      %v2387 = vpack.c.b16 %v2207, %v2205
      %v2388 = vpack.c.b16 %v2208, %v2206
      %v2389 = vpack.c.b16 %v2211, %v2209
      %v2390 = vpack.c.b16 %v2212, %v2210
      %v2391 = vpack.c.b16 %v2215, %v2213
      %v2392 = vpack.c.b16 %v2216, %v2214
      %v2393 = vpack.c.b16 %v2219, %v2217
      %v2394 = vpack.c.b16 %v2220, %v2218
      %v2395 = vpack.c.b16 %v2223, %v2221
      %v2396 = vpack.c.b16 %v2224, %v2222
      %v2397 = vpack.c.b16 %v2227, %v2225
      %v2398 = vpack.c.b16 %v2228, %v2226
      %v2399 = vpack.c.b16 %v2231, %v2229
      %v2400 = vpack.c.b16 %v2232, %v2230
      %v2401 = vpack.c.b16 %v2235, %v2233
      %v2402 = vpack.c.b16 %v2236, %v2234
      %v2403 = vpack.c.b16 %v2239, %v2237
      %v2404 = vpack.c.b16 %v2240, %v2238
      %v2405 = vpack.c.b16 %v2243, %v2241
      %v2406 = vpack.c.b16 %v2244, %v2242
      %v2407 = vpack.c.b16 %v2247, %v2245
      %v2408 = vpack.c.b16 %v2248, %v2246
      %v2409 = vpack.c.b16 %v2251, %v2249
      %v2410 = vpack.c.b16 %v2252, %v2250
      %v2411 = vpack.c.b16 %v2255, %v2253
      %v2412 = vpack.c.b16 %v2256, %v2254
      %v2413 = vpack.c.b16 %v2259, %v2257
      %v2414 = vpack.c.b16 %v2260, %v2258
      %v2415 = vpack.c.b16 %v2263, %v2261
      %v2416 = vpack.c.b16 %v2264, %v2262
      %v2417 = vpack.c.b16 %v2267, %v2265
      %v2418 = vpack.c.b16 %v2268, %v2266
      %v2419 = vpack.c.b16 %v2271, %v2269
      %v2420 = vpack.c.b16 %v2272, %v2270
      %v2421 = vpack.c.b16 %v2275, %v2273
      %v2422 = vpack.c.b16 %v2276, %v2274
      %v2423 = vpack.c.b16 %v2279, %v2277
      %v2424 = vpack.c.b16 %v2280, %v2278
      %v2425 = vpack.c.b16 %v2283, %v2281
      %v2426 = vpack.c.b16 %v2284, %v2282
      %v2427 = vpack.c.b16 %v2287, %v2285
      %v2428 = vpack.c.b16 %v2288, %v2286
      %v2429 = vpack.c.b16 %v2291, %v2289
      %v2430 = vpack.c.b16 %v2292, %v2290
      %v2431 = vpack.c.b16 %v2295, %v2293
      %v2432 = vpack.c.b16 %v2296, %v2294
      %v2433 = vpack.c.b16 %v2299, %v2297
      %v2434 = vpack.c.b16 %v2300, %v2298
      %v2435 = vpack.c.b16 %v2303, %v2301
      %v2436 = vpack.c.b16 %v2304, %v2302
      %v2437 = vpack.c.b16 %v2307, %v2305
      %v2438 = vpack.c.b16 %v2308, %v2306
      %v2439 = vpack.c.b16 %v2311, %v2309
      %v2440 = vpack.c.b16 %v2312, %v2310
      %2569 = vmatprep.subr.bf16.mxu0 %v2314
      %2570 = vmatpush1.bf16.msra.mxu0 %v2313
      %2571 = vmatprep.subr.bf16.mxu0 %v2316
      %2572 = vmatpush1.bf16.msra.mxu0 %v2315
      %2573 = vmatprep.subr.bf16.mxu0 %v2318
      %2574 = vmatpush1.bf16.msra.mxu0 %v2317
      %2575 = vmatprep.subr.bf16.mxu0 %v2320
      %2576 = vmatpush1.bf16.msra.mxu0 %v2319
      %2577 = vmatprep.subr.bf16.mxu0 %v2322
      %2578 = vmatpush1.bf16.msra.mxu0 %v2321
      %2579 = vmatprep.subr.bf16.mxu0 %v2324
      %2580 = vmatpush1.bf16.msra.mxu0 %v2323
      %2581 = vmatprep.subr.bf16.mxu0 %v2326
      %2582 = vmatpush1.bf16.msra.mxu0 %v2325
      %2583 = vmatprep.subr.bf16.mxu0 %v2328
      %2584 = vmatpush1.bf16.msra.mxu0 %v2327
      %2585 = vmatprep.subr.bf16.mxu0 %v2330
      %2586 = vmatpush1.bf16.msra.mxu0 %v2329
      %2587 = vmatprep.subr.bf16.mxu0 %v2332
      %2588 = vmatpush1.bf16.msra.mxu0 %v2331
      %2589 = vmatprep.subr.bf16.mxu0 %v2334
      %2590 = vmatpush1.bf16.msra.mxu0 %v2333
      %2591 = vmatprep.subr.bf16.mxu0 %v2336
      %2592 = vmatpush1.bf16.msra.mxu0 %v2335
      %2593 = vmatprep.subr.bf16.mxu0 %v2338
      %2594 = vmatpush1.bf16.msra.mxu0 %v2337
      %2595 = vmatprep.subr.bf16.mxu0 %v2340
      %2596 = vmatpush1.bf16.msra.mxu0 %v2339
      %2597 = vmatprep.subr.bf16.mxu0 %v2342
      %2598 = vmatpush1.bf16.msra.mxu0 %v2341
      %2599 = vmatprep.subr.bf16.mxu0 %v2344
      %2600 = vmatpush1.bf16.msra.mxu0 %v2343
      %2601 = vmatprep.mubr.bf16.mxu0 %v1726
      %2602 = vmatmul.mubr.bf16.gmra.mrb[0].mxu0 %v1725
      %v2603 = vpop.f32.mrb[0].mxu0
      %v2604 = vadd.f32 %v1922, %v2603
      %v2605 = vpop.f32.mrb[0].mxu0
      %v2606 = vadd.f32 %v1926, %v2605
      %v2607 = vpop.f32.mrb[0].mxu0
      %v2608 = vadd.f32 %v1922, %v2607
      %v2609 = vpop.f32.mrb[0].mxu0
      %v2610 = vadd.f32 %v1926, %v2609
      %2611 = vmatprep.mubr.bf16.mxu0 %v1734
      %2612 = vmatmul.mubr.bf16.gmra.mrb[0].mxu0 %v1733
      %v2613 = vpop.f32.mrb[0].mxu0
      %v2614 = vadd.f32 %v1922, %v2613
      %v2615 = vpop.f32.mrb[0].mxu0
      %v2616 = vadd.f32 %v1926, %v2615
      %v2617 = vpop.f32.mrb[0].mxu0
      %v2618 = vadd.f32 %v1922, %v2617
      %v2619 = vpop.f32.mrb[0].mxu0
      %v2620 = vadd.f32 %v1926, %v2619
      %2621 = vmatprep.mubr.bf16.mxu0 %v1742
      %2622 = vmatmul.mubr.bf16.gmra.mrb[0].mxu0 %v1741
      %v2623 = vpop.f32.mrb[0].mxu0
      %v2624 = vadd.f32 %v1922, %v2623
      %v2625 = vpop.f32.mrb[0].mxu0
      %v2626 = vadd.f32 %v1926, %v2625
      %v2627 = vpop.f32.mrb[0].mxu0
      %v2628 = vadd.f32 %v1922, %v2627
      %v2629 = vpop.f32.mrb[0].mxu0
      %v2630 = vadd.f32 %v1926, %v2629
      %2631 = vmatprep.mubr.bf16.mxu0 %v1750
      %2632 = vmatmul.mubr.bf16.gmra.mrb[0].mxu0 %v1749
      %v2633 = vpop.f32.mrb[0].mxu0
      %v2634 = vadd.f32 %v1922, %v2633
      %v2635 = vpop.f32.mrb[0].mxu0
      %v2636 = vadd.f32 %v1926, %v2635
      %v2637 = vpop.f32.mrb[0].mxu0
      %v2638 = vadd.f32 %v1922, %v2637
      %v2639 = vpop.f32.mrb[0].mxu0
      %v2640 = vadd.f32 %v1926, %v2639
      %2641 = vmatprep.mubr.bf16.mxu0 %v1758
      %2642 = vmatmul.mubr.bf16.gmra.mrb[0].mxu0 %v1757
      %v2643 = vpop.f32.mrb[0].mxu0
      %v2644 = vadd.f32 %v1922, %v2643
      %v2645 = vpop.f32.mrb[0].mxu0
      %v2646 = vadd.f32 %v1926, %v2645
      %v2647 = vpop.f32.mrb[0].mxu0
      %v2648 = vadd.f32 %v1922, %v2647
      %v2649 = vpop.f32.mrb[0].mxu0
      %v2650 = vadd.f32 %v1926, %v2649
      %2651 = vmatprep.mubr.bf16.mxu0 %v1766
      %2652 = vmatmul.mubr.bf16.gmra.mrb[0].mxu0 %v1765
      %v2653 = vpop.f32.mrb[0].mxu0
      %v2654 = vadd.f32 %v1922, %v2653
      %v2655 = vpop.f32.mrb[0].mxu0
      %v2656 = vadd.f32 %v1926, %v2655
      %v2657 = vpop.f32.mrb[0].mxu0
      %v2658 = vadd.f32 %v1922, %v2657
      %v2659 = vpop.f32.mrb[0].mxu0
      %v2660 = vadd.f32 %v1926, %v2659
      %2661 = vmatprep.mubr.bf16.mxu0 %v1774
      %2662 = vmatmul.mubr.bf16.gmra.mrb[0].mxu0 %v1773
      %v2663 = vpop.f32.mrb[0].mxu0
      %v2664 = vadd.f32 %v1922, %v2663
      %v2665 = vpop.f32.mrb[0].mxu0
      %v2666 = vadd.f32 %v1926, %v2665
      %v2667 = vpop.f32.mrb[0].mxu0
      %v2668 = vadd.f32 %v1922, %v2667
      %v2669 = vpop.f32.mrb[0].mxu0
      %v2670 = vadd.f32 %v1926, %v2669
      %2671 = vmatprep.mubr.bf16.mxu0 %v1782
      %2672 = vmatmul.mubr.bf16.gmra.mrb[0].mxu0 %v1781
      %v2673 = vpop.f32.mrb[0].mxu0
      %v2674 = vadd.f32 %v1922, %v2673
      %v2675 = vpop.f32.mrb[0].mxu0
      %v2676 = vadd.f32 %v1926, %v2675
      %v2677 = vpop.f32.mrb[0].mxu0
      %v2678 = vadd.f32 %v1922, %v2677
      %v2679 = vpop.f32.mrb[0].mxu0
      %v2680 = vadd.f32 %v1926, %v2679
      %2681 = vdwg.mxu0
      %2682 = vmatprep.subr.bf16.mxu0 %v2346
      %2683 = vmatpush1.bf16.msra.mxu0 %v2345
      %2684 = vmatprep.subr.bf16.mxu0 %v2348
      %2685 = vmatpush1.bf16.msra.mxu0 %v2347
      %2686 = vmatprep.subr.bf16.mxu0 %v2350
      %2687 = vmatpush1.bf16.msra.mxu0 %v2349
      %2688 = vmatprep.subr.bf16.mxu0 %v2352
      %2689 = vmatpush1.bf16.msra.mxu0 %v2351
      %2690 = vmatprep.subr.bf16.mxu0 %v2354
      %2691 = vmatpush1.bf16.msra.mxu0 %v2353
      %2692 = vmatprep.subr.bf16.mxu0 %v2356
      %2693 = vmatpush1.bf16.msra.mxu0 %v2355
      %2694 = vmatprep.subr.bf16.mxu0 %v2358
      %2695 = vmatpush1.bf16.msra.mxu0 %v2357
      %2696 = vmatprep.subr.bf16.mxu0 %v2360
      %2697 = vmatpush1.bf16.msra.mxu0 %v2359
      %2698 = vmatprep.subr.bf16.mxu0 %v2362
      %2699 = vmatpush1.bf16.msra.mxu0 %v2361
      %2700 = vmatprep.subr.bf16.mxu0 %v2364
      %2701 = vmatpush1.bf16.msra.mxu0 %v2363
      %2702 = vmatprep.subr.bf16.mxu0 %v2366
      %2703 = vmatpush1.bf16.msra.mxu0 %v2365
      %2704 = vmatprep.subr.bf16.mxu0 %v2368
      %2705 = vmatpush1.bf16.msra.mxu0 %v2367
      %2706 = vmatprep.subr.bf16.mxu0 %v2370
      %2707 = vmatpush1.bf16.msra.mxu0 %v2369
      %2708 = vmatprep.subr.bf16.mxu0 %v2372
      %2709 = vmatpush1.bf16.msra.mxu0 %v2371
      %2710 = vmatprep.subr.bf16.mxu0 %v2374
      %2711 = vmatpush1.bf16.msra.mxu0 %v2373
      %2712 = vmatprep.subr.bf16.mxu0 %v2376
      %2713 = vmatpush1.bf16.msra.mxu0 %v2375
      %2714 = vmatprep.mubr.bf16.mxu0 %v1728
      %2715 = vmatmul.mubr.bf16.gmra.mrb[0].mxu0 %v1727
      %v2716 = vpop.f32.mrb[0].mxu0
      %v2717 = vadd.f32 %v2604, %v2716
      %v2718 = vpop.f32.mrb[0].mxu0
      %v2719 = vadd.f32 %v2606, %v2718
      %v2720 = vpop.f32.mrb[0].mxu0
      %v2721 = vadd.f32 %v2608, %v2720
      %v2722 = vpop.f32.mrb[0].mxu0
      %v2723 = vadd.f32 %v2610, %v2722
      %2724 = vmatprep.mubr.bf16.mxu0 %v1736
      %2725 = vmatmul.mubr.bf16.gmra.mrb[0].mxu0 %v1735
      %v2726 = vpop.f32.mrb[0].mxu0
      %v2727 = vadd.f32 %v2614, %v2726
      %v2728 = vpop.f32.mrb[0].mxu0
      %v2729 = vadd.f32 %v2616, %v2728
      %v2730 = vpop.f32.mrb[0].mxu0
      %v2731 = vadd.f32 %v2618, %v2730
      %v2732 = vpop.f32.mrb[0].mxu0
      %v2733 = vadd.f32 %v2620, %v2732
      %2734 = vmatprep.mubr.bf16.mxu0 %v1744
      %2735 = vmatmul.mubr.bf16.gmra.mrb[0].mxu0 %v1743
      %v2736 = vpop.f32.mrb[0].mxu0
      %v2737 = vadd.f32 %v2624, %v2736
      %v2738 = vpop.f32.mrb[0].mxu0
      %v2739 = vadd.f32 %v2626, %v2738
      %v2740 = vpop.f32.mrb[0].mxu0
      %v2741 = vadd.f32 %v2628, %v2740
      %v2742 = vpop.f32.mrb[0].mxu0
      %v2743 = vadd.f32 %v2630, %v2742
      %2744 = vmatprep.mubr.bf16.mxu0 %v1752
      %2745 = vmatmul.mubr.bf16.gmra.mrb[0].mxu0 %v1751
      %v2746 = vpop.f32.mrb[0].mxu0
      %v2747 = vadd.f32 %v2634, %v2746
      %v2748 = vpop.f32.mrb[0].mxu0
      %v2749 = vadd.f32 %v2636, %v2748
      %v2750 = vpop.f32.mrb[0].mxu0
      %v2751 = vadd.f32 %v2638, %v2750
      %v2752 = vpop.f32.mrb[0].mxu0
      %v2753 = vadd.f32 %v2640, %v2752
      %2754 = vmatprep.mubr.bf16.mxu0 %v1760
      %2755 = vmatmul.mubr.bf16.gmra.mrb[0].mxu0 %v1759
      %v2756 = vpop.f32.mrb[0].mxu0
      %v2757 = vadd.f32 %v2644, %v2756
      %v2758 = vpop.f32.mrb[0].mxu0
      %v2759 = vadd.f32 %v2646, %v2758
      %v2760 = vpop.f32.mrb[0].mxu0
      %v2761 = vadd.f32 %v2648, %v2760
      %v2762 = vpop.f32.mrb[0].mxu0
      %v2763 = vadd.f32 %v2650, %v2762
      %2764 = vmatprep.mubr.bf16.mxu0 %v1768
      %2765 = vmatmul.mubr.bf16.gmra.mrb[0].mxu0 %v1767
      %v2766 = vpop.f32.mrb[0].mxu0
      %v2767 = vadd.f32 %v2654, %v2766
      %v2768 = vpop.f32.mrb[0].mxu0
      %v2769 = vadd.f32 %v2656, %v2768
      %v2770 = vpop.f32.mrb[0].mxu0
      %v2771 = vadd.f32 %v2658, %v2770
      %v2772 = vpop.f32.mrb[0].mxu0
      %v2773 = vadd.f32 %v2660, %v2772
      %2774 = vmatprep.mubr.bf16.mxu0 %v1776
      %2775 = vmatmul.mubr.bf16.gmra.mrb[0].mxu0 %v1775
      %v2776 = vpop.f32.mrb[0].mxu0
      %v2777 = vadd.f32 %v2664, %v2776
      %v2778 = vpop.f32.mrb[0].mxu0
      %v2779 = vadd.f32 %v2666, %v2778
      %v2780 = vpop.f32.mrb[0].mxu0
      %v2781 = vadd.f32 %v2668, %v2780
      %v2782 = vpop.f32.mrb[0].mxu0
      %v2783 = vadd.f32 %v2670, %v2782
      %2784 = vmatprep.mubr.bf16.mxu0 %v1784
      %2785 = vmatmul.mubr.bf16.gmra.mrb[0].mxu0 %v1783
      %v2786 = vpop.f32.mrb[0].mxu0
      %v2787 = vadd.f32 %v2674, %v2786
      %v2788 = vpop.f32.mrb[0].mxu0
      %v2789 = vadd.f32 %v2676, %v2788
      %v2790 = vpop.f32.mrb[0].mxu0
      %v2791 = vadd.f32 %v2678, %v2790
      %v2792 = vpop.f32.mrb[0].mxu0
      %v2793 = vadd.f32 %v2680, %v2792
      %2794 = vdwg.mxu0
      %2795 = vmatprep.subr.bf16.mxu0 %v2378
      %2796 = vmatpush1.bf16.msra.mxu0 %v2377
      %2797 = vmatprep.subr.bf16.mxu0 %v2380
      %2798 = vmatpush1.bf16.msra.mxu0 %v2379
      %2799 = vmatprep.subr.bf16.mxu0 %v2382
      %2800 = vmatpush1.bf16.msra.mxu0 %v2381
      %2801 = vmatprep.subr.bf16.mxu0 %v2384
      %2802 = vmatpush1.bf16.msra.mxu0 %v2383
      %2803 = vmatprep.subr.bf16.mxu0 %v2386
      %2804 = vmatpush1.bf16.msra.mxu0 %v2385
      %2805 = vmatprep.subr.bf16.mxu0 %v2388
      %2806 = vmatpush1.bf16.msra.mxu0 %v2387
      %2807 = vmatprep.subr.bf16.mxu0 %v2390
      %2808 = vmatpush1.bf16.msra.mxu0 %v2389
      %2809 = vmatprep.subr.bf16.mxu0 %v2392
      %2810 = vmatpush1.bf16.msra.mxu0 %v2391
      %2811 = vmatprep.subr.bf16.mxu0 %v2394
      %2812 = vmatpush1.bf16.msra.mxu0 %v2393
      %2813 = vmatprep.subr.bf16.mxu0 %v2396
      %2814 = vmatpush1.bf16.msra.mxu0 %v2395
      %2815 = vmatprep.subr.bf16.mxu0 %v2398
      %2816 = vmatpush1.bf16.msra.mxu0 %v2397
      %2817 = vmatprep.subr.bf16.mxu0 %v2400
      %2818 = vmatpush1.bf16.msra.mxu0 %v2399
      %2819 = vmatprep.subr.bf16.mxu0 %v2402
      %2820 = vmatpush1.bf16.msra.mxu0 %v2401
      %2821 = vmatprep.subr.bf16.mxu0 %v2404
      %2822 = vmatpush1.bf16.msra.mxu0 %v2403
      %2823 = vmatprep.subr.bf16.mxu0 %v2406
      %2824 = vmatpush1.bf16.msra.mxu0 %v2405
      %2825 = vmatprep.subr.bf16.mxu0 %v2408
      %2826 = vmatpush1.bf16.msra.mxu0 %v2407
      %2827 = vmatprep.mubr.bf16.mxu0 %v1730
      %2828 = vmatmul.mubr.bf16.gmra.mrb[0].mxu0 %v1729
      %v2829 = vpop.f32.mrb[0].mxu0
      %v2830 = vadd.f32 %v2717, %v2829
      %v2831 = vpop.f32.mrb[0].mxu0
      %v2832 = vadd.f32 %v2719, %v2831
      %v2833 = vpop.f32.mrb[0].mxu0
      %v2834 = vadd.f32 %v2721, %v2833
      %v2835 = vpop.f32.mrb[0].mxu0
      %v2836 = vadd.f32 %v2723, %v2835
      %2837 = vmatprep.mubr.bf16.mxu0 %v1738
      %2838 = vmatmul.mubr.bf16.gmra.mrb[0].mxu0 %v1737
      %v2839 = vpop.f32.mrb[0].mxu0
      %v2840 = vadd.f32 %v2727, %v2839
      %v2841 = vpop.f32.mrb[0].mxu0
      %v2842 = vadd.f32 %v2729, %v2841
      %v2843 = vpop.f32.mrb[0].mxu0
      %v2844 = vadd.f32 %v2731, %v2843
      %v2845 = vpop.f32.mrb[0].mxu0
      %v2846 = vadd.f32 %v2733, %v2845
      %2847 = vmatprep.mubr.bf16.mxu0 %v1746
      %2848 = vmatmul.mubr.bf16.gmra.mrb[0].mxu0 %v1745
      %v2849 = vpop.f32.mrb[0].mxu0
      %v2850 = vadd.f32 %v2737, %v2849
      %v2851 = vpop.f32.mrb[0].mxu0
      %v2852 = vadd.f32 %v2739, %v2851
      %v2853 = vpop.f32.mrb[0].mxu0
      %v2854 = vadd.f32 %v2741, %v2853
      %v2855 = vpop.f32.mrb[0].mxu0
      %v2856 = vadd.f32 %v2743, %v2855
      %2857 = vmatprep.mubr.bf16.mxu0 %v1754
      %2858 = vmatmul.mubr.bf16.gmra.mrb[0].mxu0 %v1753
      %v2859 = vpop.f32.mrb[0].mxu0
      %v2860 = vadd.f32 %v2747, %v2859
      %v2861 = vpop.f32.mrb[0].mxu0
      %v2862 = vadd.f32 %v2749, %v2861
      %v2863 = vpop.f32.mrb[0].mxu0
      %v2864 = vadd.f32 %v2751, %v2863
      %v2865 = vpop.f32.mrb[0].mxu0
      %v2866 = vadd.f32 %v2753, %v2865
      %2867 = vmatprep.mubr.bf16.mxu0 %v1762
      %2868 = vmatmul.mubr.bf16.gmra.mrb[0].mxu0 %v1761
      %v2869 = vpop.f32.mrb[0].mxu0
      %v2870 = vadd.f32 %v2757, %v2869
      %v2871 = vpop.f32.mrb[0].mxu0
      %v2872 = vadd.f32 %v2759, %v2871
      %v2873 = vpop.f32.mrb[0].mxu0
      %v2874 = vadd.f32 %v2761, %v2873
      %v2875 = vpop.f32.mrb[0].mxu0
      %v2876 = vadd.f32 %v2763, %v2875
      %2877 = vmatprep.mubr.bf16.mxu0 %v1770
      %2878 = vmatmul.mubr.bf16.gmra.mrb[0].mxu0 %v1769
      %v2879 = vpop.f32.mrb[0].mxu0
      %v2880 = vadd.f32 %v2767, %v2879
      %v2881 = vpop.f32.mrb[0].mxu0
      %v2882 = vadd.f32 %v2769, %v2881
      %v2883 = vpop.f32.mrb[0].mxu0
      %v2884 = vadd.f32 %v2771, %v2883
      %v2885 = vpop.f32.mrb[0].mxu0
      %v2886 = vadd.f32 %v2773, %v2885
      %2887 = vmatprep.mubr.bf16.mxu0 %v1778
      %2888 = vmatmul.mubr.bf16.gmra.mrb[0].mxu0 %v1777
      %v2889 = vpop.f32.mrb[0].mxu0
      %v2890 = vadd.f32 %v2777, %v2889
      %v2891 = vpop.f32.mrb[0].mxu0
      %v2892 = vadd.f32 %v2779, %v2891
      %v2893 = vpop.f32.mrb[0].mxu0
      %v2894 = vadd.f32 %v2781, %v2893
      %v2895 = vpop.f32.mrb[0].mxu0
      %v2896 = vadd.f32 %v2783, %v2895
      %2897 = vmatprep.mubr.bf16.mxu0 %v1786
      %2898 = vmatmul.mubr.bf16.gmra.mrb[0].mxu0 %v1785
      %v2899 = vpop.f32.mrb[0].mxu0
      %v2900 = vadd.f32 %v2787, %v2899
      %v2901 = vpop.f32.mrb[0].mxu0
      %v2902 = vadd.f32 %v2789, %v2901
      %v2903 = vpop.f32.mrb[0].mxu0
      %v2904 = vadd.f32 %v2791, %v2903
      %v2905 = vpop.f32.mrb[0].mxu0
      %v2906 = vadd.f32 %v2793, %v2905
      %2907 = vdwg.mxu0
      %2908 = vmatprep.subr.bf16.mxu0 %v2410
      %2909 = vmatpush1.bf16.msra.mxu0 %v2409
      %2910 = vmatprep.subr.bf16.mxu0 %v2412
      %2911 = vmatpush1.bf16.msra.mxu0 %v2411
      %2912 = vmatprep.subr.bf16.mxu0 %v2414
      %2913 = vmatpush1.bf16.msra.mxu0 %v2413
      %2914 = vmatprep.subr.bf16.mxu0 %v2416
      %2915 = vmatpush1.bf16.msra.mxu0 %v2415
      %2916 = vmatprep.subr.bf16.mxu0 %v2418
      %2917 = vmatpush1.bf16.msra.mxu0 %v2417
      %2918 = vmatprep.subr.bf16.mxu0 %v2420
      %2919 = vmatpush1.bf16.msra.mxu0 %v2419
      %2920 = vmatprep.subr.bf16.mxu0 %v2422
      %2921 = vmatpush1.bf16.msra.mxu0 %v2421
      %2922 = vmatprep.subr.bf16.mxu0 %v2424
      %2923 = vmatpush1.bf16.msra.mxu0 %v2423
      %2924 = vmatprep.subr.bf16.mxu0 %v2426
      %2925 = vmatpush1.bf16.msra.mxu0 %v2425
      %2926 = vmatprep.subr.bf16.mxu0 %v2428
      %2927 = vmatpush1.bf16.msra.mxu0 %v2427
      %2928 = vmatprep.subr.bf16.mxu0 %v2430
      %2929 = vmatpush1.bf16.msra.mxu0 %v2429
      %2930 = vmatprep.subr.bf16.mxu0 %v2432
      %2931 = vmatpush1.bf16.msra.mxu0 %v2431
      %2932 = vmatprep.subr.bf16.mxu0 %v2434
      %2933 = vmatpush1.bf16.msra.mxu0 %v2433
      %2934 = vmatprep.subr.bf16.mxu0 %v2436
      %2935 = vmatpush1.bf16.msra.mxu0 %v2435
      %2936 = vmatprep.subr.bf16.mxu0 %v2438
      %2937 = vmatpush1.bf16.msra.mxu0 %v2437
      %2938 = vmatprep.subr.bf16.mxu0 %v2440
      %2939 = vmatpush1.bf16.msra.mxu0 %v2439
      %2940 = vmatprep.mubr.bf16.mxu0 %v1732
      %2941 = vmatmul.mubr.bf16.gmra.mrb[0].mxu0 %v1731
      %v2942 = vpop.f32.mrb[0].mxu0
      %v2943 = vadd.f32 %v2830, %v2942
      %v2944 = vpop.f32.mrb[0].mxu0
      %v2945 = vadd.f32 %v2832, %v2944
      %v2946 = vpop.f32.mrb[0].mxu0
      %v2947 = vadd.f32 %v2834, %v2946
      %v2948 = vpop.f32.mrb[0].mxu0
      %v2949 = vadd.f32 %v2836, %v2948
      %2950 = vmatprep.mubr.bf16.mxu0 %v1740
      %2951 = vmatmul.mubr.bf16.gmra.mrb[0].mxu0 %v1739
      %v2952 = vpop.f32.mrb[0].mxu0
      %v2953 = vadd.f32 %v2840, %v2952
      %v2954 = vpop.f32.mrb[0].mxu0
      %v2955 = vadd.f32 %v2842, %v2954
      %v2956 = vpop.f32.mrb[0].mxu0
      %v2957 = vadd.f32 %v2844, %v2956
      %v2958 = vpop.f32.mrb[0].mxu0
      %v2959 = vadd.f32 %v2846, %v2958
      %2960 = vmatprep.mubr.bf16.mxu0 %v1748
      %2961 = vmatmul.mubr.bf16.gmra.mrb[0].mxu0 %v1747
      %v2962 = vpop.f32.mrb[0].mxu0
      %v2963 = vadd.f32 %v2850, %v2962
      %v2964 = vpop.f32.mrb[0].mxu0
      %v2965 = vadd.f32 %v2852, %v2964
      %v2966 = vpop.f32.mrb[0].mxu0
      %v2967 = vadd.f32 %v2854, %v2966
      %v2968 = vpop.f32.mrb[0].mxu0
      %v2969 = vadd.f32 %v2856, %v2968
      %2970 = vmatprep.mubr.bf16.mxu0 %v1756
      %2971 = vmatmul.mubr.bf16.gmra.mrb[0].mxu0 %v1755
      %v2972 = vpop.f32.mrb[0].mxu0
      %v2973 = vadd.f32 %v2860, %v2972
      %v2974 = vpop.f32.mrb[0].mxu0
      %v2975 = vadd.f32 %v2862, %v2974
      %v2976 = vpop.f32.mrb[0].mxu0
      %v2977 = vadd.f32 %v2864, %v2976
      %v2978 = vpop.f32.mrb[0].mxu0
      %v2979 = vadd.f32 %v2866, %v2978
      %2980 = vmatprep.mubr.bf16.mxu0 %v1764
      %2981 = vmatmul.mubr.bf16.gmra.mrb[0].mxu0 %v1763
      %v2982 = vpop.f32.mrb[0].mxu0
      %v2983 = vadd.f32 %v2870, %v2982
      %v2984 = vpop.f32.mrb[0].mxu0
      %v2985 = vadd.f32 %v2872, %v2984
      %v2986 = vpop.f32.mrb[0].mxu0
      %v2987 = vadd.f32 %v2874, %v2986
      %v2988 = vpop.f32.mrb[0].mxu0
      %v2989 = vadd.f32 %v2876, %v2988
      %2990 = vmatprep.mubr.bf16.mxu0 %v1772
      %2991 = vmatmul.mubr.bf16.gmra.mrb[0].mxu0 %v1771
      %v2992 = vpop.f32.mrb[0].mxu0
      %v2993 = vadd.f32 %v2880, %v2992
      %v2994 = vpop.f32.mrb[0].mxu0
      %v2995 = vadd.f32 %v2882, %v2994
      %v2996 = vpop.f32.mrb[0].mxu0
      %v2997 = vadd.f32 %v2884, %v2996
      %v2998 = vpop.f32.mrb[0].mxu0
      %v2999 = vadd.f32 %v2886, %v2998
      %3000 = vmatprep.mubr.bf16.mxu0 %v1780
      %3001 = vmatmul.mubr.bf16.gmra.mrb[0].mxu0 %v1779
      %v3002 = vpop.f32.mrb[0].mxu0
      %v3003 = vadd.f32 %v2890, %v3002
      %v3004 = vpop.f32.mrb[0].mxu0
      %v3005 = vadd.f32 %v2892, %v3004
      %v3006 = vpop.f32.mrb[0].mxu0
      %v3007 = vadd.f32 %v2894, %v3006
      %v3008 = vpop.f32.mrb[0].mxu0
      %v3009 = vadd.f32 %v2896, %v3008
      %3010 = vmatprep.mubr.bf16.mxu0 %v1788
      %3011 = vmatmul.mubr.bf16.gmra.mrb[0].mxu0 %v1787
      %v3012 = vpop.f32.mrb[0].mxu0
      %v3013 = vadd.f32 %v2900, %v3012
      %v3014 = vpop.f32.mrb[0].mxu0
      %v3015 = vadd.f32 %v2902, %v3014
      %v3016 = vpop.f32.mrb[0].mxu0
      %v3017 = vadd.f32 %v2904, %v3016
      %v3018 = vpop.f32.mrb[0].mxu0
      %v3019 = vadd.f32 %v2906, %v3018
      %3020 = vdwg.mxu0
      %v3021 = vadd.f32 %v287, %v2943
      %v3022 = vadd.f32 %v288, %v2945
      %v3023 = vadd.f32 %v289, %v2947
      %v3024 = vadd.f32 %v290, %v2949
      %v3025 = vadd.f32 %v291, %v2953
      %v3026 = vadd.f32 %v292, %v2955
      %v3027 = vadd.f32 %v293, %v2957
      %v3028 = vadd.f32 %v294, %v2959
      %v3029 = vadd.f32 %v295, %v2963
      %v3030 = vadd.f32 %v296, %v2965
      %v3031 = vadd.f32 %v297, %v2967
      %v3032 = vadd.f32 %v298, %v2969
      %v3033 = vadd.f32 %v299, %v2973
      %v3034 = vadd.f32 %v300, %v2975
      %v3035 = vadd.f32 %v301, %v2977
      %v3036 = vadd.f32 %v302, %v2979
      %v3037 = vadd.f32 %v303, %v2983
      %v3038 = vadd.f32 %v304, %v2985
      %v3039 = vadd.f32 %v305, %v2987
      %v3040 = vadd.f32 %v306, %v2989
      %v3041 = vadd.f32 %v307, %v2993
      %v3042 = vadd.f32 %v308, %v2995
      %v3043 = vadd.f32 %v309, %v2997
      %v3044 = vadd.f32 %v310, %v2999
      %v3045 = vadd.f32 %v311, %v3003
      %v3046 = vadd.f32 %v312, %v3005
      %v3047 = vadd.f32 %v313, %v3007
      %v3048 = vadd.f32 %v314, %v3009
      %v3049 = vadd.f32 %v315, %v3013
      %v3050 = vadd.f32 %v316, %v3015
      %v3051 = vadd.f32 %v317, %v3017
      %v3052 = vadd.f32 %v318, %v3019
      %v3053 = vadd.f32 %v3021, %v3022
      %3054 = vadd.xlane.f32.xlu0 %v3053
      %v3055 = vpop.xlane.xlu0 %3054
      %v3056 = vadd.f32 %v3023, %v3024
      %3057 = vadd.xlane.f32.xlu0 %v3056
      %v3058 = vpop.xlane.xlu0 %3057
      %v3059 = vadd.f32 %v3025, %v3026
      %3060 = vadd.xlane.f32.xlu0 %v3059
      %v3061 = vpop.xlane.xlu0 %3060
      %v3062 = vadd.f32 %v3027, %v3028
      %3063 = vadd.xlane.f32.xlu0 %v3062
      %v3064 = vpop.xlane.xlu0 %3063
      %v3065 = vadd.f32 %v3029, %v3030
      %3066 = vadd.xlane.f32.xlu0 %v3065
      %v3067 = vpop.xlane.xlu0 %3066
      %v3068 = vadd.f32 %v3031, %v3032
      %3069 = vadd.xlane.f32.xlu0 %v3068
      %v3070 = vpop.xlane.xlu0 %3069
      %v3071 = vadd.f32 %v3033, %v3034
      %3072 = vadd.xlane.f32.xlu0 %v3071
      %v3073 = vpop.xlane.xlu0 %3072
      %v3074 = vadd.f32 %v3035, %v3036
      %3075 = vadd.xlane.f32.xlu0 %v3074
      %v3076 = vpop.xlane.xlu0 %3075
      %v3077 = vadd.f32 %v3037, %v3038
      %3078 = vadd.xlane.f32.xlu0 %v3077
      %v3079 = vpop.xlane.xlu0 %3078
      %v3080 = vadd.f32 %v3039, %v3040
      %3081 = vadd.xlane.f32.xlu0 %v3080
      %v3082 = vpop.xlane.xlu0 %3081
      %v3083 = vadd.f32 %v3041, %v3042
      %3084 = vadd.xlane.f32.xlu0 %v3083
      %v3085 = vpop.xlane.xlu0 %3084
      %v3086 = vadd.f32 %v3043, %v3044
      %3087 = vadd.xlane.f32.xlu0 %v3086
      %v3088 = vpop.xlane.xlu0 %3087
      %v3089 = vadd.f32 %v3045, %v3046
      %3090 = vadd.xlane.f32.xlu0 %v3089
      %v3091 = vpop.xlane.xlu0 %3090
      %v3092 = vadd.f32 %v3047, %v3048
      %3093 = vadd.xlane.f32.xlu0 %v3092
      %v3094 = vpop.xlane.xlu0 %3093
      %v3095 = vadd.f32 %v3049, %v3050
      %3096 = vadd.xlane.f32.xlu0 %v3095
      %v3097 = vpop.xlane.xlu0 %3096
      %v3098 = vadd.f32 %v3051, %v3052
      %3099 = vadd.xlane.f32.xlu0 %v3098
      %v3100 = vpop.xlane.xlu0 %3099
      %v3101 = vrcp.pop 256.0
      %v3102 = vmul.f32 %v3055, %v3101
      %v3103 = vmul.f32 %v3058, %v3101
      %v3104 = vmul.f32 %v3061, %v3101
      %v3105 = vmul.f32 %v3064, %v3101
      %v3106 = vmul.f32 %v3067, %v3101
      %v3107 = vmul.f32 %v3070, %v3101
      %v3108 = vmul.f32 %v3073, %v3101
      %v3109 = vmul.f32 %v3076, %v3101
      %v3110 = vmul.f32 %v3079, %v3101
      %v3111 = vmul.f32 %v3082, %v3101
      %v3112 = vmul.f32 %v3085, %v3101
      %v3113 = vmul.f32 %v3088, %v3101
      %v3114 = vmul.f32 %v3091, %v3101
      %v3115 = vmul.f32 %v3094, %v3101
      %v3116 = vmul.f32 %v3097, %v3101
      %v3117 = vmul.f32 %v3100, %v3101
      %v3118 = vsub.f32 %v3021, %v3102
      %v3119 = vsub.f32 %v3022, %v3102
      %v3120 = vsub.f32 %v3023, %v3103
      %v3121 = vsub.f32 %v3024, %v3103
      %v3122 = vsub.f32 %v3025, %v3104
      %v3123 = vsub.f32 %v3026, %v3104
      %v3124 = vsub.f32 %v3027, %v3105
      %v3125 = vsub.f32 %v3028, %v3105
      %v3126 = vsub.f32 %v3029, %v3106
      %v3127 = vsub.f32 %v3030, %v3106
      %v3128 = vsub.f32 %v3031, %v3107
      %v3129 = vsub.f32 %v3032, %v3107
      %v3130 = vsub.f32 %v3033, %v3108
      %v3131 = vsub.f32 %v3034, %v3108
      %v3132 = vsub.f32 %v3035, %v3109
      %v3133 = vsub.f32 %v3036, %v3109
      %v3134 = vsub.f32 %v3037, %v3110
      %v3135 = vsub.f32 %v3038, %v3110
      %v3136 = vsub.f32 %v3039, %v3111
      %v3137 = vsub.f32 %v3040, %v3111
      %v3138 = vsub.f32 %v3041, %v3112
      %v3139 = vsub.f32 %v3042, %v3112
      %v3140 = vsub.f32 %v3043, %v3113
      %v3141 = vsub.f32 %v3044, %v3113
      %v3142 = vsub.f32 %v3045, %v3114
      %v3143 = vsub.f32 %v3046, %v3114
      %v3144 = vsub.f32 %v3047, %v3115
      %v3145 = vsub.f32 %v3048, %v3115
      %v3146 = vsub.f32 %v3049, %v3116
      %v3147 = vsub.f32 %v3050, %v3116
      %v3148 = vsub.f32 %v3051, %v3117
      %v3149 = vsub.f32 %v3052, %v3117
      %v3150 = vmul.f32 %v3118, %v3118
      %v3151 = vmul.f32 %v3119, %v3119
      %v3152 = vmul.f32 %v3120, %v3120
      %v3153 = vmul.f32 %v3121, %v3121
      %v3154 = vmul.f32 %v3122, %v3122
      %v3155 = vmul.f32 %v3123, %v3123
      %v3156 = vmul.f32 %v3124, %v3124
      %v3157 = vmul.f32 %v3125, %v3125
      %v3158 = vmul.f32 %v3126, %v3126
      %v3159 = vmul.f32 %v3127, %v3127
      %v3160 = vmul.f32 %v3128, %v3128
      %v3161 = vmul.f32 %v3129, %v3129
      %v3162 = vmul.f32 %v3130, %v3130
      %v3163 = vmul.f32 %v3131, %v3131
      %v3164 = vmul.f32 %v3132, %v3132
      %v3165 = vmul.f32 %v3133, %v3133
      %v3166 = vmul.f32 %v3134, %v3134
      %v3167 = vmul.f32 %v3135, %v3135
      %v3168 = vmul.f32 %v3136, %v3136
      %v3169 = vmul.f32 %v3137, %v3137
      %v3170 = vmul.f32 %v3138, %v3138
      %v3171 = vmul.f32 %v3139, %v3139
      %v3172 = vmul.f32 %v3140, %v3140
      %v3173 = vmul.f32 %v3141, %v3141
      %v3174 = vmul.f32 %v3142, %v3142
      %v3175 = vmul.f32 %v3143, %v3143
      %v3176 = vmul.f32 %v3144, %v3144
      %v3177 = vmul.f32 %v3145, %v3145
      %v3178 = vmul.f32 %v3146, %v3146
      %v3179 = vmul.f32 %v3147, %v3147
      %v3180 = vmul.f32 %v3148, %v3148
      %v3181 = vmul.f32 %v3149, %v3149
      %v3182 = vadd.f32 %v3150, %v3151
      %3183 = vadd.xlane.f32.xlu0 %v3182
      %v3184 = vpop.xlane.xlu0 %3183
      %v3185 = vadd.f32 %v3152, %v3153
      %3186 = vadd.xlane.f32.xlu0 %v3185
      %v3187 = vpop.xlane.xlu0 %3186
      %v3188 = vadd.f32 %v3154, %v3155
      %3189 = vadd.xlane.f32.xlu0 %v3188
      %v3190 = vpop.xlane.xlu0 %3189
      %v3191 = vadd.f32 %v3156, %v3157
      %3192 = vadd.xlane.f32.xlu0 %v3191
      %v3193 = vpop.xlane.xlu0 %3192
      %v3194 = vadd.f32 %v3158, %v3159
      %3195 = vadd.xlane.f32.xlu0 %v3194
      %v3196 = vpop.xlane.xlu0 %3195
      %v3197 = vadd.f32 %v3160, %v3161
      %3198 = vadd.xlane.f32.xlu0 %v3197
      %v3199 = vpop.xlane.xlu0 %3198
      %v3200 = vadd.f32 %v3162, %v3163
      %3201 = vadd.xlane.f32.xlu0 %v3200
      %v3202 = vpop.xlane.xlu0 %3201
      %v3203 = vadd.f32 %v3164, %v3165
      %3204 = vadd.xlane.f32.xlu0 %v3203
      %v3205 = vpop.xlane.xlu0 %3204
      %v3206 = vadd.f32 %v3166, %v3167
      %3207 = vadd.xlane.f32.xlu0 %v3206
      %v3208 = vpop.xlane.xlu0 %3207
      %v3209 = vadd.f32 %v3168, %v3169
      %3210 = vadd.xlane.f32.xlu0 %v3209
      %v3211 = vpop.xlane.xlu0 %3210
      %v3212 = vadd.f32 %v3170, %v3171
      %3213 = vadd.xlane.f32.xlu0 %v3212
      %v3214 = vpop.xlane.xlu0 %3213
      %v3215 = vadd.f32 %v3172, %v3173
      %3216 = vadd.xlane.f32.xlu0 %v3215
      %v3217 = vpop.xlane.xlu0 %3216
      %v3218 = vadd.f32 %v3174, %v3175
      %3219 = vadd.xlane.f32.xlu0 %v3218
      %v3220 = vpop.xlane.xlu0 %3219
      %v3221 = vadd.f32 %v3176, %v3177
      %3222 = vadd.xlane.f32.xlu0 %v3221
      %v3223 = vpop.xlane.xlu0 %3222
      %v3224 = vadd.f32 %v3178, %v3179
      %3225 = vadd.xlane.f32.xlu0 %v3224
      %v3226 = vpop.xlane.xlu0 %3225
      %v3227 = vadd.f32 %v3180, %v3181
      %3228 = vadd.xlane.f32.xlu0 %v3227
      %v3229 = vpop.xlane.xlu0 %3228
      %v3230 = vmul.f32 %v3184, %v3101
      %v3231 = vmul.f32 %v3187, %v3101
      %v3232 = vmul.f32 %v3190, %v3101
      %v3233 = vmul.f32 %v3193, %v3101
      %v3234 = vmul.f32 %v3196, %v3101
      %v3235 = vmul.f32 %v3199, %v3101
      %v3236 = vmul.f32 %v3202, %v3101
      %v3237 = vmul.f32 %v3205, %v3101
      %v3238 = vmul.f32 %v3208, %v3101
      %v3239 = vmul.f32 %v3211, %v3101
      %v3240 = vmul.f32 %v3214, %v3101
      %v3241 = vmul.f32 %v3217, %v3101
      %v3242 = vmul.f32 %v3220, %v3101
      %v3243 = vmul.f32 %v3223, %v3101
      %v3244 = vmul.f32 %v3226, %v3101
      %v3245 = vmul.f32 %v3229, %v3101
      %v3246 = vadd.f32 %v3230, 1e-05
      %v3247 = vadd.f32 %v3231, 1e-05
      %v3248 = vadd.f32 %v3232, 1e-05
      %v3249 = vadd.f32 %v3233, 1e-05
      %v3250 = vadd.f32 %v3234, 1e-05
      %v3251 = vadd.f32 %v3235, 1e-05
      %v3252 = vadd.f32 %v3236, 1e-05
      %v3253 = vadd.f32 %v3237, 1e-05
      %v3254 = vadd.f32 %v3238, 1e-05
      %v3255 = vadd.f32 %v3239, 1e-05
      %v3256 = vadd.f32 %v3240, 1e-05
      %v3257 = vadd.f32 %v3241, 1e-05
      %v3258 = vadd.f32 %v3242, 1e-05
      %v3259 = vadd.f32 %v3243, 1e-05
      %v3260 = vadd.f32 %v3244, 1e-05
      %v3261 = vadd.f32 %v3245, 1e-05
      %v3262 = vrsqrt.pop %v3246
      %v3263 = vrsqrt.pop %v3247
      %v3264 = vrsqrt.pop %v3248
      %v3265 = vrsqrt.pop %v3249
      %v3266 = vrsqrt.pop %v3250
      %v3267 = vrsqrt.pop %v3251
      %v3268 = vrsqrt.pop %v3252
      %v3269 = vrsqrt.pop %v3253
      %v3270 = vrsqrt.pop %v3254
      %v3271 = vrsqrt.pop %v3255
      %v3272 = vrsqrt.pop %v3256
      %v3273 = vrsqrt.pop %v3257
      %v3274 = vrsqrt.pop %v3258
      %v3275 = vrsqrt.pop %v3259
      %v3276 = vrsqrt.pop %v3260
      %v3277 = vrsqrt.pop %v3261
      %v3278 = vmul.f32 %v3118, %v3262
      %v3279 = vmul.f32 %v3119, %v3262
      %v3280 = vmul.f32 %v3120, %v3263
      %v3281 = vmul.f32 %v3121, %v3263
      %v3282 = vmul.f32 %v3122, %v3264
      %v3283 = vmul.f32 %v3123, %v3264
      %v3284 = vmul.f32 %v3124, %v3265
      %v3285 = vmul.f32 %v3125, %v3265
      %v3286 = vmul.f32 %v3126, %v3266
      %v3287 = vmul.f32 %v3127, %v3266
      %v3288 = vmul.f32 %v3128, %v3267
      %v3289 = vmul.f32 %v3129, %v3267
      %v3290 = vmul.f32 %v3130, %v3268
      %v3291 = vmul.f32 %v3131, %v3268
      %v3292 = vmul.f32 %v3132, %v3269
      %v3293 = vmul.f32 %v3133, %v3269
      %v3294 = vmul.f32 %v3134, %v3270
      %v3295 = vmul.f32 %v3135, %v3270
      %v3296 = vmul.f32 %v3136, %v3271
      %v3297 = vmul.f32 %v3137, %v3271
      %v3298 = vmul.f32 %v3138, %v3272
      %v3299 = vmul.f32 %v3139, %v3272
      %v3300 = vmul.f32 %v3140, %v3273
      %v3301 = vmul.f32 %v3141, %v3273
      %v3302 = vmul.f32 %v3142, %v3274
      %v3303 = vmul.f32 %v3143, %v3274
      %v3304 = vmul.f32 %v3144, %v3275
      %v3305 = vmul.f32 %v3145, %v3275
      %v3306 = vmul.f32 %v3146, %v3276
      %v3307 = vmul.f32 %v3147, %v3276
      %v3308 = vmul.f32 %v3148, %v3277
      %v3309 = vmul.f32 %v3149, %v3277
      %v3310 = vld [vmem:[%s5] sm:$0x3]
      %v3312 = vlaneseq
      %v3313 = vshrl.u32 %v3312, 7
      %v3314 = vsub.s32 0, %v3313
      %v3315 = vrot.slane %v3310, %v3314
      %v3316 = vlaneseq
      %v3317 = vshrl.u32 %v3316, 7
      %v3318 = vsub.s32 1, %v3317
      %v3319 = vrot.slane %v3310, %v3318
      %v3322 = vmul.f32 %v3278, %v3315
      %v3323 = vmul.f32 %v3279, %v3319
      %v3324 = vmul.f32 %v3280, %v3315
      %v3325 = vmul.f32 %v3281, %v3319
      %v3326 = vmul.f32 %v3282, %v3315
      %v3327 = vmul.f32 %v3283, %v3319
      %v3328 = vmul.f32 %v3284, %v3315
      %v3329 = vmul.f32 %v3285, %v3319
      %v3330 = vmul.f32 %v3286, %v3315
      %v3331 = vmul.f32 %v3287, %v3319
      %v3332 = vmul.f32 %v3288, %v3315
      %v3333 = vmul.f32 %v3289, %v3319
      %v3334 = vmul.f32 %v3290, %v3315
      %v3335 = vmul.f32 %v3291, %v3319
      %v3336 = vmul.f32 %v3292, %v3315
      %v3337 = vmul.f32 %v3293, %v3319
      %v3338 = vmul.f32 %v3294, %v3315
      %v3339 = vmul.f32 %v3295, %v3319
      %v3340 = vmul.f32 %v3296, %v3315
      %v3341 = vmul.f32 %v3297, %v3319
      %v3342 = vmul.f32 %v3298, %v3315
      %v3343 = vmul.f32 %v3299, %v3319
      %v3344 = vmul.f32 %v3300, %v3315
      %v3345 = vmul.f32 %v3301, %v3319
      %v3346 = vmul.f32 %v3302, %v3315
      %v3347 = vmul.f32 %v3303, %v3319
      %v3348 = vmul.f32 %v3304, %v3315
      %v3349 = vmul.f32 %v3305, %v3319
      %v3350 = vmul.f32 %v3306, %v3315
      %v3351 = vmul.f32 %v3307, %v3319
      %v3352 = vmul.f32 %v3308, %v3315
      %v3353 = vmul.f32 %v3309, %v3319
      %v3354 = vld [vmem:[%s6] sm:$0x3]
      %v3356 = vlaneseq
      %v3357 = vshrl.u32 %v3356, 7
      %v3358 = vsub.s32 0, %v3357
      %v3359 = vrot.slane %v3354, %v3358
      %v3360 = vlaneseq
      %v3361 = vshrl.u32 %v3360, 7
      %v3362 = vsub.s32 1, %v3361
      %v3363 = vrot.slane %v3354, %v3362
      %v3366 = vadd.f32 %v3322, %v3359
      %v3367 = vadd.f32 %v3323, %v3363
      %v3368 = vadd.f32 %v3324, %v3359
      %v3369 = vadd.f32 %v3325, %v3363
      %v3370 = vadd.f32 %v3326, %v3359
      %v3371 = vadd.f32 %v3327, %v3363
      %v3372 = vadd.f32 %v3328, %v3359
      %v3373 = vadd.f32 %v3329, %v3363
      %v3374 = vadd.f32 %v3330, %v3359
      %v3375 = vadd.f32 %v3331, %v3363
      %v3376 = vadd.f32 %v3332, %v3359
      %v3377 = vadd.f32 %v3333, %v3363
      %v3378 = vadd.f32 %v3334, %v3359
      %v3379 = vadd.f32 %v3335, %v3363
      %v3380 = vadd.f32 %v3336, %v3359
      %v3381 = vadd.f32 %v3337, %v3363
      %v3382 = vadd.f32 %v3338, %v3359
      %v3383 = vadd.f32 %v3339, %v3363
      %v3384 = vadd.f32 %v3340, %v3359
      %v3385 = vadd.f32 %v3341, %v3363
      %v3386 = vadd.f32 %v3342, %v3359
      %v3387 = vadd.f32 %v3343, %v3363
      %v3388 = vadd.f32 %v3344, %v3359
      %v3389 = vadd.f32 %v3345, %v3363
      %v3390 = vadd.f32 %v3346, %v3359
      %v3391 = vadd.f32 %v3347, %v3363
      %v3392 = vadd.f32 %v3348, %v3359
      %v3393 = vadd.f32 %v3349, %v3363
      %v3394 = vadd.f32 %v3350, %v3359
      %v3395 = vadd.f32 %v3351, %v3363
      %v3396 = vadd.f32 %v3352, %v3359
      %v3397 = vadd.f32 %v3353, %v3363
      %3398 = vst [vmem:[%s285] sm:$0xff] %v3366
      %3399 = vst [vmem:[%s285 + $0x8] sm:$0xff] %v3367
      %3400 = vst [vmem:[%s285 + $0x10] sm:$0xff] %v3368
      %3401 = vst [vmem:[%s285 + $0x18] sm:$0xff] %v3369
      %3402 = vst [vmem:[%s285 + $0x20] sm:$0xff] %v3370
      %3403 = vst [vmem:[%s285 + $0x28] sm:$0xff] %v3371
      %3404 = vst [vmem:[%s285 + $0x30] sm:$0xff] %v3372
      %3405 = vst [vmem:[%s285 + $0x38] sm:$0xff] %v3373
      %3406 = vst [vmem:[%s285 + $0x40] sm:$0xff] %v3374
      %3407 = vst [vmem:[%s285 + $0x48] sm:$0xff] %v3375
      %3408 = vst [vmem:[%s285 + $0x50] sm:$0xff] %v3376
      %3409 = vst [vmem:[%s285 + $0x58] sm:$0xff] %v3377
      %3410 = vst [vmem:[%s285 + $0x60] sm:$0xff] %v3378
      %3411 = vst [vmem:[%s285 + $0x68] sm:$0xff] %v3379
      %3412 = vst [vmem:[%s285 + $0x70] sm:$0xff] %v3380
      %3413 = vst [vmem:[%s285 + $0x78] sm:$0xff] %v3381
      %3414 = vst [vmem:[%s285 + $0x80] sm:$0xff] %v3382
      %3415 = vst [vmem:[%s285 + $0x88] sm:$0xff] %v3383
      %3416 = vst [vmem:[%s285 + $0x90] sm:$0xff] %v3384
      %3417 = vst [vmem:[%s285 + $0x98] sm:$0xff] %v3385
      %3418 = vst [vmem:[%s285 + $0xa0] sm:$0xff] %v3386
      %3419 = vst [vmem:[%s285 + $0xa8] sm:$0xff] %v3387
      %3420 = vst [vmem:[%s285 + $0xb0] sm:$0xff] %v3388
      %3421 = vst [vmem:[%s285 + $0xb8] sm:$0xff] %v3389
      %3422 = vst [vmem:[%s285 + $0xc0] sm:$0xff] %v3390
      %3423 = vst [vmem:[%s285 + $0xc8] sm:$0xff] %v3391
      %3424 = vst [vmem:[%s285 + $0xd0] sm:$0xff] %v3392
      %3425 = vst [vmem:[%s285 + $0xd8] sm:$0xff] %v3393
      %3426 = vst [vmem:[%s285 + $0xe0] sm:$0xff] %v3394
      %3427 = vst [vmem:[%s285 + $0xe8] sm:$0xff] %v3395
      %3428 = vst [vmem:[%s285 + $0xf0] sm:$0xff] %v3396
      %3429 = vst [vmem:[%s285 + $0xf8] sm:$0xff] %v3397
      %s3430 = smul.u32 16, %s18
      %p3431 = scmp.lt.s32.totalorder %s3430, 31
      %s3432 = scalar_select %p3431, %s3430, 31
      %s3433 = smul.addr %s3432, 2
      %s3434 = smul.addr %s3433, 8
      %s3435 = scalar_lea.vmem %s7, %s3434
      // Predicated region
      $region49: #{encoder_forward.5} parent=47 // pred_check
        %p3436 = pneg %p188
      $region50: #{encoder_forward.5} parent=47 // pred_check_branch
        %3438 = sbr.rel (%p3436) target = $region52
      $region51: #{encoder_forward.5} parent=47 // pred_region
        %s3439 = smul.u32 16, %s18
      $region52: #{encoder_forward.5} parent=47 // pred_fallthru
        _
    $region48: #{encoder_forward.5} parent=5 // pred_fallthru
      _
    %p3440 = scmp.le.s32.totalorder 2, %s13
    // Predicated region
    $region53: #{encoder_forward.5} parent=5 // pred_check
      %p3441 = pneg %p3440
    $region54: #{encoder_forward.5} parent=5 // pred_check_branch
      %3443 = sbr.rel (%p3441) target = $region56
    $region55: #{encoder_forward.5} parent=5 // pred_region
      %s3444 = ssub.s32 %s13, 2
      // Predicated region
      $region57: #{encoder_forward.5} parent=55 // pred_check
        %p3445 = pneg %p194
      $region58: #{encoder_forward.5} parent=55 // pred_check_branch
        %3447 = sbr.rel (%p3445) target = $region60
      $region59: #{encoder_forward.5} parent=55 // pred_region
        %s3448 = smul.u32 16, %s19
        %p3449 = scmp.lt.s32.totalorder %s3448, 31
        %s3450 = scalar_select %p3449, %s3448, 31
        %s3451 = smul.addr %s3450, 2
        %s3452 = smul.addr %s3451, 8
        %s3453 = scalar_lea.vmem %s7, %s3452
      $region60: #{encoder_forward.5} parent=55 // pred_fallthru
        _
    $region56: #{encoder_forward.5} parent=5 // pred_fallthru
      _
  $region6: #{encoder_forward.5} parent=0 // loop_footer
    %s17 = sadd.s32 1, %s13
  $region7: #{encoder_forward.5} parent=0 // loop_footer_branch
    %12 = sbr.rel target = $region3
  $region8: #{encoder_forward.5} parent=0 // loop_exit
    _

// kernel: encoder_forward.7
$region0: #{encoder_forward.7}
  #allocation0 [shape = 'u32[]', space=smem, size = 0x4, offset = 0x4, fixed_abs, tag = 'smem constant byte address 0x4 - core index']
  #allocation1 [shape = 'u32[144,128]{1,0:T(1,128)}', space=vmem, size = 0x12000, scoped, tag = 'internal scratch']
  %s0 = inlined_call_operand.vmem [shape: f32[256,256], index: 0, kind: input, shape index: {}]
  %s1 = inlined_call_operand.vmem [shape: bf16[256,1024], index: 1, kind: input, shape index: {}]
  %s2 = inlined_call_operand.vmem [shape: f32[1,1024], index: 2, kind: input, shape index: {}]
  %s3 = inlined_call_operand.vmem [shape: bf16[1024,256], index: 3, kind: input, shape index: {}]
  %s4 = inlined_call_operand.vmem [shape: f32[1,256], index: 4, kind: input, shape index: {}]
  %s5 = inlined_call_operand.vmem [shape: f32[1,256], index: 5, kind: input, shape index: {}]
  %s6 = inlined_call_operand.vmem [shape: f32[1,256], index: 6, kind: input, shape index: {}]
  %s7 = inlined_call_operand.hbm [shape: f32[256,256], index: 7, kind: output, shape index: {}]
  %s8 = sld [smem:[#allocation0]]
  $region61: #{encoder_forward.7} parent=0
    _
  %s10 = ssub.s32 1, %s8
  %s11 = scalar_select 0, %s10, %s8
  $region1: #{encoder_forward.7} parent=0
    #allocation2 [shape = 'u8[262144]{0}', space=vmem, size = 0x40000, scoped, tag = 'output window, operand 0']
    #allocation3 [shape = 's32[2]{0}', space=sflag, size = 0x8, scoped, tag = 'scoped memory for encoder_forward.7']
    %12 = vsyncpa [#allocation3], 0
    %s13 = scalar_lea.sflag [#allocation3], 1
    %14 = vsyncpa %s13, 0
    loop: start=0, step=1, limit=4
    $region2: #{encoder_forward.7} parent=1 // loop_pre_header
      _
    $region3: #{encoder_forward.7} parent=1 // loop_header
      %s16 = sphi 0, %s20
      %p17 = scmp.ge.s32.totalorder %s16, 4
      %s26 = sphi 0, %s28
      %s29 = sphi 0, %s26
      %s30 = sphi 0, %s29
      %s46 = sphi 0, %s30
      %s50 = sphi 0, %s50
      %s52 = sphi 0, %s50
      %s53 = sphi 0, %s52
      %s67 = sphi 0, %s53
      %s71 = sphi 0, %s71
      %s73 = sphi 0, %s71
      %s74 = sphi 0, %s73
      %s88 = sphi 0, %s74
      %s92 = sphi 0, %s92
      %s94 = sphi 0, %s92
      %s95 = sphi 0, %s94
      %s109 = sphi 0, %s95
      %s113 = sphi 0, %s113
      %s115 = sphi 0, %s113
      %s116 = sphi 0, %s115
      %s130 = sphi 0, %s116
      %s134 = sphi 0, %s134
      %s136 = sphi 0, %s134
      %s137 = sphi 0, %s136
      %s151 = sphi 0, %s137
      %s155 = sphi 0, %s155
      %s157 = sphi 0, %s155
      %s158 = sphi 0, %s157
      %s172 = sphi 0, %s158
      %s178 = sphi 0, %s180
      %s181 = sphi 0, %s178
      %s182 = sphi 0, %s181
      %s198 = sphi 0, %s182
    $region4: #{encoder_forward.7} parent=1 // loop_header_branch
      %19 = sbr.rel (%p17) target = $region8
    $region5: #{encoder_forward.7} parent=1 // loop_body
      %s21 = ssub.s32 %s16, 1
      %s22 = ssub.s32 %s16, 2
      %s23 = sadd.s32 %s16, 1
      %s24 = ssub.s32 %s16, %s23
      %p25 = scmp.eq.s32.totalorder %s24, 0
      %s27 = sadd.s32 %s26, 1
      %s28 = scalar_select %p25, %s26, %s27
      %p31 = pneg %p25
      %p32 = scmp.eq.s32.totalorder %s16, 1
      %p33 = por %p31, %p32
      %p34 = scmp.ne.s32.totalorder %s26, %s29
      %p35 = scmp.eq.s32.totalorder %s16, 0
      %p36 = por %p34, %p35
      %p37 = scmp.ne.s32.totalorder %s26, %s29
      %p38 = scmp.eq.s32.totalorder %s21, 1
      %p39 = por %p37, %p38
      %p40 = scmp.ne.s32.totalorder %s29, %s30
      %p41 = scmp.eq.s32.totalorder %s21, 0
      %p42 = por %p40, %p41
      %p43 = scmp.ne.s32.totalorder %s29, %s30
      %p44 = scmp.eq.s32.totalorder %s22, 1
      %p45 = por %p43, %p44
      %p47 = scmp.ne.s32.totalorder %s30, %s46
      %p48 = scmp.eq.s32.totalorder %s22, 0
      %p49 = por %p47, %p48
      %s51 = sadd.s32 %s50, 1
      %p54 = scmp.eq.s32.totalorder %s16, 1
      %p55 = scmp.ne.s32.totalorder %s50, %s52
      %p56 = scmp.eq.s32.totalorder %s16, 0
      %p57 = por %p55, %p56
      %p58 = scmp.ne.s32.totalorder %s50, %s52
      %p59 = scmp.eq.s32.totalorder %s21, 1
      %p60 = por %p58, %p59
      %p61 = scmp.ne.s32.totalorder %s52, %s53
      %p62 = scmp.eq.s32.totalorder %s21, 0
      %p63 = por %p61, %p62
      %p64 = scmp.ne.s32.totalorder %s52, %s53
      %p65 = scmp.eq.s32.totalorder %s22, 1
      %p66 = por %p64, %p65
      %p68 = scmp.ne.s32.totalorder %s53, %s67
      %p69 = scmp.eq.s32.totalorder %s22, 0
      %p70 = por %p68, %p69
      %s72 = sadd.s32 %s71, 1
      %p75 = scmp.eq.s32.totalorder %s16, 1
      %p76 = scmp.ne.s32.totalorder %s71, %s73
      %p77 = scmp.eq.s32.totalorder %s16, 0
      %p78 = por %p76, %p77
      %p79 = scmp.ne.s32.totalorder %s71, %s73
      %p80 = scmp.eq.s32.totalorder %s21, 1
      %p81 = por %p79, %p80
      %p82 = scmp.ne.s32.totalorder %s73, %s74
      %p83 = scmp.eq.s32.totalorder %s21, 0
      %p84 = por %p82, %p83
      %p85 = scmp.ne.s32.totalorder %s73, %s74
      %p86 = scmp.eq.s32.totalorder %s22, 1
      %p87 = por %p85, %p86
      %p89 = scmp.ne.s32.totalorder %s74, %s88
      %p90 = scmp.eq.s32.totalorder %s22, 0
      %p91 = por %p89, %p90
      %s93 = sadd.s32 %s92, 1
      %p96 = scmp.eq.s32.totalorder %s16, 1
      %p97 = scmp.ne.s32.totalorder %s92, %s94
      %p98 = scmp.eq.s32.totalorder %s16, 0
      %p99 = por %p97, %p98
      %p100 = scmp.ne.s32.totalorder %s92, %s94
      %p101 = scmp.eq.s32.totalorder %s21, 1
      %p102 = por %p100, %p101
      %p103 = scmp.ne.s32.totalorder %s94, %s95
      %p104 = scmp.eq.s32.totalorder %s21, 0
      %p105 = por %p103, %p104
      %p106 = scmp.ne.s32.totalorder %s94, %s95
      %p107 = scmp.eq.s32.totalorder %s22, 1
      %p108 = por %p106, %p107
      %p110 = scmp.ne.s32.totalorder %s95, %s109
      %p111 = scmp.eq.s32.totalorder %s22, 0
      %p112 = por %p110, %p111
      %s114 = sadd.s32 %s113, 1
      %p117 = scmp.eq.s32.totalorder %s16, 1
      %p118 = scmp.ne.s32.totalorder %s113, %s115
      %p119 = scmp.eq.s32.totalorder %s16, 0
      %p120 = por %p118, %p119
      %p121 = scmp.ne.s32.totalorder %s113, %s115
      %p122 = scmp.eq.s32.totalorder %s21, 1
      %p123 = por %p121, %p122
      %p124 = scmp.ne.s32.totalorder %s115, %s116
      %p125 = scmp.eq.s32.totalorder %s21, 0
      %p126 = por %p124, %p125
      %p127 = scmp.ne.s32.totalorder %s115, %s116
      %p128 = scmp.eq.s32.totalorder %s22, 1
      %p129 = por %p127, %p128
      %p131 = scmp.ne.s32.totalorder %s116, %s130
      %p132 = scmp.eq.s32.totalorder %s22, 0
      %p133 = por %p131, %p132
      %s135 = sadd.s32 %s134, 1
      %p138 = scmp.eq.s32.totalorder %s16, 1
      %p139 = scmp.ne.s32.totalorder %s134, %s136
      %p140 = scmp.eq.s32.totalorder %s16, 0
      %p141 = por %p139, %p140
      %p142 = scmp.ne.s32.totalorder %s134, %s136
      %p143 = scmp.eq.s32.totalorder %s21, 1
      %p144 = por %p142, %p143
      %p145 = scmp.ne.s32.totalorder %s136, %s137
      %p146 = scmp.eq.s32.totalorder %s21, 0
      %p147 = por %p145, %p146
      %p148 = scmp.ne.s32.totalorder %s136, %s137
      %p149 = scmp.eq.s32.totalorder %s22, 1
      %p150 = por %p148, %p149
      %p152 = scmp.ne.s32.totalorder %s137, %s151
      %p153 = scmp.eq.s32.totalorder %s22, 0
      %p154 = por %p152, %p153
      %s156 = sadd.s32 %s155, 1
      %p159 = scmp.eq.s32.totalorder %s16, 1
      %p160 = scmp.ne.s32.totalorder %s155, %s157
      %p161 = scmp.eq.s32.totalorder %s16, 0
      %p162 = por %p160, %p161
      %p163 = scmp.ne.s32.totalorder %s155, %s157
      %p164 = scmp.eq.s32.totalorder %s21, 1
      %p165 = por %p163, %p164
      %p166 = scmp.ne.s32.totalorder %s157, %s158
      %p167 = scmp.eq.s32.totalorder %s21, 0
      %p168 = por %p166, %p167
      %p169 = scmp.ne.s32.totalorder %s157, %s158
      %p170 = scmp.eq.s32.totalorder %s22, 1
      %p171 = por %p169, %p170
      %p173 = scmp.ne.s32.totalorder %s158, %s172
      %p174 = scmp.eq.s32.totalorder %s22, 0
      %p175 = por %p173, %p174
      %s176 = ssub.s32 %s16, %s23
      %p177 = scmp.eq.s32.totalorder %s176, 0
      %s179 = sadd.s32 %s178, 1
      %s180 = scalar_select %p177, %s178, %s179
      %p183 = pneg %p177
      %p184 = scmp.eq.s32.totalorder %s16, 1
      %p185 = por %p183, %p184
      %p186 = scmp.ne.s32.totalorder %s178, %s181
      %p187 = scmp.eq.s32.totalorder %s16, 0
      %p188 = por %p186, %p187
      %p189 = scmp.ne.s32.totalorder %s178, %s181
      %p190 = scmp.eq.s32.totalorder %s21, 1
      %p191 = por %p189, %p190
      %p192 = scmp.ne.s32.totalorder %s181, %s182
      %p193 = scmp.eq.s32.totalorder %s21, 0
      %p194 = por %p192, %p193
      %p195 = scmp.ne.s32.totalorder %s181, %s182
      %p196 = scmp.eq.s32.totalorder %s22, 1
      %p197 = por %p195, %p196
      %p199 = scmp.ne.s32.totalorder %s182, %s198
      %p200 = scmp.eq.s32.totalorder %s22, 0
      %p201 = por %p199, %p200
      %p202 = scmp.le.s32.totalorder 1, %s16
      %p203 = scmp.lt.s32.totalorder %s16, 3
      %p204 = pnand %p202, %p203
      %p205 = pneg %p204
      // Predicated region
      $region9: #{encoder_forward.7} parent=5 // pred_check
        _
      $region10: #{encoder_forward.7} parent=5 // pred_check_branch
        %207 = sbr.rel (%p204) target = $region12
      $region11: #{encoder_forward.7} parent=5 // pred_region
        %s208 = ssub.s32 %s16, 1
        // Predicated region
        $region13: #{encoder_forward.7} parent=11 // pred_check
          %p209 = pneg %p63
        $region14: #{encoder_forward.7} parent=11 // pred_check_branch
          %211 = sbr.rel (%p209) target = $region16
        $region15: #{encoder_forward.7} parent=11 // pred_region
          _
        $region16: #{encoder_forward.7} parent=11 // pred_fallthru
          _
        // Predicated region
        $region17: #{encoder_forward.7} parent=11 // pred_check
          %p212 = pneg %p84
        $region18: #{encoder_forward.7} parent=11 // pred_check_branch
          %214 = sbr.rel (%p212) target = $region20
        $region19: #{encoder_forward.7} parent=11 // pred_region
          _
        $region20: #{encoder_forward.7} parent=11 // pred_fallthru
          _
        // Predicated region
        $region21: #{encoder_forward.7} parent=11 // pred_check
          %p215 = pneg %p105
        $region22: #{encoder_forward.7} parent=11 // pred_check_branch
          %217 = sbr.rel (%p215) target = $region24
        $region23: #{encoder_forward.7} parent=11 // pred_region
          _
        $region24: #{encoder_forward.7} parent=11 // pred_fallthru
          _
        // Predicated region
        $region25: #{encoder_forward.7} parent=11 // pred_check
          %p218 = pneg %p126
        $region26: #{encoder_forward.7} parent=11 // pred_check_branch
          %220 = sbr.rel (%p218) target = $region28
        $region27: #{encoder_forward.7} parent=11 // pred_region
          _
        $region28: #{encoder_forward.7} parent=11 // pred_fallthru
          _
        // Predicated region
        $region29: #{encoder_forward.7} parent=11 // pred_check
          %p221 = pneg %p147
        $region30: #{encoder_forward.7} parent=11 // pred_check_branch
          %223 = sbr.rel (%p221) target = $region32
        $region31: #{encoder_forward.7} parent=11 // pred_region
          _
        $region32: #{encoder_forward.7} parent=11 // pred_fallthru
          _
        // Predicated region
        $region33: #{encoder_forward.7} parent=11 // pred_check
          %p224 = pneg %p168
        $region34: #{encoder_forward.7} parent=11 // pred_check_branch
          %226 = sbr.rel (%p224) target = $region36
        $region35: #{encoder_forward.7} parent=11 // pred_region
          _
        $region36: #{encoder_forward.7} parent=11 // pred_fallthru
          _
      $region12: #{encoder_forward.7} parent=5 // pred_fallthru
        _
      %p227 = scmp.lt.s32.totalorder %s16, 2
      // Predicated region
      $region37: #{encoder_forward.7} parent=5 // pred_check
        %p228 = pneg %p227
      $region38: #{encoder_forward.7} parent=5 // pred_check_branch
        %230 = sbr.rel (%p228) target = $region40
      $region39: #{encoder_forward.7} parent=5 // pred_region
        // Predicated region
        $region41: #{encoder_forward.7} parent=39 // pred_check
          %p231 = pneg %p36
        $region42: #{encoder_forward.7} parent=39 // pred_check_branch
          %233 = sbr.rel (%p231) target = $region44
        $region43: #{encoder_forward.7} parent=39 // pred_region
          %s234 = smul.u32 16, %s16
          %p235 = scmp.lt.s32.totalorder %s234, 31
          %s236 = scalar_select %p235, %s234, 31
          %s237 = smul.addr %s236, 2
          %s238 = smul.addr %s237, 8
          %s239 = scalar_lea.vmem %s0, %s238
          %s240 = smul.u32 16, %s16
        $region44: #{encoder_forward.7} parent=39 // pred_fallthru
          _
      $region40: #{encoder_forward.7} parent=5 // pred_fallthru
        _
      %p241 = scmp.le.s32.totalorder 1, %s16
      %p242 = scmp.lt.s32.totalorder %s16, 3
      %p243 = pnand %p241, %p242
      %p244 = pneg %p243
      // Predicated region
      $region45: #{encoder_forward.7} parent=5 // pred_check
        _
      $region46: #{encoder_forward.7} parent=5 // pred_check_branch
        %246 = sbr.rel (%p243) target = $region48
      $region47: #{encoder_forward.7} parent=5 // pred_region
        %s247 = ssub.s32 %s16, 1
        %s248 = smul.u32 16, %s21
        %p249 = scmp.lt.s32.totalorder %s248, 31
        %s250 = scalar_select %p249, %s248, 31
        %s251 = smul.addr %s250, 2
        %s252 = smul.addr %s251, 8
        %s253 = scalar_lea.vmem %s0, %s252
        %p254 = pneg %p42
        %p255 = pneg %p39
        %p256 = pneg %p63
        %p257 = pneg %p60
        %p258 = pneg %p84
        %p259 = pneg %p81
        %p260 = pneg %p105
        %p261 = pneg %p102
        %p262 = pneg %p126
        %p263 = pneg %p123
        %p264 = pneg %p147
        %p265 = pneg %p144
        %p266 = pneg %p168
        %p267 = pneg %p165
        %p268 = pneg %p194
        %p269 = pneg %p191
        %s270 = sand.u32 %s181, 1
        %s271 = scalar_lea.sflag [#allocation3], %s270
        %s272 = sand.u32 %s181, 1
        %s273 = smul.addr %s272, 256
        %s274 = scalar_lea.vmem [#allocation2], %s273
        %s275 = smul.u32 16, %s21
        %p276 = scmp.lt.s32.totalorder %s275, 31
        %s277 = scalar_select %p276, %s275, 31
        %s278 = smul.addr %s277, 2
        %s279 = smul.addr %s278, 8
        %s280 = scalar_lea.vmem %s0, %s279
        %s281 = smul.u32 16, %s21
        %s282 = smul.u32 16, %s21
        %v283 = vld [vmem:[%s280] sm:$0xff]
        %v284 = vld [vmem:[%s280 + $0x8] sm:$0xff]
        %v285 = vld [vmem:[%s280 + $0x10] sm:$0xff]
        %v286 = vld [vmem:[%s280 + $0x18] sm:$0xff]
        %v287 = vld [vmem:[%s280 + $0x20] sm:$0xff]
        %v288 = vld [vmem:[%s280 + $0x28] sm:$0xff]
        %v289 = vld [vmem:[%s280 + $0x30] sm:$0xff]
        %v290 = vld [vmem:[%s280 + $0x38] sm:$0xff]
        %v291 = vld [vmem:[%s280 + $0x40] sm:$0xff]
        %v292 = vld [vmem:[%s280 + $0x48] sm:$0xff]
        %v293 = vld [vmem:[%s280 + $0x50] sm:$0xff]
        %v294 = vld [vmem:[%s280 + $0x58] sm:$0xff]
        %v295 = vld [vmem:[%s280 + $0x60] sm:$0xff]
        %v296 = vld [vmem:[%s280 + $0x68] sm:$0xff]
        %v297 = vld [vmem:[%s280 + $0x70] sm:$0xff]
        %v298 = vld [vmem:[%s280 + $0x78] sm:$0xff]
        %v299 = vld [vmem:[%s280 + $0x80] sm:$0xff]
        %v300 = vld [vmem:[%s280 + $0x88] sm:$0xff]
        %v301 = vld [vmem:[%s280 + $0x90] sm:$0xff]
        %v302 = vld [vmem:[%s280 + $0x98] sm:$0xff]
        %v303 = vld [vmem:[%s280 + $0xa0] sm:$0xff]
        %v304 = vld [vmem:[%s280 + $0xa8] sm:$0xff]
        %v305 = vld [vmem:[%s280 + $0xb0] sm:$0xff]
        %v306 = vld [vmem:[%s280 + $0xb8] sm:$0xff]
        %v307 = vld [vmem:[%s280 + $0xc0] sm:$0xff]
        %v308 = vld [vmem:[%s280 + $0xc8] sm:$0xff]
        %v309 = vld [vmem:[%s280 + $0xd0] sm:$0xff]
        %v310 = vld [vmem:[%s280 + $0xd8] sm:$0xff]
        %v311 = vld [vmem:[%s280 + $0xe0] sm:$0xff]
        %v312 = vld [vmem:[%s280 + $0xe8] sm:$0xff]
        %v313 = vld [vmem:[%s280 + $0xf0] sm:$0xff]
        %v314 = vld [vmem:[%s280 + $0xf8] sm:$0xff]
        %v315 = vpack.c.bf16 %v285, %v283
        %v316 = vpack.c.bf16 %v286, %v284
        %v317 = vpack.c.bf16 %v289, %v287
        %v318 = vpack.c.bf16 %v290, %v288
        %v319 = vpack.c.bf16 %v293, %v291
        %v320 = vpack.c.bf16 %v294, %v292
        %v321 = vpack.c.bf16 %v297, %v295
        %v322 = vpack.c.bf16 %v298, %v296
        %v323 = vpack.c.bf16 %v301, %v299
        %v324 = vpack.c.bf16 %v302, %v300
        %v325 = vpack.c.bf16 %v305, %v303
        %v326 = vpack.c.bf16 %v306, %v304
        %v327 = vpack.c.bf16 %v309, %v307
        %v328 = vpack.c.bf16 %v310, %v308
        %v329 = vpack.c.bf16 %v313, %v311
        %v330 = vpack.c.bf16 %v314, %v312
        %v331 = vld [vmem:[%s1] sm:$0xff]
        %v332 = vld [vmem:[%s1 + $0x8] sm:$0xff]
        %v333 = vld [vmem:[%s1 + $0x10] sm:$0xff]
        %v334 = vld [vmem:[%s1 + $0x18] sm:$0xff]
        %v335 = vld [vmem:[%s1 + $0x20] sm:$0xff]
        %v336 = vld [vmem:[%s1 + $0x28] sm:$0xff]
        %v337 = vld [vmem:[%s1 + $0x30] sm:$0xff]
        %v338 = vld [vmem:[%s1 + $0x38] sm:$0xff]
        %v339 = vld [vmem:[%s1 + $0x40] sm:$0xff]
        %v340 = vld [vmem:[%s1 + $0x48] sm:$0xff]
        %v341 = vld [vmem:[%s1 + $0x50] sm:$0xff]
        %v342 = vld [vmem:[%s1 + $0x58] sm:$0xff]
        %v343 = vld [vmem:[%s1 + $0x60] sm:$0xff]
        %v344 = vld [vmem:[%s1 + $0x68] sm:$0xff]
        %v345 = vld [vmem:[%s1 + $0x70] sm:$0xff]
        %v346 = vld [vmem:[%s1 + $0x78] sm:$0xff]
        %v347 = vld [vmem:[%s1 + $0x80] sm:$0xff]
        %v348 = vld [vmem:[%s1 + $0x88] sm:$0xff]
        %v349 = vld [vmem:[%s1 + $0x90] sm:$0xff]
        %v350 = vld [vmem:[%s1 + $0x98] sm:$0xff]
        %v351 = vld [vmem:[%s1 + $0xa0] sm:$0xff]
        %v352 = vld [vmem:[%s1 + $0xa8] sm:$0xff]
        %v353 = vld [vmem:[%s1 + $0xb0] sm:$0xff]
        %v354 = vld [vmem:[%s1 + $0xb8] sm:$0xff]
        %v355 = vld [vmem:[%s1 + $0xc0] sm:$0xff]
        %v356 = vld [vmem:[%s1 + $0xc8] sm:$0xff]
        %v357 = vld [vmem:[%s1 + $0xd0] sm:$0xff]
        %v358 = vld [vmem:[%s1 + $0xd8] sm:$0xff]
        %v359 = vld [vmem:[%s1 + $0xe0] sm:$0xff]
        %v360 = vld [vmem:[%s1 + $0xe8] sm:$0xff]
        %v361 = vld [vmem:[%s1 + $0xf0] sm:$0xff]
        %v362 = vld [vmem:[%s1 + $0xf8] sm:$0xff]
        %v363 = vld [vmem:[%s1 + $0x100] sm:$0xff]
        %v364 = vld [vmem:[%s1 + $0x108] sm:$0xff]
        %v365 = vld [vmem:[%s1 + $0x110] sm:$0xff]
        %v366 = vld [vmem:[%s1 + $0x118] sm:$0xff]
        %v367 = vld [vmem:[%s1 + $0x120] sm:$0xff]
        %v368 = vld [vmem:[%s1 + $0x128] sm:$0xff]
        %v369 = vld [vmem:[%s1 + $0x130] sm:$0xff]
        %v370 = vld [vmem:[%s1 + $0x138] sm:$0xff]
        %v371 = vld [vmem:[%s1 + $0x140] sm:$0xff]
        %v372 = vld [vmem:[%s1 + $0x148] sm:$0xff]
        %v373 = vld [vmem:[%s1 + $0x150] sm:$0xff]
        %v374 = vld [vmem:[%s1 + $0x158] sm:$0xff]
        %v375 = vld [vmem:[%s1 + $0x160] sm:$0xff]
        %v376 = vld [vmem:[%s1 + $0x168] sm:$0xff]
        %v377 = vld [vmem:[%s1 + $0x170] sm:$0xff]
        %v378 = vld [vmem:[%s1 + $0x178] sm:$0xff]
        %v379 = vld [vmem:[%s1 + $0x180] sm:$0xff]
        %v380 = vld [vmem:[%s1 + $0x188] sm:$0xff]
        %v381 = vld [vmem:[%s1 + $0x190] sm:$0xff]
        %v382 = vld [vmem:[%s1 + $0x198] sm:$0xff]
        %v383 = vld [vmem:[%s1 + $0x1a0] sm:$0xff]
        %v384 = vld [vmem:[%s1 + $0x1a8] sm:$0xff]
        %v385 = vld [vmem:[%s1 + $0x1b0] sm:$0xff]
        %v386 = vld [vmem:[%s1 + $0x1b8] sm:$0xff]
        %v387 = vld [vmem:[%s1 + $0x1c0] sm:$0xff]
        %v388 = vld [vmem:[%s1 + $0x1c8] sm:$0xff]
        %v389 = vld [vmem:[%s1 + $0x1d0] sm:$0xff]
        %v390 = vld [vmem:[%s1 + $0x1d8] sm:$0xff]
        %v391 = vld [vmem:[%s1 + $0x1e0] sm:$0xff]
        %v392 = vld [vmem:[%s1 + $0x1e8] sm:$0xff]
        %v393 = vld [vmem:[%s1 + $0x1f0] sm:$0xff]
        %v394 = vld [vmem:[%s1 + $0x1f8] sm:$0xff]
        %v395 = vld [vmem:[%s1 + $0x200] sm:$0xff]
        %v396 = vld [vmem:[%s1 + $0x208] sm:$0xff]
        %v397 = vld [vmem:[%s1 + $0x210] sm:$0xff]
        %v398 = vld [vmem:[%s1 + $0x218] sm:$0xff]
        %v399 = vld [vmem:[%s1 + $0x220] sm:$0xff]
        %v400 = vld [vmem:[%s1 + $0x228] sm:$0xff]
        %v401 = vld [vmem:[%s1 + $0x230] sm:$0xff]
        %v402 = vld [vmem:[%s1 + $0x238] sm:$0xff]
        %v403 = vld [vmem:[%s1 + $0x240] sm:$0xff]
        %v404 = vld [vmem:[%s1 + $0x248] sm:$0xff]
        %v405 = vld [vmem:[%s1 + $0x250] sm:$0xff]
        %v406 = vld [vmem:[%s1 + $0x258] sm:$0xff]
        %v407 = vld [vmem:[%s1 + $0x260] sm:$0xff]
        %v408 = vld [vmem:[%s1 + $0x268] sm:$0xff]
        %v409 = vld [vmem:[%s1 + $0x270] sm:$0xff]
        %v410 = vld [vmem:[%s1 + $0x278] sm:$0xff]
        %v411 = vld [vmem:[%s1 + $0x280] sm:$0xff]
        %v412 = vld [vmem:[%s1 + $0x288] sm:$0xff]
        %v413 = vld [vmem:[%s1 + $0x290] sm:$0xff]
        %v414 = vld [vmem:[%s1 + $0x298] sm:$0xff]
        %v415 = vld [vmem:[%s1 + $0x2a0] sm:$0xff]
        %v416 = vld [vmem:[%s1 + $0x2a8] sm:$0xff]
        %v417 = vld [vmem:[%s1 + $0x2b0] sm:$0xff]
        %v418 = vld [vmem:[%s1 + $0x2b8] sm:$0xff]
        %v419 = vld [vmem:[%s1 + $0x2c0] sm:$0xff]
        %v420 = vld [vmem:[%s1 + $0x2c8] sm:$0xff]
        %v421 = vld [vmem:[%s1 + $0x2d0] sm:$0xff]
        %v422 = vld [vmem:[%s1 + $0x2d8] sm:$0xff]
        %v423 = vld [vmem:[%s1 + $0x2e0] sm:$0xff]
        %v424 = vld [vmem:[%s1 + $0x2e8] sm:$0xff]
        %v425 = vld [vmem:[%s1 + $0x2f0] sm:$0xff]
        %v426 = vld [vmem:[%s1 + $0x2f8] sm:$0xff]
        %v427 = vld [vmem:[%s1 + $0x300] sm:$0xff]
        %v428 = vld [vmem:[%s1 + $0x308] sm:$0xff]
        %v429 = vld [vmem:[%s1 + $0x310] sm:$0xff]
        %v430 = vld [vmem:[%s1 + $0x318] sm:$0xff]
        %v431 = vld [vmem:[%s1 + $0x320] sm:$0xff]
        %v432 = vld [vmem:[%s1 + $0x328] sm:$0xff]
        %v433 = vld [vmem:[%s1 + $0x330] sm:$0xff]
        %v434 = vld [vmem:[%s1 + $0x338] sm:$0xff]
        %v435 = vld [vmem:[%s1 + $0x340] sm:$0xff]
        %v436 = vld [vmem:[%s1 + $0x348] sm:$0xff]
        %v437 = vld [vmem:[%s1 + $0x350] sm:$0xff]
        %v438 = vld [vmem:[%s1 + $0x358] sm:$0xff]
        %v439 = vld [vmem:[%s1 + $0x360] sm:$0xff]
        %v440 = vld [vmem:[%s1 + $0x368] sm:$0xff]
        %v441 = vld [vmem:[%s1 + $0x370] sm:$0xff]
        %v442 = vld [vmem:[%s1 + $0x378] sm:$0xff]
        %v443 = vld [vmem:[%s1 + $0x380] sm:$0xff]
        %v444 = vld [vmem:[%s1 + $0x388] sm:$0xff]
        %v445 = vld [vmem:[%s1 + $0x390] sm:$0xff]
        %v446 = vld [vmem:[%s1 + $0x398] sm:$0xff]
        %v447 = vld [vmem:[%s1 + $0x3a0] sm:$0xff]
        %v448 = vld [vmem:[%s1 + $0x3a8] sm:$0xff]
        %v449 = vld [vmem:[%s1 + $0x3b0] sm:$0xff]
        %v450 = vld [vmem:[%s1 + $0x3b8] sm:$0xff]
        %v451 = vld [vmem:[%s1 + $0x3c0] sm:$0xff]
        %v452 = vld [vmem:[%s1 + $0x3c8] sm:$0xff]
        %v453 = vld [vmem:[%s1 + $0x3d0] sm:$0xff]
        %v454 = vld [vmem:[%s1 + $0x3d8] sm:$0xff]
        %v455 = vld [vmem:[%s1 + $0x3e0] sm:$0xff]
        %v456 = vld [vmem:[%s1 + $0x3e8] sm:$0xff]
        %v457 = vld [vmem:[%s1 + $0x3f0] sm:$0xff]
        %v458 = vld [vmem:[%s1 + $0x3f8] sm:$0xff]
        %v459 = vld [vmem:[%s2] sm:$0xff]
        %v461 = vlaneseq
        %v462 = vshrl.u32 %v461, 7
        %v463 = vsub.s32 0, %v462
        %v464 = vrot.slane %v459, %v463
        %v465 = vlaneseq
        %v466 = vshrl.u32 %v465, 7
        %v467 = vsub.s32 1, %v466
        %v468 = vrot.slane %v459, %v467
        %v469 = vlaneseq
        %v470 = vshrl.u32 %v469, 7
        %v471 = vsub.s32 2, %v470
        %v472 = vrot.slane %v459, %v471
        %v473 = vlaneseq
        %v474 = vshrl.u32 %v473, 7
        %v475 = vsub.s32 3, %v474
        %v476 = vrot.slane %v459, %v475
        %v477 = vlaneseq
        %v478 = vshrl.u32 %v477, 7
        %v479 = vsub.s32 4, %v478
        %v480 = vrot.slane %v459, %v479
        %v481 = vlaneseq
        %v482 = vshrl.u32 %v481, 7
        %v483 = vsub.s32 5, %v482
        %v484 = vrot.slane %v459, %v483
        %v485 = vlaneseq
        %v486 = vshrl.u32 %v485, 7
        %v487 = vsub.s32 6, %v486
        %v488 = vrot.slane %v459, %v487
        %v489 = vlaneseq
        %v490 = vshrl.u32 %v489, 7
        %v491 = vsub.s32 7, %v490
        %v492 = vrot.slane %v459, %v491
        %v629 = vunpack.c.l.b16 %v331
        %v630 = vunpack.c.h.b16 %v331
        %v631 = vunpack.c.l.b16 %v332
        %v632 = vunpack.c.h.b16 %v332
        %v633 = vunpack.c.l.b16 %v333
        %v634 = vunpack.c.h.b16 %v333
        %v635 = vunpack.c.l.b16 %v334
        %v636 = vunpack.c.h.b16 %v334
        %v637 = vunpack.c.l.b16 %v335
        %v638 = vunpack.c.h.b16 %v335
        %v639 = vunpack.c.l.b16 %v336
        %v640 = vunpack.c.h.b16 %v336
        %v641 = vunpack.c.l.b16 %v337
        %v642 = vunpack.c.h.b16 %v337
        %v643 = vunpack.c.l.b16 %v338
        %v644 = vunpack.c.h.b16 %v338
        %v645 = vunpack.c.l.b16 %v339
        %v646 = vunpack.c.h.b16 %v339
        %v647 = vunpack.c.l.b16 %v340
        %v648 = vunpack.c.h.b16 %v340
        %v649 = vunpack.c.l.b16 %v341
        %v650 = vunpack.c.h.b16 %v341
        %v651 = vunpack.c.l.b16 %v342
        %v652 = vunpack.c.h.b16 %v342
        %v653 = vunpack.c.l.b16 %v343
        %v654 = vunpack.c.h.b16 %v343
        %v655 = vunpack.c.l.b16 %v344
        %v656 = vunpack.c.h.b16 %v344
        %v657 = vunpack.c.l.b16 %v345
        %v658 = vunpack.c.h.b16 %v345
        %v659 = vunpack.c.l.b16 %v346
        %v660 = vunpack.c.h.b16 %v346
        %v661 = vunpack.c.l.b16 %v347
        %v662 = vunpack.c.h.b16 %v347
        %v663 = vunpack.c.l.b16 %v348
        %v664 = vunpack.c.h.b16 %v348
        %v665 = vunpack.c.l.b16 %v349
        %v666 = vunpack.c.h.b16 %v349
        %v667 = vunpack.c.l.b16 %v350
        %v668 = vunpack.c.h.b16 %v350
        %v669 = vunpack.c.l.b16 %v351
        %v670 = vunpack.c.h.b16 %v351
        %v671 = vunpack.c.l.b16 %v352
        %v672 = vunpack.c.h.b16 %v352
        %v673 = vunpack.c.l.b16 %v353
        %v674 = vunpack.c.h.b16 %v353
        %v675 = vunpack.c.l.b16 %v354
        %v676 = vunpack.c.h.b16 %v354
        %v677 = vunpack.c.l.b16 %v355
        %v678 = vunpack.c.h.b16 %v355
        %v679 = vunpack.c.l.b16 %v356
        %v680 = vunpack.c.h.b16 %v356
        %v681 = vunpack.c.l.b16 %v357
        %v682 = vunpack.c.h.b16 %v357
        %v683 = vunpack.c.l.b16 %v358
        %v684 = vunpack.c.h.b16 %v358
        %v685 = vunpack.c.l.b16 %v359
        %v686 = vunpack.c.h.b16 %v359
        %v687 = vunpack.c.l.b16 %v360
        %v688 = vunpack.c.h.b16 %v360
        %v689 = vunpack.c.l.b16 %v361
        %v690 = vunpack.c.h.b16 %v361
        %v691 = vunpack.c.l.b16 %v362
        %v692 = vunpack.c.h.b16 %v362
        %v693 = vunpack.c.l.b16 %v363
        %v694 = vunpack.c.h.b16 %v363
        %v695 = vunpack.c.l.b16 %v364
        %v696 = vunpack.c.h.b16 %v364
        %v697 = vunpack.c.l.b16 %v365
        %v698 = vunpack.c.h.b16 %v365
        %v699 = vunpack.c.l.b16 %v366
        %v700 = vunpack.c.h.b16 %v366
        %v701 = vunpack.c.l.b16 %v367
        %v702 = vunpack.c.h.b16 %v367
        %v703 = vunpack.c.l.b16 %v368
        %v704 = vunpack.c.h.b16 %v368
        %v705 = vunpack.c.l.b16 %v369
        %v706 = vunpack.c.h.b16 %v369
        %v707 = vunpack.c.l.b16 %v370
        %v708 = vunpack.c.h.b16 %v370
        %v709 = vunpack.c.l.b16 %v371
        %v710 = vunpack.c.h.b16 %v371
        %v711 = vunpack.c.l.b16 %v372
        %v712 = vunpack.c.h.b16 %v372
        %v713 = vunpack.c.l.b16 %v373
        %v714 = vunpack.c.h.b16 %v373
        %v715 = vunpack.c.l.b16 %v374
        %v716 = vunpack.c.h.b16 %v374
        %v717 = vunpack.c.l.b16 %v375
        %v718 = vunpack.c.h.b16 %v375
        %v719 = vunpack.c.l.b16 %v376
        %v720 = vunpack.c.h.b16 %v376
        %v721 = vunpack.c.l.b16 %v377
        %v722 = vunpack.c.h.b16 %v377
        %v723 = vunpack.c.l.b16 %v378
        %v724 = vunpack.c.h.b16 %v378
        %v725 = vunpack.c.l.b16 %v379
        %v726 = vunpack.c.h.b16 %v379
        %v727 = vunpack.c.l.b16 %v380
        %v728 = vunpack.c.h.b16 %v380
        %v729 = vunpack.c.l.b16 %v381
        %v730 = vunpack.c.h.b16 %v381
        %v731 = vunpack.c.l.b16 %v382
        %v732 = vunpack.c.h.b16 %v382
        %v733 = vunpack.c.l.b16 %v383
        %v734 = vunpack.c.h.b16 %v383
        %v735 = vunpack.c.l.b16 %v384
        %v736 = vunpack.c.h.b16 %v384
        %v737 = vunpack.c.l.b16 %v385
        %v738 = vunpack.c.h.b16 %v385
        %v739 = vunpack.c.l.b16 %v386
        %v740 = vunpack.c.h.b16 %v386
        %v741 = vunpack.c.l.b16 %v387
        %v742 = vunpack.c.h.b16 %v387
        %v743 = vunpack.c.l.b16 %v388
        %v744 = vunpack.c.h.b16 %v388
        %v745 = vunpack.c.l.b16 %v389
        %v746 = vunpack.c.h.b16 %v389
        %v747 = vunpack.c.l.b16 %v390
        %v748 = vunpack.c.h.b16 %v390
        %v749 = vunpack.c.l.b16 %v391
        %v750 = vunpack.c.h.b16 %v391
        %v751 = vunpack.c.l.b16 %v392
        %v752 = vunpack.c.h.b16 %v392
        %v753 = vunpack.c.l.b16 %v393
        %v754 = vunpack.c.h.b16 %v393
        %v755 = vunpack.c.l.b16 %v394
        %v756 = vunpack.c.h.b16 %v394
        %v757 = vunpack.c.l.b16 %v395
        %v758 = vunpack.c.h.b16 %v395
        %v759 = vunpack.c.l.b16 %v396
        %v760 = vunpack.c.h.b16 %v396
        %v761 = vunpack.c.l.b16 %v397
        %v762 = vunpack.c.h.b16 %v397
        %v763 = vunpack.c.l.b16 %v398
        %v764 = vunpack.c.h.b16 %v398
        %v765 = vunpack.c.l.b16 %v399
        %v766 = vunpack.c.h.b16 %v399
        %v767 = vunpack.c.l.b16 %v400
        %v768 = vunpack.c.h.b16 %v400
        %v769 = vunpack.c.l.b16 %v401
        %v770 = vunpack.c.h.b16 %v401
        %v771 = vunpack.c.l.b16 %v402
        %v772 = vunpack.c.h.b16 %v402
        %v773 = vunpack.c.l.b16 %v403
        %v774 = vunpack.c.h.b16 %v403
        %v775 = vunpack.c.l.b16 %v404
        %v776 = vunpack.c.h.b16 %v404
        %v777 = vunpack.c.l.b16 %v405
        %v778 = vunpack.c.h.b16 %v405
        %v779 = vunpack.c.l.b16 %v406
        %v780 = vunpack.c.h.b16 %v406
        %v781 = vunpack.c.l.b16 %v407
        %v782 = vunpack.c.h.b16 %v407
        %v783 = vunpack.c.l.b16 %v408
        %v784 = vunpack.c.h.b16 %v408
        %v785 = vunpack.c.l.b16 %v409
        %v786 = vunpack.c.h.b16 %v409
        %v787 = vunpack.c.l.b16 %v410
        %v788 = vunpack.c.h.b16 %v410
        %v789 = vunpack.c.l.b16 %v411
        %v790 = vunpack.c.h.b16 %v411
        %v791 = vunpack.c.l.b16 %v412
        %v792 = vunpack.c.h.b16 %v412
        %v793 = vunpack.c.l.b16 %v413
        %v794 = vunpack.c.h.b16 %v413
        %v795 = vunpack.c.l.b16 %v414
        %v796 = vunpack.c.h.b16 %v414
        %v797 = vunpack.c.l.b16 %v415
        %v798 = vunpack.c.h.b16 %v415
        %v799 = vunpack.c.l.b16 %v416
        %v800 = vunpack.c.h.b16 %v416
        %v801 = vunpack.c.l.b16 %v417
        %v802 = vunpack.c.h.b16 %v417
        %v803 = vunpack.c.l.b16 %v418
        %v804 = vunpack.c.h.b16 %v418
        %v805 = vunpack.c.l.b16 %v419
        %v806 = vunpack.c.h.b16 %v419
        %v807 = vunpack.c.l.b16 %v420
        %v808 = vunpack.c.h.b16 %v420
        %v809 = vunpack.c.l.b16 %v421
        %v810 = vunpack.c.h.b16 %v421
        %v811 = vunpack.c.l.b16 %v422
        %v812 = vunpack.c.h.b16 %v422
        %v813 = vunpack.c.l.b16 %v423
        %v814 = vunpack.c.h.b16 %v423
        %v815 = vunpack.c.l.b16 %v424
        %v816 = vunpack.c.h.b16 %v424
        %v817 = vunpack.c.l.b16 %v425
        %v818 = vunpack.c.h.b16 %v425
        %v819 = vunpack.c.l.b16 %v426
        %v820 = vunpack.c.h.b16 %v426
        %v821 = vunpack.c.l.b16 %v427
        %v822 = vunpack.c.h.b16 %v427
        %v823 = vunpack.c.l.b16 %v428
        %v824 = vunpack.c.h.b16 %v428
        %v825 = vunpack.c.l.b16 %v429
        %v826 = vunpack.c.h.b16 %v429
        %v827 = vunpack.c.l.b16 %v430
        %v828 = vunpack.c.h.b16 %v430
        %v829 = vunpack.c.l.b16 %v431
        %v830 = vunpack.c.h.b16 %v431
        %v831 = vunpack.c.l.b16 %v432
        %v832 = vunpack.c.h.b16 %v432
        %v833 = vunpack.c.l.b16 %v433
        %v834 = vunpack.c.h.b16 %v433
        %v835 = vunpack.c.l.b16 %v434
        %v836 = vunpack.c.h.b16 %v434
        %v837 = vunpack.c.l.b16 %v435
        %v838 = vunpack.c.h.b16 %v435
        %v839 = vunpack.c.l.b16 %v436
        %v840 = vunpack.c.h.b16 %v436
        %v841 = vunpack.c.l.b16 %v437
        %v842 = vunpack.c.h.b16 %v437
        %v843 = vunpack.c.l.b16 %v438
        %v844 = vunpack.c.h.b16 %v438
        %v845 = vunpack.c.l.b16 %v439
        %v846 = vunpack.c.h.b16 %v439
        %v847 = vunpack.c.l.b16 %v440
        %v848 = vunpack.c.h.b16 %v440
        %v849 = vunpack.c.l.b16 %v441
        %v850 = vunpack.c.h.b16 %v441
        %v851 = vunpack.c.l.b16 %v442
        %v852 = vunpack.c.h.b16 %v442
        %v853 = vunpack.c.l.b16 %v443
        %v854 = vunpack.c.h.b16 %v443
        %v855 = vunpack.c.l.b16 %v444
        %v856 = vunpack.c.h.b16 %v444
        %v857 = vunpack.c.l.b16 %v445
        %v858 = vunpack.c.h.b16 %v445
        %v859 = vunpack.c.l.b16 %v446
        %v860 = vunpack.c.h.b16 %v446
        %v861 = vunpack.c.l.b16 %v447
        %v862 = vunpack.c.h.b16 %v447
        %v863 = vunpack.c.l.b16 %v448
        %v864 = vunpack.c.h.b16 %v448
        %v865 = vunpack.c.l.b16 %v449
        %v866 = vunpack.c.h.b16 %v449
        %v867 = vunpack.c.l.b16 %v450
        %v868 = vunpack.c.h.b16 %v450
        %v869 = vunpack.c.l.b16 %v451
        %v870 = vunpack.c.h.b16 %v451
        %v871 = vunpack.c.l.b16 %v452
        %v872 = vunpack.c.h.b16 %v452
        %v873 = vunpack.c.l.b16 %v453
        %v874 = vunpack.c.h.b16 %v453
        %v875 = vunpack.c.l.b16 %v454
        %v876 = vunpack.c.h.b16 %v454
        %v877 = vunpack.c.l.b16 %v455
        %v878 = vunpack.c.h.b16 %v455
        %v879 = vunpack.c.l.b16 %v456
        %v880 = vunpack.c.h.b16 %v456
        %v881 = vunpack.c.l.b16 %v457
        %v882 = vunpack.c.h.b16 %v457
        %v883 = vunpack.c.l.b16 %v458
        %v884 = vunpack.c.h.b16 %v458
        %v885 = vpack.c.b16 %v637, %v629
        %v886 = vpack.c.b16 %v638, %v630
        %v887 = vpack.c.b16 %v639, %v631
        %v888 = vpack.c.b16 %v640, %v632
        %v889 = vpack.c.b16 %v641, %v633
        %v890 = vpack.c.b16 %v642, %v634
        %v891 = vpack.c.b16 %v643, %v635
        %v892 = vpack.c.b16 %v644, %v636
        %v893 = vpack.c.b16 %v653, %v645
        %v894 = vpack.c.b16 %v654, %v646
        %v895 = vpack.c.b16 %v655, %v647
        %v896 = vpack.c.b16 %v656, %v648
        %v897 = vpack.c.b16 %v657, %v649
        %v898 = vpack.c.b16 %v658, %v650
        %v899 = vpack.c.b16 %v659, %v651
        %v900 = vpack.c.b16 %v660, %v652
        %v901 = vpack.c.b16 %v669, %v661
        %v902 = vpack.c.b16 %v670, %v662
        %v903 = vpack.c.b16 %v671, %v663
        %v904 = vpack.c.b16 %v672, %v664
        %v905 = vpack.c.b16 %v673, %v665
        %v906 = vpack.c.b16 %v674, %v666
        %v907 = vpack.c.b16 %v675, %v667
        %v908 = vpack.c.b16 %v676, %v668
        %v909 = vpack.c.b16 %v685, %v677
        %v910 = vpack.c.b16 %v686, %v678
        %v911 = vpack.c.b16 %v687, %v679
        %v912 = vpack.c.b16 %v688, %v680
        %v913 = vpack.c.b16 %v689, %v681
        %v914 = vpack.c.b16 %v690, %v682
        %v915 = vpack.c.b16 %v691, %v683
        %v916 = vpack.c.b16 %v692, %v684
        %v917 = vpack.c.b16 %v701, %v693
        %v918 = vpack.c.b16 %v702, %v694
        %v919 = vpack.c.b16 %v703, %v695
        %v920 = vpack.c.b16 %v704, %v696
        %v921 = vpack.c.b16 %v705, %v697
        %v922 = vpack.c.b16 %v706, %v698
        %v923 = vpack.c.b16 %v707, %v699
        %v924 = vpack.c.b16 %v708, %v700
        %v925 = vpack.c.b16 %v717, %v709
        %v926 = vpack.c.b16 %v718, %v710
        %v927 = vpack.c.b16 %v719, %v711
        %v928 = vpack.c.b16 %v720, %v712
        %v929 = vpack.c.b16 %v721, %v713
        %v930 = vpack.c.b16 %v722, %v714
        %v931 = vpack.c.b16 %v723, %v715
        %v932 = vpack.c.b16 %v724, %v716
        %v933 = vpack.c.b16 %v733, %v725
        %v934 = vpack.c.b16 %v734, %v726
        %v935 = vpack.c.b16 %v735, %v727
        %v936 = vpack.c.b16 %v736, %v728
        %v937 = vpack.c.b16 %v737, %v729
        %v938 = vpack.c.b16 %v738, %v730
        %v939 = vpack.c.b16 %v739, %v731
        %v940 = vpack.c.b16 %v740, %v732
        %v941 = vpack.c.b16 %v749, %v741
        %v942 = vpack.c.b16 %v750, %v742
        %v943 = vpack.c.b16 %v751, %v743
        %v944 = vpack.c.b16 %v752, %v744
        %v945 = vpack.c.b16 %v753, %v745
        %v946 = vpack.c.b16 %v754, %v746
        %v947 = vpack.c.b16 %v755, %v747
        %v948 = vpack.c.b16 %v756, %v748
        %v949 = vpack.c.b16 %v765, %v757
        %v950 = vpack.c.b16 %v766, %v758
        %v951 = vpack.c.b16 %v767, %v759
        %v952 = vpack.c.b16 %v768, %v760
        %v953 = vpack.c.b16 %v769, %v761
        %v954 = vpack.c.b16 %v770, %v762
        %v955 = vpack.c.b16 %v771, %v763
        %v956 = vpack.c.b16 %v772, %v764
        %v957 = vpack.c.b16 %v781, %v773
        %v958 = vpack.c.b16 %v782, %v774
        %v959 = vpack.c.b16 %v783, %v775
        %v960 = vpack.c.b16 %v784, %v776
        %v961 = vpack.c.b16 %v785, %v777
        %v962 = vpack.c.b16 %v786, %v778
        %v963 = vpack.c.b16 %v787, %v779
        %v964 = vpack.c.b16 %v788, %v780
        %v965 = vpack.c.b16 %v797, %v789
        %v966 = vpack.c.b16 %v798, %v790
        %v967 = vpack.c.b16 %v799, %v791
        %v968 = vpack.c.b16 %v800, %v792
        %v969 = vpack.c.b16 %v801, %v793
        %v970 = vpack.c.b16 %v802, %v794
        %v971 = vpack.c.b16 %v803, %v795
        %v972 = vpack.c.b16 %v804, %v796
        %v973 = vpack.c.b16 %v813, %v805
        %v974 = vpack.c.b16 %v814, %v806
        %v975 = vpack.c.b16 %v815, %v807
        %v976 = vpack.c.b16 %v816, %v808
        %v977 = vpack.c.b16 %v817, %v809
        %v978 = vpack.c.b16 %v818, %v810
        %v979 = vpack.c.b16 %v819, %v811
        %v980 = vpack.c.b16 %v820, %v812
        %v981 = vpack.c.b16 %v829, %v821
        %v982 = vpack.c.b16 %v830, %v822
        %v983 = vpack.c.b16 %v831, %v823
        %v984 = vpack.c.b16 %v832, %v824
        %v985 = vpack.c.b16 %v833, %v825
        %v986 = vpack.c.b16 %v834, %v826
        %v987 = vpack.c.b16 %v835, %v827
        %v988 = vpack.c.b16 %v836, %v828
        %v989 = vpack.c.b16 %v845, %v837
        %v990 = vpack.c.b16 %v846, %v838
        %v991 = vpack.c.b16 %v847, %v839
        %v992 = vpack.c.b16 %v848, %v840
        %v993 = vpack.c.b16 %v849, %v841
        %v994 = vpack.c.b16 %v850, %v842
        %v995 = vpack.c.b16 %v851, %v843
        %v996 = vpack.c.b16 %v852, %v844
        %v997 = vpack.c.b16 %v861, %v853
        %v998 = vpack.c.b16 %v862, %v854
        %v999 = vpack.c.b16 %v863, %v855
        %v1000 = vpack.c.b16 %v864, %v856
        %v1001 = vpack.c.b16 %v865, %v857
        %v1002 = vpack.c.b16 %v866, %v858
        %v1003 = vpack.c.b16 %v867, %v859
        %v1004 = vpack.c.b16 %v868, %v860
        %v1005 = vpack.c.b16 %v877, %v869
        %v1006 = vpack.c.b16 %v878, %v870
        %v1007 = vpack.c.b16 %v879, %v871
        %v1008 = vpack.c.b16 %v880, %v872
        %v1009 = vpack.c.b16 %v881, %v873
        %v1010 = vpack.c.b16 %v882, %v874
        %v1011 = vpack.c.b16 %v883, %v875
        %v1012 = vpack.c.b16 %v884, %v876
        %1141 = vmatprep.subr.bf16.mxu0 %v886
        %1142 = vmatpush1.bf16.msra.mxu0 %v885
        %1143 = vmatprep.subr.bf16.mxu0 %v894
        %1144 = vmatpush1.bf16.msra.mxu0 %v893
        %1145 = vmatprep.subr.bf16.mxu0 %v902
        %1146 = vmatpush1.bf16.msra.mxu0 %v901
        %1147 = vmatprep.subr.bf16.mxu0 %v910
        %1148 = vmatpush1.bf16.msra.mxu0 %v909
        %1149 = vmatprep.subr.bf16.mxu0 %v918
        %1150 = vmatpush1.bf16.msra.mxu0 %v917
        %1151 = vmatprep.subr.bf16.mxu0 %v926
        %1152 = vmatpush1.bf16.msra.mxu0 %v925
        %1153 = vmatprep.subr.bf16.mxu0 %v934
        %1154 = vmatpush1.bf16.msra.mxu0 %v933
        %1155 = vmatprep.subr.bf16.mxu0 %v942
        %1156 = vmatpush1.bf16.msra.mxu0 %v941
        %1157 = vmatprep.subr.bf16.mxu0 %v950
        %1158 = vmatpush1.bf16.msra.mxu0 %v949
        %1159 = vmatprep.subr.bf16.mxu0 %v958
        %1160 = vmatpush1.bf16.msra.mxu0 %v957
        %1161 = vmatprep.subr.bf16.mxu0 %v966
        %1162 = vmatpush1.bf16.msra.mxu0 %v965
        %1163 = vmatprep.subr.bf16.mxu0 %v974
        %1164 = vmatpush1.bf16.msra.mxu0 %v973
        %1165 = vmatprep.subr.bf16.mxu0 %v982
        %1166 = vmatpush1.bf16.msra.mxu0 %v981
        %1167 = vmatprep.subr.bf16.mxu0 %v990
        %1168 = vmatpush1.bf16.msra.mxu0 %v989
        %1169 = vmatprep.subr.bf16.mxu0 %v998
        %1170 = vmatpush1.bf16.msra.mxu0 %v997
        %1171 = vmatprep.subr.bf16.mxu0 %v1006
        %1172 = vmatpush1.bf16.msra.mxu0 %v1005
        %1173 = vmatprep.mubr.bf16.mxu0 %v316
        %1174 = vmatmul.mubr.bf16.gmra.mrb[0].mxu0 %v315
        %v1175 = vpop.f32.mrb[0].mxu0
        %v1176 = vadd.f32 %v464, %v1175
        %v1177 = vpop.f32.mrb[0].mxu0
        %v1178 = vadd.f32 %v468, %v1177
        %v1179 = vpop.f32.mrb[0].mxu0
        %v1180 = vadd.f32 %v464, %v1179
        %v1181 = vpop.f32.mrb[0].mxu0
        %v1182 = vadd.f32 %v468, %v1181
        %1183 = vmatprep.mubr.bf16.mxu0 %v318
        %1184 = vmatmul.mubr.bf16.gmra.mrb[0].mxu0 %v317
        %v1185 = vpop.f32.mrb[0].mxu0
        %v1186 = vadd.f32 %v464, %v1185
        %v1187 = vpop.f32.mrb[0].mxu0
        %v1188 = vadd.f32 %v468, %v1187
        %v1189 = vpop.f32.mrb[0].mxu0
        %v1190 = vadd.f32 %v464, %v1189
        %v1191 = vpop.f32.mrb[0].mxu0
        %v1192 = vadd.f32 %v468, %v1191
        %1193 = vmatprep.mubr.bf16.mxu0 %v320
        %1194 = vmatmul.mubr.bf16.gmra.mrb[0].mxu0 %v319
        %v1195 = vpop.f32.mrb[0].mxu0
        %v1196 = vadd.f32 %v464, %v1195
        %v1197 = vpop.f32.mrb[0].mxu0
        %v1198 = vadd.f32 %v468, %v1197
        %v1199 = vpop.f32.mrb[0].mxu0
        %v1200 = vadd.f32 %v464, %v1199
        %v1201 = vpop.f32.mrb[0].mxu0
        %v1202 = vadd.f32 %v468, %v1201
        %1203 = vmatprep.mubr.bf16.mxu0 %v322
        %1204 = vmatmul.mubr.bf16.gmra.mrb[0].mxu0 %v321
        %v1205 = vpop.f32.mrb[0].mxu0
        %v1206 = vadd.f32 %v464, %v1205
        %v1207 = vpop.f32.mrb[0].mxu0
        %v1208 = vadd.f32 %v468, %v1207
        %v1209 = vpop.f32.mrb[0].mxu0
        %v1210 = vadd.f32 %v464, %v1209
        %v1211 = vpop.f32.mrb[0].mxu0
        %v1212 = vadd.f32 %v468, %v1211
        %1213 = vmatprep.mubr.bf16.mxu0 %v324
        %1214 = vmatmul.mubr.bf16.gmra.mrb[0].mxu0 %v323
        %v1215 = vpop.f32.mrb[0].mxu0
        %v1216 = vadd.f32 %v464, %v1215
        %v1217 = vpop.f32.mrb[0].mxu0
        %v1218 = vadd.f32 %v468, %v1217
        %v1219 = vpop.f32.mrb[0].mxu0
        %v1220 = vadd.f32 %v464, %v1219
        %v1221 = vpop.f32.mrb[0].mxu0
        %v1222 = vadd.f32 %v468, %v1221
        %1223 = vmatprep.mubr.bf16.mxu0 %v326
        %1224 = vmatmul.mubr.bf16.gmra.mrb[0].mxu0 %v325
        %v1225 = vpop.f32.mrb[0].mxu0
        %v1226 = vadd.f32 %v464, %v1225
        %v1227 = vpop.f32.mrb[0].mxu0
        %v1228 = vadd.f32 %v468, %v1227
        %v1229 = vpop.f32.mrb[0].mxu0
        %v1230 = vadd.f32 %v464, %v1229
        %v1231 = vpop.f32.mrb[0].mxu0
        %v1232 = vadd.f32 %v468, %v1231
        %1233 = vmatprep.mubr.bf16.mxu0 %v328
        %1234 = vmatmul.mubr.bf16.gmra.mrb[0].mxu0 %v327
        %v1235 = vpop.f32.mrb[0].mxu0
        %v1236 = vadd.f32 %v464, %v1235
        %v1237 = vpop.f32.mrb[0].mxu0
        %v1238 = vadd.f32 %v468, %v1237
        %v1239 = vpop.f32.mrb[0].mxu0
        %v1240 = vadd.f32 %v464, %v1239
        %v1241 = vpop.f32.mrb[0].mxu0
        %v1242 = vadd.f32 %v468, %v1241
        %1243 = vmatprep.mubr.bf16.mxu0 %v330
        %1244 = vmatmul.mubr.bf16.gmra.mrb[0].mxu0 %v329
        %v1245 = vpop.f32.mrb[0].mxu0
        %v1246 = vadd.f32 %v464, %v1245
        %v1247 = vpop.f32.mrb[0].mxu0
        %v1248 = vadd.f32 %v468, %v1247
        %v1249 = vpop.f32.mrb[0].mxu0
        %v1250 = vadd.f32 %v464, %v1249
        %v1251 = vpop.f32.mrb[0].mxu0
        %v1252 = vadd.f32 %v468, %v1251
        %1253 = vdwg.mxu0
        %1254 = vmatprep.subr.bf16.mxu0 %v888
        %1255 = vmatpush1.bf16.msra.mxu0 %v887
        %1256 = vmatprep.subr.bf16.mxu0 %v896
        %1257 = vmatpush1.bf16.msra.mxu0 %v895
        %1258 = vmatprep.subr.bf16.mxu0 %v904
        %1259 = vmatpush1.bf16.msra.mxu0 %v903
        %1260 = vmatprep.subr.bf16.mxu0 %v912
        %1261 = vmatpush1.bf16.msra.mxu0 %v911
        %1262 = vmatprep.subr.bf16.mxu0 %v920
        %1263 = vmatpush1.bf16.msra.mxu0 %v919
        %1264 = vmatprep.subr.bf16.mxu0 %v928
        %1265 = vmatpush1.bf16.msra.mxu0 %v927
        %1266 = vmatprep.subr.bf16.mxu0 %v936
        %1267 = vmatpush1.bf16.msra.mxu0 %v935
        %1268 = vmatprep.subr.bf16.mxu0 %v944
        %1269 = vmatpush1.bf16.msra.mxu0 %v943
        %1270 = vmatprep.subr.bf16.mxu0 %v952
        %1271 = vmatpush1.bf16.msra.mxu0 %v951
        %1272 = vmatprep.subr.bf16.mxu0 %v960
        %1273 = vmatpush1.bf16.msra.mxu0 %v959
        %1274 = vmatprep.subr.bf16.mxu0 %v968
        %1275 = vmatpush1.bf16.msra.mxu0 %v967
        %1276 = vmatprep.subr.bf16.mxu0 %v976
        %1277 = vmatpush1.bf16.msra.mxu0 %v975
        %1278 = vmatprep.subr.bf16.mxu0 %v984
        %1279 = vmatpush1.bf16.msra.mxu0 %v983
        %1280 = vmatprep.subr.bf16.mxu0 %v992
        %1281 = vmatpush1.bf16.msra.mxu0 %v991
        %1282 = vmatprep.subr.bf16.mxu0 %v1000
        %1283 = vmatpush1.bf16.msra.mxu0 %v999
        %1284 = vmatprep.subr.bf16.mxu0 %v1008
        %1285 = vmatpush1.bf16.msra.mxu0 %v1007
        %1286 = vmatprep.mubr.bf16.mxu0 %v316
        %1287 = vmatmul.mubr.bf16.gmra.mrb[0].mxu0 %v315
        %v1288 = vpop.f32.mrb[0].mxu0
        %v1289 = vadd.f32 %v472, %v1288
        %v1290 = vpop.f32.mrb[0].mxu0
        %v1291 = vadd.f32 %v476, %v1290
        %v1292 = vpop.f32.mrb[0].mxu0
        %v1293 = vadd.f32 %v472, %v1292
        %v1294 = vpop.f32.mrb[0].mxu0
        %v1295 = vadd.f32 %v476, %v1294
        %1296 = vmatprep.mubr.bf16.mxu0 %v318
        %1297 = vmatmul.mubr.bf16.gmra.mrb[0].mxu0 %v317
        %v1298 = vpop.f32.mrb[0].mxu0
        %v1299 = vadd.f32 %v472, %v1298
        %v1300 = vpop.f32.mrb[0].mxu0
        %v1301 = vadd.f32 %v476, %v1300
        %v1302 = vpop.f32.mrb[0].mxu0
        %v1303 = vadd.f32 %v472, %v1302
        %v1304 = vpop.f32.mrb[0].mxu0
        %v1305 = vadd.f32 %v476, %v1304
        %1306 = vmatprep.mubr.bf16.mxu0 %v320
        %1307 = vmatmul.mubr.bf16.gmra.mrb[0].mxu0 %v319
        %v1308 = vpop.f32.mrb[0].mxu0
        %v1309 = vadd.f32 %v472, %v1308
        %v1310 = vpop.f32.mrb[0].mxu0
        %v1311 = vadd.f32 %v476, %v1310
        %v1312 = vpop.f32.mrb[0].mxu0
        %v1313 = vadd.f32 %v472, %v1312
        %v1314 = vpop.f32.mrb[0].mxu0
        %v1315 = vadd.f32 %v476, %v1314
        %1316 = vmatprep.mubr.bf16.mxu0 %v322
        %1317 = vmatmul.mubr.bf16.gmra.mrb[0].mxu0 %v321
        %v1318 = vpop.f32.mrb[0].mxu0
        %v1319 = vadd.f32 %v472, %v1318
        %v1320 = vpop.f32.mrb[0].mxu0
        %v1321 = vadd.f32 %v476, %v1320
        %v1322 = vpop.f32.mrb[0].mxu0
        %v1323 = vadd.f32 %v472, %v1322
        %v1324 = vpop.f32.mrb[0].mxu0
        %v1325 = vadd.f32 %v476, %v1324
        %1326 = vmatprep.mubr.bf16.mxu0 %v324
        %1327 = vmatmul.mubr.bf16.gmra.mrb[0].mxu0 %v323
        %v1328 = vpop.f32.mrb[0].mxu0
        %v1329 = vadd.f32 %v472, %v1328
        %v1330 = vpop.f32.mrb[0].mxu0
        %v1331 = vadd.f32 %v476, %v1330
        %v1332 = vpop.f32.mrb[0].mxu0
        %v1333 = vadd.f32 %v472, %v1332
        %v1334 = vpop.f32.mrb[0].mxu0
        %v1335 = vadd.f32 %v476, %v1334
        %1336 = vmatprep.mubr.bf16.mxu0 %v326
        %1337 = vmatmul.mubr.bf16.gmra.mrb[0].mxu0 %v325
        %v1338 = vpop.f32.mrb[0].mxu0
        %v1339 = vadd.f32 %v472, %v1338
        %v1340 = vpop.f32.mrb[0].mxu0
        %v1341 = vadd.f32 %v476, %v1340
        %v1342 = vpop.f32.mrb[0].mxu0
        %v1343 = vadd.f32 %v472, %v1342
        %v1344 = vpop.f32.mrb[0].mxu0
        %v1345 = vadd.f32 %v476, %v1344
        %1346 = vmatprep.mubr.bf16.mxu0 %v328
        %1347 = vmatmul.mubr.bf16.gmra.mrb[0].mxu0 %v327
        %v1348 = vpop.f32.mrb[0].mxu0
        %v1349 = vadd.f32 %v472, %v1348
        %v1350 = vpop.f32.mrb[0].mxu0
        %v1351 = vadd.f32 %v476, %v1350
        %v1352 = vpop.f32.mrb[0].mxu0
        %v1353 = vadd.f32 %v472, %v1352
        %v1354 = vpop.f32.mrb[0].mxu0
        %v1355 = vadd.f32 %v476, %v1354
        %1356 = vmatprep.mubr.bf16.mxu0 %v330
        %1357 = vmatmul.mubr.bf16.gmra.mrb[0].mxu0 %v329
        %v1358 = vpop.f32.mrb[0].mxu0
        %v1359 = vadd.f32 %v472, %v1358
        %v1360 = vpop.f32.mrb[0].mxu0
        %v1361 = vadd.f32 %v476, %v1360
        %v1362 = vpop.f32.mrb[0].mxu0
        %v1363 = vadd.f32 %v472, %v1362
        %v1364 = vpop.f32.mrb[0].mxu0
        %v1365 = vadd.f32 %v476, %v1364
        %1366 = vdwg.mxu0
        %1367 = vmatprep.subr.bf16.mxu0 %v890
        %1368 = vmatpush1.bf16.msra.mxu0 %v889
        %1369 = vmatprep.subr.bf16.mxu0 %v898
        %1370 = vmatpush1.bf16.msra.mxu0 %v897
        %1371 = vmatprep.subr.bf16.mxu0 %v906
        %1372 = vmatpush1.bf16.msra.mxu0 %v905
        %1373 = vmatprep.subr.bf16.mxu0 %v914
        %1374 = vmatpush1.bf16.msra.mxu0 %v913
        %1375 = vmatprep.subr.bf16.mxu0 %v922
        %1376 = vmatpush1.bf16.msra.mxu0 %v921
        %1377 = vmatprep.subr.bf16.mxu0 %v930
        %1378 = vmatpush1.bf16.msra.mxu0 %v929
        %1379 = vmatprep.subr.bf16.mxu0 %v938
        %1380 = vmatpush1.bf16.msra.mxu0 %v937
        %1381 = vmatprep.subr.bf16.mxu0 %v946
        %1382 = vmatpush1.bf16.msra.mxu0 %v945
        %1383 = vmatprep.subr.bf16.mxu0 %v954
        %1384 = vmatpush1.bf16.msra.mxu0 %v953
        %1385 = vmatprep.subr.bf16.mxu0 %v962
        %1386 = vmatpush1.bf16.msra.mxu0 %v961
        %1387 = vmatprep.subr.bf16.mxu0 %v970
        %1388 = vmatpush1.bf16.msra.mxu0 %v969
        %1389 = vmatprep.subr.bf16.mxu0 %v978
        %1390 = vmatpush1.bf16.msra.mxu0 %v977
        %1391 = vmatprep.subr.bf16.mxu0 %v986
        %1392 = vmatpush1.bf16.msra.mxu0 %v985
        %1393 = vmatprep.subr.bf16.mxu0 %v994
        %1394 = vmatpush1.bf16.msra.mxu0 %v993
        %1395 = vmatprep.subr.bf16.mxu0 %v1002
        %1396 = vmatpush1.bf16.msra.mxu0 %v1001
        %1397 = vmatprep.subr.bf16.mxu0 %v1010
        %1398 = vmatpush1.bf16.msra.mxu0 %v1009
        %1399 = vmatprep.mubr.bf16.mxu0 %v316
        %1400 = vmatmul.mubr.bf16.gmra.mrb[0].mxu0 %v315
        %v1401 = vpop.f32.mrb[0].mxu0
        %v1402 = vadd.f32 %v480, %v1401
        %v1403 = vpop.f32.mrb[0].mxu0
        %v1404 = vadd.f32 %v484, %v1403
        %v1405 = vpop.f32.mrb[0].mxu0
        %v1406 = vadd.f32 %v480, %v1405
        %v1407 = vpop.f32.mrb[0].mxu0
        %v1408 = vadd.f32 %v484, %v1407
        %1409 = vmatprep.mubr.bf16.mxu0 %v318
        %1410 = vmatmul.mubr.bf16.gmra.mrb[0].mxu0 %v317
        %v1411 = vpop.f32.mrb[0].mxu0
        %v1412 = vadd.f32 %v480, %v1411
        %v1413 = vpop.f32.mrb[0].mxu0
        %v1414 = vadd.f32 %v484, %v1413
        %v1415 = vpop.f32.mrb[0].mxu0
        %v1416 = vadd.f32 %v480, %v1415
        %v1417 = vpop.f32.mrb[0].mxu0
        %v1418 = vadd.f32 %v484, %v1417
        %1419 = vmatprep.mubr.bf16.mxu0 %v320
        %1420 = vmatmul.mubr.bf16.gmra.mrb[0].mxu0 %v319
        %v1421 = vpop.f32.mrb[0].mxu0
        %v1422 = vadd.f32 %v480, %v1421
        %v1423 = vpop.f32.mrb[0].mxu0
        %v1424 = vadd.f32 %v484, %v1423
        %v1425 = vpop.f32.mrb[0].mxu0
        %v1426 = vadd.f32 %v480, %v1425
        %v1427 = vpop.f32.mrb[0].mxu0
        %v1428 = vadd.f32 %v484, %v1427
        %1429 = vmatprep.mubr.bf16.mxu0 %v322
        %1430 = vmatmul.mubr.bf16.gmra.mrb[0].mxu0 %v321
        %v1431 = vpop.f32.mrb[0].mxu0
        %v1432 = vadd.f32 %v480, %v1431
        %v1433 = vpop.f32.mrb[0].mxu0
        %v1434 = vadd.f32 %v484, %v1433
        %v1435 = vpop.f32.mrb[0].mxu0
        %v1436 = vadd.f32 %v480, %v1435
        %v1437 = vpop.f32.mrb[0].mxu0
        %v1438 = vadd.f32 %v484, %v1437
        %1439 = vmatprep.mubr.bf16.mxu0 %v324
        %1440 = vmatmul.mubr.bf16.gmra.mrb[0].mxu0 %v323
        %v1441 = vpop.f32.mrb[0].mxu0
        %v1442 = vadd.f32 %v480, %v1441
        %v1443 = vpop.f32.mrb[0].mxu0
        %v1444 = vadd.f32 %v484, %v1443
        %v1445 = vpop.f32.mrb[0].mxu0
        %v1446 = vadd.f32 %v480, %v1445
        %v1447 = vpop.f32.mrb[0].mxu0
        %v1448 = vadd.f32 %v484, %v1447
        %1449 = vmatprep.mubr.bf16.mxu0 %v326
        %1450 = vmatmul.mubr.bf16.gmra.mrb[0].mxu0 %v325
        %v1451 = vpop.f32.mrb[0].mxu0
        %v1452 = vadd.f32 %v480, %v1451
        %v1453 = vpop.f32.mrb[0].mxu0
        %v1454 = vadd.f32 %v484, %v1453
        %v1455 = vpop.f32.mrb[0].mxu0
        %v1456 = vadd.f32 %v480, %v1455
        %v1457 = vpop.f32.mrb[0].mxu0
        %v1458 = vadd.f32 %v484, %v1457
        %1459 = vmatprep.mubr.bf16.mxu0 %v328
        %1460 = vmatmul.mubr.bf16.gmra.mrb[0].mxu0 %v327
        %v1461 = vpop.f32.mrb[0].mxu0
        %v1462 = vadd.f32 %v480, %v1461
        %v1463 = vpop.f32.mrb[0].mxu0
        %v1464 = vadd.f32 %v484, %v1463
        %v1465 = vpop.f32.mrb[0].mxu0
        %v1466 = vadd.f32 %v480, %v1465
        %v1467 = vpop.f32.mrb[0].mxu0
        %v1468 = vadd.f32 %v484, %v1467
        %1469 = vmatprep.mubr.bf16.mxu0 %v330
        %1470 = vmatmul.mubr.bf16.gmra.mrb[0].mxu0 %v329
        %v1471 = vpop.f32.mrb[0].mxu0
        %v1472 = vadd.f32 %v480, %v1471
        %v1473 = vpop.f32.mrb[0].mxu0
        %v1474 = vadd.f32 %v484, %v1473
        %v1475 = vpop.f32.mrb[0].mxu0
        %v1476 = vadd.f32 %v480, %v1475
        %v1477 = vpop.f32.mrb[0].mxu0
        %v1478 = vadd.f32 %v484, %v1477
        %1479 = vdwg.mxu0
        %1480 = vmatprep.subr.bf16.mxu0 %v892
        %1481 = vmatpush1.bf16.msra.mxu0 %v891
        %1482 = vmatprep.subr.bf16.mxu0 %v900
        %1483 = vmatpush1.bf16.msra.mxu0 %v899
        %1484 = vmatprep.subr.bf16.mxu0 %v908
        %1485 = vmatpush1.bf16.msra.mxu0 %v907
        %1486 = vmatprep.subr.bf16.mxu0 %v916
        %1487 = vmatpush1.bf16.msra.mxu0 %v915
        %1488 = vmatprep.subr.bf16.mxu0 %v924
        %1489 = vmatpush1.bf16.msra.mxu0 %v923
        %1490 = vmatprep.subr.bf16.mxu0 %v932
        %1491 = vmatpush1.bf16.msra.mxu0 %v931
        %1492 = vmatprep.subr.bf16.mxu0 %v940
        %1493 = vmatpush1.bf16.msra.mxu0 %v939
        %1494 = vmatprep.subr.bf16.mxu0 %v948
        %1495 = vmatpush1.bf16.msra.mxu0 %v947
        %1496 = vmatprep.subr.bf16.mxu0 %v956
        %1497 = vmatpush1.bf16.msra.mxu0 %v955
        %1498 = vmatprep.subr.bf16.mxu0 %v964
        %1499 = vmatpush1.bf16.msra.mxu0 %v963
        %1500 = vmatprep.subr.bf16.mxu0 %v972
        %1501 = vmatpush1.bf16.msra.mxu0 %v971
        %1502 = vmatprep.subr.bf16.mxu0 %v980
        %1503 = vmatpush1.bf16.msra.mxu0 %v979
        %1504 = vmatprep.subr.bf16.mxu0 %v988
        %1505 = vmatpush1.bf16.msra.mxu0 %v987
        %1506 = vmatprep.subr.bf16.mxu0 %v996
        %1507 = vmatpush1.bf16.msra.mxu0 %v995
        %1508 = vmatprep.subr.bf16.mxu0 %v1004
        %1509 = vmatpush1.bf16.msra.mxu0 %v1003
        %1510 = vmatprep.subr.bf16.mxu0 %v1012
        %1511 = vmatpush1.bf16.msra.mxu0 %v1011
        %1512 = vmatprep.mubr.bf16.mxu0 %v316
        %1513 = vmatmul.mubr.bf16.gmra.mrb[0].mxu0 %v315
        %v1514 = vpop.f32.mrb[0].mxu0
        %v1515 = vadd.f32 %v488, %v1514
        %v1516 = vpop.f32.mrb[0].mxu0
        %v1517 = vadd.f32 %v492, %v1516
        %v1518 = vpop.f32.mrb[0].mxu0
        %v1519 = vadd.f32 %v488, %v1518
        %v1520 = vpop.f32.mrb[0].mxu0
        %v1521 = vadd.f32 %v492, %v1520
        %1522 = vmatprep.mubr.bf16.mxu0 %v318
        %1523 = vmatmul.mubr.bf16.gmra.mrb[0].mxu0 %v317
        %v1524 = vpop.f32.mrb[0].mxu0
        %v1525 = vadd.f32 %v488, %v1524
        %v1526 = vpop.f32.mrb[0].mxu0
        %v1527 = vadd.f32 %v492, %v1526
        %v1528 = vpop.f32.mrb[0].mxu0
        %v1529 = vadd.f32 %v488, %v1528
        %v1530 = vpop.f32.mrb[0].mxu0
        %v1531 = vadd.f32 %v492, %v1530
        %1532 = vmatprep.mubr.bf16.mxu0 %v320
        %1533 = vmatmul.mubr.bf16.gmra.mrb[0].mxu0 %v319
        %v1534 = vpop.f32.mrb[0].mxu0
        %v1535 = vadd.f32 %v488, %v1534
        %v1536 = vpop.f32.mrb[0].mxu0
        %v1537 = vadd.f32 %v492, %v1536
        %v1538 = vpop.f32.mrb[0].mxu0
        %v1539 = vadd.f32 %v488, %v1538
        %v1540 = vpop.f32.mrb[0].mxu0
        %v1541 = vadd.f32 %v492, %v1540
        %1542 = vmatprep.mubr.bf16.mxu0 %v322
        %1543 = vmatmul.mubr.bf16.gmra.mrb[0].mxu0 %v321
        %v1544 = vpop.f32.mrb[0].mxu0
        %v1545 = vadd.f32 %v488, %v1544
        %v1546 = vpop.f32.mrb[0].mxu0
        %v1547 = vadd.f32 %v492, %v1546
        %v1548 = vpop.f32.mrb[0].mxu0
        %v1549 = vadd.f32 %v488, %v1548
        %v1550 = vpop.f32.mrb[0].mxu0
        %v1551 = vadd.f32 %v492, %v1550
        %1552 = vmatprep.mubr.bf16.mxu0 %v324
        %1553 = vmatmul.mubr.bf16.gmra.mrb[0].mxu0 %v323
        %v1554 = vpop.f32.mrb[0].mxu0
        %v1555 = vadd.f32 %v488, %v1554
        %v1556 = vpop.f32.mrb[0].mxu0
        %v1557 = vadd.f32 %v492, %v1556
        %v1558 = vpop.f32.mrb[0].mxu0
        %v1559 = vadd.f32 %v488, %v1558
        %v1560 = vpop.f32.mrb[0].mxu0
        %v1561 = vadd.f32 %v492, %v1560
        %1562 = vmatprep.mubr.bf16.mxu0 %v326
        %1563 = vmatmul.mubr.bf16.gmra.mrb[0].mxu0 %v325
        %v1564 = vpop.f32.mrb[0].mxu0
        %v1565 = vadd.f32 %v488, %v1564
        %v1566 = vpop.f32.mrb[0].mxu0
        %v1567 = vadd.f32 %v492, %v1566
        %v1568 = vpop.f32.mrb[0].mxu0
        %v1569 = vadd.f32 %v488, %v1568
        %v1570 = vpop.f32.mrb[0].mxu0
        %v1571 = vadd.f32 %v492, %v1570
        %1572 = vmatprep.mubr.bf16.mxu0 %v328
        %1573 = vmatmul.mubr.bf16.gmra.mrb[0].mxu0 %v327
        %v1574 = vpop.f32.mrb[0].mxu0
        %v1575 = vadd.f32 %v488, %v1574
        %v1576 = vpop.f32.mrb[0].mxu0
        %v1577 = vadd.f32 %v492, %v1576
        %v1578 = vpop.f32.mrb[0].mxu0
        %v1579 = vadd.f32 %v488, %v1578
        %v1580 = vpop.f32.mrb[0].mxu0
        %v1581 = vadd.f32 %v492, %v1580
        %1582 = vmatprep.mubr.bf16.mxu0 %v330
        %1583 = vmatmul.mubr.bf16.gmra.mrb[0].mxu0 %v329
        %v1584 = vpop.f32.mrb[0].mxu0
        %v1585 = vadd.f32 %v488, %v1584
        %v1586 = vpop.f32.mrb[0].mxu0
        %v1587 = vadd.f32 %v492, %v1586
        %v1588 = vpop.f32.mrb[0].mxu0
        %v1589 = vadd.f32 %v488, %v1588
        %v1590 = vpop.f32.mrb[0].mxu0
        %v1591 = vadd.f32 %v492, %v1590
        %1592 = vdwg.mxu0
        %v1593 = vmax.f32 %v1176, 0.0
        %v1594 = vmax.f32 %v1178, 0.0
        %v1595 = vmax.f32 %v1289, 0.0
        %v1596 = vmax.f32 %v1291, 0.0
        %v1597 = vmax.f32 %v1402, 0.0
        %v1598 = vmax.f32 %v1404, 0.0
        %v1599 = vmax.f32 %v1515, 0.0
        %v1600 = vmax.f32 %v1517, 0.0
        %v1601 = vmax.f32 %v1180, 0.0
        %v1602 = vmax.f32 %v1182, 0.0
        %v1603 = vmax.f32 %v1293, 0.0
        %v1604 = vmax.f32 %v1295, 0.0
        %v1605 = vmax.f32 %v1406, 0.0
        %v1606 = vmax.f32 %v1408, 0.0
        %v1607 = vmax.f32 %v1519, 0.0
        %v1608 = vmax.f32 %v1521, 0.0
        %v1609 = vmax.f32 %v1186, 0.0
        %v1610 = vmax.f32 %v1188, 0.0
        %v1611 = vmax.f32 %v1299, 0.0
        %v1612 = vmax.f32 %v1301, 0.0
        %v1613 = vmax.f32 %v1412, 0.0
        %v1614 = vmax.f32 %v1414, 0.0
        %v1615 = vmax.f32 %v1525, 0.0
        %v1616 = vmax.f32 %v1527, 0.0
        %v1617 = vmax.f32 %v1190, 0.0
        %v1618 = vmax.f32 %v1192, 0.0
        %v1619 = vmax.f32 %v1303, 0.0
        %v1620 = vmax.f32 %v1305, 0.0
        %v1621 = vmax.f32 %v1416, 0.0
        %v1622 = vmax.f32 %v1418, 0.0
        %v1623 = vmax.f32 %v1529, 0.0
        %v1624 = vmax.f32 %v1531, 0.0
        %v1625 = vmax.f32 %v1196, 0.0
        %v1626 = vmax.f32 %v1198, 0.0
        %v1627 = vmax.f32 %v1309, 0.0
        %v1628 = vmax.f32 %v1311, 0.0
        %v1629 = vmax.f32 %v1422, 0.0
        %v1630 = vmax.f32 %v1424, 0.0
        %v1631 = vmax.f32 %v1535, 0.0
        %v1632 = vmax.f32 %v1537, 0.0
        %v1633 = vmax.f32 %v1200, 0.0
        %v1634 = vmax.f32 %v1202, 0.0
        %v1635 = vmax.f32 %v1313, 0.0
        %v1636 = vmax.f32 %v1315, 0.0
        %v1637 = vmax.f32 %v1426, 0.0
        %v1638 = vmax.f32 %v1428, 0.0
        %v1639 = vmax.f32 %v1539, 0.0
        %v1640 = vmax.f32 %v1541, 0.0
        %v1641 = vmax.f32 %v1206, 0.0
        %v1642 = vmax.f32 %v1208, 0.0
        %v1643 = vmax.f32 %v1319, 0.0
        %v1644 = vmax.f32 %v1321, 0.0
        %v1645 = vmax.f32 %v1432, 0.0
        %v1646 = vmax.f32 %v1434, 0.0
        %v1647 = vmax.f32 %v1545, 0.0
        %v1648 = vmax.f32 %v1547, 0.0
        %v1649 = vmax.f32 %v1210, 0.0
        %v1650 = vmax.f32 %v1212, 0.0
        %v1651 = vmax.f32 %v1323, 0.0
        %v1652 = vmax.f32 %v1325, 0.0
        %v1653 = vmax.f32 %v1436, 0.0
        %v1654 = vmax.f32 %v1438, 0.0
        %v1655 = vmax.f32 %v1549, 0.0
        %v1656 = vmax.f32 %v1551, 0.0
        %v1657 = vmax.f32 %v1216, 0.0
        %v1658 = vmax.f32 %v1218, 0.0
        %v1659 = vmax.f32 %v1329, 0.0
        %v1660 = vmax.f32 %v1331, 0.0
        %v1661 = vmax.f32 %v1442, 0.0
        %v1662 = vmax.f32 %v1444, 0.0
        %v1663 = vmax.f32 %v1555, 0.0
        %v1664 = vmax.f32 %v1557, 0.0
        %v1665 = vmax.f32 %v1220, 0.0
        %v1666 = vmax.f32 %v1222, 0.0
        %v1667 = vmax.f32 %v1333, 0.0
        %v1668 = vmax.f32 %v1335, 0.0
        %v1669 = vmax.f32 %v1446, 0.0
        %v1670 = vmax.f32 %v1448, 0.0
        %v1671 = vmax.f32 %v1559, 0.0
        %v1672 = vmax.f32 %v1561, 0.0
        %v1673 = vmax.f32 %v1226, 0.0
        %v1674 = vmax.f32 %v1228, 0.0
        %v1675 = vmax.f32 %v1339, 0.0
        %v1676 = vmax.f32 %v1341, 0.0
        %v1677 = vmax.f32 %v1452, 0.0
        %v1678 = vmax.f32 %v1454, 0.0
        %v1679 = vmax.f32 %v1565, 0.0
        %v1680 = vmax.f32 %v1567, 0.0
        %v1681 = vmax.f32 %v1230, 0.0
        %v1682 = vmax.f32 %v1232, 0.0
        %v1683 = vmax.f32 %v1343, 0.0
        %v1684 = vmax.f32 %v1345, 0.0
        %v1685 = vmax.f32 %v1456, 0.0
        %v1686 = vmax.f32 %v1458, 0.0
        %v1687 = vmax.f32 %v1569, 0.0
        %v1688 = vmax.f32 %v1571, 0.0
        %v1689 = vmax.f32 %v1236, 0.0
        %v1690 = vmax.f32 %v1238, 0.0
        %v1691 = vmax.f32 %v1349, 0.0
        %v1692 = vmax.f32 %v1351, 0.0
        %v1693 = vmax.f32 %v1462, 0.0
        %v1694 = vmax.f32 %v1464, 0.0
        %v1695 = vmax.f32 %v1575, 0.0
        %v1696 = vmax.f32 %v1577, 0.0
        %v1697 = vmax.f32 %v1240, 0.0
        %v1698 = vmax.f32 %v1242, 0.0
        %v1699 = vmax.f32 %v1353, 0.0
        %v1700 = vmax.f32 %v1355, 0.0
        %v1701 = vmax.f32 %v1466, 0.0
        %v1702 = vmax.f32 %v1468, 0.0
        %v1703 = vmax.f32 %v1579, 0.0
        %v1704 = vmax.f32 %v1581, 0.0
        %v1705 = vmax.f32 %v1246, 0.0
        %v1706 = vmax.f32 %v1248, 0.0
        %v1707 = vmax.f32 %v1359, 0.0
        %v1708 = vmax.f32 %v1361, 0.0
        %v1709 = vmax.f32 %v1472, 0.0
        %v1710 = vmax.f32 %v1474, 0.0
        %v1711 = vmax.f32 %v1585, 0.0
        %v1712 = vmax.f32 %v1587, 0.0
        %v1713 = vmax.f32 %v1250, 0.0
        %v1714 = vmax.f32 %v1252, 0.0
        %v1715 = vmax.f32 %v1363, 0.0
        %v1716 = vmax.f32 %v1365, 0.0
        %v1717 = vmax.f32 %v1476, 0.0
        %v1718 = vmax.f32 %v1478, 0.0
        %v1719 = vmax.f32 %v1589, 0.0
        %v1720 = vmax.f32 %v1591, 0.0
        %v1721 = vpack.c.bf16 %v1601, %v1593
        %v1722 = vpack.c.bf16 %v1602, %v1594
        %v1723 = vpack.c.bf16 %v1603, %v1595
        %v1724 = vpack.c.bf16 %v1604, %v1596
        %v1725 = vpack.c.bf16 %v1605, %v1597
        %v1726 = vpack.c.bf16 %v1606, %v1598
        %v1727 = vpack.c.bf16 %v1607, %v1599
        %v1728 = vpack.c.bf16 %v1608, %v1600
        %v1729 = vpack.c.bf16 %v1617, %v1609
        %v1730 = vpack.c.bf16 %v1618, %v1610
        %v1731 = vpack.c.bf16 %v1619, %v1611
        %v1732 = vpack.c.bf16 %v1620, %v1612
        %v1733 = vpack.c.bf16 %v1621, %v1613
        %v1734 = vpack.c.bf16 %v1622, %v1614
        %v1735 = vpack.c.bf16 %v1623, %v1615
        %v1736 = vpack.c.bf16 %v1624, %v1616
        %v1737 = vpack.c.bf16 %v1633, %v1625
        %v1738 = vpack.c.bf16 %v1634, %v1626
        %v1739 = vpack.c.bf16 %v1635, %v1627
        %v1740 = vpack.c.bf16 %v1636, %v1628
        %v1741 = vpack.c.bf16 %v1637, %v1629
        %v1742 = vpack.c.bf16 %v1638, %v1630
        %v1743 = vpack.c.bf16 %v1639, %v1631
        %v1744 = vpack.c.bf16 %v1640, %v1632
        %v1745 = vpack.c.bf16 %v1649, %v1641
        %v1746 = vpack.c.bf16 %v1650, %v1642
        %v1747 = vpack.c.bf16 %v1651, %v1643
        %v1748 = vpack.c.bf16 %v1652, %v1644
        %v1749 = vpack.c.bf16 %v1653, %v1645
        %v1750 = vpack.c.bf16 %v1654, %v1646
        %v1751 = vpack.c.bf16 %v1655, %v1647
        %v1752 = vpack.c.bf16 %v1656, %v1648
        %v1753 = vpack.c.bf16 %v1665, %v1657
        %v1754 = vpack.c.bf16 %v1666, %v1658
        %v1755 = vpack.c.bf16 %v1667, %v1659
        %v1756 = vpack.c.bf16 %v1668, %v1660
        %v1757 = vpack.c.bf16 %v1669, %v1661
        %v1758 = vpack.c.bf16 %v1670, %v1662
        %v1759 = vpack.c.bf16 %v1671, %v1663
        %v1760 = vpack.c.bf16 %v1672, %v1664
        %v1761 = vpack.c.bf16 %v1681, %v1673
        %v1762 = vpack.c.bf16 %v1682, %v1674
        %v1763 = vpack.c.bf16 %v1683, %v1675
        %v1764 = vpack.c.bf16 %v1684, %v1676
        %v1765 = vpack.c.bf16 %v1685, %v1677
        %v1766 = vpack.c.bf16 %v1686, %v1678
        %v1767 = vpack.c.bf16 %v1687, %v1679
        %v1768 = vpack.c.bf16 %v1688, %v1680
        %v1769 = vpack.c.bf16 %v1697, %v1689
        %v1770 = vpack.c.bf16 %v1698, %v1690
        %v1771 = vpack.c.bf16 %v1699, %v1691
        %v1772 = vpack.c.bf16 %v1700, %v1692
        %v1773 = vpack.c.bf16 %v1701, %v1693
        %v1774 = vpack.c.bf16 %v1702, %v1694
        %v1775 = vpack.c.bf16 %v1703, %v1695
        %v1776 = vpack.c.bf16 %v1704, %v1696
        %v1777 = vpack.c.bf16 %v1713, %v1705
        %v1778 = vpack.c.bf16 %v1714, %v1706
        %v1779 = vpack.c.bf16 %v1715, %v1707
        %v1780 = vpack.c.bf16 %v1716, %v1708
        %v1781 = vpack.c.bf16 %v1717, %v1709
        %v1782 = vpack.c.bf16 %v1718, %v1710
        %v1783 = vpack.c.bf16 %v1719, %v1711
        %v1784 = vpack.c.bf16 %v1720, %v1712
        %v1785 = vld [vmem:[%s3] sm:$0xff]
        %v1786 = vld [vmem:[%s3 + $0x8] sm:$0xff]
        %v1787 = vld [vmem:[%s3 + $0x10] sm:$0xff]
        %v1788 = vld [vmem:[%s3 + $0x18] sm:$0xff]
        %v1789 = vld [vmem:[%s3 + $0x20] sm:$0xff]
        %v1790 = vld [vmem:[%s3 + $0x28] sm:$0xff]
        %v1791 = vld [vmem:[%s3 + $0x30] sm:$0xff]
        %v1792 = vld [vmem:[%s3 + $0x38] sm:$0xff]
        %v1793 = vld [vmem:[%s3 + $0x40] sm:$0xff]
        %v1794 = vld [vmem:[%s3 + $0x48] sm:$0xff]
        %v1795 = vld [vmem:[%s3 + $0x50] sm:$0xff]
        %v1796 = vld [vmem:[%s3 + $0x58] sm:$0xff]
        %v1797 = vld [vmem:[%s3 + $0x60] sm:$0xff]
        %v1798 = vld [vmem:[%s3 + $0x68] sm:$0xff]
        %v1799 = vld [vmem:[%s3 + $0x70] sm:$0xff]
        %v1800 = vld [vmem:[%s3 + $0x78] sm:$0xff]
        %v1801 = vld [vmem:[%s3 + $0x80] sm:$0xff]
        %v1802 = vld [vmem:[%s3 + $0x88] sm:$0xff]
        %v1803 = vld [vmem:[%s3 + $0x90] sm:$0xff]
        %v1804 = vld [vmem:[%s3 + $0x98] sm:$0xff]
        %v1805 = vld [vmem:[%s3 + $0xa0] sm:$0xff]
        %v1806 = vld [vmem:[%s3 + $0xa8] sm:$0xff]
        %v1807 = vld [vmem:[%s3 + $0xb0] sm:$0xff]
        %v1808 = vld [vmem:[%s3 + $0xb8] sm:$0xff]
        %v1809 = vld [vmem:[%s3 + $0xc0] sm:$0xff]
        %v1810 = vld [vmem:[%s3 + $0xc8] sm:$0xff]
        %v1811 = vld [vmem:[%s3 + $0xd0] sm:$0xff]
        %v1812 = vld [vmem:[%s3 + $0xd8] sm:$0xff]
        %v1813 = vld [vmem:[%s3 + $0xe0] sm:$0xff]
        %v1814 = vld [vmem:[%s3 + $0xe8] sm:$0xff]
        %v1815 = vld [vmem:[%s3 + $0xf0] sm:$0xff]
        %v1816 = vld [vmem:[%s3 + $0xf8] sm:$0xff]
        %v1817 = vld [vmem:[%s3 + $0x100] sm:$0xff]
        %v1818 = vld [vmem:[%s3 + $0x108] sm:$0xff]
        %v1819 = vld [vmem:[%s3 + $0x110] sm:$0xff]
        %v1820 = vld [vmem:[%s3 + $0x118] sm:$0xff]
        %v1821 = vld [vmem:[%s3 + $0x120] sm:$0xff]
        %v1822 = vld [vmem:[%s3 + $0x128] sm:$0xff]
        %v1823 = vld [vmem:[%s3 + $0x130] sm:$0xff]
        %v1824 = vld [vmem:[%s3 + $0x138] sm:$0xff]
        %v1825 = vld [vmem:[%s3 + $0x140] sm:$0xff]
        %v1826 = vld [vmem:[%s3 + $0x148] sm:$0xff]
        %v1827 = vld [vmem:[%s3 + $0x150] sm:$0xff]
        %v1828 = vld [vmem:[%s3 + $0x158] sm:$0xff]
        %v1829 = vld [vmem:[%s3 + $0x160] sm:$0xff]
        %v1830 = vld [vmem:[%s3 + $0x168] sm:$0xff]
        %v1831 = vld [vmem:[%s3 + $0x170] sm:$0xff]
        %v1832 = vld [vmem:[%s3 + $0x178] sm:$0xff]
        %v1833 = vld [vmem:[%s3 + $0x180] sm:$0xff]
        %v1834 = vld [vmem:[%s3 + $0x188] sm:$0xff]
        %v1835 = vld [vmem:[%s3 + $0x190] sm:$0xff]
        %v1836 = vld [vmem:[%s3 + $0x198] sm:$0xff]
        %v1837 = vld [vmem:[%s3 + $0x1a0] sm:$0xff]
        %v1838 = vld [vmem:[%s3 + $0x1a8] sm:$0xff]
        %v1839 = vld [vmem:[%s3 + $0x1b0] sm:$0xff]
        %v1840 = vld [vmem:[%s3 + $0x1b8] sm:$0xff]
        %v1841 = vld [vmem:[%s3 + $0x1c0] sm:$0xff]
        %v1842 = vld [vmem:[%s3 + $0x1c8] sm:$0xff]
        %v1843 = vld [vmem:[%s3 + $0x1d0] sm:$0xff]
        %v1844 = vld [vmem:[%s3 + $0x1d8] sm:$0xff]
        %v1845 = vld [vmem:[%s3 + $0x1e0] sm:$0xff]
        %v1846 = vld [vmem:[%s3 + $0x1e8] sm:$0xff]
        %v1847 = vld [vmem:[%s3 + $0x1f0] sm:$0xff]
        %v1848 = vld [vmem:[%s3 + $0x1f8] sm:$0xff]
        %v1849 = vld [vmem:[%s3 + $0x200] sm:$0xff]
        %v1850 = vld [vmem:[%s3 + $0x208] sm:$0xff]
        %v1851 = vld [vmem:[%s3 + $0x210] sm:$0xff]
        %v1852 = vld [vmem:[%s3 + $0x218] sm:$0xff]
        %v1853 = vld [vmem:[%s3 + $0x220] sm:$0xff]
        %v1854 = vld [vmem:[%s3 + $0x228] sm:$0xff]
        %v1855 = vld [vmem:[%s3 + $0x230] sm:$0xff]
        %v1856 = vld [vmem:[%s3 + $0x238] sm:$0xff]
        %v1857 = vld [vmem:[%s3 + $0x240] sm:$0xff]
        %v1858 = vld [vmem:[%s3 + $0x248] sm:$0xff]
        %v1859 = vld [vmem:[%s3 + $0x250] sm:$0xff]
        %v1860 = vld [vmem:[%s3 + $0x258] sm:$0xff]
        %v1861 = vld [vmem:[%s3 + $0x260] sm:$0xff]
        %v1862 = vld [vmem:[%s3 + $0x268] sm:$0xff]
        %v1863 = vld [vmem:[%s3 + $0x270] sm:$0xff]
        %v1864 = vld [vmem:[%s3 + $0x278] sm:$0xff]
        %v1865 = vld [vmem:[%s3 + $0x280] sm:$0xff]
        %v1866 = vld [vmem:[%s3 + $0x288] sm:$0xff]
        %v1867 = vld [vmem:[%s3 + $0x290] sm:$0xff]
        %v1868 = vld [vmem:[%s3 + $0x298] sm:$0xff]
        %v1869 = vld [vmem:[%s3 + $0x2a0] sm:$0xff]
        %v1870 = vld [vmem:[%s3 + $0x2a8] sm:$0xff]
        %v1871 = vld [vmem:[%s3 + $0x2b0] sm:$0xff]
        %v1872 = vld [vmem:[%s3 + $0x2b8] sm:$0xff]
        %v1873 = vld [vmem:[%s3 + $0x2c0] sm:$0xff]
        %v1874 = vld [vmem:[%s3 + $0x2c8] sm:$0xff]
        %v1875 = vld [vmem:[%s3 + $0x2d0] sm:$0xff]
        %v1876 = vld [vmem:[%s3 + $0x2d8] sm:$0xff]
        %v1877 = vld [vmem:[%s3 + $0x2e0] sm:$0xff]
        %v1878 = vld [vmem:[%s3 + $0x2e8] sm:$0xff]
        %v1879 = vld [vmem:[%s3 + $0x2f0] sm:$0xff]
        %v1880 = vld [vmem:[%s3 + $0x2f8] sm:$0xff]
        %v1881 = vld [vmem:[%s3 + $0x300] sm:$0xff]
        %v1882 = vld [vmem:[%s3 + $0x308] sm:$0xff]
        %v1883 = vld [vmem:[%s3 + $0x310] sm:$0xff]
        %v1884 = vld [vmem:[%s3 + $0x318] sm:$0xff]
        %v1885 = vld [vmem:[%s3 + $0x320] sm:$0xff]
        %v1886 = vld [vmem:[%s3 + $0x328] sm:$0xff]
        %v1887 = vld [vmem:[%s3 + $0x330] sm:$0xff]
        %v1888 = vld [vmem:[%s3 + $0x338] sm:$0xff]
        %v1889 = vld [vmem:[%s3 + $0x340] sm:$0xff]
        %v1890 = vld [vmem:[%s3 + $0x348] sm:$0xff]
        %v1891 = vld [vmem:[%s3 + $0x350] sm:$0xff]
        %v1892 = vld [vmem:[%s3 + $0x358] sm:$0xff]
        %v1893 = vld [vmem:[%s3 + $0x360] sm:$0xff]
        %v1894 = vld [vmem:[%s3 + $0x368] sm:$0xff]
        %v1895 = vld [vmem:[%s3 + $0x370] sm:$0xff]
        %v1896 = vld [vmem:[%s3 + $0x378] sm:$0xff]
        %v1897 = vld [vmem:[%s3 + $0x380] sm:$0xff]
        %v1898 = vld [vmem:[%s3 + $0x388] sm:$0xff]
        %v1899 = vld [vmem:[%s3 + $0x390] sm:$0xff]
        %v1900 = vld [vmem:[%s3 + $0x398] sm:$0xff]
        %v1901 = vld [vmem:[%s3 + $0x3a0] sm:$0xff]
        %v1902 = vld [vmem:[%s3 + $0x3a8] sm:$0xff]
        %v1903 = vld [vmem:[%s3 + $0x3b0] sm:$0xff]
        %v1904 = vld [vmem:[%s3 + $0x3b8] sm:$0xff]
        %v1905 = vld [vmem:[%s3 + $0x3c0] sm:$0xff]
        %v1906 = vld [vmem:[%s3 + $0x3c8] sm:$0xff]
        %v1907 = vld [vmem:[%s3 + $0x3d0] sm:$0xff]
        %v1908 = vld [vmem:[%s3 + $0x3d8] sm:$0xff]
        %v1909 = vld [vmem:[%s3 + $0x3e0] sm:$0xff]
        %v1910 = vld [vmem:[%s3 + $0x3e8] sm:$0xff]
        %v1911 = vld [vmem:[%s3 + $0x3f0] sm:$0xff]
        %v1912 = vld [vmem:[%s3 + $0x3f8] sm:$0xff]
        %v1913 = vld [vmem:[%s4] sm:$0x3]
        %v1915 = vlaneseq
        %v1916 = vshrl.u32 %v1915, 7
        %v1917 = vsub.s32 0, %v1916
        %v1918 = vrot.slane %v1913, %v1917
        %v1919 = vlaneseq
        %v1920 = vshrl.u32 %v1919, 7
        %v1921 = vsub.s32 1, %v1920
        %v1922 = vrot.slane %v1913, %v1921
        %v2053 = vunpack.c.l.b16 %v1785
        %v2054 = vunpack.c.h.b16 %v1785
        %v2055 = vunpack.c.l.b16 %v1786
        %v2056 = vunpack.c.h.b16 %v1786
        %v2057 = vunpack.c.l.b16 %v1787
        %v2058 = vunpack.c.h.b16 %v1787
        %v2059 = vunpack.c.l.b16 %v1788
        %v2060 = vunpack.c.h.b16 %v1788
        %v2061 = vunpack.c.l.b16 %v1789
        %v2062 = vunpack.c.h.b16 %v1789
        %v2063 = vunpack.c.l.b16 %v1790
        %v2064 = vunpack.c.h.b16 %v1790
        %v2065 = vunpack.c.l.b16 %v1791
        %v2066 = vunpack.c.h.b16 %v1791
        %v2067 = vunpack.c.l.b16 %v1792
        %v2068 = vunpack.c.h.b16 %v1792
        %v2069 = vunpack.c.l.b16 %v1793
        %v2070 = vunpack.c.h.b16 %v1793
        %v2071 = vunpack.c.l.b16 %v1794
        %v2072 = vunpack.c.h.b16 %v1794
        %v2073 = vunpack.c.l.b16 %v1795
        %v2074 = vunpack.c.h.b16 %v1795
        %v2075 = vunpack.c.l.b16 %v1796
        %v2076 = vunpack.c.h.b16 %v1796
        %v2077 = vunpack.c.l.b16 %v1797
        %v2078 = vunpack.c.h.b16 %v1797
        %v2079 = vunpack.c.l.b16 %v1798
        %v2080 = vunpack.c.h.b16 %v1798
        %v2081 = vunpack.c.l.b16 %v1799
        %v2082 = vunpack.c.h.b16 %v1799
        %v2083 = vunpack.c.l.b16 %v1800
        %v2084 = vunpack.c.h.b16 %v1800
        %v2085 = vunpack.c.l.b16 %v1801
        %v2086 = vunpack.c.h.b16 %v1801
        %v2087 = vunpack.c.l.b16 %v1802
        %v2088 = vunpack.c.h.b16 %v1802
        %v2089 = vunpack.c.l.b16 %v1803
        %v2090 = vunpack.c.h.b16 %v1803
        %v2091 = vunpack.c.l.b16 %v1804
        %v2092 = vunpack.c.h.b16 %v1804
        %v2093 = vunpack.c.l.b16 %v1805
        %v2094 = vunpack.c.h.b16 %v1805
        %v2095 = vunpack.c.l.b16 %v1806
        %v2096 = vunpack.c.h.b16 %v1806
        %v2097 = vunpack.c.l.b16 %v1807
        %v2098 = vunpack.c.h.b16 %v1807
        %v2099 = vunpack.c.l.b16 %v1808
        %v2100 = vunpack.c.h.b16 %v1808
        %v2101 = vunpack.c.l.b16 %v1809
        %v2102 = vunpack.c.h.b16 %v1809
        %v2103 = vunpack.c.l.b16 %v1810
        %v2104 = vunpack.c.h.b16 %v1810
        %v2105 = vunpack.c.l.b16 %v1811
        %v2106 = vunpack.c.h.b16 %v1811
        %v2107 = vunpack.c.l.b16 %v1812
        %v2108 = vunpack.c.h.b16 %v1812
        %v2109 = vunpack.c.l.b16 %v1813
        %v2110 = vunpack.c.h.b16 %v1813
        %v2111 = vunpack.c.l.b16 %v1814
        %v2112 = vunpack.c.h.b16 %v1814
        %v2113 = vunpack.c.l.b16 %v1815
        %v2114 = vunpack.c.h.b16 %v1815
        %v2115 = vunpack.c.l.b16 %v1816
        %v2116 = vunpack.c.h.b16 %v1816
        %v2117 = vunpack.c.l.b16 %v1817
        %v2118 = vunpack.c.h.b16 %v1817
        %v2119 = vunpack.c.l.b16 %v1818
        %v2120 = vunpack.c.h.b16 %v1818
        %v2121 = vunpack.c.l.b16 %v1819
        %v2122 = vunpack.c.h.b16 %v1819
        %v2123 = vunpack.c.l.b16 %v1820
        %v2124 = vunpack.c.h.b16 %v1820
        %v2125 = vunpack.c.l.b16 %v1821
        %v2126 = vunpack.c.h.b16 %v1821
        %v2127 = vunpack.c.l.b16 %v1822
        %v2128 = vunpack.c.h.b16 %v1822
        %v2129 = vunpack.c.l.b16 %v1823
        %v2130 = vunpack.c.h.b16 %v1823
        %v2131 = vunpack.c.l.b16 %v1824
        %v2132 = vunpack.c.h.b16 %v1824
        %v2133 = vunpack.c.l.b16 %v1825
        %v2134 = vunpack.c.h.b16 %v1825
        %v2135 = vunpack.c.l.b16 %v1826
        %v2136 = vunpack.c.h.b16 %v1826
        %v2137 = vunpack.c.l.b16 %v1827
        %v2138 = vunpack.c.h.b16 %v1827
        %v2139 = vunpack.c.l.b16 %v1828
        %v2140 = vunpack.c.h.b16 %v1828
        %v2141 = vunpack.c.l.b16 %v1829
        %v2142 = vunpack.c.h.b16 %v1829
        %v2143 = vunpack.c.l.b16 %v1830
        %v2144 = vunpack.c.h.b16 %v1830
        %v2145 = vunpack.c.l.b16 %v1831
        %v2146 = vunpack.c.h.b16 %v1831
        %v2147 = vunpack.c.l.b16 %v1832
        %v2148 = vunpack.c.h.b16 %v1832
        %v2149 = vunpack.c.l.b16 %v1833
        %v2150 = vunpack.c.h.b16 %v1833
        %v2151 = vunpack.c.l.b16 %v1834
        %v2152 = vunpack.c.h.b16 %v1834
        %v2153 = vunpack.c.l.b16 %v1835
        %v2154 = vunpack.c.h.b16 %v1835
        %v2155 = vunpack.c.l.b16 %v1836
        %v2156 = vunpack.c.h.b16 %v1836
        %v2157 = vunpack.c.l.b16 %v1837
        %v2158 = vunpack.c.h.b16 %v1837
        %v2159 = vunpack.c.l.b16 %v1838
        %v2160 = vunpack.c.h.b16 %v1838
        %v2161 = vunpack.c.l.b16 %v1839
        %v2162 = vunpack.c.h.b16 %v1839
        %v2163 = vunpack.c.l.b16 %v1840
        %v2164 = vunpack.c.h.b16 %v1840
        %v2165 = vunpack.c.l.b16 %v1841
        %v2166 = vunpack.c.h.b16 %v1841
        %v2167 = vunpack.c.l.b16 %v1842
        %v2168 = vunpack.c.h.b16 %v1842
        %v2169 = vunpack.c.l.b16 %v1843
        %v2170 = vunpack.c.h.b16 %v1843
        %v2171 = vunpack.c.l.b16 %v1844
        %v2172 = vunpack.c.h.b16 %v1844
        %v2173 = vunpack.c.l.b16 %v1845
        %v2174 = vunpack.c.h.b16 %v1845
        %v2175 = vunpack.c.l.b16 %v1846
        %v2176 = vunpack.c.h.b16 %v1846
        %v2177 = vunpack.c.l.b16 %v1847
        %v2178 = vunpack.c.h.b16 %v1847
        %v2179 = vunpack.c.l.b16 %v1848
        %v2180 = vunpack.c.h.b16 %v1848
        %v2181 = vunpack.c.l.b16 %v1849
        %v2182 = vunpack.c.h.b16 %v1849
        %v2183 = vunpack.c.l.b16 %v1850
        %v2184 = vunpack.c.h.b16 %v1850
        %v2185 = vunpack.c.l.b16 %v1851
        %v2186 = vunpack.c.h.b16 %v1851
        %v2187 = vunpack.c.l.b16 %v1852
        %v2188 = vunpack.c.h.b16 %v1852
        %v2189 = vunpack.c.l.b16 %v1853
        %v2190 = vunpack.c.h.b16 %v1853
        %v2191 = vunpack.c.l.b16 %v1854
        %v2192 = vunpack.c.h.b16 %v1854
        %v2193 = vunpack.c.l.b16 %v1855
        %v2194 = vunpack.c.h.b16 %v1855
        %v2195 = vunpack.c.l.b16 %v1856
        %v2196 = vunpack.c.h.b16 %v1856
        %v2197 = vunpack.c.l.b16 %v1857
        %v2198 = vunpack.c.h.b16 %v1857
        %v2199 = vunpack.c.l.b16 %v1858
        %v2200 = vunpack.c.h.b16 %v1858
        %v2201 = vunpack.c.l.b16 %v1859
        %v2202 = vunpack.c.h.b16 %v1859
        %v2203 = vunpack.c.l.b16 %v1860
        %v2204 = vunpack.c.h.b16 %v1860
        %v2205 = vunpack.c.l.b16 %v1861
        %v2206 = vunpack.c.h.b16 %v1861
        %v2207 = vunpack.c.l.b16 %v1862
        %v2208 = vunpack.c.h.b16 %v1862
        %v2209 = vunpack.c.l.b16 %v1863
        %v2210 = vunpack.c.h.b16 %v1863
        %v2211 = vunpack.c.l.b16 %v1864
        %v2212 = vunpack.c.h.b16 %v1864
        %v2213 = vunpack.c.l.b16 %v1865
        %v2214 = vunpack.c.h.b16 %v1865
        %v2215 = vunpack.c.l.b16 %v1866
        %v2216 = vunpack.c.h.b16 %v1866
        %v2217 = vunpack.c.l.b16 %v1867
        %v2218 = vunpack.c.h.b16 %v1867
        %v2219 = vunpack.c.l.b16 %v1868
        %v2220 = vunpack.c.h.b16 %v1868
        %v2221 = vunpack.c.l.b16 %v1869
        %v2222 = vunpack.c.h.b16 %v1869
        %v2223 = vunpack.c.l.b16 %v1870
        %v2224 = vunpack.c.h.b16 %v1870
        %v2225 = vunpack.c.l.b16 %v1871
        %v2226 = vunpack.c.h.b16 %v1871
        %v2227 = vunpack.c.l.b16 %v1872
        %v2228 = vunpack.c.h.b16 %v1872
        %v2229 = vunpack.c.l.b16 %v1873
        %v2230 = vunpack.c.h.b16 %v1873
        %v2231 = vunpack.c.l.b16 %v1874
        %v2232 = vunpack.c.h.b16 %v1874
        %v2233 = vunpack.c.l.b16 %v1875
        %v2234 = vunpack.c.h.b16 %v1875
        %v2235 = vunpack.c.l.b16 %v1876
        %v2236 = vunpack.c.h.b16 %v1876
        %v2237 = vunpack.c.l.b16 %v1877
        %v2238 = vunpack.c.h.b16 %v1877
        %v2239 = vunpack.c.l.b16 %v1878
        %v2240 = vunpack.c.h.b16 %v1878
        %v2241 = vunpack.c.l.b16 %v1879
        %v2242 = vunpack.c.h.b16 %v1879
        %v2243 = vunpack.c.l.b16 %v1880
        %v2244 = vunpack.c.h.b16 %v1880
        %v2245 = vunpack.c.l.b16 %v1881
        %v2246 = vunpack.c.h.b16 %v1881
        %v2247 = vunpack.c.l.b16 %v1882
        %v2248 = vunpack.c.h.b16 %v1882
        %v2249 = vunpack.c.l.b16 %v1883
        %v2250 = vunpack.c.h.b16 %v1883
        %v2251 = vunpack.c.l.b16 %v1884
        %v2252 = vunpack.c.h.b16 %v1884
        %v2253 = vunpack.c.l.b16 %v1885
        %v2254 = vunpack.c.h.b16 %v1885
        %v2255 = vunpack.c.l.b16 %v1886
        %v2256 = vunpack.c.h.b16 %v1886
        %v2257 = vunpack.c.l.b16 %v1887
        %v2258 = vunpack.c.h.b16 %v1887
        %v2259 = vunpack.c.l.b16 %v1888
        %v2260 = vunpack.c.h.b16 %v1888
        %v2261 = vunpack.c.l.b16 %v1889
        %v2262 = vunpack.c.h.b16 %v1889
        %v2263 = vunpack.c.l.b16 %v1890
        %v2264 = vunpack.c.h.b16 %v1890
        %v2265 = vunpack.c.l.b16 %v1891
        %v2266 = vunpack.c.h.b16 %v1891
        %v2267 = vunpack.c.l.b16 %v1892
        %v2268 = vunpack.c.h.b16 %v1892
        %v2269 = vunpack.c.l.b16 %v1893
        %v2270 = vunpack.c.h.b16 %v1893
        %v2271 = vunpack.c.l.b16 %v1894
        %v2272 = vunpack.c.h.b16 %v1894
        %v2273 = vunpack.c.l.b16 %v1895
        %v2274 = vunpack.c.h.b16 %v1895
        %v2275 = vunpack.c.l.b16 %v1896
        %v2276 = vunpack.c.h.b16 %v1896
        %v2277 = vunpack.c.l.b16 %v1897
        %v2278 = vunpack.c.h.b16 %v1897
        %v2279 = vunpack.c.l.b16 %v1898
        %v2280 = vunpack.c.h.b16 %v1898
        %v2281 = vunpack.c.l.b16 %v1899
        %v2282 = vunpack.c.h.b16 %v1899
        %v2283 = vunpack.c.l.b16 %v1900
        %v2284 = vunpack.c.h.b16 %v1900
        %v2285 = vunpack.c.l.b16 %v1901
        %v2286 = vunpack.c.h.b16 %v1901
        %v2287 = vunpack.c.l.b16 %v1902
        %v2288 = vunpack.c.h.b16 %v1902
        %v2289 = vunpack.c.l.b16 %v1903
        %v2290 = vunpack.c.h.b16 %v1903
        %v2291 = vunpack.c.l.b16 %v1904
        %v2292 = vunpack.c.h.b16 %v1904
        %v2293 = vunpack.c.l.b16 %v1905
        %v2294 = vunpack.c.h.b16 %v1905
        %v2295 = vunpack.c.l.b16 %v1906
        %v2296 = vunpack.c.h.b16 %v1906
        %v2297 = vunpack.c.l.b16 %v1907
        %v2298 = vunpack.c.h.b16 %v1907
        %v2299 = vunpack.c.l.b16 %v1908
        %v2300 = vunpack.c.h.b16 %v1908
        %v2301 = vunpack.c.l.b16 %v1909
        %v2302 = vunpack.c.h.b16 %v1909
        %v2303 = vunpack.c.l.b16 %v1910
        %v2304 = vunpack.c.h.b16 %v1910
        %v2305 = vunpack.c.l.b16 %v1911
        %v2306 = vunpack.c.h.b16 %v1911
        %v2307 = vunpack.c.l.b16 %v1912
        %v2308 = vunpack.c.h.b16 %v1912
        %v2309 = vpack.c.b16 %v2055, %v2053
        %v2310 = vpack.c.b16 %v2056, %v2054
        %v2311 = vpack.c.b16 %v2059, %v2057
        %v2312 = vpack.c.b16 %v2060, %v2058
        %v2313 = vpack.c.b16 %v2063, %v2061
        %v2314 = vpack.c.b16 %v2064, %v2062
        %v2315 = vpack.c.b16 %v2067, %v2065
        %v2316 = vpack.c.b16 %v2068, %v2066
        %v2317 = vpack.c.b16 %v2071, %v2069
        %v2318 = vpack.c.b16 %v2072, %v2070
        %v2319 = vpack.c.b16 %v2075, %v2073
        %v2320 = vpack.c.b16 %v2076, %v2074
        %v2321 = vpack.c.b16 %v2079, %v2077
        %v2322 = vpack.c.b16 %v2080, %v2078
        %v2323 = vpack.c.b16 %v2083, %v2081
        %v2324 = vpack.c.b16 %v2084, %v2082
        %v2325 = vpack.c.b16 %v2087, %v2085
        %v2326 = vpack.c.b16 %v2088, %v2086
        %v2327 = vpack.c.b16 %v2091, %v2089
        %v2328 = vpack.c.b16 %v2092, %v2090
        %v2329 = vpack.c.b16 %v2095, %v2093
        %v2330 = vpack.c.b16 %v2096, %v2094
        %v2331 = vpack.c.b16 %v2099, %v2097
        %v2332 = vpack.c.b16 %v2100, %v2098
        %v2333 = vpack.c.b16 %v2103, %v2101
        %v2334 = vpack.c.b16 %v2104, %v2102
        %v2335 = vpack.c.b16 %v2107, %v2105
        %v2336 = vpack.c.b16 %v2108, %v2106
        %v2337 = vpack.c.b16 %v2111, %v2109
        %v2338 = vpack.c.b16 %v2112, %v2110
        %v2339 = vpack.c.b16 %v2115, %v2113
        %v2340 = vpack.c.b16 %v2116, %v2114
        %v2341 = vpack.c.b16 %v2119, %v2117
        %v2342 = vpack.c.b16 %v2120, %v2118
        %v2343 = vpack.c.b16 %v2123, %v2121
        %v2344 = vpack.c.b16 %v2124, %v2122
        %v2345 = vpack.c.b16 %v2127, %v2125
        %v2346 = vpack.c.b16 %v2128, %v2126
        %v2347 = vpack.c.b16 %v2131, %v2129
        %v2348 = vpack.c.b16 %v2132, %v2130
        %v2349 = vpack.c.b16 %v2135, %v2133
        %v2350 = vpack.c.b16 %v2136, %v2134
        %v2351 = vpack.c.b16 %v2139, %v2137
        %v2352 = vpack.c.b16 %v2140, %v2138
        %v2353 = vpack.c.b16 %v2143, %v2141
        %v2354 = vpack.c.b16 %v2144, %v2142
        %v2355 = vpack.c.b16 %v2147, %v2145
        %v2356 = vpack.c.b16 %v2148, %v2146
        %v2357 = vpack.c.b16 %v2151, %v2149
        %v2358 = vpack.c.b16 %v2152, %v2150
        %v2359 = vpack.c.b16 %v2155, %v2153
        %v2360 = vpack.c.b16 %v2156, %v2154
        %v2361 = vpack.c.b16 %v2159, %v2157
        %v2362 = vpack.c.b16 %v2160, %v2158
        %v2363 = vpack.c.b16 %v2163, %v2161
        %v2364 = vpack.c.b16 %v2164, %v2162
        %v2365 = vpack.c.b16 %v2167, %v2165
        %v2366 = vpack.c.b16 %v2168, %v2166
        %v2367 = vpack.c.b16 %v2171, %v2169
        %v2368 = vpack.c.b16 %v2172, %v2170
        %v2369 = vpack.c.b16 %v2175, %v2173
        %v2370 = vpack.c.b16 %v2176, %v2174
        %v2371 = vpack.c.b16 %v2179, %v2177
        %v2372 = vpack.c.b16 %v2180, %v2178
        %v2373 = vpack.c.b16 %v2183, %v2181
        %v2374 = vpack.c.b16 %v2184, %v2182
        %v2375 = vpack.c.b16 %v2187, %v2185
        %v2376 = vpack.c.b16 %v2188, %v2186
        %v2377 = vpack.c.b16 %v2191, %v2189
        %v2378 = vpack.c.b16 %v2192, %v2190
        %v2379 = vpack.c.b16 %v2195, %v2193
        %v2380 = vpack.c.b16 %v2196, %v2194
        %v2381 = vpack.c.b16 %v2199, %v2197
        %v2382 = vpack.c.b16 %v2200, %v2198
        %v2383 = vpack.c.b16 %v2203, %v2201
        %v2384 = vpack.c.b16 %v2204, %v2202
        %v2385 = vpack.c.b16 %v2207, %v2205
        %v2386 = vpack.c.b16 %v2208, %v2206
        %v2387 = vpack.c.b16 %v2211, %v2209
        %v2388 = vpack.c.b16 %v2212, %v2210
        %v2389 = vpack.c.b16 %v2215, %v2213
        %v2390 = vpack.c.b16 %v2216, %v2214
        %v2391 = vpack.c.b16 %v2219, %v2217
        %v2392 = vpack.c.b16 %v2220, %v2218
        %v2393 = vpack.c.b16 %v2223, %v2221
        %v2394 = vpack.c.b16 %v2224, %v2222
        %v2395 = vpack.c.b16 %v2227, %v2225
        %v2396 = vpack.c.b16 %v2228, %v2226
        %v2397 = vpack.c.b16 %v2231, %v2229
        %v2398 = vpack.c.b16 %v2232, %v2230
        %v2399 = vpack.c.b16 %v2235, %v2233
        %v2400 = vpack.c.b16 %v2236, %v2234
        %v2401 = vpack.c.b16 %v2239, %v2237
        %v2402 = vpack.c.b16 %v2240, %v2238
        %v2403 = vpack.c.b16 %v2243, %v2241
        %v2404 = vpack.c.b16 %v2244, %v2242
        %v2405 = vpack.c.b16 %v2247, %v2245
        %v2406 = vpack.c.b16 %v2248, %v2246
        %v2407 = vpack.c.b16 %v2251, %v2249
        %v2408 = vpack.c.b16 %v2252, %v2250
        %v2409 = vpack.c.b16 %v2255, %v2253
        %v2410 = vpack.c.b16 %v2256, %v2254
        %v2411 = vpack.c.b16 %v2259, %v2257
        %v2412 = vpack.c.b16 %v2260, %v2258
        %v2413 = vpack.c.b16 %v2263, %v2261
        %v2414 = vpack.c.b16 %v2264, %v2262
        %v2415 = vpack.c.b16 %v2267, %v2265
        %v2416 = vpack.c.b16 %v2268, %v2266
        %v2417 = vpack.c.b16 %v2271, %v2269
        %v2418 = vpack.c.b16 %v2272, %v2270
        %v2419 = vpack.c.b16 %v2275, %v2273
        %v2420 = vpack.c.b16 %v2276, %v2274
        %v2421 = vpack.c.b16 %v2279, %v2277
        %v2422 = vpack.c.b16 %v2280, %v2278
        %v2423 = vpack.c.b16 %v2283, %v2281
        %v2424 = vpack.c.b16 %v2284, %v2282
        %v2425 = vpack.c.b16 %v2287, %v2285
        %v2426 = vpack.c.b16 %v2288, %v2286
        %v2427 = vpack.c.b16 %v2291, %v2289
        %v2428 = vpack.c.b16 %v2292, %v2290
        %v2429 = vpack.c.b16 %v2295, %v2293
        %v2430 = vpack.c.b16 %v2296, %v2294
        %v2431 = vpack.c.b16 %v2299, %v2297
        %v2432 = vpack.c.b16 %v2300, %v2298
        %v2433 = vpack.c.b16 %v2303, %v2301
        %v2434 = vpack.c.b16 %v2304, %v2302
        %v2435 = vpack.c.b16 %v2307, %v2305
        %v2436 = vpack.c.b16 %v2308, %v2306
        %2565 = vmatprep.subr.bf16.mxu0 %v2310
        %2566 = vmatpush1.bf16.msra.mxu0 %v2309
        %2567 = vmatprep.subr.bf16.mxu0 %v2312
        %2568 = vmatpush1.bf16.msra.mxu0 %v2311
        %2569 = vmatprep.subr.bf16.mxu0 %v2314
        %2570 = vmatpush1.bf16.msra.mxu0 %v2313
        %2571 = vmatprep.subr.bf16.mxu0 %v2316
        %2572 = vmatpush1.bf16.msra.mxu0 %v2315
        %2573 = vmatprep.subr.bf16.mxu0 %v2318
        %2574 = vmatpush1.bf16.msra.mxu0 %v2317
        %2575 = vmatprep.subr.bf16.mxu0 %v2320
        %2576 = vmatpush1.bf16.msra.mxu0 %v2319
        %2577 = vmatprep.subr.bf16.mxu0 %v2322
        %2578 = vmatpush1.bf16.msra.mxu0 %v2321
        %2579 = vmatprep.subr.bf16.mxu0 %v2324
        %2580 = vmatpush1.bf16.msra.mxu0 %v2323
        %2581 = vmatprep.subr.bf16.mxu0 %v2326
        %2582 = vmatpush1.bf16.msra.mxu0 %v2325
        %2583 = vmatprep.subr.bf16.mxu0 %v2328
        %2584 = vmatpush1.bf16.msra.mxu0 %v2327
        %2585 = vmatprep.subr.bf16.mxu0 %v2330
        %2586 = vmatpush1.bf16.msra.mxu0 %v2329
        %2587 = vmatprep.subr.bf16.mxu0 %v2332
        %2588 = vmatpush1.bf16.msra.mxu0 %v2331
        %2589 = vmatprep.subr.bf16.mxu0 %v2334
        %2590 = vmatpush1.bf16.msra.mxu0 %v2333
        %2591 = vmatprep.subr.bf16.mxu0 %v2336
        %2592 = vmatpush1.bf16.msra.mxu0 %v2335
        %2593 = vmatprep.subr.bf16.mxu0 %v2338
        %2594 = vmatpush1.bf16.msra.mxu0 %v2337
        %2595 = vmatprep.subr.bf16.mxu0 %v2340
        %2596 = vmatpush1.bf16.msra.mxu0 %v2339
        %2597 = vmatprep.mubr.bf16.mxu0 %v1722
        %2598 = vmatmul.mubr.bf16.gmra.mrb[0].mxu0 %v1721
        %v2599 = vpop.f32.mrb[0].mxu0
        %v2600 = vadd.f32 %v1918, %v2599
        %v2601 = vpop.f32.mrb[0].mxu0
        %v2602 = vadd.f32 %v1922, %v2601
        %v2603 = vpop.f32.mrb[0].mxu0
        %v2604 = vadd.f32 %v1918, %v2603
        %v2605 = vpop.f32.mrb[0].mxu0
        %v2606 = vadd.f32 %v1922, %v2605
        %2607 = vmatprep.mubr.bf16.mxu0 %v1730
        %2608 = vmatmul.mubr.bf16.gmra.mrb[0].mxu0 %v1729
        %v2609 = vpop.f32.mrb[0].mxu0
        %v2610 = vadd.f32 %v1918, %v2609
        %v2611 = vpop.f32.mrb[0].mxu0
        %v2612 = vadd.f32 %v1922, %v2611
        %v2613 = vpop.f32.mrb[0].mxu0
        %v2614 = vadd.f32 %v1918, %v2613
        %v2615 = vpop.f32.mrb[0].mxu0
        %v2616 = vadd.f32 %v1922, %v2615
        %2617 = vmatprep.mubr.bf16.mxu0 %v1738
        %2618 = vmatmul.mubr.bf16.gmra.mrb[0].mxu0 %v1737
        %v2619 = vpop.f32.mrb[0].mxu0
        %v2620 = vadd.f32 %v1918, %v2619
        %v2621 = vpop.f32.mrb[0].mxu0
        %v2622 = vadd.f32 %v1922, %v2621
        %v2623 = vpop.f32.mrb[0].mxu0
        %v2624 = vadd.f32 %v1918, %v2623
        %v2625 = vpop.f32.mrb[0].mxu0
        %v2626 = vadd.f32 %v1922, %v2625
        %2627 = vmatprep.mubr.bf16.mxu0 %v1746
        %2628 = vmatmul.mubr.bf16.gmra.mrb[0].mxu0 %v1745
        %v2629 = vpop.f32.mrb[0].mxu0
        %v2630 = vadd.f32 %v1918, %v2629
        %v2631 = vpop.f32.mrb[0].mxu0
        %v2632 = vadd.f32 %v1922, %v2631
        %v2633 = vpop.f32.mrb[0].mxu0
        %v2634 = vadd.f32 %v1918, %v2633
        %v2635 = vpop.f32.mrb[0].mxu0
        %v2636 = vadd.f32 %v1922, %v2635
        %2637 = vmatprep.mubr.bf16.mxu0 %v1754
        %2638 = vmatmul.mubr.bf16.gmra.mrb[0].mxu0 %v1753
        %v2639 = vpop.f32.mrb[0].mxu0
        %v2640 = vadd.f32 %v1918, %v2639
        %v2641 = vpop.f32.mrb[0].mxu0
        %v2642 = vadd.f32 %v1922, %v2641
        %v2643 = vpop.f32.mrb[0].mxu0
        %v2644 = vadd.f32 %v1918, %v2643
        %v2645 = vpop.f32.mrb[0].mxu0
        %v2646 = vadd.f32 %v1922, %v2645
        %2647 = vmatprep.mubr.bf16.mxu0 %v1762
        %2648 = vmatmul.mubr.bf16.gmra.mrb[0].mxu0 %v1761
        %v2649 = vpop.f32.mrb[0].mxu0
        %v2650 = vadd.f32 %v1918, %v2649
        %v2651 = vpop.f32.mrb[0].mxu0
        %v2652 = vadd.f32 %v1922, %v2651
        %v2653 = vpop.f32.mrb[0].mxu0
        %v2654 = vadd.f32 %v1918, %v2653
        %v2655 = vpop.f32.mrb[0].mxu0
        %v2656 = vadd.f32 %v1922, %v2655
        %2657 = vmatprep.mubr.bf16.mxu0 %v1770
        %2658 = vmatmul.mubr.bf16.gmra.mrb[0].mxu0 %v1769
        %v2659 = vpop.f32.mrb[0].mxu0
        %v2660 = vadd.f32 %v1918, %v2659
        %v2661 = vpop.f32.mrb[0].mxu0
        %v2662 = vadd.f32 %v1922, %v2661
        %v2663 = vpop.f32.mrb[0].mxu0
        %v2664 = vadd.f32 %v1918, %v2663
        %v2665 = vpop.f32.mrb[0].mxu0
        %v2666 = vadd.f32 %v1922, %v2665
        %2667 = vmatprep.mubr.bf16.mxu0 %v1778
        %2668 = vmatmul.mubr.bf16.gmra.mrb[0].mxu0 %v1777
        %v2669 = vpop.f32.mrb[0].mxu0
        %v2670 = vadd.f32 %v1918, %v2669
        %v2671 = vpop.f32.mrb[0].mxu0
        %v2672 = vadd.f32 %v1922, %v2671
        %v2673 = vpop.f32.mrb[0].mxu0
        %v2674 = vadd.f32 %v1918, %v2673
        %v2675 = vpop.f32.mrb[0].mxu0
        %v2676 = vadd.f32 %v1922, %v2675
        %2677 = vdwg.mxu0
        %2678 = vmatprep.subr.bf16.mxu0 %v2342
        %2679 = vmatpush1.bf16.msra.mxu0 %v2341
        %2680 = vmatprep.subr.bf16.mxu0 %v2344
        %2681 = vmatpush1.bf16.msra.mxu0 %v2343
        %2682 = vmatprep.subr.bf16.mxu0 %v2346
        %2683 = vmatpush1.bf16.msra.mxu0 %v2345
        %2684 = vmatprep.subr.bf16.mxu0 %v2348
        %2685 = vmatpush1.bf16.msra.mxu0 %v2347
        %2686 = vmatprep.subr.bf16.mxu0 %v2350
        %2687 = vmatpush1.bf16.msra.mxu0 %v2349
        %2688 = vmatprep.subr.bf16.mxu0 %v2352
        %2689 = vmatpush1.bf16.msra.mxu0 %v2351
        %2690 = vmatprep.subr.bf16.mxu0 %v2354
        %2691 = vmatpush1.bf16.msra.mxu0 %v2353
        %2692 = vmatprep.subr.bf16.mxu0 %v2356
        %2693 = vmatpush1.bf16.msra.mxu0 %v2355
        %2694 = vmatprep.subr.bf16.mxu0 %v2358
        %2695 = vmatpush1.bf16.msra.mxu0 %v2357
        %2696 = vmatprep.subr.bf16.mxu0 %v2360
        %2697 = vmatpush1.bf16.msra.mxu0 %v2359
        %2698 = vmatprep.subr.bf16.mxu0 %v2362
        %2699 = vmatpush1.bf16.msra.mxu0 %v2361
        %2700 = vmatprep.subr.bf16.mxu0 %v2364
        %2701 = vmatpush1.bf16.msra.mxu0 %v2363
        %2702 = vmatprep.subr.bf16.mxu0 %v2366
        %2703 = vmatpush1.bf16.msra.mxu0 %v2365
        %2704 = vmatprep.subr.bf16.mxu0 %v2368
        %2705 = vmatpush1.bf16.msra.mxu0 %v2367
        %2706 = vmatprep.subr.bf16.mxu0 %v2370
        %2707 = vmatpush1.bf16.msra.mxu0 %v2369
        %2708 = vmatprep.subr.bf16.mxu0 %v2372
        %2709 = vmatpush1.bf16.msra.mxu0 %v2371
        %2710 = vmatprep.mubr.bf16.mxu0 %v1724
        %2711 = vmatmul.mubr.bf16.gmra.mrb[0].mxu0 %v1723
        %v2712 = vpop.f32.mrb[0].mxu0
        %v2713 = vadd.f32 %v2600, %v2712
        %v2714 = vpop.f32.mrb[0].mxu0
        %v2715 = vadd.f32 %v2602, %v2714
        %v2716 = vpop.f32.mrb[0].mxu0
        %v2717 = vadd.f32 %v2604, %v2716
        %v2718 = vpop.f32.mrb[0].mxu0
        %v2719 = vadd.f32 %v2606, %v2718
        %2720 = vmatprep.mubr.bf16.mxu0 %v1732
        %2721 = vmatmul.mubr.bf16.gmra.mrb[0].mxu0 %v1731
        %v2722 = vpop.f32.mrb[0].mxu0
        %v2723 = vadd.f32 %v2610, %v2722
        %v2724 = vpop.f32.mrb[0].mxu0
        %v2725 = vadd.f32 %v2612, %v2724
        %v2726 = vpop.f32.mrb[0].mxu0
        %v2727 = vadd.f32 %v2614, %v2726
        %v2728 = vpop.f32.mrb[0].mxu0
        %v2729 = vadd.f32 %v2616, %v2728
        %2730 = vmatprep.mubr.bf16.mxu0 %v1740
        %2731 = vmatmul.mubr.bf16.gmra.mrb[0].mxu0 %v1739
        %v2732 = vpop.f32.mrb[0].mxu0
        %v2733 = vadd.f32 %v2620, %v2732
        %v2734 = vpop.f32.mrb[0].mxu0
        %v2735 = vadd.f32 %v2622, %v2734
        %v2736 = vpop.f32.mrb[0].mxu0
        %v2737 = vadd.f32 %v2624, %v2736
        %v2738 = vpop.f32.mrb[0].mxu0
        %v2739 = vadd.f32 %v2626, %v2738
        %2740 = vmatprep.mubr.bf16.mxu0 %v1748
        %2741 = vmatmul.mubr.bf16.gmra.mrb[0].mxu0 %v1747
        %v2742 = vpop.f32.mrb[0].mxu0
        %v2743 = vadd.f32 %v2630, %v2742
        %v2744 = vpop.f32.mrb[0].mxu0
        %v2745 = vadd.f32 %v2632, %v2744
        %v2746 = vpop.f32.mrb[0].mxu0
        %v2747 = vadd.f32 %v2634, %v2746
        %v2748 = vpop.f32.mrb[0].mxu0
        %v2749 = vadd.f32 %v2636, %v2748
        %2750 = vmatprep.mubr.bf16.mxu0 %v1756
        %2751 = vmatmul.mubr.bf16.gmra.mrb[0].mxu0 %v1755
        %v2752 = vpop.f32.mrb[0].mxu0
        %v2753 = vadd.f32 %v2640, %v2752
        %v2754 = vpop.f32.mrb[0].mxu0
        %v2755 = vadd.f32 %v2642, %v2754
        %v2756 = vpop.f32.mrb[0].mxu0
        %v2757 = vadd.f32 %v2644, %v2756
        %v2758 = vpop.f32.mrb[0].mxu0
        %v2759 = vadd.f32 %v2646, %v2758
        %2760 = vmatprep.mubr.bf16.mxu0 %v1764
        %2761 = vmatmul.mubr.bf16.gmra.mrb[0].mxu0 %v1763
        %v2762 = vpop.f32.mrb[0].mxu0
        %v2763 = vadd.f32 %v2650, %v2762
        %v2764 = vpop.f32.mrb[0].mxu0
        %v2765 = vadd.f32 %v2652, %v2764
        %v2766 = vpop.f32.mrb[0].mxu0
        %v2767 = vadd.f32 %v2654, %v2766
        %v2768 = vpop.f32.mrb[0].mxu0
        %v2769 = vadd.f32 %v2656, %v2768
        %2770 = vmatprep.mubr.bf16.mxu0 %v1772
        %2771 = vmatmul.mubr.bf16.gmra.mrb[0].mxu0 %v1771
        %v2772 = vpop.f32.mrb[0].mxu0
        %v2773 = vadd.f32 %v2660, %v2772
        %v2774 = vpop.f32.mrb[0].mxu0
        %v2775 = vadd.f32 %v2662, %v2774
        %v2776 = vpop.f32.mrb[0].mxu0
        %v2777 = vadd.f32 %v2664, %v2776
        %v2778 = vpop.f32.mrb[0].mxu0
        %v2779 = vadd.f32 %v2666, %v2778
        %2780 = vmatprep.mubr.bf16.mxu0 %v1780
        %2781 = vmatmul.mubr.bf16.gmra.mrb[0].mxu0 %v1779
        %v2782 = vpop.f32.mrb[0].mxu0
        %v2783 = vadd.f32 %v2670, %v2782
        %v2784 = vpop.f32.mrb[0].mxu0
        %v2785 = vadd.f32 %v2672, %v2784
        %v2786 = vpop.f32.mrb[0].mxu0
        %v2787 = vadd.f32 %v2674, %v2786
        %v2788 = vpop.f32.mrb[0].mxu0
        %v2789 = vadd.f32 %v2676, %v2788
        %2790 = vdwg.mxu0
        %2791 = vmatprep.subr.bf16.mxu0 %v2374
        %2792 = vmatpush1.bf16.msra.mxu0 %v2373
        %2793 = vmatprep.subr.bf16.mxu0 %v2376
        %2794 = vmatpush1.bf16.msra.mxu0 %v2375
        %2795 = vmatprep.subr.bf16.mxu0 %v2378
        %2796 = vmatpush1.bf16.msra.mxu0 %v2377
        %2797 = vmatprep.subr.bf16.mxu0 %v2380
        %2798 = vmatpush1.bf16.msra.mxu0 %v2379
        %2799 = vmatprep.subr.bf16.mxu0 %v2382
        %2800 = vmatpush1.bf16.msra.mxu0 %v2381
        %2801 = vmatprep.subr.bf16.mxu0 %v2384
        %2802 = vmatpush1.bf16.msra.mxu0 %v2383
        %2803 = vmatprep.subr.bf16.mxu0 %v2386
        %2804 = vmatpush1.bf16.msra.mxu0 %v2385
        %2805 = vmatprep.subr.bf16.mxu0 %v2388
        %2806 = vmatpush1.bf16.msra.mxu0 %v2387
        %2807 = vmatprep.subr.bf16.mxu0 %v2390
        %2808 = vmatpush1.bf16.msra.mxu0 %v2389
        %2809 = vmatprep.subr.bf16.mxu0 %v2392
        %2810 = vmatpush1.bf16.msra.mxu0 %v2391
        %2811 = vmatprep.subr.bf16.mxu0 %v2394
        %2812 = vmatpush1.bf16.msra.mxu0 %v2393
        %2813 = vmatprep.subr.bf16.mxu0 %v2396
        %2814 = vmatpush1.bf16.msra.mxu0 %v2395
        %2815 = vmatprep.subr.bf16.mxu0 %v2398
        %2816 = vmatpush1.bf16.msra.mxu0 %v2397
        %2817 = vmatprep.subr.bf16.mxu0 %v2400
        %2818 = vmatpush1.bf16.msra.mxu0 %v2399
        %2819 = vmatprep.subr.bf16.mxu0 %v2402
        %2820 = vmatpush1.bf16.msra.mxu0 %v2401
        %2821 = vmatprep.subr.bf16.mxu0 %v2404
        %2822 = vmatpush1.bf16.msra.mxu0 %v2403
        %2823 = vmatprep.mubr.bf16.mxu0 %v1726
        %2824 = vmatmul.mubr.bf16.gmra.mrb[0].mxu0 %v1725
        %v2825 = vpop.f32.mrb[0].mxu0
        %v2826 = vadd.f32 %v2713, %v2825
        %v2827 = vpop.f32.mrb[0].mxu0
        %v2828 = vadd.f32 %v2715, %v2827
        %v2829 = vpop.f32.mrb[0].mxu0
        %v2830 = vadd.f32 %v2717, %v2829
        %v2831 = vpop.f32.mrb[0].mxu0
        %v2832 = vadd.f32 %v2719, %v2831
        %2833 = vmatprep.mubr.bf16.mxu0 %v1734
        %2834 = vmatmul.mubr.bf16.gmra.mrb[0].mxu0 %v1733
        %v2835 = vpop.f32.mrb[0].mxu0
        %v2836 = vadd.f32 %v2723, %v2835
        %v2837 = vpop.f32.mrb[0].mxu0
        %v2838 = vadd.f32 %v2725, %v2837
        %v2839 = vpop.f32.mrb[0].mxu0
        %v2840 = vadd.f32 %v2727, %v2839
        %v2841 = vpop.f32.mrb[0].mxu0
        %v2842 = vadd.f32 %v2729, %v2841
        %2843 = vmatprep.mubr.bf16.mxu0 %v1742
        %2844 = vmatmul.mubr.bf16.gmra.mrb[0].mxu0 %v1741
        %v2845 = vpop.f32.mrb[0].mxu0
        %v2846 = vadd.f32 %v2733, %v2845
        %v2847 = vpop.f32.mrb[0].mxu0
        %v2848 = vadd.f32 %v2735, %v2847
        %v2849 = vpop.f32.mrb[0].mxu0
        %v2850 = vadd.f32 %v2737, %v2849
        %v2851 = vpop.f32.mrb[0].mxu0
        %v2852 = vadd.f32 %v2739, %v2851
        %2853 = vmatprep.mubr.bf16.mxu0 %v1750
        %2854 = vmatmul.mubr.bf16.gmra.mrb[0].mxu0 %v1749
        %v2855 = vpop.f32.mrb[0].mxu0
        %v2856 = vadd.f32 %v2743, %v2855
        %v2857 = vpop.f32.mrb[0].mxu0
        %v2858 = vadd.f32 %v2745, %v2857
        %v2859 = vpop.f32.mrb[0].mxu0
        %v2860 = vadd.f32 %v2747, %v2859
        %v2861 = vpop.f32.mrb[0].mxu0
        %v2862 = vadd.f32 %v2749, %v2861
        %2863 = vmatprep.mubr.bf16.mxu0 %v1758
        %2864 = vmatmul.mubr.bf16.gmra.mrb[0].mxu0 %v1757
        %v2865 = vpop.f32.mrb[0].mxu0
        %v2866 = vadd.f32 %v2753, %v2865
        %v2867 = vpop.f32.mrb[0].mxu0
        %v2868 = vadd.f32 %v2755, %v2867
        %v2869 = vpop.f32.mrb[0].mxu0
        %v2870 = vadd.f32 %v2757, %v2869
        %v2871 = vpop.f32.mrb[0].mxu0
        %v2872 = vadd.f32 %v2759, %v2871
        %2873 = vmatprep.mubr.bf16.mxu0 %v1766
        %2874 = vmatmul.mubr.bf16.gmra.mrb[0].mxu0 %v1765
        %v2875 = vpop.f32.mrb[0].mxu0
        %v2876 = vadd.f32 %v2763, %v2875
        %v2877 = vpop.f32.mrb[0].mxu0
        %v2878 = vadd.f32 %v2765, %v2877
        %v2879 = vpop.f32.mrb[0].mxu0
        %v2880 = vadd.f32 %v2767, %v2879
        %v2881 = vpop.f32.mrb[0].mxu0
        %v2882 = vadd.f32 %v2769, %v2881
        %2883 = vmatprep.mubr.bf16.mxu0 %v1774
        %2884 = vmatmul.mubr.bf16.gmra.mrb[0].mxu0 %v1773
        %v2885 = vpop.f32.mrb[0].mxu0
        %v2886 = vadd.f32 %v2773, %v2885
        %v2887 = vpop.f32.mrb[0].mxu0
        %v2888 = vadd.f32 %v2775, %v2887
        %v2889 = vpop.f32.mrb[0].mxu0
        %v2890 = vadd.f32 %v2777, %v2889
        %v2891 = vpop.f32.mrb[0].mxu0
        %v2892 = vadd.f32 %v2779, %v2891
        %2893 = vmatprep.mubr.bf16.mxu0 %v1782
        %2894 = vmatmul.mubr.bf16.gmra.mrb[0].mxu0 %v1781
        %v2895 = vpop.f32.mrb[0].mxu0
        %v2896 = vadd.f32 %v2783, %v2895
        %v2897 = vpop.f32.mrb[0].mxu0
        %v2898 = vadd.f32 %v2785, %v2897
        %v2899 = vpop.f32.mrb[0].mxu0
        %v2900 = vadd.f32 %v2787, %v2899
        %v2901 = vpop.f32.mrb[0].mxu0
        %v2902 = vadd.f32 %v2789, %v2901
        %2903 = vdwg.mxu0
        %2904 = vmatprep.subr.bf16.mxu0 %v2406
        %2905 = vmatpush1.bf16.msra.mxu0 %v2405
        %2906 = vmatprep.subr.bf16.mxu0 %v2408
        %2907 = vmatpush1.bf16.msra.mxu0 %v2407
        %2908 = vmatprep.subr.bf16.mxu0 %v2410
        %2909 = vmatpush1.bf16.msra.mxu0 %v2409
        %2910 = vmatprep.subr.bf16.mxu0 %v2412
        %2911 = vmatpush1.bf16.msra.mxu0 %v2411
        %2912 = vmatprep.subr.bf16.mxu0 %v2414
        %2913 = vmatpush1.bf16.msra.mxu0 %v2413
        %2914 = vmatprep.subr.bf16.mxu0 %v2416
        %2915 = vmatpush1.bf16.msra.mxu0 %v2415
        %2916 = vmatprep.subr.bf16.mxu0 %v2418
        %2917 = vmatpush1.bf16.msra.mxu0 %v2417
        %2918 = vmatprep.subr.bf16.mxu0 %v2420
        %2919 = vmatpush1.bf16.msra.mxu0 %v2419
        %2920 = vmatprep.subr.bf16.mxu0 %v2422
        %2921 = vmatpush1.bf16.msra.mxu0 %v2421
        %2922 = vmatprep.subr.bf16.mxu0 %v2424
        %2923 = vmatpush1.bf16.msra.mxu0 %v2423
        %2924 = vmatprep.subr.bf16.mxu0 %v2426
        %2925 = vmatpush1.bf16.msra.mxu0 %v2425
        %2926 = vmatprep.subr.bf16.mxu0 %v2428
        %2927 = vmatpush1.bf16.msra.mxu0 %v2427
        %2928 = vmatprep.subr.bf16.mxu0 %v2430
        %2929 = vmatpush1.bf16.msra.mxu0 %v2429
        %2930 = vmatprep.subr.bf16.mxu0 %v2432
        %2931 = vmatpush1.bf16.msra.mxu0 %v2431
        %2932 = vmatprep.subr.bf16.mxu0 %v2434
        %2933 = vmatpush1.bf16.msra.mxu0 %v2433
        %2934 = vmatprep.subr.bf16.mxu0 %v2436
        %2935 = vmatpush1.bf16.msra.mxu0 %v2435
        %2936 = vmatprep.mubr.bf16.mxu0 %v1728
        %2937 = vmatmul.mubr.bf16.gmra.mrb[0].mxu0 %v1727
        %v2938 = vpop.f32.mrb[0].mxu0
        %v2939 = vadd.f32 %v2826, %v2938
        %v2940 = vpop.f32.mrb[0].mxu0
        %v2941 = vadd.f32 %v2828, %v2940
        %v2942 = vpop.f32.mrb[0].mxu0
        %v2943 = vadd.f32 %v2830, %v2942
        %v2944 = vpop.f32.mrb[0].mxu0
        %v2945 = vadd.f32 %v2832, %v2944
        %2946 = vmatprep.mubr.bf16.mxu0 %v1736
        %2947 = vmatmul.mubr.bf16.gmra.mrb[0].mxu0 %v1735
        %v2948 = vpop.f32.mrb[0].mxu0
        %v2949 = vadd.f32 %v2836, %v2948
        %v2950 = vpop.f32.mrb[0].mxu0
        %v2951 = vadd.f32 %v2838, %v2950
        %v2952 = vpop.f32.mrb[0].mxu0
        %v2953 = vadd.f32 %v2840, %v2952
        %v2954 = vpop.f32.mrb[0].mxu0
        %v2955 = vadd.f32 %v2842, %v2954
        %2956 = vmatprep.mubr.bf16.mxu0 %v1744
        %2957 = vmatmul.mubr.bf16.gmra.mrb[0].mxu0 %v1743
        %v2958 = vpop.f32.mrb[0].mxu0
        %v2959 = vadd.f32 %v2846, %v2958
        %v2960 = vpop.f32.mrb[0].mxu0
        %v2961 = vadd.f32 %v2848, %v2960
        %v2962 = vpop.f32.mrb[0].mxu0
        %v2963 = vadd.f32 %v2850, %v2962
        %v2964 = vpop.f32.mrb[0].mxu0
        %v2965 = vadd.f32 %v2852, %v2964
        %2966 = vmatprep.mubr.bf16.mxu0 %v1752
        %2967 = vmatmul.mubr.bf16.gmra.mrb[0].mxu0 %v1751
        %v2968 = vpop.f32.mrb[0].mxu0
        %v2969 = vadd.f32 %v2856, %v2968
        %v2970 = vpop.f32.mrb[0].mxu0
        %v2971 = vadd.f32 %v2858, %v2970
        %v2972 = vpop.f32.mrb[0].mxu0
        %v2973 = vadd.f32 %v2860, %v2972
        %v2974 = vpop.f32.mrb[0].mxu0
        %v2975 = vadd.f32 %v2862, %v2974
        %2976 = vmatprep.mubr.bf16.mxu0 %v1760
        %2977 = vmatmul.mubr.bf16.gmra.mrb[0].mxu0 %v1759
        %v2978 = vpop.f32.mrb[0].mxu0
        %v2979 = vadd.f32 %v2866, %v2978
        %v2980 = vpop.f32.mrb[0].mxu0
        %v2981 = vadd.f32 %v2868, %v2980
        %v2982 = vpop.f32.mrb[0].mxu0
        %v2983 = vadd.f32 %v2870, %v2982
        %v2984 = vpop.f32.mrb[0].mxu0
        %v2985 = vadd.f32 %v2872, %v2984
        %2986 = vmatprep.mubr.bf16.mxu0 %v1768
        %2987 = vmatmul.mubr.bf16.gmra.mrb[0].mxu0 %v1767
        %v2988 = vpop.f32.mrb[0].mxu0
        %v2989 = vadd.f32 %v2876, %v2988
        %v2990 = vpop.f32.mrb[0].mxu0
        %v2991 = vadd.f32 %v2878, %v2990
        %v2992 = vpop.f32.mrb[0].mxu0
        %v2993 = vadd.f32 %v2880, %v2992
        %v2994 = vpop.f32.mrb[0].mxu0
        %v2995 = vadd.f32 %v2882, %v2994
        %2996 = vmatprep.mubr.bf16.mxu0 %v1776
        %2997 = vmatmul.mubr.bf16.gmra.mrb[0].mxu0 %v1775
        %v2998 = vpop.f32.mrb[0].mxu0
        %v2999 = vadd.f32 %v2886, %v2998
        %v3000 = vpop.f32.mrb[0].mxu0
        %v3001 = vadd.f32 %v2888, %v3000
        %v3002 = vpop.f32.mrb[0].mxu0
        %v3003 = vadd.f32 %v2890, %v3002
        %v3004 = vpop.f32.mrb[0].mxu0
        %v3005 = vadd.f32 %v2892, %v3004
        %3006 = vmatprep.mubr.bf16.mxu0 %v1784
        %3007 = vmatmul.mubr.bf16.gmra.mrb[0].mxu0 %v1783
        %v3008 = vpop.f32.mrb[0].mxu0
        %v3009 = vadd.f32 %v2896, %v3008
        %v3010 = vpop.f32.mrb[0].mxu0
        %v3011 = vadd.f32 %v2898, %v3010
        %v3012 = vpop.f32.mrb[0].mxu0
        %v3013 = vadd.f32 %v2900, %v3012
        %v3014 = vpop.f32.mrb[0].mxu0
        %v3015 = vadd.f32 %v2902, %v3014
        %3016 = vdwg.mxu0
        %v3017 = vadd.f32 %v283, %v2939
        %v3018 = vadd.f32 %v284, %v2941
        %v3019 = vadd.f32 %v285, %v2943
        %v3020 = vadd.f32 %v286, %v2945
        %v3021 = vadd.f32 %v287, %v2949
        %v3022 = vadd.f32 %v288, %v2951
        %v3023 = vadd.f32 %v289, %v2953
        %v3024 = vadd.f32 %v290, %v2955
        %v3025 = vadd.f32 %v291, %v2959
        %v3026 = vadd.f32 %v292, %v2961
        %v3027 = vadd.f32 %v293, %v2963
        %v3028 = vadd.f32 %v294, %v2965
        %v3029 = vadd.f32 %v295, %v2969
        %v3030 = vadd.f32 %v296, %v2971
        %v3031 = vadd.f32 %v297, %v2973
        %v3032 = vadd.f32 %v298, %v2975
        %v3033 = vadd.f32 %v299, %v2979
        %v3034 = vadd.f32 %v300, %v2981
        %v3035 = vadd.f32 %v301, %v2983
        %v3036 = vadd.f32 %v302, %v2985
        %v3037 = vadd.f32 %v303, %v2989
        %v3038 = vadd.f32 %v304, %v2991
        %v3039 = vadd.f32 %v305, %v2993
        %v3040 = vadd.f32 %v306, %v2995
        %v3041 = vadd.f32 %v307, %v2999
        %v3042 = vadd.f32 %v308, %v3001
        %v3043 = vadd.f32 %v309, %v3003
        %v3044 = vadd.f32 %v310, %v3005
        %v3045 = vadd.f32 %v311, %v3009
        %v3046 = vadd.f32 %v312, %v3011
        %v3047 = vadd.f32 %v313, %v3013
        %v3048 = vadd.f32 %v314, %v3015
        %v3049 = vadd.f32 %v3017, %v3018
        %3050 = vadd.xlane.f32.xlu0 %v3049
        %v3051 = vpop.xlane.xlu0 %3050
        %v3052 = vadd.f32 %v3019, %v3020
        %3053 = vadd.xlane.f32.xlu0 %v3052
        %v3054 = vpop.xlane.xlu0 %3053
        %v3055 = vadd.f32 %v3021, %v3022
        %3056 = vadd.xlane.f32.xlu0 %v3055
        %v3057 = vpop.xlane.xlu0 %3056
        %v3058 = vadd.f32 %v3023, %v3024
        %3059 = vadd.xlane.f32.xlu0 %v3058
        %v3060 = vpop.xlane.xlu0 %3059
        %v3061 = vadd.f32 %v3025, %v3026
        %3062 = vadd.xlane.f32.xlu0 %v3061
        %v3063 = vpop.xlane.xlu0 %3062
        %v3064 = vadd.f32 %v3027, %v3028
        %3065 = vadd.xlane.f32.xlu0 %v3064
        %v3066 = vpop.xlane.xlu0 %3065
        %v3067 = vadd.f32 %v3029, %v3030
        %3068 = vadd.xlane.f32.xlu0 %v3067
        %v3069 = vpop.xlane.xlu0 %3068
        %v3070 = vadd.f32 %v3031, %v3032
        %3071 = vadd.xlane.f32.xlu0 %v3070
        %v3072 = vpop.xlane.xlu0 %3071
        %v3073 = vadd.f32 %v3033, %v3034
        %3074 = vadd.xlane.f32.xlu0 %v3073
        %v3075 = vpop.xlane.xlu0 %3074
        %v3076 = vadd.f32 %v3035, %v3036
        %3077 = vadd.xlane.f32.xlu0 %v3076
        %v3078 = vpop.xlane.xlu0 %3077
        %v3079 = vadd.f32 %v3037, %v3038
        %3080 = vadd.xlane.f32.xlu0 %v3079
        %v3081 = vpop.xlane.xlu0 %3080
        %v3082 = vadd.f32 %v3039, %v3040
        %3083 = vadd.xlane.f32.xlu0 %v3082
        %v3084 = vpop.xlane.xlu0 %3083
        %v3085 = vadd.f32 %v3041, %v3042
        %3086 = vadd.xlane.f32.xlu0 %v3085
        %v3087 = vpop.xlane.xlu0 %3086
        %v3088 = vadd.f32 %v3043, %v3044
        %3089 = vadd.xlane.f32.xlu0 %v3088
        %v3090 = vpop.xlane.xlu0 %3089
        %v3091 = vadd.f32 %v3045, %v3046
        %3092 = vadd.xlane.f32.xlu0 %v3091
        %v3093 = vpop.xlane.xlu0 %3092
        %v3094 = vadd.f32 %v3047, %v3048
        %3095 = vadd.xlane.f32.xlu0 %v3094
        %v3096 = vpop.xlane.xlu0 %3095
        %v3097 = vrcp.pop 256.0
        %v3098 = vmul.f32 %v3051, %v3097
        %v3099 = vmul.f32 %v3054, %v3097
        %v3100 = vmul.f32 %v3057, %v3097
        %v3101 = vmul.f32 %v3060, %v3097
        %v3102 = vmul.f32 %v3063, %v3097
        %v3103 = vmul.f32 %v3066, %v3097
        %v3104 = vmul.f32 %v3069, %v3097
        %v3105 = vmul.f32 %v3072, %v3097
        %v3106 = vmul.f32 %v3075, %v3097
        %v3107 = vmul.f32 %v3078, %v3097
        %v3108 = vmul.f32 %v3081, %v3097
        %v3109 = vmul.f32 %v3084, %v3097
        %v3110 = vmul.f32 %v3087, %v3097
        %v3111 = vmul.f32 %v3090, %v3097
        %v3112 = vmul.f32 %v3093, %v3097
        %v3113 = vmul.f32 %v3096, %v3097
        %v3114 = vsub.f32 %v3017, %v3098
        %v3115 = vsub.f32 %v3018, %v3098
        %v3116 = vsub.f32 %v3019, %v3099
        %v3117 = vsub.f32 %v3020, %v3099
        %v3118 = vsub.f32 %v3021, %v3100
        %v3119 = vsub.f32 %v3022, %v3100
        %v3120 = vsub.f32 %v3023, %v3101
        %v3121 = vsub.f32 %v3024, %v3101
        %v3122 = vsub.f32 %v3025, %v3102
        %v3123 = vsub.f32 %v3026, %v3102
        %v3124 = vsub.f32 %v3027, %v3103
        %v3125 = vsub.f32 %v3028, %v3103
        %v3126 = vsub.f32 %v3029, %v3104
        %v3127 = vsub.f32 %v3030, %v3104
        %v3128 = vsub.f32 %v3031, %v3105
        %v3129 = vsub.f32 %v3032, %v3105
        %v3130 = vsub.f32 %v3033, %v3106
        %v3131 = vsub.f32 %v3034, %v3106
        %v3132 = vsub.f32 %v3035, %v3107
        %v3133 = vsub.f32 %v3036, %v3107
        %v3134 = vsub.f32 %v3037, %v3108
        %v3135 = vsub.f32 %v3038, %v3108
        %v3136 = vsub.f32 %v3039, %v3109
        %v3137 = vsub.f32 %v3040, %v3109
        %v3138 = vsub.f32 %v3041, %v3110
        %v3139 = vsub.f32 %v3042, %v3110
        %v3140 = vsub.f32 %v3043, %v3111
        %v3141 = vsub.f32 %v3044, %v3111
        %v3142 = vsub.f32 %v3045, %v3112
        %v3143 = vsub.f32 %v3046, %v3112
        %v3144 = vsub.f32 %v3047, %v3113
        %v3145 = vsub.f32 %v3048, %v3113
        %v3146 = vmul.f32 %v3114, %v3114
        %v3147 = vmul.f32 %v3115, %v3115
        %v3148 = vmul.f32 %v3116, %v3116
        %v3149 = vmul.f32 %v3117, %v3117
        %v3150 = vmul.f32 %v3118, %v3118
        %v3151 = vmul.f32 %v3119, %v3119
        %v3152 = vmul.f32 %v3120, %v3120
        %v3153 = vmul.f32 %v3121, %v3121
        %v3154 = vmul.f32 %v3122, %v3122
        %v3155 = vmul.f32 %v3123, %v3123
        %v3156 = vmul.f32 %v3124, %v3124
        %v3157 = vmul.f32 %v3125, %v3125
        %v3158 = vmul.f32 %v3126, %v3126
        %v3159 = vmul.f32 %v3127, %v3127
        %v3160 = vmul.f32 %v3128, %v3128
        %v3161 = vmul.f32 %v3129, %v3129
        %v3162 = vmul.f32 %v3130, %v3130
        %v3163 = vmul.f32 %v3131, %v3131
        %v3164 = vmul.f32 %v3132, %v3132
        %v3165 = vmul.f32 %v3133, %v3133
        %v3166 = vmul.f32 %v3134, %v3134
        %v3167 = vmul.f32 %v3135, %v3135
        %v3168 = vmul.f32 %v3136, %v3136
        %v3169 = vmul.f32 %v3137, %v3137
        %v3170 = vmul.f32 %v3138, %v3138
        %v3171 = vmul.f32 %v3139, %v3139
        %v3172 = vmul.f32 %v3140, %v3140
        %v3173 = vmul.f32 %v3141, %v3141
        %v3174 = vmul.f32 %v3142, %v3142
        %v3175 = vmul.f32 %v3143, %v3143
        %v3176 = vmul.f32 %v3144, %v3144
        %v3177 = vmul.f32 %v3145, %v3145
        %v3178 = vadd.f32 %v3146, %v3147
        %3179 = vadd.xlane.f32.xlu0 %v3178
        %v3180 = vpop.xlane.xlu0 %3179
        %v3181 = vadd.f32 %v3148, %v3149
        %3182 = vadd.xlane.f32.xlu0 %v3181
        %v3183 = vpop.xlane.xlu0 %3182
        %v3184 = vadd.f32 %v3150, %v3151
        %3185 = vadd.xlane.f32.xlu0 %v3184
        %v3186 = vpop.xlane.xlu0 %3185
        %v3187 = vadd.f32 %v3152, %v3153
        %3188 = vadd.xlane.f32.xlu0 %v3187
        %v3189 = vpop.xlane.xlu0 %3188
        %v3190 = vadd.f32 %v3154, %v3155
        %3191 = vadd.xlane.f32.xlu0 %v3190
        %v3192 = vpop.xlane.xlu0 %3191
        %v3193 = vadd.f32 %v3156, %v3157
        %3194 = vadd.xlane.f32.xlu0 %v3193
        %v3195 = vpop.xlane.xlu0 %3194
        %v3196 = vadd.f32 %v3158, %v3159
        %3197 = vadd.xlane.f32.xlu0 %v3196
        %v3198 = vpop.xlane.xlu0 %3197
        %v3199 = vadd.f32 %v3160, %v3161
        %3200 = vadd.xlane.f32.xlu0 %v3199
        %v3201 = vpop.xlane.xlu0 %3200
        %v3202 = vadd.f32 %v3162, %v3163
        %3203 = vadd.xlane.f32.xlu0 %v3202
        %v3204 = vpop.xlane.xlu0 %3203
        %v3205 = vadd.f32 %v3164, %v3165
        %3206 = vadd.xlane.f32.xlu0 %v3205
        %v3207 = vpop.xlane.xlu0 %3206
        %v3208 = vadd.f32 %v3166, %v3167
        %3209 = vadd.xlane.f32.xlu0 %v3208
        %v3210 = vpop.xlane.xlu0 %3209
        %v3211 = vadd.f32 %v3168, %v3169
        %3212 = vadd.xlane.f32.xlu0 %v3211
        %v3213 = vpop.xlane.xlu0 %3212
        %v3214 = vadd.f32 %v3170, %v3171
        %3215 = vadd.xlane.f32.xlu0 %v3214
        %v3216 = vpop.xlane.xlu0 %3215
        %v3217 = vadd.f32 %v3172, %v3173
        %3218 = vadd.xlane.f32.xlu0 %v3217
        %v3219 = vpop.xlane.xlu0 %3218
        %v3220 = vadd.f32 %v3174, %v3175
        %3221 = vadd.xlane.f32.xlu0 %v3220
        %v3222 = vpop.xlane.xlu0 %3221
        %v3223 = vadd.f32 %v3176, %v3177
        %3224 = vadd.xlane.f32.xlu0 %v3223
        %v3225 = vpop.xlane.xlu0 %3224
        %v3226 = vmul.f32 %v3180, %v3097
        %v3227 = vmul.f32 %v3183, %v3097
        %v3228 = vmul.f32 %v3186, %v3097
        %v3229 = vmul.f32 %v3189, %v3097
        %v3230 = vmul.f32 %v3192, %v3097
        %v3231 = vmul.f32 %v3195, %v3097
        %v3232 = vmul.f32 %v3198, %v3097
        %v3233 = vmul.f32 %v3201, %v3097
        %v3234 = vmul.f32 %v3204, %v3097
        %v3235 = vmul.f32 %v3207, %v3097
        %v3236 = vmul.f32 %v3210, %v3097
        %v3237 = vmul.f32 %v3213, %v3097
        %v3238 = vmul.f32 %v3216, %v3097
        %v3239 = vmul.f32 %v3219, %v3097
        %v3240 = vmul.f32 %v3222, %v3097
        %v3241 = vmul.f32 %v3225, %v3097
        %v3242 = vadd.f32 %v3226, 1e-05
        %v3243 = vadd.f32 %v3227, 1e-05
        %v3244 = vadd.f32 %v3228, 1e-05
        %v3245 = vadd.f32 %v3229, 1e-05
        %v3246 = vadd.f32 %v3230, 1e-05
        %v3247 = vadd.f32 %v3231, 1e-05
        %v3248 = vadd.f32 %v3232, 1e-05
        %v3249 = vadd.f32 %v3233, 1e-05
        %v3250 = vadd.f32 %v3234, 1e-05
        %v3251 = vadd.f32 %v3235, 1e-05
        %v3252 = vadd.f32 %v3236, 1e-05
        %v3253 = vadd.f32 %v3237, 1e-05
        %v3254 = vadd.f32 %v3238, 1e-05
        %v3255 = vadd.f32 %v3239, 1e-05
        %v3256 = vadd.f32 %v3240, 1e-05
        %v3257 = vadd.f32 %v3241, 1e-05
        %v3258 = vrsqrt.pop %v3242
        %v3259 = vrsqrt.pop %v3243
        %v3260 = vrsqrt.pop %v3244
        %v3261 = vrsqrt.pop %v3245
        %v3262 = vrsqrt.pop %v3246
        %v3263 = vrsqrt.pop %v3247
        %v3264 = vrsqrt.pop %v3248
        %v3265 = vrsqrt.pop %v3249
        %v3266 = vrsqrt.pop %v3250
        %v3267 = vrsqrt.pop %v3251
        %v3268 = vrsqrt.pop %v3252
        %v3269 = vrsqrt.pop %v3253
        %v3270 = vrsqrt.pop %v3254
        %v3271 = vrsqrt.pop %v3255
        %v3272 = vrsqrt.pop %v3256
        %v3273 = vrsqrt.pop %v3257
        %v3274 = vmul.f32 %v3114, %v3258
        %v3275 = vmul.f32 %v3115, %v3258
        %v3276 = vmul.f32 %v3116, %v3259
        %v3277 = vmul.f32 %v3117, %v3259
        %v3278 = vmul.f32 %v3118, %v3260
        %v3279 = vmul.f32 %v3119, %v3260
        %v3280 = vmul.f32 %v3120, %v3261
        %v3281 = vmul.f32 %v3121, %v3261
        %v3282 = vmul.f32 %v3122, %v3262
        %v3283 = vmul.f32 %v3123, %v3262
        %v3284 = vmul.f32 %v3124, %v3263
        %v3285 = vmul.f32 %v3125, %v3263
        %v3286 = vmul.f32 %v3126, %v3264
        %v3287 = vmul.f32 %v3127, %v3264
        %v3288 = vmul.f32 %v3128, %v3265
        %v3289 = vmul.f32 %v3129, %v3265
        %v3290 = vmul.f32 %v3130, %v3266
        %v3291 = vmul.f32 %v3131, %v3266
        %v3292 = vmul.f32 %v3132, %v3267
        %v3293 = vmul.f32 %v3133, %v3267
        %v3294 = vmul.f32 %v3134, %v3268
        %v3295 = vmul.f32 %v3135, %v3268
        %v3296 = vmul.f32 %v3136, %v3269
        %v3297 = vmul.f32 %v3137, %v3269
        %v3298 = vmul.f32 %v3138, %v3270
        %v3299 = vmul.f32 %v3139, %v3270
        %v3300 = vmul.f32 %v3140, %v3271
        %v3301 = vmul.f32 %v3141, %v3271
        %v3302 = vmul.f32 %v3142, %v3272
        %v3303 = vmul.f32 %v3143, %v3272
        %v3304 = vmul.f32 %v3144, %v3273
        %v3305 = vmul.f32 %v3145, %v3273
        %v3306 = vld [vmem:[%s5] sm:$0x3]
        %v3308 = vlaneseq
        %v3309 = vshrl.u32 %v3308, 7
        %v3310 = vsub.s32 0, %v3309
        %v3311 = vrot.slane %v3306, %v3310
        %v3312 = vlaneseq
        %v3313 = vshrl.u32 %v3312, 7
        %v3314 = vsub.s32 1, %v3313
        %v3315 = vrot.slane %v3306, %v3314
        %v3318 = vmul.f32 %v3274, %v3311
        %v3319 = vmul.f32 %v3275, %v3315
        %v3320 = vmul.f32 %v3276, %v3311
        %v3321 = vmul.f32 %v3277, %v3315
        %v3322 = vmul.f32 %v3278, %v3311
        %v3323 = vmul.f32 %v3279, %v3315
        %v3324 = vmul.f32 %v3280, %v3311
        %v3325 = vmul.f32 %v3281, %v3315
        %v3326 = vmul.f32 %v3282, %v3311
        %v3327 = vmul.f32 %v3283, %v3315
        %v3328 = vmul.f32 %v3284, %v3311
        %v3329 = vmul.f32 %v3285, %v3315
        %v3330 = vmul.f32 %v3286, %v3311
        %v3331 = vmul.f32 %v3287, %v3315
        %v3332 = vmul.f32 %v3288, %v3311
        %v3333 = vmul.f32 %v3289, %v3315
        %v3334 = vmul.f32 %v3290, %v3311
        %v3335 = vmul.f32 %v3291, %v3315
        %v3336 = vmul.f32 %v3292, %v3311
        %v3337 = vmul.f32 %v3293, %v3315
        %v3338 = vmul.f32 %v3294, %v3311
        %v3339 = vmul.f32 %v3295, %v3315
        %v3340 = vmul.f32 %v3296, %v3311
        %v3341 = vmul.f32 %v3297, %v3315
        %v3342 = vmul.f32 %v3298, %v3311
        %v3343 = vmul.f32 %v3299, %v3315
        %v3344 = vmul.f32 %v3300, %v3311
        %v3345 = vmul.f32 %v3301, %v3315
        %v3346 = vmul.f32 %v3302, %v3311
        %v3347 = vmul.f32 %v3303, %v3315
        %v3348 = vmul.f32 %v3304, %v3311
        %v3349 = vmul.f32 %v3305, %v3315
        %v3350 = vld [vmem:[%s6] sm:$0x3]
        %v3352 = vlaneseq
        %v3353 = vshrl.u32 %v3352, 7
        %v3354 = vsub.s32 0, %v3353
        %v3355 = vrot.slane %v3350, %v3354
        %v3356 = vlaneseq
        %v3357 = vshrl.u32 %v3356, 7
        %v3358 = vsub.s32 1, %v3357
        %v3359 = vrot.slane %v3350, %v3358
        %v3362 = vadd.f32 %v3318, %v3355
        %v3363 = vadd.f32 %v3319, %v3359
        %v3364 = vadd.f32 %v3320, %v3355
        %v3365 = vadd.f32 %v3321, %v3359
        %v3366 = vadd.f32 %v3322, %v3355
        %v3367 = vadd.f32 %v3323, %v3359
        %v3368 = vadd.f32 %v3324, %v3355
        %v3369 = vadd.f32 %v3325, %v3359
        %v3370 = vadd.f32 %v3326, %v3355
        %v3371 = vadd.f32 %v3327, %v3359
        %v3372 = vadd.f32 %v3328, %v3355
        %v3373 = vadd.f32 %v3329, %v3359
        %v3374 = vadd.f32 %v3330, %v3355
        %v3375 = vadd.f32 %v3331, %v3359
        %v3376 = vadd.f32 %v3332, %v3355
        %v3377 = vadd.f32 %v3333, %v3359
        %v3378 = vadd.f32 %v3334, %v3355
        %v3379 = vadd.f32 %v3335, %v3359
        %v3380 = vadd.f32 %v3336, %v3355
        %v3381 = vadd.f32 %v3337, %v3359
        %v3382 = vadd.f32 %v3338, %v3355
        %v3383 = vadd.f32 %v3339, %v3359
        %v3384 = vadd.f32 %v3340, %v3355
        %v3385 = vadd.f32 %v3341, %v3359
        %v3386 = vadd.f32 %v3342, %v3355
        %v3387 = vadd.f32 %v3343, %v3359
        %v3388 = vadd.f32 %v3344, %v3355
        %v3389 = vadd.f32 %v3345, %v3359
        %v3390 = vadd.f32 %v3346, %v3355
        %v3391 = vadd.f32 %v3347, %v3359
        %v3392 = vadd.f32 %v3348, %v3355
        %v3393 = vadd.f32 %v3349, %v3359
        %3394 = vst [vmem:[%s274] sm:$0xff] %v3362
        %3395 = vst [vmem:[%s274 + $0x8] sm:$0xff] %v3363
        %3396 = vst [vmem:[%s274 + $0x10] sm:$0xff] %v3364
        %3397 = vst [vmem:[%s274 + $0x18] sm:$0xff] %v3365
        %3398 = vst [vmem:[%s274 + $0x20] sm:$0xff] %v3366
        %3399 = vst [vmem:[%s274 + $0x28] sm:$0xff] %v3367
        %3400 = vst [vmem:[%s274 + $0x30] sm:$0xff] %v3368
        %3401 = vst [vmem:[%s274 + $0x38] sm:$0xff] %v3369
        %3402 = vst [vmem:[%s274 + $0x40] sm:$0xff] %v3370
        %3403 = vst [vmem:[%s274 + $0x48] sm:$0xff] %v3371
        %3404 = vst [vmem:[%s274 + $0x50] sm:$0xff] %v3372
        %3405 = vst [vmem:[%s274 + $0x58] sm:$0xff] %v3373
        %3406 = vst [vmem:[%s274 + $0x60] sm:$0xff] %v3374
        %3407 = vst [vmem:[%s274 + $0x68] sm:$0xff] %v3375
        %3408 = vst [vmem:[%s274 + $0x70] sm:$0xff] %v3376
        %3409 = vst [vmem:[%s274 + $0x78] sm:$0xff] %v3377
        %3410 = vst [vmem:[%s274 + $0x80] sm:$0xff] %v3378
        %3411 = vst [vmem:[%s274 + $0x88] sm:$0xff] %v3379
        %3412 = vst [vmem:[%s274 + $0x90] sm:$0xff] %v3380
        %3413 = vst [vmem:[%s274 + $0x98] sm:$0xff] %v3381
        %3414 = vst [vmem:[%s274 + $0xa0] sm:$0xff] %v3382
        %3415 = vst [vmem:[%s274 + $0xa8] sm:$0xff] %v3383
        %3416 = vst [vmem:[%s274 + $0xb0] sm:$0xff] %v3384
        %3417 = vst [vmem:[%s274 + $0xb8] sm:$0xff] %v3385
        %3418 = vst [vmem:[%s274 + $0xc0] sm:$0xff] %v3386
        %3419 = vst [vmem:[%s274 + $0xc8] sm:$0xff] %v3387
        %3420 = vst [vmem:[%s274 + $0xd0] sm:$0xff] %v3388
        %3421 = vst [vmem:[%s274 + $0xd8] sm:$0xff] %v3389
        %3422 = vst [vmem:[%s274 + $0xe0] sm:$0xff] %v3390
        %3423 = vst [vmem:[%s274 + $0xe8] sm:$0xff] %v3391
        %3424 = vst [vmem:[%s274 + $0xf0] sm:$0xff] %v3392
        %3425 = vst [vmem:[%s274 + $0xf8] sm:$0xff] %v3393
        %s3426 = sand.u32 %s181, 1
        %s3427 = scalar_lea.sflag [#allocation3], %s3426
        %s3428 = sand.u32 %s181, 1
        %s3429 = smul.addr %s3428, 256
        %s3430 = scalar_lea.vmem [#allocation2], %s3429
        // Predicated region
        $region49: #{encoder_forward.7} parent=47 // pred_check
          %p3431 = pneg %p191
        $region50: #{encoder_forward.7} parent=47 // pred_check_branch
          %3433 = sbr.rel (%p3431) target = $region52
        $region51: #{encoder_forward.7} parent=47 // pred_region
          %s3434 = smul.u32 16, %s21
          %s3436 = ssub.s32 4096, 4096
          %3437 = vsyncadd %s3427, %s3436
          %s3438 = smul.addr %s3434, 2
          %s3439 = smul.addr %s3438, 128
          %s3440 = scalar_lea.hbm %s7, %s3439
          %s3441 = sshll.u32 %s3430, 4
          %s3442 = int_to_ptr.vmem [resolvable:$true] %s3441
          %3447 = dma.vmem_to_hbm [thread:$0]  %s3442, 4096, %s3440, %s3427, 256, 256, 16
        $region52: #{encoder_forward.7} parent=47 // pred_fallthru
          _
      $region48: #{encoder_forward.7} parent=5 // pred_fallthru
        _
      %p3448 = scmp.le.s32.totalorder 2, %s16
      // Predicated region
      $region53: #{encoder_forward.7} parent=5 // pred_check
        %p3449 = pneg %p3448
      $region54: #{encoder_forward.7} parent=5 // pred_check_branch
        %3451 = sbr.rel (%p3449) target = $region56
      $region55: #{encoder_forward.7} parent=5 // pred_region
        %s3452 = ssub.s32 %s16, 2
        // Predicated region
        $region57: #{encoder_forward.7} parent=55 // pred_check
          %p3453 = pneg %p197
        $region58: #{encoder_forward.7} parent=55 // pred_check_branch
          %3455 = sbr.rel (%p3453) target = $region60
        $region59: #{encoder_forward.7} parent=55 // pred_region
          %s3456 = sand.u32 %s182, 1
          %s3457 = scalar_lea.sflag [#allocation3], %s3456
          %s3458 = sand.u32 %s182, 1
          %s3459 = smul.addr %s3458, 256
          %s3460 = scalar_lea.vmem [#allocation2], %s3459
          %3461 = dma.done %s3457, 4096
        $region60: #{encoder_forward.7} parent=55 // pred_fallthru
          _
      $region56: #{encoder_forward.7} parent=5 // pred_fallthru
        _
    $region6: #{encoder_forward.7} parent=1 // loop_footer
      %s20 = sadd.s32 1, %s16
    $region7: #{encoder_forward.7} parent=1 // loop_footer_branch
      %15 = sbr.rel target = $region3
    $region8: #{encoder_forward.7} parent=1 // loop_exit
      _
    %3462 = vsyncpa [#allocation3], 1
    %s3463 = scalar_lea.sflag [#allocation3], 1
    %3464 = vsyncpa %s3463, 1

</llo_original>
